<compile_context>
chip_gen: v7x
topology: tpu7x:2x2x1
jax: 0.10.0
libtpu: 0.0.40
codegen_flags: <defaults>
</compile_context>

<pallas_src>
import functools
import math

import jax
import jax.numpy as jnp
from jax.experimental import pallas as pl
from jax.experimental.pallas import tpu as pltpu


# ----------------------------------------------------------------------------
# Fused kernel
# ----------------------------------------------------------------------------
def _lstm_ae_kernel(*refs, T, B, H, n_enc, n_dec):
    """Fused LSTMAE_small forward.

    refs = [x,
            (w_ih_t, w_hh_t, b) * n_enc,
            (w_ih_t, w_hh_t, b) * n_dec,
            fc_w_pad, fc_b_pad,
            out]
    """
    idx = 0
    x_ref = refs[idx]; idx += 1
    enc = [refs[idx + 3 * k: idx + 3 * k + 3] for k in range(n_enc)]
    idx += 3 * n_enc
    dec = [refs[idx + 3 * k: idx + 3 * k + 3] for k in range(n_dec)]
    idx += 3 * n_dec
    fcw_ref, fcb_ref = refs[idx], refs[idx + 1]; idx += 2
    out_ref = refs[idx]

    G = 4 * H

    def cell(gx_t, h, c, whh):
        """One LSTM step; gx_t already holds x_t @ W_ih + b_ih + b_hh."""
        gates = gx_t + jnp.dot(h, whh, preferred_element_type=jnp.float32)
        # Full-tile activations: sigmoid = 0.5*tanh(0.5*x)+0.5 -> one EUP push,
        # tanh -> one EUP push.  Slicing i/f/g/o afterwards is lane plumbing.
        sig = 0.5 * jnp.tanh(0.5 * gates) + 0.5
        th = jnp.tanh(gates)
        i_g = sig[:, 0:H]
        f_g = sig[:, H:2 * H]
        g_g = th[:, 2 * H:3 * H]
        o_g = sig[:, 3 * H:4 * H]
        c = f_g * c + i_g * g_g
        h = o_g * jnp.tanh(c)
        return h, c

    # ---------------- Encoder (stacked LSTM) ----------------
    x = x_ref[...].astype(jnp.float32)                       # (T*B, Din)
    wih0 = enc[0][0][...]
    b0 = jnp.broadcast_to(enc[0][2][...], (T * B, G))
    gx_all = jnp.dot(x, wih0, preferred_element_type=jnp.float32) + b0
    gx_list = [gx_all[t * B:(t + 1) * B, :] for t in range(T)]

    h_enc = None
    for k in range(n_enc):
        whh = enc[k][1][...]
        last = (k == n_enc - 1)
        if not last:
            wih_n = enc[k + 1][0][...]
            b_n = jnp.broadcast_to(enc[k + 1][2][...], (B, G))
        h = jnp.zeros((B, H), jnp.float32)
        c = jnp.zeros((B, H), jnp.float32)
        nxt = []
        for t in range(T):                                   # static unroll
            h, c = cell(gx_list[t], h, c, whh)
            if not last:
                # Next layer's projection issued per step -> overlaps with the
                # remaining recurrence of this layer.
                nxt.append(jnp.dot(h, wih_n,
                                   preferred_element_type=jnp.float32) + b_n)
        gx_list = nxt
        h_enc = h                                            # (B, H) final state

    # ---------------- Decoder (stacked LSTM) ----------------
    fcw = fcw_ref[...]
    DP = fcw.shape[1]
    fcb = jnp.broadcast_to(fcb_ref[...], (B, DP))

    for k in range(n_dec):
        whh = dec[k][1][...]
        last = (k == n_dec - 1)
        if k == 0:
            # Decoder input = h_enc repeated along time: projection done once.
            gx_const = (jnp.dot(h_enc, dec[0][0][...],
                                preferred_element_type=jnp.float32)
                        + jnp.broadcast_to(dec[0][2][...], (B, G)))
        if not last:
            wih_n = dec[k + 1][0][...]
            b_n = jnp.broadcast_to(dec[k + 1][2][...], (B, G))
        h = jnp.zeros((B, H), jnp.float32)
        c = jnp.zeros((B, H), jnp.float32)
        nxt = []
        for t in range(T):                                   # static unroll
            gx_t = gx_const if k == 0 else gx_list[t]
            h, c = cell(gx_t, h, c, whh)
            if last:
                # Final Linear per step (hidden stays vreg-resident); the
                # lane-dense (B, 128) rows are written as they become ready.
                out_t = jnp.dot(h, fcw,
                                preferred_element_type=jnp.float32) + fcb
                out_ref[t * B:(t + 1) * B, :] = out_t.astype(out_ref.dtype)
            else:
                nxt.append(jnp.dot(h, wih_n,
                                   preferred_element_type=jnp.float32) + b_n)
        gx_list = nxt


# ----------------------------------------------------------------------------
# Wrapper
# ----------------------------------------------------------------------------
def lstm_ae_forward(x, params):
    """x: (B, T, input_dim) batch-first, same as the PyTorch module."""
    B, T, D = x.shape
    H = params["enc"][0]["w_hh_t"].shape[0]
    n_enc = len(params["enc"])
    n_dec = len(params["dec"])
    DP = max(128, ((D + 127) // 128) * 128)          # lane-padded fc width

    # time-major, flattened rows ordered (t, b)
    x_flat = jnp.transpose(x, (1, 0, 2)).reshape(T * B, D)

    # Zero-pad the final Linear to a 128-lane output so the single HBM store
    # is an unmasked full-lane slab; narrowing happens in the wrapper.
    fc_w_pad = jnp.zeros((H, DP), jnp.float32).at[:, :D].set(params["fc_w_t"])
    fc_b_pad = jnp.zeros((1, DP), jnp.float32).at[:, :D].set(params["fc_b"])

    inputs = [x_flat]
    in_specs = [pl.BlockSpec((T * B, D), lambda i: (0, 0))]
    for layer in params["enc"] + params["dec"]:
        for name in ("w_ih_t", "w_hh_t", "b"):
            arr = layer[name]
            inputs.append(arr)
            in_specs.append(pl.BlockSpec(arr.shape, lambda i: (0, 0)))
    inputs += [fc_w_pad, fc_b_pad]
    in_specs += [pl.BlockSpec((H, DP), lambda i: (0, 0)),
                 pl.BlockSpec((1, DP), lambda i: (0, 0))]

    kernel = functools.partial(_lstm_ae_kernel, T=T, B=B, H=H,
                               n_enc=n_enc, n_dec=n_dec)
    out2d = pl.pallas_call(
        kernel,
        out_shape=jax.ShapeDtypeStruct((T * B, DP), jnp.float32),
        grid_spec=pltpu.PrefetchScalarGridSpec(
            num_scalar_prefetch=0,
            grid=(1,),
            in_specs=in_specs,
            out_specs=pl.BlockSpec((T * B, DP), lambda i: (0, 0))),
        compiler_params=pltpu.CompilerParams(
            dimension_semantics=("arbitrary",)),
    )(*inputs)

    out = out2d[:, :D].reshape(T, B, D)
    return jnp.transpose(out, (1, 0, 2))             # back to batch-first


# ----------------------------------------------------------------------------
# Parameter construction (deterministic, mimics torch default uniform init)
# ----------------------------------------------------------------------------
def init_lstm_stack_params(key, input_size, hidden_size, num_layers):
    k = 1.0 / math.sqrt(hidden_size)
    layers = []
    for layer in range(num_layers):
        d_in = input_size if layer == 0 else hidden_size
        key, k1, k2, k3, k4 = jax.random.split(key, 5)
        w_ih = jax.random.uniform(k1, (4 * hidden_size, d_in), jnp.float32, -k, k)
        w_hh = jax.random.uniform(k2, (4 * hidden_size, hidden_size), jnp.float32, -k, k)
        b_ih = jax.random.uniform(k3, (4 * hidden_size,), jnp.float32, -k, k)
        b_hh = jax.random.uniform(k4, (4 * hidden_size,), jnp.float32, -k, k)
        layers.append({
            "w_ih_t": w_ih.T,                      # (Din, 4H)
            "w_hh_t": w_hh.T,                      # (H, 4H)
            "b": (b_ih + b_hh)[None, :],           # (1, 4H)
        })
    return key, layers


def init_params(key, input_dim, hidden_size, num_layers):
    key, enc = init_lstm_stack_params(key, input_dim, hidden_size, num_layers)
    key, dec = init_lstm_stack_params(key, hidden_size, hidden_size, num_layers)
    k = 1.0 / math.sqrt(hidden_size)
    key, k1, k2 = jax.random.split(key, 3)
    fc_w = jax.random.uniform(k1, (input_dim, hidden_size), jnp.float32, -k, k)
    fc_b = jax.random.uniform(k2, (input_dim,), jnp.float32, -k, k)
    return {"enc": enc, "dec": dec,
            "fc_w_t": fc_w.T, "fc_b": fc_b[None, :]}


# ----------------------------------------------------------------------------
# Pure-JAX reference (correctness check)
# ----------------------------------------------------------------------------
def _lstm_layer_ref(x_tbd, w_ih_t, w_hh_t, b):
    T, B, _ = x_tbd.shape
    H = w_hh_t.shape[0]
    h = jnp.zeros((B, H), jnp.float32)
    c = jnp.zeros((B, H), jnp.float32)
    outs = []
    for t in range(T):
        gates = x_tbd[t] @ w_ih_t + h @ w_hh_t + b
        i = jax.nn.sigmoid(gates[:, :H])
        f = jax.nn.sigmoid(gates[:, H:2 * H])
        g = jnp.tanh(gates[:, 2 * H:3 * H])
        o = jax.nn.sigmoid(gates[:, 3 * H:])
        c = f * c + i * g
        h = o * jnp.tanh(c)
        outs.append(h)
    return jnp.stack(outs), h


def lstm_ae_forward_ref(x, params):
    B, T, D = x.shape
    x_tbd = jnp.transpose(x, (1, 0, 2))
    h = x_tbd
    h_last = None
    for layer in params["enc"]:
        h, h_last = _lstm_layer_ref(h, layer["w_ih_t"], layer["w_hh_t"], layer["b"])
    H = h_last.shape[-1]
    d = jnp.broadcast_to(h_last[None, :, :], (T, B, H))
    for layer in params["dec"]:
        d, _ = _lstm_layer_ref(d, layer["w_ih_t"], layer["w_hh_t"], layer["b"])
    out = d.reshape(T * B, H) @ params["fc_w_t"] + params["fc_b"]
    return jnp.transpose(out.reshape(T, B, D), (1, 0, 2))


# ----------------------------------------------------------------------------
if __name__ == "__main__":
    B, T = 2, 8
    INPUT_DIM, HIDDEN, NUM_LAYERS = 4, 32, 2   # dropout_ratio = 0 (default)

    key = jax.random.PRNGKey(0)
    key, xkey = jax.random.split(key)
    x = jax.random.normal(xkey, (B, T, INPUT_DIM), jnp.float32)

    params = init_params(key, INPUT_DIM, HIDDEN, NUM_LAYERS)

    out = jax.block_until_ready(lstm_ae_forward(x, params))
    ref = jax.block_until_ready(lstm_ae_forward_ref(x, params))

    assert out.shape == (B, T, INPUT_DIM), out.shape
    max_err = float(jnp.max(jnp.abs(out - ref)))
    assert jnp.allclose(out, ref, atol=1e-4, rtol=1e-4), max_err

    print("KERNEL_OK")
</pallas_src>

<mosaic_0001>
module attributes {stable_mosaic.version = 11 : i64} {
  func.func @_lstm_ae_kernel(%arg0: i32, %arg1: memref<16x4xf32, #tpu.memory_space<vmem>>, %arg2: memref<4x128xf32, #tpu.memory_space<vmem>>, %arg3: memref<32x128xf32, #tpu.memory_space<vmem>>, %arg4: memref<1x128xf32, #tpu.memory_space<vmem>>, %arg5: memref<32x128xf32, #tpu.memory_space<vmem>>, %arg6: memref<32x128xf32, #tpu.memory_space<vmem>>, %arg7: memref<1x128xf32, #tpu.memory_space<vmem>>, %arg8: memref<32x128xf32, #tpu.memory_space<vmem>>, %arg9: memref<32x128xf32, #tpu.memory_space<vmem>>, %arg10: memref<1x128xf32, #tpu.memory_space<vmem>>, %arg11: memref<32x128xf32, #tpu.memory_space<vmem>>, %arg12: memref<32x128xf32, #tpu.memory_space<vmem>>, %arg13: memref<1x128xf32, #tpu.memory_space<vmem>>, %arg14: memref<32x128xf32, #tpu.memory_space<vmem>>, %arg15: memref<1x128xf32, #tpu.memory_space<vmem>>, %arg16: memref<16x128xf32, #tpu.memory_space<vmem>>) attributes {dimension_semantics = [#tpu.dimension_semantics<arbitrary>], iteration_bounds = array<i64: 1>, scalar_prefetch = 0 : i64, scratch_operands = 0 : i64, tpu.core_type = #tpu.core_type<tc>, window_params = [{pipeline_mode = #tpu.pipeline_mode<synchronous>, transform_indices = @transform_0, window_bounds = array<i64: 16, 4>}, {pipeline_mode = #tpu.pipeline_mode<synchronous>, transform_indices = @transform_1, window_bounds = array<i64: 4, 128>}, {pipeline_mode = #tpu.pipeline_mode<synchronous>, transform_indices = @transform_2, window_bounds = array<i64: 32, 128>}, {pipeline_mode = #tpu.pipeline_mode<synchronous>, transform_indices = @transform_3, window_bounds = array<i64: 1, 128>}, {pipeline_mode = #tpu.pipeline_mode<synchronous>, transform_indices = @transform_4, window_bounds = array<i64: 32, 128>}, {pipeline_mode = #tpu.pipeline_mode<synchronous>, transform_indices = @transform_5, window_bounds = array<i64: 32, 128>}, {pipeline_mode = #tpu.pipeline_mode<synchronous>, transform_indices = @transform_6, window_bounds = array<i64: 1, 128>}, {pipeline_mode = #tpu.pipeline_mode<synchronous>, transform_indices = @transform_7, window_bounds = array<i64: 32, 128>}, {pipeline_mode = #tpu.pipeline_mode<synchronous>, transform_indices = @transform_8, window_bounds = array<i64: 32, 128>}, {pipeline_mode = #tpu.pipeline_mode<synchronous>, transform_indices = @transform_9, window_bounds = array<i64: 1, 128>}, {pipeline_mode = #tpu.pipeline_mode<synchronous>, transform_indices = @transform_10, window_bounds = array<i64: 32, 128>}, {pipeline_mode = #tpu.pipeline_mode<synchronous>, transform_indices = @transform_11, window_bounds = array<i64: 32, 128>}, {pipeline_mode = #tpu.pipeline_mode<synchronous>, transform_indices = @transform_12, window_bounds = array<i64: 1, 128>}, {pipeline_mode = #tpu.pipeline_mode<synchronous>, transform_indices = @transform_13, window_bounds = array<i64: 32, 128>}, {pipeline_mode = #tpu.pipeline_mode<synchronous>, transform_indices = @transform_14, window_bounds = array<i64: 1, 128>}, {pipeline_mode = #tpu.pipeline_mode<synchronous>, transform_indices = @transform_15, window_bounds = array<i64: 16, 128>}]} {
    %c0 = arith.constant 0 : index
    %c0_0 = arith.constant 0 : index
    %0 = vector.load %arg1[%c0, %c0_0] : memref<16x4xf32, #tpu.memory_space<vmem>>, vector<16x4xf32>
    %c0_1 = arith.constant 0 : index
    %c0_2 = arith.constant 0 : index
    %1 = vector.load %arg2[%c0_1, %c0_2] : memref<4x128xf32, #tpu.memory_space<vmem>>, vector<4x128xf32>
    %c0_3 = arith.constant 0 : index
    %c0_4 = arith.constant 0 : index
    %2 = vector.load %arg4[%c0_3, %c0_4] : memref<1x128xf32, #tpu.memory_space<vmem>>, vector<1x128xf32>
    %3 = vector.shape_cast %2 : vector<1x128xf32> to vector<1x128xf32>
    %4 = vector.broadcast %3 : vector<1x128xf32> to vector<16x128xf32>
    %cst = arith.constant dense<0.000000e+00> : vector<16x128xf32>
    %5 = tpu.matmul %0, %1, %cst {dimension_numbers = #tpu.dot_dimension_numbers<[1], [0], [0], [1], [0, 0, 1, 1], [], []>} : vector<16x4xf32>, vector<4x128xf32>, vector<16x128xf32> -> vector<16x128xf32>
    %6 = arith.addf %5, %4 : vector<16x128xf32>
    %7 = vector.extract_strided_slice %6 {offsets = [0, 0], sizes = [2, 128], strides = [1, 1]} : vector<16x128xf32> to vector<2x128xf32>
    %8 = vector.extract_strided_slice %6 {offsets = [2, 0], sizes = [2, 128], strides = [1, 1]} : vector<16x128xf32> to vector<2x128xf32>
    %9 = vector.extract_strided_slice %6 {offsets = [4, 0], sizes = [2, 128], strides = [1, 1]} : vector<16x128xf32> to vector<2x128xf32>
    %10 = vector.extract_strided_slice %6 {offsets = [6, 0], sizes = [2, 128], strides = [1, 1]} : vector<16x128xf32> to vector<2x128xf32>
    %11 = vector.extract_strided_slice %6 {offsets = [8, 0], sizes = [2, 128], strides = [1, 1]} : vector<16x128xf32> to vector<2x128xf32>
    %12 = vector.extract_strided_slice %6 {offsets = [10, 0], sizes = [2, 128], strides = [1, 1]} : vector<16x128xf32> to vector<2x128xf32>
    %13 = vector.extract_strided_slice %6 {offsets = [12, 0], sizes = [2, 128], strides = [1, 1]} : vector<16x128xf32> to vector<2x128xf32>
    %14 = vector.extract_strided_slice %6 {offsets = [14, 0], sizes = [2, 128], strides = [1, 1]} : vector<16x128xf32> to vector<2x128xf32>
    %c0_5 = arith.constant 0 : index
    %c0_6 = arith.constant 0 : index
    %15 = vector.load %arg3[%c0_5, %c0_6] : memref<32x128xf32, #tpu.memory_space<vmem>>, vector<32x128xf32>
    %c0_7 = arith.constant 0 : index
    %c0_8 = arith.constant 0 : index
    %16 = vector.load %arg5[%c0_7, %c0_8] : memref<32x128xf32, #tpu.memory_space<vmem>>, vector<32x128xf32>
    %c0_9 = arith.constant 0 : index
    %c0_10 = arith.constant 0 : index
    %17 = vector.load %arg7[%c0_9, %c0_10] : memref<1x128xf32, #tpu.memory_space<vmem>>, vector<1x128xf32>
    %18 = vector.shape_cast %17 : vector<1x128xf32> to vector<1x128xf32>
    %19 = vector.broadcast %18 : vector<1x128xf32> to vector<2x128xf32>
    %cst_11 = arith.constant 0.000000e+00 : f32
    %20 = vector.broadcast %cst_11 : f32 to vector<2x32xf32>
    %cst_12 = arith.constant 0.000000e+00 : f32
    %21 = vector.broadcast %cst_12 : f32 to vector<2x32xf32>
    %cst_13 = arith.constant dense<0.000000e+00> : vector<2x128xf32>
    %22 = tpu.matmul %20, %15, %cst_13 {dimension_numbers = #tpu.dot_dimension_numbers<[1], [0], [0], [1], [0, 0, 1, 1], [], []>} : vector<2x32xf32>, vector<32x128xf32>, vector<2x128xf32> -> vector<2x128xf32>
    %23 = arith.addf %7, %22 : vector<2x128xf32>
    %cst_14 = arith.constant 5.000000e-01 : f32
    %24 = vector.broadcast %cst_14 : f32 to vector<2x128xf32>
    %25 = arith.mulf %24, %23 : vector<2x128xf32>
    %26 = math.tanh %25 : vector<2x128xf32>
    %cst_15 = arith.constant 5.000000e-01 : f32
    %27 = vector.broadcast %cst_15 : f32 to vector<2x128xf32>
    %28 = arith.mulf %27, %26 : vector<2x128xf32>
    %cst_16 = arith.constant 5.000000e-01 : f32
    %29 = vector.broadcast %cst_16 : f32 to vector<2x128xf32>
    %30 = arith.addf %28, %29 : vector<2x128xf32>
    %31 = math.tanh %23 : vector<2x128xf32>
    %32 = vector.extract_strided_slice %30 {offsets = [0, 0], sizes = [2, 32], strides = [1, 1]} : vector<2x128xf32> to vector<2x32xf32>
    %33 = vector.extract_strided_slice %30 {offsets = [0, 32], sizes = [2, 32], strides = [1, 1]} : vector<2x128xf32> to vector<2x32xf32>
    %34 = vector.extract_strided_slice %31 {offsets = [0, 64], sizes = [2, 32], strides = [1, 1]} : vector<2x128xf32> to vector<2x32xf32>
    %35 = vector.extract_strided_slice %30 {offsets = [0, 96], sizes = [2, 32], strides = [1, 1]} : vector<2x128xf32> to vector<2x32xf32>
    %36 = arith.mulf %33, %21 : vector<2x32xf32>
    %37 = arith.mulf %32, %34 : vector<2x32xf32>
    %38 = arith.addf %36, %37 : vector<2x32xf32>
    %39 = math.tanh %38 : vector<2x32xf32>
    %40 = arith.mulf %35, %39 : vector<2x32xf32>
    %cst_17 = arith.constant dense<0.000000e+00> : vector<2x128xf32>
    %41 = tpu.matmul %40, %16, %cst_17 {dimension_numbers = #tpu.dot_dimension_numbers<[1], [0], [0], [1], [0, 0, 1, 1], [], []>} : vector<2x32xf32>, vector<32x128xf32>, vector<2x128xf32> -> vector<2x128xf32>
    %42 = arith.addf %41, %19 : vector<2x128xf32>
    %cst_18 = arith.constant dense<0.000000e+00> : vector<2x128xf32>
    %43 = tpu.matmul %40, %15, %cst_18 {dimension_numbers = #tpu.dot_dimension_numbers<[1], [0], [0], [1], [0, 0, 1, 1], [], []>} : vector<2x32xf32>, vector<32x128xf32>, vector<2x128xf32> -> vector<2x128xf32>
    %44 = arith.addf %8, %43 : vector<2x128xf32>
    %cst_19 = arith.constant 5.000000e-01 : f32
    %45 = vector.broadcast %cst_19 : f32 to vector<2x128xf32>
    %46 = arith.mulf %45, %44 : vector<2x128xf32>
    %47 = math.tanh %46 : vector<2x128xf32>
    %cst_20 = arith.constant 5.000000e-01 : f32
    %48 = vector.broadcast %cst_20 : f32 to vector<2x128xf32>
    %49 = arith.mulf %48, %47 : vector<2x128xf32>
    %cst_21 = arith.constant 5.000000e-01 : f32
    %50 = vector.broadcast %cst_21 : f32 to vector<2x128xf32>
    %51 = arith.addf %49, %50 : vector<2x128xf32>
    %52 = math.tanh %44 : vector<2x128xf32>
    %53 = vector.extract_strided_slice %51 {offsets = [0, 0], sizes = [2, 32], strides = [1, 1]} : vector<2x128xf32> to vector<2x32xf32>
    %54 = vector.extract_strided_slice %51 {offsets = [0, 32], sizes = [2, 32], strides = [1, 1]} : vector<2x128xf32> to vector<2x32xf32>
    %55 = vector.extract_strided_slice %52 {offsets = [0, 64], sizes = [2, 32], strides = [1, 1]} : vector<2x128xf32> to vector<2x32xf32>
    %56 = vector.extract_strided_slice %51 {offsets = [0, 96], sizes = [2, 32], strides = [1, 1]} : vector<2x128xf32> to vector<2x32xf32>
    %57 = arith.mulf %54, %38 : vector<2x32xf32>
    %58 = arith.mulf %53, %55 : vector<2x32xf32>
    %59 = arith.addf %57, %58 : vector<2x32xf32>
    %60 = math.tanh %59 : vector<2x32xf32>
    %61 = arith.mulf %56, %60 : vector<2x32xf32>
    %cst_22 = arith.constant dense<0.000000e+00> : vector<2x128xf32>
    %62 = tpu.matmul %61, %16, %cst_22 {dimension_numbers = #tpu.dot_dimension_numbers<[1], [0], [0], [1], [0, 0, 1, 1], [], []>} : vector<2x32xf32>, vector<32x128xf32>, vector<2x128xf32> -> vector<2x128xf32>
    %63 = arith.addf %62, %19 : vector<2x128xf32>
    %cst_23 = arith.constant dense<0.000000e+00> : vector<2x128xf32>
    %64 = tpu.matmul %61, %15, %cst_23 {dimension_numbers = #tpu.dot_dimension_numbers<[1], [0], [0], [1], [0, 0, 1, 1], [], []>} : vector<2x32xf32>, vector<32x128xf32>, vector<2x128xf32> -> vector<2x128xf32>
    %65 = arith.addf %9, %64 : vector<2x128xf32>
    %cst_24 = arith.constant 5.000000e-01 : f32
    %66 = vector.broadcast %cst_24 : f32 to vector<2x128xf32>
    %67 = arith.mulf %66, %65 : vector<2x128xf32>
    %68 = math.tanh %67 : vector<2x128xf32>
    %cst_25 = arith.constant 5.000000e-01 : f32
    %69 = vector.broadcast %cst_25 : f32 to vector<2x128xf32>
    %70 = arith.mulf %69, %68 : vector<2x128xf32>
    %cst_26 = arith.constant 5.000000e-01 : f32
    %71 = vector.broadcast %cst_26 : f32 to vector<2x128xf32>
    %72 = arith.addf %70, %71 : vector<2x128xf32>
    %73 = math.tanh %65 : vector<2x128xf32>
    %74 = vector.extract_strided_slice %72 {offsets = [0, 0], sizes = [2, 32], strides = [1, 1]} : vector<2x128xf32> to vector<2x32xf32>
    %75 = vector.extract_strided_slice %72 {offsets = [0, 32], sizes = [2, 32], strides = [1, 1]} : vector<2x128xf32> to vector<2x32xf32>
    %76 = vector.extract_strided_slice %73 {offsets = [0, 64], sizes = [2, 32], strides = [1, 1]} : vector<2x128xf32> to vector<2x32xf32>
    %77 = vector.extract_strided_slice %72 {offsets = [0, 96], sizes = [2, 32], strides = [1, 1]} : vector<2x128xf32> to vector<2x32xf32>
    %78 = arith.mulf %75, %59 : vector<2x32xf32>
    %79 = arith.mulf %74, %76 : vector<2x32xf32>
    %80 = arith.addf %78, %79 : vector<2x32xf32>
    %81 = math.tanh %80 : vector<2x32xf32>
    %82 = arith.mulf %77, %81 : vector<2x32xf32>
    %cst_27 = arith.constant dense<0.000000e+00> : vector<2x128xf32>
    %83 = tpu.matmul %82, %16, %cst_27 {dimension_numbers = #tpu.dot_dimension_numbers<[1], [0], [0], [1], [0, 0, 1, 1], [], []>} : vector<2x32xf32>, vector<32x128xf32>, vector<2x128xf32> -> vector<2x128xf32>
    %84 = arith.addf %83, %19 : vector<2x128xf32>
    %cst_28 = arith.constant dense<0.000000e+00> : vector<2x128xf32>
    %85 = tpu.matmul %82, %15, %cst_28 {dimension_numbers = #tpu.dot_dimension_numbers<[1], [0], [0], [1], [0, 0, 1, 1], [], []>} : vector<2x32xf32>, vector<32x128xf32>, vector<2x128xf32> -> vector<2x128xf32>
    %86 = arith.addf %10, %85 : vector<2x128xf32>
    %cst_29 = arith.constant 5.000000e-01 : f32
    %87 = vector.broadcast %cst_29 : f32 to vector<2x128xf32>
    %88 = arith.mulf %87, %86 : vector<2x128xf32>
    %89 = math.tanh %88 : vector<2x128xf32>
    %cst_30 = arith.constant 5.000000e-01 : f32
    %90 = vector.broadcast %cst_30 : f32 to vector<2x128xf32>
    %91 = arith.mulf %90, %89 : vector<2x128xf32>
    %cst_31 = arith.constant 5.000000e-01 : f32
    %92 = vector.broadcast %cst_31 : f32 to vector<2x128xf32>
    %93 = arith.addf %91, %92 : vector<2x128xf32>
    %94 = math.tanh %86 : vector<2x128xf32>
    %95 = vector.extract_strided_slice %93 {offsets = [0, 0], sizes = [2, 32], strides = [1, 1]} : vector<2x128xf32> to vector<2x32xf32>
    %96 = vector.extract_strided_slice %93 {offsets = [0, 32], sizes = [2, 32], strides = [1, 1]} : vector<2x128xf32> to vector<2x32xf32>
    %97 = vector.extract_strided_slice %94 {offsets = [0, 64], sizes = [2, 32], strides = [1, 1]} : vector<2x128xf32> to vector<2x32xf32>
    %98 = vector.extract_strided_slice %93 {offsets = [0, 96], sizes = [2, 32], strides = [1, 1]} : vector<2x128xf32> to vector<2x32xf32>
    %99 = arith.mulf %96, %80 : vector<2x32xf32>
    %100 = arith.mulf %95, %97 : vector<2x32xf32>
    %101 = arith.addf %99, %100 : vector<2x32xf32>
    %102 = math.tanh %101 : vector<2x32xf32>
    %103 = arith.mulf %98, %102 : vector<2x32xf32>
    %cst_32 = arith.constant dense<0.000000e+00> : vector<2x128xf32>
    %104 = tpu.matmul %103, %16, %cst_32 {dimension_numbers = #tpu.dot_dimension_numbers<[1], [0], [0], [1], [0, 0, 1, 1], [], []>} : vector<2x32xf32>, vector<32x128xf32>, vector<2x128xf32> -> vector<2x128xf32>
    %105 = arith.addf %104, %19 : vector<2x128xf32>
    %cst_33 = arith.constant dense<0.000000e+00> : vector<2x128xf32>
    %106 = tpu.matmul %103, %15, %cst_33 {dimension_numbers = #tpu.dot_dimension_numbers<[1], [0], [0], [1], [0, 0, 1, 1], [], []>} : vector<2x32xf32>, vector<32x128xf32>, vector<2x128xf32> -> vector<2x128xf32>
    %107 = arith.addf %11, %106 : vector<2x128xf32>
    %cst_34 = arith.constant 5.000000e-01 : f32
    %108 = vector.broadcast %cst_34 : f32 to vector<2x128xf32>
    %109 = arith.mulf %108, %107 : vector<2x128xf32>
    %110 = math.tanh %109 : vector<2x128xf32>
    %cst_35 = arith.constant 5.000000e-01 : f32
    %111 = vector.broadcast %cst_35 : f32 to vector<2x128xf32>
    %112 = arith.mulf %111, %110 : vector<2x128xf32>
    %cst_36 = arith.constant 5.000000e-01 : f32
    %113 = vector.broadcast %cst_36 : f32 to vector<2x128xf32>
    %114 = arith.addf %112, %113 : vector<2x128xf32>
    %115 = math.tanh %107 : vector<2x128xf32>
    %116 = vector.extract_strided_slice %114 {offsets = [0, 0], sizes = [2, 32], strides = [1, 1]} : vector<2x128xf32> to vector<2x32xf32>
    %117 = vector.extract_strided_slice %114 {offsets = [0, 32], sizes = [2, 32], strides = [1, 1]} : vector<2x128xf32> to vector<2x32xf32>
    %118 = vector.extract_strided_slice %115 {offsets = [0, 64], sizes = [2, 32], strides = [1, 1]} : vector<2x128xf32> to vector<2x32xf32>
    %119 = vector.extract_strided_slice %114 {offsets = [0, 96], sizes = [2, 32], strides = [1, 1]} : vector<2x128xf32> to vector<2x32xf32>
    %120 = arith.mulf %117, %101 : vector<2x32xf32>
    %121 = arith.mulf %116, %118 : vector<2x32xf32>
    %122 = arith.addf %120, %121 : vector<2x32xf32>
    %123 = math.tanh %122 : vector<2x32xf32>
    %124 = arith.mulf %119, %123 : vector<2x32xf32>
    %cst_37 = arith.constant dense<0.000000e+00> : vector<2x128xf32>
    %125 = tpu.matmul %124, %16, %cst_37 {dimension_numbers = #tpu.dot_dimension_numbers<[1], [0], [0], [1], [0, 0, 1, 1], [], []>} : vector<2x32xf32>, vector<32x128xf32>, vector<2x128xf32> -> vector<2x128xf32>
    %126 = arith.addf %125, %19 : vector<2x128xf32>
    %cst_38 = arith.constant dense<0.000000e+00> : vector<2x128xf32>
    %127 = tpu.matmul %124, %15, %cst_38 {dimension_numbers = #tpu.dot_dimension_numbers<[1], [0], [0], [1], [0, 0, 1, 1], [], []>} : vector<2x32xf32>, vector<32x128xf32>, vector<2x128xf32> -> vector<2x128xf32>
    %128 = arith.addf %12, %127 : vector<2x128xf32>
    %cst_39 = arith.constant 5.000000e-01 : f32
    %129 = vector.broadcast %cst_39 : f32 to vector<2x128xf32>
    %130 = arith.mulf %129, %128 : vector<2x128xf32>
    %131 = math.tanh %130 : vector<2x128xf32>
    %cst_40 = arith.constant 5.000000e-01 : f32
    %132 = vector.broadcast %cst_40 : f32 to vector<2x128xf32>
    %133 = arith.mulf %132, %131 : vector<2x128xf32>
    %cst_41 = arith.constant 5.000000e-01 : f32
    %134 = vector.broadcast %cst_41 : f32 to vector<2x128xf32>
    %135 = arith.addf %133, %134 : vector<2x128xf32>
    %136 = math.tanh %128 : vector<2x128xf32>
    %137 = vector.extract_strided_slice %135 {offsets = [0, 0], sizes = [2, 32], strides = [1, 1]} : vector<2x128xf32> to vector<2x32xf32>
    %138 = vector.extract_strided_slice %135 {offsets = [0, 32], sizes = [2, 32], strides = [1, 1]} : vector<2x128xf32> to vector<2x32xf32>
    %139 = vector.extract_strided_slice %136 {offsets = [0, 64], sizes = [2, 32], strides = [1, 1]} : vector<2x128xf32> to vector<2x32xf32>
    %140 = vector.extract_strided_slice %135 {offsets = [0, 96], sizes = [2, 32], strides = [1, 1]} : vector<2x128xf32> to vector<2x32xf32>
    %141 = arith.mulf %138, %122 : vector<2x32xf32>
    %142 = arith.mulf %137, %139 : vector<2x32xf32>
    %143 = arith.addf %141, %142 : vector<2x32xf32>
    %144 = math.tanh %143 : vector<2x32xf32>
    %145 = arith.mulf %140, %144 : vector<2x32xf32>
    %cst_42 = arith.constant dense<0.000000e+00> : vector<2x128xf32>
    %146 = tpu.matmul %145, %16, %cst_42 {dimension_numbers = #tpu.dot_dimension_numbers<[1], [0], [0], [1], [0, 0, 1, 1], [], []>} : vector<2x32xf32>, vector<32x128xf32>, vector<2x128xf32> -> vector<2x128xf32>
    %147 = arith.addf %146, %19 : vector<2x128xf32>
    %cst_43 = arith.constant dense<0.000000e+00> : vector<2x128xf32>
    %148 = tpu.matmul %145, %15, %cst_43 {dimension_numbers = #tpu.dot_dimension_numbers<[1], [0], [0], [1], [0, 0, 1, 1], [], []>} : vector<2x32xf32>, vector<32x128xf32>, vector<2x128xf32> -> vector<2x128xf32>
    %149 = arith.addf %13, %148 : vector<2x128xf32>
    %cst_44 = arith.constant 5.000000e-01 : f32
    %150 = vector.broadcast %cst_44 : f32 to vector<2x128xf32>
    %151 = arith.mulf %150, %149 : vector<2x128xf32>
    %152 = math.tanh %151 : vector<2x128xf32>
    %cst_45 = arith.constant 5.000000e-01 : f32
    %153 = vector.broadcast %cst_45 : f32 to vector<2x128xf32>
    %154 = arith.mulf %153, %152 : vector<2x128xf32>
    %cst_46 = arith.constant 5.000000e-01 : f32
    %155 = vector.broadcast %cst_46 : f32 to vector<2x128xf32>
    %156 = arith.addf %154, %155 : vector<2x128xf32>
    %157 = math.tanh %149 : vector<2x128xf32>
    %158 = vector.extract_strided_slice %156 {offsets = [0, 0], sizes = [2, 32], strides = [1, 1]} : vector<2x128xf32> to vector<2x32xf32>
    %159 = vector.extract_strided_slice %156 {offsets = [0, 32], sizes = [2, 32], strides = [1, 1]} : vector<2x128xf32> to vector<2x32xf32>
    %160 = vector.extract_strided_slice %157 {offsets = [0, 64], sizes = [2, 32], strides = [1, 1]} : vector<2x128xf32> to vector<2x32xf32>
    %161 = vector.extract_strided_slice %156 {offsets = [0, 96], sizes = [2, 32], strides = [1, 1]} : vector<2x128xf32> to vector<2x32xf32>
    %162 = arith.mulf %159, %143 : vector<2x32xf32>
    %163 = arith.mulf %158, %160 : vector<2x32xf32>
    %164 = arith.addf %162, %163 : vector<2x32xf32>
    %165 = math.tanh %164 : vector<2x32xf32>
    %166 = arith.mulf %161, %165 : vector<2x32xf32>
    %cst_47 = arith.constant dense<0.000000e+00> : vector<2x128xf32>
    %167 = tpu.matmul %166, %16, %cst_47 {dimension_numbers = #tpu.dot_dimension_numbers<[1], [0], [0], [1], [0, 0, 1, 1], [], []>} : vector<2x32xf32>, vector<32x128xf32>, vector<2x128xf32> -> vector<2x128xf32>
    %168 = arith.addf %167, %19 : vector<2x128xf32>
    %cst_48 = arith.constant dense<0.000000e+00> : vector<2x128xf32>
    %169 = tpu.matmul %166, %15, %cst_48 {dimension_numbers = #tpu.dot_dimension_numbers<[1], [0], [0], [1], [0, 0, 1, 1], [], []>} : vector<2x32xf32>, vector<32x128xf32>, vector<2x128xf32> -> vector<2x128xf32>
    %170 = arith.addf %14, %169 : vector<2x128xf32>
    %cst_49 = arith.constant 5.000000e-01 : f32
    %171 = vector.broadcast %cst_49 : f32 to vector<2x128xf32>
    %172 = arith.mulf %171, %170 : vector<2x128xf32>
    %173 = math.tanh %172 : vector<2x128xf32>
    %cst_50 = arith.constant 5.000000e-01 : f32
    %174 = vector.broadcast %cst_50 : f32 to vector<2x128xf32>
    %175 = arith.mulf %174, %173 : vector<2x128xf32>
    %cst_51 = arith.constant 5.000000e-01 : f32
    %176 = vector.broadcast %cst_51 : f32 to vector<2x128xf32>
    %177 = arith.addf %175, %176 : vector<2x128xf32>
    %178 = math.tanh %170 : vector<2x128xf32>
    %179 = vector.extract_strided_slice %177 {offsets = [0, 0], sizes = [2, 32], strides = [1, 1]} : vector<2x128xf32> to vector<2x32xf32>
    %180 = vector.extract_strided_slice %177 {offsets = [0, 32], sizes = [2, 32], strides = [1, 1]} : vector<2x128xf32> to vector<2x32xf32>
    %181 = vector.extract_strided_slice %178 {offsets = [0, 64], sizes = [2, 32], strides = [1, 1]} : vector<2x128xf32> to vector<2x32xf32>
    %182 = vector.extract_strided_slice %177 {offsets = [0, 96], sizes = [2, 32], strides = [1, 1]} : vector<2x128xf32> to vector<2x32xf32>
    %183 = arith.mulf %180, %164 : vector<2x32xf32>
    %184 = arith.mulf %179, %181 : vector<2x32xf32>
    %185 = arith.addf %183, %184 : vector<2x32xf32>
    %186 = math.tanh %185 : vector<2x32xf32>
    %187 = arith.mulf %182, %186 : vector<2x32xf32>
    %cst_52 = arith.constant dense<0.000000e+00> : vector<2x128xf32>
    %188 = tpu.matmul %187, %16, %cst_52 {dimension_numbers = #tpu.dot_dimension_numbers<[1], [0], [0], [1], [0, 0, 1, 1], [], []>} : vector<2x32xf32>, vector<32x128xf32>, vector<2x128xf32> -> vector<2x128xf32>
    %189 = arith.addf %188, %19 : vector<2x128xf32>
    %c0_53 = arith.constant 0 : index
    %c0_54 = arith.constant 0 : index
    %190 = vector.load %arg6[%c0_53, %c0_54] : memref<32x128xf32, #tpu.memory_space<vmem>>, vector<32x128xf32>
    %cst_55 = arith.constant 0.000000e+00 : f32
    %191 = vector.broadcast %cst_55 : f32 to vector<2x32xf32>
    %cst_56 = arith.constant 0.000000e+00 : f32
    %192 = vector.broadcast %cst_56 : f32 to vector<2x32xf32>
    %cst_57 = arith.constant dense<0.000000e+00> : vector<2x128xf32>
    %193 = tpu.matmul %191, %190, %cst_57 {dimension_numbers = #tpu.dot_dimension_numbers<[1], [0], [0], [1], [0, 0, 1, 1], [], []>} : vector<2x32xf32>, vector<32x128xf32>, vector<2x128xf32> -> vector<2x128xf32>
    %194 = arith.addf %42, %193 : vector<2x128xf32>
    %cst_58 = arith.constant 5.000000e-01 : f32
    %195 = vector.broadcast %cst_58 : f32 to vector<2x128xf32>
    %196 = arith.mulf %195, %194 : vector<2x128xf32>
    %197 = math.tanh %196 : vector<2x128xf32>
    %cst_59 = arith.constant 5.000000e-01 : f32
    %198 = vector.broadcast %cst_59 : f32 to vector<2x128xf32>
    %199 = arith.mulf %198, %197 : vector<2x128xf32>
    %cst_60 = arith.constant 5.000000e-01 : f32
    %200 = vector.broadcast %cst_60 : f32 to vector<2x128xf32>
    %201 = arith.addf %199, %200 : vector<2x128xf32>
    %202 = math.tanh %194 : vector<2x128xf32>
    %203 = vector.extract_strided_slice %201 {offsets = [0, 0], sizes = [2, 32], strides = [1, 1]} : vector<2x128xf32> to vector<2x32xf32>
    %204 = vector.extract_strided_slice %201 {offsets = [0, 32], sizes = [2, 32], strides = [1, 1]} : vector<2x128xf32> to vector<2x32xf32>
    %205 = vector.extract_strided_slice %202 {offsets = [0, 64], sizes = [2, 32], strides = [1, 1]} : vector<2x128xf32> to vector<2x32xf32>
    %206 = vector.extract_strided_slice %201 {offsets = [0, 96], sizes = [2, 32], strides = [1, 1]} : vector<2x128xf32> to vector<2x32xf32>
    %207 = arith.mulf %204, %192 : vector<2x32xf32>
    %208 = arith.mulf %203, %205 : vector<2x32xf32>
    %209 = arith.addf %207, %208 : vector<2x32xf32>
    %210 = math.tanh %209 : vector<2x32xf32>
    %211 = arith.mulf %206, %210 : vector<2x32xf32>
    %cst_61 = arith.constant dense<0.000000e+00> : vector<2x128xf32>
    %212 = tpu.matmul %211, %190, %cst_61 {dimension_numbers = #tpu.dot_dimension_numbers<[1], [0], [0], [1], [0, 0, 1, 1], [], []>} : vector<2x32xf32>, vector<32x128xf32>, vector<2x128xf32> -> vector<2x128xf32>
    %213 = arith.addf %63, %212 : vector<2x128xf32>
    %cst_62 = arith.constant 5.000000e-01 : f32
    %214 = vector.broadcast %cst_62 : f32 to vector<2x128xf32>
    %215 = arith.mulf %214, %213 : vector<2x128xf32>
    %216 = math.tanh %215 : vector<2x128xf32>
    %cst_63 = arith.constant 5.000000e-01 : f32
    %217 = vector.broadcast %cst_63 : f32 to vector<2x128xf32>
    %218 = arith.mulf %217, %216 : vector<2x128xf32>
    %cst_64 = arith.constant 5.000000e-01 : f32
    %219 = vector.broadcast %cst_64 : f32 to vector<2x128xf32>
    %220 = arith.addf %218, %219 : vector<2x128xf32>
    %221 = math.tanh %213 : vector<2x128xf32>
    %222 = vector.extract_strided_slice %220 {offsets = [0, 0], sizes = [2, 32], strides = [1, 1]} : vector<2x128xf32> to vector<2x32xf32>
    %223 = vector.extract_strided_slice %220 {offsets = [0, 32], sizes = [2, 32], strides = [1, 1]} : vector<2x128xf32> to vector<2x32xf32>
    %224 = vector.extract_strided_slice %221 {offsets = [0, 64], sizes = [2, 32], strides = [1, 1]} : vector<2x128xf32> to vector<2x32xf32>
    %225 = vector.extract_strided_slice %220 {offsets = [0, 96], sizes = [2, 32], strides = [1, 1]} : vector<2x128xf32> to vector<2x32xf32>
    %226 = arith.mulf %223, %209 : vector<2x32xf32>
    %227 = arith.mulf %222, %224 : vector<2x32xf32>
    %228 = arith.addf %226, %227 : vector<2x32xf32>
    %229 = math.tanh %228 : vector<2x32xf32>
    %230 = arith.mulf %225, %229 : vector<2x32xf32>
    %cst_65 = arith.constant dense<0.000000e+00> : vector<2x128xf32>
    %231 = tpu.matmul %230, %190, %cst_65 {dimension_numbers = #tpu.dot_dimension_numbers<[1], [0], [0], [1], [0, 0, 1, 1], [], []>} : vector<2x32xf32>, vector<32x128xf32>, vector<2x128xf32> -> vector<2x128xf32>
    %232 = arith.addf %84, %231 : vector<2x128xf32>
    %cst_66 = arith.constant 5.000000e-01 : f32
    %233 = vector.broadcast %cst_66 : f32 to vector<2x128xf32>
    %234 = arith.mulf %233, %232 : vector<2x128xf32>
    %235 = math.tanh %234 : vector<2x128xf32>
    %cst_67 = arith.constant 5.000000e-01 : f32
    %236 = vector.broadcast %cst_67 : f32 to vector<2x128xf32>
    %237 = arith.mulf %236, %235 : vector<2x128xf32>
    %cst_68 = arith.constant 5.000000e-01 : f32
    %238 = vector.broadcast %cst_68 : f32 to vector<2x128xf32>
    %239 = arith.addf %237, %238 : vector<2x128xf32>
    %240 = math.tanh %232 : vector<2x128xf32>
    %241 = vector.extract_strided_slice %239 {offsets = [0, 0], sizes = [2, 32], strides = [1, 1]} : vector<2x128xf32> to vector<2x32xf32>
    %242 = vector.extract_strided_slice %239 {offsets = [0, 32], sizes = [2, 32], strides = [1, 1]} : vector<2x128xf32> to vector<2x32xf32>
    %243 = vector.extract_strided_slice %240 {offsets = [0, 64], sizes = [2, 32], strides = [1, 1]} : vector<2x128xf32> to vector<2x32xf32>
    %244 = vector.extract_strided_slice %239 {offsets = [0, 96], sizes = [2, 32], strides = [1, 1]} : vector<2x128xf32> to vector<2x32xf32>
    %245 = arith.mulf %242, %228 : vector<2x32xf32>
    %246 = arith.mulf %241, %243 : vector<2x32xf32>
    %247 = arith.addf %245, %246 : vector<2x32xf32>
    %248 = math.tanh %247 : vector<2x32xf32>
    %249 = arith.mulf %244, %248 : vector<2x32xf32>
    %cst_69 = arith.constant dense<0.000000e+00> : vector<2x128xf32>
    %250 = tpu.matmul %249, %190, %cst_69 {dimension_numbers = #tpu.dot_dimension_numbers<[1], [0], [0], [1], [0, 0, 1, 1], [], []>} : vector<2x32xf32>, vector<32x128xf32>, vector<2x128xf32> -> vector<2x128xf32>
    %251 = arith.addf %105, %250 : vector<2x128xf32>
    %cst_70 = arith.constant 5.000000e-01 : f32
    %252 = vector.broadcast %cst_70 : f32 to vector<2x128xf32>
    %253 = arith.mulf %252, %251 : vector<2x128xf32>
    %254 = math.tanh %253 : vector<2x128xf32>
    %cst_71 = arith.constant 5.000000e-01 : f32
    %255 = vector.broadcast %cst_71 : f32 to vector<2x128xf32>
    %256 = arith.mulf %255, %254 : vector<2x128xf32>
    %cst_72 = arith.constant 5.000000e-01 : f32
    %257 = vector.broadcast %cst_72 : f32 to vector<2x128xf32>
    %258 = arith.addf %256, %257 : vector<2x128xf32>
    %259 = math.tanh %251 : vector<2x128xf32>
    %260 = vector.extract_strided_slice %258 {offsets = [0, 0], sizes = [2, 32], strides = [1, 1]} : vector<2x128xf32> to vector<2x32xf32>
    %261 = vector.extract_strided_slice %258 {offsets = [0, 32], sizes = [2, 32], strides = [1, 1]} : vector<2x128xf32> to vector<2x32xf32>
    %262 = vector.extract_strided_slice %259 {offsets = [0, 64], sizes = [2, 32], strides = [1, 1]} : vector<2x128xf32> to vector<2x32xf32>
    %263 = vector.extract_strided_slice %258 {offsets = [0, 96], sizes = [2, 32], strides = [1, 1]} : vector<2x128xf32> to vector<2x32xf32>
    %264 = arith.mulf %261, %247 : vector<2x32xf32>
    %265 = arith.mulf %260, %262 : vector<2x32xf32>
    %266 = arith.addf %264, %265 : vector<2x32xf32>
    %267 = math.tanh %266 : vector<2x32xf32>
    %268 = arith.mulf %263, %267 : vector<2x32xf32>
    %cst_73 = arith.constant dense<0.000000e+00> : vector<2x128xf32>
    %269 = tpu.matmul %268, %190, %cst_73 {dimension_numbers = #tpu.dot_dimension_numbers<[1], [0], [0], [1], [0, 0, 1, 1], [], []>} : vector<2x32xf32>, vector<32x128xf32>, vector<2x128xf32> -> vector<2x128xf32>
    %270 = arith.addf %126, %269 : vector<2x128xf32>
    %cst_74 = arith.constant 5.000000e-01 : f32
    %271 = vector.broadcast %cst_74 : f32 to vector<2x128xf32>
    %272 = arith.mulf %271, %270 : vector<2x128xf32>
    %273 = math.tanh %272 : vector<2x128xf32>
    %cst_75 = arith.constant 5.000000e-01 : f32
    %274 = vector.broadcast %cst_75 : f32 to vector<2x128xf32>
    %275 = arith.mulf %274, %273 : vector<2x128xf32>
    %cst_76 = arith.constant 5.000000e-01 : f32
    %276 = vector.broadcast %cst_76 : f32 to vector<2x128xf32>
    %277 = arith.addf %275, %276 : vector<2x128xf32>
    %278 = math.tanh %270 : vector<2x128xf32>
    %279 = vector.extract_strided_slice %277 {offsets = [0, 0], sizes = [2, 32], strides = [1, 1]} : vector<2x128xf32> to vector<2x32xf32>
    %280 = vector.extract_strided_slice %277 {offsets = [0, 32], sizes = [2, 32], strides = [1, 1]} : vector<2x128xf32> to vector<2x32xf32>
    %281 = vector.extract_strided_slice %278 {offsets = [0, 64], sizes = [2, 32], strides = [1, 1]} : vector<2x128xf32> to vector<2x32xf32>
    %282 = vector.extract_strided_slice %277 {offsets = [0, 96], sizes = [2, 32], strides = [1, 1]} : vector<2x128xf32> to vector<2x32xf32>
    %283 = arith.mulf %280, %266 : vector<2x32xf32>
    %284 = arith.mulf %279, %281 : vector<2x32xf32>
    %285 = arith.addf %283, %284 : vector<2x32xf32>
    %286 = math.tanh %285 : vector<2x32xf32>
    %287 = arith.mulf %282, %286 : vector<2x32xf32>
    %cst_77 = arith.constant dense<0.000000e+00> : vector<2x128xf32>
    %288 = tpu.matmul %287, %190, %cst_77 {dimension_numbers = #tpu.dot_dimension_numbers<[1], [0], [0], [1], [0, 0, 1, 1], [], []>} : vector<2x32xf32>, vector<32x128xf32>, vector<2x128xf32> -> vector<2x128xf32>
    %289 = arith.addf %147, %288 : vector<2x128xf32>
    %cst_78 = arith.constant 5.000000e-01 : f32
    %290 = vector.broadcast %cst_78 : f32 to vector<2x128xf32>
    %291 = arith.mulf %290, %289 : vector<2x128xf32>
    %292 = math.tanh %291 : vector<2x128xf32>
    %cst_79 = arith.constant 5.000000e-01 : f32
    %293 = vector.broadcast %cst_79 : f32 to vector<2x128xf32>
    %294 = arith.mulf %293, %292 : vector<2x128xf32>
    %cst_80 = arith.constant 5.000000e-01 : f32
    %295 = vector.broadcast %cst_80 : f32 to vector<2x128xf32>
    %296 = arith.addf %294, %295 : vector<2x128xf32>
    %297 = math.tanh %289 : vector<2x128xf32>
    %298 = vector.extract_strided_slice %296 {offsets = [0, 0], sizes = [2, 32], strides = [1, 1]} : vector<2x128xf32> to vector<2x32xf32>
    %299 = vector.extract_strided_slice %296 {offsets = [0, 32], sizes = [2, 32], strides = [1, 1]} : vector<2x128xf32> to vector<2x32xf32>
    %300 = vector.extract_strided_slice %297 {offsets = [0, 64], sizes = [2, 32], strides = [1, 1]} : vector<2x128xf32> to vector<2x32xf32>
    %301 = vector.extract_strided_slice %296 {offsets = [0, 96], sizes = [2, 32], strides = [1, 1]} : vector<2x128xf32> to vector<2x32xf32>
    %302 = arith.mulf %299, %285 : vector<2x32xf32>
    %303 = arith.mulf %298, %300 : vector<2x32xf32>
    %304 = arith.addf %302, %303 : vector<2x32xf32>
    %305 = math.tanh %304 : vector<2x32xf32>
    %306 = arith.mulf %301, %305 : vector<2x32xf32>
    %cst_81 = arith.constant dense<0.000000e+00> : vector<2x128xf32>
    %307 = tpu.matmul %306, %190, %cst_81 {dimension_numbers = #tpu.dot_dimension_numbers<[1], [0], [0], [1], [0, 0, 1, 1], [], []>} : vector<2x32xf32>, vector<32x128xf32>, vector<2x128xf32> -> vector<2x128xf32>
    %308 = arith.addf %168, %307 : vector<2x128xf32>
    %cst_82 = arith.constant 5.000000e-01 : f32
    %309 = vector.broadcast %cst_82 : f32 to vector<2x128xf32>
    %310 = arith.mulf %309, %308 : vector<2x128xf32>
    %311 = math.tanh %310 : vector<2x128xf32>
    %cst_83 = arith.constant 5.000000e-01 : f32
    %312 = vector.broadcast %cst_83 : f32 to vector<2x128xf32>
    %313 = arith.mulf %312, %311 : vector<2x128xf32>
    %cst_84 = arith.constant 5.000000e-01 : f32
    %314 = vector.broadcast %cst_84 : f32 to vector<2x128xf32>
    %315 = arith.addf %313, %314 : vector<2x128xf32>
    %316 = math.tanh %308 : vector<2x128xf32>
    %317 = vector.extract_strided_slice %315 {offsets = [0, 0], sizes = [2, 32], strides = [1, 1]} : vector<2x128xf32> to vector<2x32xf32>
    %318 = vector.extract_strided_slice %315 {offsets = [0, 32], sizes = [2, 32], strides = [1, 1]} : vector<2x128xf32> to vector<2x32xf32>
    %319 = vector.extract_strided_slice %316 {offsets = [0, 64], sizes = [2, 32], strides = [1, 1]} : vector<2x128xf32> to vector<2x32xf32>
    %320 = vector.extract_strided_slice %315 {offsets = [0, 96], sizes = [2, 32], strides = [1, 1]} : vector<2x128xf32> to vector<2x32xf32>
    %321 = arith.mulf %318, %304 : vector<2x32xf32>
    %322 = arith.mulf %317, %319 : vector<2x32xf32>
    %323 = arith.addf %321, %322 : vector<2x32xf32>
    %324 = math.tanh %323 : vector<2x32xf32>
    %325 = arith.mulf %320, %324 : vector<2x32xf32>
    %cst_85 = arith.constant dense<0.000000e+00> : vector<2x128xf32>
    %326 = tpu.matmul %325, %190, %cst_85 {dimension_numbers = #tpu.dot_dimension_numbers<[1], [0], [0], [1], [0, 0, 1, 1], [], []>} : vector<2x32xf32>, vector<32x128xf32>, vector<2x128xf32> -> vector<2x128xf32>
    %327 = arith.addf %189, %326 : vector<2x128xf32>
    %cst_86 = arith.constant 5.000000e-01 : f32
    %328 = vector.broadcast %cst_86 : f32 to vector<2x128xf32>
    %329 = arith.mulf %328, %327 : vector<2x128xf32>
    %330 = math.tanh %329 : vector<2x128xf32>
    %cst_87 = arith.constant 5.000000e-01 : f32
    %331 = vector.broadcast %cst_87 : f32 to vector<2x128xf32>
    %332 = arith.mulf %331, %330 : vector<2x128xf32>
    %cst_88 = arith.constant 5.000000e-01 : f32
    %333 = vector.broadcast %cst_88 : f32 to vector<2x128xf32>
    %334 = arith.addf %332, %333 : vector<2x128xf32>
    %335 = math.tanh %327 : vector<2x128xf32>
    %336 = vector.extract_strided_slice %334 {offsets = [0, 0], sizes = [2, 32], strides = [1, 1]} : vector<2x128xf32> to vector<2x32xf32>
    %337 = vector.extract_strided_slice %334 {offsets = [0, 32], sizes = [2, 32], strides = [1, 1]} : vector<2x128xf32> to vector<2x32xf32>
    %338 = vector.extract_strided_slice %335 {offsets = [0, 64], sizes = [2, 32], strides = [1, 1]} : vector<2x128xf32> to vector<2x32xf32>
    %339 = vector.extract_strided_slice %334 {offsets = [0, 96], sizes = [2, 32], strides = [1, 1]} : vector<2x128xf32> to vector<2x32xf32>
    %340 = arith.mulf %337, %323 : vector<2x32xf32>
    %341 = arith.mulf %336, %338 : vector<2x32xf32>
    %342 = arith.addf %340, %341 : vector<2x32xf32>
    %343 = math.tanh %342 : vector<2x32xf32>
    %344 = arith.mulf %339, %343 : vector<2x32xf32>
    %c0_89 = arith.constant 0 : index
    %c0_90 = arith.constant 0 : index
    %345 = vector.load %arg14[%c0_89, %c0_90] : memref<32x128xf32, #tpu.memory_space<vmem>>, vector<32x128xf32>
    %c0_91 = arith.constant 0 : index
    %c0_92 = arith.constant 0 : index
    %346 = vector.load %arg15[%c0_91, %c0_92] : memref<1x128xf32, #tpu.memory_space<vmem>>, vector<1x128xf32>
    %347 = vector.shape_cast %346 : vector<1x128xf32> to vector<1x128xf32>
    %348 = vector.broadcast %347 : vector<1x128xf32> to vector<2x128xf32>
    %c0_93 = arith.constant 0 : index
    %c0_94 = arith.constant 0 : index
    %349 = vector.load %arg9[%c0_93, %c0_94] : memref<32x128xf32, #tpu.memory_space<vmem>>, vector<32x128xf32>
    %c0_95 = arith.constant 0 : index
    %c0_96 = arith.constant 0 : index
    %350 = vector.load %arg8[%c0_95, %c0_96] : memref<32x128xf32, #tpu.memory_space<vmem>>, vector<32x128xf32>
    %cst_97 = arith.constant dense<0.000000e+00> : vector<2x128xf32>
    %351 = tpu.matmul %344, %350, %cst_97 {dimension_numbers = #tpu.dot_dimension_numbers<[1], [0], [0], [1], [0, 0, 1, 1], [], []>} : vector<2x32xf32>, vector<32x128xf32>, vector<2x128xf32> -> vector<2x128xf32>
    %c0_98 = arith.constant 0 : index
    %c0_99 = arith.constant 0 : index
    %352 = vector.load %arg10[%c0_98, %c0_99] : memref<1x128xf32, #tpu.memory_space<vmem>>, vector<1x128xf32>
    %353 = vector.shape_cast %352 : vector<1x128xf32> to vector<1x128xf32>
    %354 = vector.broadcast %353 : vector<1x128xf32> to vector<2x128xf32>
    %355 = arith.addf %351, %354 : vector<2x128xf32>
    %c0_100 = arith.constant 0 : index
    %c0_101 = arith.constant 0 : index
    %356 = vector.load %arg11[%c0_100, %c0_101] : memref<32x128xf32, #tpu.memory_space<vmem>>, vector<32x128xf32>
    %c0_102 = arith.constant 0 : index
    %c0_103 = arith.constant 0 : index
    %357 = vector.load %arg13[%c0_102, %c0_103] : memref<1x128xf32, #tpu.memory_space<vmem>>, vector<1x128xf32>
    %358 = vector.shape_cast %357 : vector<1x128xf32> to vector<1x128xf32>
    %359 = vector.broadcast %358 : vector<1x128xf32> to vector<2x128xf32>
    %cst_104 = arith.constant 0.000000e+00 : f32
    %360 = vector.broadcast %cst_104 : f32 to vector<2x32xf32>
    %cst_105 = arith.constant 0.000000e+00 : f32
    %361 = vector.broadcast %cst_105 : f32 to vector<2x32xf32>
    %cst_106 = arith.constant dense<0.000000e+00> : vector<2x128xf32>
    %362 = tpu.matmul %360, %349, %cst_106 {dimension_numbers = #tpu.dot_dimension_numbers<[1], [0], [0], [1], [0, 0, 1, 1], [], []>} : vector<2x32xf32>, vector<32x128xf32>, vector<2x128xf32> -> vector<2x128xf32>
    %363 = arith.addf %355, %362 : vector<2x128xf32>
    %cst_107 = arith.constant 5.000000e-01 : f32
    %364 = vector.broadcast %cst_107 : f32 to vector<2x128xf32>
    %365 = arith.mulf %364, %363 : vector<2x128xf32>
    %366 = math.tanh %365 : vector<2x128xf32>
    %cst_108 = arith.constant 5.000000e-01 : f32
    %367 = vector.broadcast %cst_108 : f32 to vector<2x128xf32>
    %368 = arith.mulf %367, %366 : vector<2x128xf32>
    %cst_109 = arith.constant 5.000000e-01 : f32
    %369 = vector.broadcast %cst_109 : f32 to vector<2x128xf32>
    %370 = arith.addf %368, %369 : vector<2x128xf32>
    %371 = math.tanh %363 : vector<2x128xf32>
    %372 = vector.extract_strided_slice %370 {offsets = [0, 0], sizes = [2, 32], strides = [1, 1]} : vector<2x128xf32> to vector<2x32xf32>
    %373 = vector.extract_strided_slice %370 {offsets = [0, 32], sizes = [2, 32], strides = [1, 1]} : vector<2x128xf32> to vector<2x32xf32>
    %374 = vector.extract_strided_slice %371 {offsets = [0, 64], sizes = [2, 32], strides = [1, 1]} : vector<2x128xf32> to vector<2x32xf32>
    %375 = vector.extract_strided_slice %370 {offsets = [0, 96], sizes = [2, 32], strides = [1, 1]} : vector<2x128xf32> to vector<2x32xf32>
    %376 = arith.mulf %373, %361 : vector<2x32xf32>
    %377 = arith.mulf %372, %374 : vector<2x32xf32>
    %378 = arith.addf %376, %377 : vector<2x32xf32>
    %379 = math.tanh %378 : vector<2x32xf32>
    %380 = arith.mulf %375, %379 : vector<2x32xf32>
    %cst_110 = arith.constant dense<0.000000e+00> : vector<2x128xf32>
    %381 = tpu.matmul %380, %356, %cst_110 {dimension_numbers = #tpu.dot_dimension_numbers<[1], [0], [0], [1], [0, 0, 1, 1], [], []>} : vector<2x32xf32>, vector<32x128xf32>, vector<2x128xf32> -> vector<2x128xf32>
    %382 = arith.addf %381, %359 : vector<2x128xf32>
    %cst_111 = arith.constant dense<0.000000e+00> : vector<2x128xf32>
    %383 = tpu.matmul %380, %349, %cst_111 {dimension_numbers = #tpu.dot_dimension_numbers<[1], [0], [0], [1], [0, 0, 1, 1], [], []>} : vector<2x32xf32>, vector<32x128xf32>, vector<2x128xf32> -> vector<2x128xf32>
    %384 = arith.addf %355, %383 : vector<2x128xf32>
    %cst_112 = arith.constant 5.000000e-01 : f32
    %385 = vector.broadcast %cst_112 : f32 to vector<2x128xf32>
    %386 = arith.mulf %385, %384 : vector<2x128xf32>
    %387 = math.tanh %386 : vector<2x128xf32>
    %cst_113 = arith.constant 5.000000e-01 : f32
    %388 = vector.broadcast %cst_113 : f32 to vector<2x128xf32>
    %389 = arith.mulf %388, %387 : vector<2x128xf32>
    %cst_114 = arith.constant 5.000000e-01 : f32
    %390 = vector.broadcast %cst_114 : f32 to vector<2x128xf32>
    %391 = arith.addf %389, %390 : vector<2x128xf32>
    %392 = math.tanh %384 : vector<2x128xf32>
    %393 = vector.extract_strided_slice %391 {offsets = [0, 0], sizes = [2, 32], strides = [1, 1]} : vector<2x128xf32> to vector<2x32xf32>
    %394 = vector.extract_strided_slice %391 {offsets = [0, 32], sizes = [2, 32], strides = [1, 1]} : vector<2x128xf32> to vector<2x32xf32>
    %395 = vector.extract_strided_slice %392 {offsets = [0, 64], sizes = [2, 32], strides = [1, 1]} : vector<2x128xf32> to vector<2x32xf32>
    %396 = vector.extract_strided_slice %391 {offsets = [0, 96], sizes = [2, 32], strides = [1, 1]} : vector<2x128xf32> to vector<2x32xf32>
    %397 = arith.mulf %394, %378 : vector<2x32xf32>
    %398 = arith.mulf %393, %395 : vector<2x32xf32>
    %399 = arith.addf %397, %398 : vector<2x32xf32>
    %400 = math.tanh %399 : vector<2x32xf32>
    %401 = arith.mulf %396, %400 : vector<2x32xf32>
    %cst_115 = arith.constant dense<0.000000e+00> : vector<2x128xf32>
    %402 = tpu.matmul %401, %356, %cst_115 {dimension_numbers = #tpu.dot_dimension_numbers<[1], [0], [0], [1], [0, 0, 1, 1], [], []>} : vector<2x32xf32>, vector<32x128xf32>, vector<2x128xf32> -> vector<2x128xf32>
    %403 = arith.addf %402, %359 : vector<2x128xf32>
    %cst_116 = arith.constant dense<0.000000e+00> : vector<2x128xf32>
    %404 = tpu.matmul %401, %349, %cst_116 {dimension_numbers = #tpu.dot_dimension_numbers<[1], [0], [0], [1], [0, 0, 1, 1], [], []>} : vector<2x32xf32>, vector<32x128xf32>, vector<2x128xf32> -> vector<2x128xf32>
    %405 = arith.addf %355, %404 : vector<2x128xf32>
    %cst_117 = arith.constant 5.000000e-01 : f32
    %406 = vector.broadcast %cst_117 : f32 to vector<2x128xf32>
    %407 = arith.mulf %406, %405 : vector<2x128xf32>
    %408 = math.tanh %407 : vector<2x128xf32>
    %cst_118 = arith.constant 5.000000e-01 : f32
    %409 = vector.broadcast %cst_118 : f32 to vector<2x128xf32>
    %410 = arith.mulf %409, %408 : vector<2x128xf32>
    %cst_119 = arith.constant 5.000000e-01 : f32
    %411 = vector.broadcast %cst_119 : f32 to vector<2x128xf32>
    %412 = arith.addf %410, %411 : vector<2x128xf32>
    %413 = math.tanh %405 : vector<2x128xf32>
    %414 = vector.extract_strided_slice %412 {offsets = [0, 0], sizes = [2, 32], strides = [1, 1]} : vector<2x128xf32> to vector<2x32xf32>
    %415 = vector.extract_strided_slice %412 {offsets = [0, 32], sizes = [2, 32], strides = [1, 1]} : vector<2x128xf32> to vector<2x32xf32>
    %416 = vector.extract_strided_slice %413 {offsets = [0, 64], sizes = [2, 32], strides = [1, 1]} : vector<2x128xf32> to vector<2x32xf32>
    %417 = vector.extract_strided_slice %412 {offsets = [0, 96], sizes = [2, 32], strides = [1, 1]} : vector<2x128xf32> to vector<2x32xf32>
    %418 = arith.mulf %415, %399 : vector<2x32xf32>
    %419 = arith.mulf %414, %416 : vector<2x32xf32>
    %420 = arith.addf %418, %419 : vector<2x32xf32>
    %421 = math.tanh %420 : vector<2x32xf32>
    %422 = arith.mulf %417, %421 : vector<2x32xf32>
    %cst_120 = arith.constant dense<0.000000e+00> : vector<2x128xf32>
    %423 = tpu.matmul %422, %356, %cst_120 {dimension_numbers = #tpu.dot_dimension_numbers<[1], [0], [0], [1], [0, 0, 1, 1], [], []>} : vector<2x32xf32>, vector<32x128xf32>, vector<2x128xf32> -> vector<2x128xf32>
    %424 = arith.addf %423, %359 : vector<2x128xf32>
    %cst_121 = arith.constant dense<0.000000e+00> : vector<2x128xf32>
    %425 = tpu.matmul %422, %349, %cst_121 {dimension_numbers = #tpu.dot_dimension_numbers<[1], [0], [0], [1], [0, 0, 1, 1], [], []>} : vector<2x32xf32>, vector<32x128xf32>, vector<2x128xf32> -> vector<2x128xf32>
    %426 = arith.addf %355, %425 : vector<2x128xf32>
    %cst_122 = arith.constant 5.000000e-01 : f32
    %427 = vector.broadcast %cst_122 : f32 to vector<2x128xf32>
    %428 = arith.mulf %427, %426 : vector<2x128xf32>
    %429 = math.tanh %428 : vector<2x128xf32>
    %cst_123 = arith.constant 5.000000e-01 : f32
    %430 = vector.broadcast %cst_123 : f32 to vector<2x128xf32>
    %431 = arith.mulf %430, %429 : vector<2x128xf32>
    %cst_124 = arith.constant 5.000000e-01 : f32
    %432 = vector.broadcast %cst_124 : f32 to vector<2x128xf32>
    %433 = arith.addf %431, %432 : vector<2x128xf32>
    %434 = math.tanh %426 : vector<2x128xf32>
    %435 = vector.extract_strided_slice %433 {offsets = [0, 0], sizes = [2, 32], strides = [1, 1]} : vector<2x128xf32> to vector<2x32xf32>
    %436 = vector.extract_strided_slice %433 {offsets = [0, 32], sizes = [2, 32], strides = [1, 1]} : vector<2x128xf32> to vector<2x32xf32>
    %437 = vector.extract_strided_slice %434 {offsets = [0, 64], sizes = [2, 32], strides = [1, 1]} : vector<2x128xf32> to vector<2x32xf32>
    %438 = vector.extract_strided_slice %433 {offsets = [0, 96], sizes = [2, 32], strides = [1, 1]} : vector<2x128xf32> to vector<2x32xf32>
    %439 = arith.mulf %436, %420 : vector<2x32xf32>
    %440 = arith.mulf %435, %437 : vector<2x32xf32>
    %441 = arith.addf %439, %440 : vector<2x32xf32>
    %442 = math.tanh %441 : vector<2x32xf32>
    %443 = arith.mulf %438, %442 : vector<2x32xf32>
    %cst_125 = arith.constant dense<0.000000e+00> : vector<2x128xf32>
    %444 = tpu.matmul %443, %356, %cst_125 {dimension_numbers = #tpu.dot_dimension_numbers<[1], [0], [0], [1], [0, 0, 1, 1], [], []>} : vector<2x32xf32>, vector<32x128xf32>, vector<2x128xf32> -> vector<2x128xf32>
    %445 = arith.addf %444, %359 : vector<2x128xf32>
    %cst_126 = arith.constant dense<0.000000e+00> : vector<2x128xf32>
    %446 = tpu.matmul %443, %349, %cst_126 {dimension_numbers = #tpu.dot_dimension_numbers<[1], [0], [0], [1], [0, 0, 1, 1], [], []>} : vector<2x32xf32>, vector<32x128xf32>, vector<2x128xf32> -> vector<2x128xf32>
    %447 = arith.addf %355, %446 : vector<2x128xf32>
    %cst_127 = arith.constant 5.000000e-01 : f32
    %448 = vector.broadcast %cst_127 : f32 to vector<2x128xf32>
    %449 = arith.mulf %448, %447 : vector<2x128xf32>
    %450 = math.tanh %449 : vector<2x128xf32>
    %cst_128 = arith.constant 5.000000e-01 : f32
    %451 = vector.broadcast %cst_128 : f32 to vector<2x128xf32>
    %452 = arith.mulf %451, %450 : vector<2x128xf32>
    %cst_129 = arith.constant 5.000000e-01 : f32
    %453 = vector.broadcast %cst_129 : f32 to vector<2x128xf32>
    %454 = arith.addf %452, %453 : vector<2x128xf32>
    %455 = math.tanh %447 : vector<2x128xf32>
    %456 = vector.extract_strided_slice %454 {offsets = [0, 0], sizes = [2, 32], strides = [1, 1]} : vector<2x128xf32> to vector<2x32xf32>
    %457 = vector.extract_strided_slice %454 {offsets = [0, 32], sizes = [2, 32], strides = [1, 1]} : vector<2x128xf32> to vector<2x32xf32>
    %458 = vector.extract_strided_slice %455 {offsets = [0, 64], sizes = [2, 32], strides = [1, 1]} : vector<2x128xf32> to vector<2x32xf32>
    %459 = vector.extract_strided_slice %454 {offsets = [0, 96], sizes = [2, 32], strides = [1, 1]} : vector<2x128xf32> to vector<2x32xf32>
    %460 = arith.mulf %457, %441 : vector<2x32xf32>
    %461 = arith.mulf %456, %458 : vector<2x32xf32>
    %462 = arith.addf %460, %461 : vector<2x32xf32>
    %463 = math.tanh %462 : vector<2x32xf32>
    %464 = arith.mulf %459, %463 : vector<2x32xf32>
    %cst_130 = arith.constant dense<0.000000e+00> : vector<2x128xf32>
    %465 = tpu.matmul %464, %356, %cst_130 {dimension_numbers = #tpu.dot_dimension_numbers<[1], [0], [0], [1], [0, 0, 1, 1], [], []>} : vector<2x32xf32>, vector<32x128xf32>, vector<2x128xf32> -> vector<2x128xf32>
    %466 = arith.addf %465, %359 : vector<2x128xf32>
    %cst_131 = arith.constant dense<0.000000e+00> : vector<2x128xf32>
    %467 = tpu.matmul %464, %349, %cst_131 {dimension_numbers = #tpu.dot_dimension_numbers<[1], [0], [0], [1], [0, 0, 1, 1], [], []>} : vector<2x32xf32>, vector<32x128xf32>, vector<2x128xf32> -> vector<2x128xf32>
    %468 = arith.addf %355, %467 : vector<2x128xf32>
    %cst_132 = arith.constant 5.000000e-01 : f32
    %469 = vector.broadcast %cst_132 : f32 to vector<2x128xf32>
    %470 = arith.mulf %469, %468 : vector<2x128xf32>
    %471 = math.tanh %470 : vector<2x128xf32>
    %cst_133 = arith.constant 5.000000e-01 : f32
    %472 = vector.broadcast %cst_133 : f32 to vector<2x128xf32>
    %473 = arith.mulf %472, %471 : vector<2x128xf32>
    %cst_134 = arith.constant 5.000000e-01 : f32
    %474 = vector.broadcast %cst_134 : f32 to vector<2x128xf32>
    %475 = arith.addf %473, %474 : vector<2x128xf32>
    %476 = math.tanh %468 : vector<2x128xf32>
    %477 = vector.extract_strided_slice %475 {offsets = [0, 0], sizes = [2, 32], strides = [1, 1]} : vector<2x128xf32> to vector<2x32xf32>
    %478 = vector.extract_strided_slice %475 {offsets = [0, 32], sizes = [2, 32], strides = [1, 1]} : vector<2x128xf32> to vector<2x32xf32>
    %479 = vector.extract_strided_slice %476 {offsets = [0, 64], sizes = [2, 32], strides = [1, 1]} : vector<2x128xf32> to vector<2x32xf32>
    %480 = vector.extract_strided_slice %475 {offsets = [0, 96], sizes = [2, 32], strides = [1, 1]} : vector<2x128xf32> to vector<2x32xf32>
    %481 = arith.mulf %478, %462 : vector<2x32xf32>
    %482 = arith.mulf %477, %479 : vector<2x32xf32>
    %483 = arith.addf %481, %482 : vector<2x32xf32>
    %484 = math.tanh %483 : vector<2x32xf32>
    %485 = arith.mulf %480, %484 : vector<2x32xf32>
    %cst_135 = arith.constant dense<0.000000e+00> : vector<2x128xf32>
    %486 = tpu.matmul %485, %356, %cst_135 {dimension_numbers = #tpu.dot_dimension_numbers<[1], [0], [0], [1], [0, 0, 1, 1], [], []>} : vector<2x32xf32>, vector<32x128xf32>, vector<2x128xf32> -> vector<2x128xf32>
    %487 = arith.addf %486, %359 : vector<2x128xf32>
    %cst_136 = arith.constant dense<0.000000e+00> : vector<2x128xf32>
    %488 = tpu.matmul %485, %349, %cst_136 {dimension_numbers = #tpu.dot_dimension_numbers<[1], [0], [0], [1], [0, 0, 1, 1], [], []>} : vector<2x32xf32>, vector<32x128xf32>, vector<2x128xf32> -> vector<2x128xf32>
    %489 = arith.addf %355, %488 : vector<2x128xf32>
    %cst_137 = arith.constant 5.000000e-01 : f32
    %490 = vector.broadcast %cst_137 : f32 to vector<2x128xf32>
    %491 = arith.mulf %490, %489 : vector<2x128xf32>
    %492 = math.tanh %491 : vector<2x128xf32>
    %cst_138 = arith.constant 5.000000e-01 : f32
    %493 = vector.broadcast %cst_138 : f32 to vector<2x128xf32>
    %494 = arith.mulf %493, %492 : vector<2x128xf32>
    %cst_139 = arith.constant 5.000000e-01 : f32
    %495 = vector.broadcast %cst_139 : f32 to vector<2x128xf32>
    %496 = arith.addf %494, %495 : vector<2x128xf32>
    %497 = math.tanh %489 : vector<2x128xf32>
    %498 = vector.extract_strided_slice %496 {offsets = [0, 0], sizes = [2, 32], strides = [1, 1]} : vector<2x128xf32> to vector<2x32xf32>
    %499 = vector.extract_strided_slice %496 {offsets = [0, 32], sizes = [2, 32], strides = [1, 1]} : vector<2x128xf32> to vector<2x32xf32>
    %500 = vector.extract_strided_slice %497 {offsets = [0, 64], sizes = [2, 32], strides = [1, 1]} : vector<2x128xf32> to vector<2x32xf32>
    %501 = vector.extract_strided_slice %496 {offsets = [0, 96], sizes = [2, 32], strides = [1, 1]} : vector<2x128xf32> to vector<2x32xf32>
    %502 = arith.mulf %499, %483 : vector<2x32xf32>
    %503 = arith.mulf %498, %500 : vector<2x32xf32>
    %504 = arith.addf %502, %503 : vector<2x32xf32>
    %505 = math.tanh %504 : vector<2x32xf32>
    %506 = arith.mulf %501, %505 : vector<2x32xf32>
    %cst_140 = arith.constant dense<0.000000e+00> : vector<2x128xf32>
    %507 = tpu.matmul %506, %356, %cst_140 {dimension_numbers = #tpu.dot_dimension_numbers<[1], [0], [0], [1], [0, 0, 1, 1], [], []>} : vector<2x32xf32>, vector<32x128xf32>, vector<2x128xf32> -> vector<2x128xf32>
    %508 = arith.addf %507, %359 : vector<2x128xf32>
    %cst_141 = arith.constant dense<0.000000e+00> : vector<2x128xf32>
    %509 = tpu.matmul %506, %349, %cst_141 {dimension_numbers = #tpu.dot_dimension_numbers<[1], [0], [0], [1], [0, 0, 1, 1], [], []>} : vector<2x32xf32>, vector<32x128xf32>, vector<2x128xf32> -> vector<2x128xf32>
    %510 = arith.addf %355, %509 : vector<2x128xf32>
    %cst_142 = arith.constant 5.000000e-01 : f32
    %511 = vector.broadcast %cst_142 : f32 to vector<2x128xf32>
    %512 = arith.mulf %511, %510 : vector<2x128xf32>
    %513 = math.tanh %512 : vector<2x128xf32>
    %cst_143 = arith.constant 5.000000e-01 : f32
    %514 = vector.broadcast %cst_143 : f32 to vector<2x128xf32>
    %515 = arith.mulf %514, %513 : vector<2x128xf32>
    %cst_144 = arith.constant 5.000000e-01 : f32
    %516 = vector.broadcast %cst_144 : f32 to vector<2x128xf32>
    %517 = arith.addf %515, %516 : vector<2x128xf32>
    %518 = math.tanh %510 : vector<2x128xf32>
    %519 = vector.extract_strided_slice %517 {offsets = [0, 0], sizes = [2, 32], strides = [1, 1]} : vector<2x128xf32> to vector<2x32xf32>
    %520 = vector.extract_strided_slice %517 {offsets = [0, 32], sizes = [2, 32], strides = [1, 1]} : vector<2x128xf32> to vector<2x32xf32>
    %521 = vector.extract_strided_slice %518 {offsets = [0, 64], sizes = [2, 32], strides = [1, 1]} : vector<2x128xf32> to vector<2x32xf32>
    %522 = vector.extract_strided_slice %517 {offsets = [0, 96], sizes = [2, 32], strides = [1, 1]} : vector<2x128xf32> to vector<2x32xf32>
    %523 = arith.mulf %520, %504 : vector<2x32xf32>
    %524 = arith.mulf %519, %521 : vector<2x32xf32>
    %525 = arith.addf %523, %524 : vector<2x32xf32>
    %526 = math.tanh %525 : vector<2x32xf32>
    %527 = arith.mulf %522, %526 : vector<2x32xf32>
    %cst_145 = arith.constant dense<0.000000e+00> : vector<2x128xf32>
    %528 = tpu.matmul %527, %356, %cst_145 {dimension_numbers = #tpu.dot_dimension_numbers<[1], [0], [0], [1], [0, 0, 1, 1], [], []>} : vector<2x32xf32>, vector<32x128xf32>, vector<2x128xf32> -> vector<2x128xf32>
    %529 = arith.addf %528, %359 : vector<2x128xf32>
    %c0_146 = arith.constant 0 : index
    %c0_147 = arith.constant 0 : index
    %530 = vector.load %arg12[%c0_146, %c0_147] : memref<32x128xf32, #tpu.memory_space<vmem>>, vector<32x128xf32>
    %cst_148 = arith.constant 0.000000e+00 : f32
    %531 = vector.broadcast %cst_148 : f32 to vector<2x32xf32>
    %cst_149 = arith.constant 0.000000e+00 : f32
    %532 = vector.broadcast %cst_149 : f32 to vector<2x32xf32>
    %cst_150 = arith.constant dense<0.000000e+00> : vector<2x128xf32>
    %533 = tpu.matmul %531, %530, %cst_150 {dimension_numbers = #tpu.dot_dimension_numbers<[1], [0], [0], [1], [0, 0, 1, 1], [], []>} : vector<2x32xf32>, vector<32x128xf32>, vector<2x128xf32> -> vector<2x128xf32>
    %534 = arith.addf %382, %533 : vector<2x128xf32>
    %cst_151 = arith.constant 5.000000e-01 : f32
    %535 = vector.broadcast %cst_151 : f32 to vector<2x128xf32>
    %536 = arith.mulf %535, %534 : vector<2x128xf32>
    %537 = math.tanh %536 : vector<2x128xf32>
    %cst_152 = arith.constant 5.000000e-01 : f32
    %538 = vector.broadcast %cst_152 : f32 to vector<2x128xf32>
    %539 = arith.mulf %538, %537 : vector<2x128xf32>
    %cst_153 = arith.constant 5.000000e-01 : f32
    %540 = vector.broadcast %cst_153 : f32 to vector<2x128xf32>
    %541 = arith.addf %539, %540 : vector<2x128xf32>
    %542 = math.tanh %534 : vector<2x128xf32>
    %543 = vector.extract_strided_slice %541 {offsets = [0, 0], sizes = [2, 32], strides = [1, 1]} : vector<2x128xf32> to vector<2x32xf32>
    %544 = vector.extract_strided_slice %541 {offsets = [0, 32], sizes = [2, 32], strides = [1, 1]} : vector<2x128xf32> to vector<2x32xf32>
    %545 = vector.extract_strided_slice %542 {offsets = [0, 64], sizes = [2, 32], strides = [1, 1]} : vector<2x128xf32> to vector<2x32xf32>
    %546 = vector.extract_strided_slice %541 {offsets = [0, 96], sizes = [2, 32], strides = [1, 1]} : vector<2x128xf32> to vector<2x32xf32>
    %547 = arith.mulf %544, %532 : vector<2x32xf32>
    %548 = arith.mulf %543, %545 : vector<2x32xf32>
    %549 = arith.addf %547, %548 : vector<2x32xf32>
    %550 = math.tanh %549 : vector<2x32xf32>
    %551 = arith.mulf %546, %550 : vector<2x32xf32>
    %cst_154 = arith.constant dense<0.000000e+00> : vector<2x128xf32>
    %552 = tpu.matmul %551, %345, %cst_154 {dimension_numbers = #tpu.dot_dimension_numbers<[1], [0], [0], [1], [0, 0, 1, 1], [], []>} : vector<2x32xf32>, vector<32x128xf32>, vector<2x128xf32> -> vector<2x128xf32>
    %553 = arith.addf %552, %348 : vector<2x128xf32>
    %c0_155 = arith.constant 0 : index
    %c0_156 = arith.constant 0 : index
    %554 = vector.load %arg16[%c0_155, %c0_156] : memref<16x128xf32, #tpu.memory_space<vmem>>, vector<2x128xf32>
    tpu.vector_store %arg16[%c0_155, %c0_156], %553 {strides = array<i32>} : memref<16x128xf32, #tpu.memory_space<vmem>>, vector<2x128xf32>,
    %cst_157 = arith.constant dense<0.000000e+00> : vector<2x128xf32>
    %555 = tpu.matmul %551, %530, %cst_157 {dimension_numbers = #tpu.dot_dimension_numbers<[1], [0], [0], [1], [0, 0, 1, 1], [], []>} : vector<2x32xf32>, vector<32x128xf32>, vector<2x128xf32> -> vector<2x128xf32>
    %556 = arith.addf %403, %555 : vector<2x128xf32>
    %cst_158 = arith.constant 5.000000e-01 : f32
    %557 = vector.broadcast %cst_158 : f32 to vector<2x128xf32>
    %558 = arith.mulf %557, %556 : vector<2x128xf32>
    %559 = math.tanh %558 : vector<2x128xf32>
    %cst_159 = arith.constant 5.000000e-01 : f32
    %560 = vector.broadcast %cst_159 : f32 to vector<2x128xf32>
    %561 = arith.mulf %560, %559 : vector<2x128xf32>
    %cst_160 = arith.constant 5.000000e-01 : f32
    %562 = vector.broadcast %cst_160 : f32 to vector<2x128xf32>
    %563 = arith.addf %561, %562 : vector<2x128xf32>
    %564 = math.tanh %556 : vector<2x128xf32>
    %565 = vector.extract_strided_slice %563 {offsets = [0, 0], sizes = [2, 32], strides = [1, 1]} : vector<2x128xf32> to vector<2x32xf32>
    %566 = vector.extract_strided_slice %563 {offsets = [0, 32], sizes = [2, 32], strides = [1, 1]} : vector<2x128xf32> to vector<2x32xf32>
    %567 = vector.extract_strided_slice %564 {offsets = [0, 64], sizes = [2, 32], strides = [1, 1]} : vector<2x128xf32> to vector<2x32xf32>
    %568 = vector.extract_strided_slice %563 {offsets = [0, 96], sizes = [2, 32], strides = [1, 1]} : vector<2x128xf32> to vector<2x32xf32>
    %569 = arith.mulf %566, %549 : vector<2x32xf32>
    %570 = arith.mulf %565, %567 : vector<2x32xf32>
    %571 = arith.addf %569, %570 : vector<2x32xf32>
    %572 = math.tanh %571 : vector<2x32xf32>
    %573 = arith.mulf %568, %572 : vector<2x32xf32>
    %cst_161 = arith.constant dense<0.000000e+00> : vector<2x128xf32>
    %574 = tpu.matmul %573, %345, %cst_161 {dimension_numbers = #tpu.dot_dimension_numbers<[1], [0], [0], [1], [0, 0, 1, 1], [], []>} : vector<2x32xf32>, vector<32x128xf32>, vector<2x128xf32> -> vector<2x128xf32>
    %575 = arith.addf %574, %348 : vector<2x128xf32>
    %c2 = arith.constant 2 : index
    %c0_162 = arith.constant 0 : index
    %576 = vector.load %arg16[%c2, %c0_162] : memref<16x128xf32, #tpu.memory_space<vmem>>, vector<2x128xf32>
    tpu.vector_store %arg16[%c2, %c0_162], %575 {strides = array<i32>} : memref<16x128xf32, #tpu.memory_space<vmem>>, vector<2x128xf32>,
    %cst_163 = arith.constant dense<0.000000e+00> : vector<2x128xf32>
    %577 = tpu.matmul %573, %530, %cst_163 {dimension_numbers = #tpu.dot_dimension_numbers<[1], [0], [0], [1], [0, 0, 1, 1], [], []>} : vector<2x32xf32>, vector<32x128xf32>, vector<2x128xf32> -> vector<2x128xf32>
    %578 = arith.addf %424, %577 : vector<2x128xf32>
    %cst_164 = arith.constant 5.000000e-01 : f32
    %579 = vector.broadcast %cst_164 : f32 to vector<2x128xf32>
    %580 = arith.mulf %579, %578 : vector<2x128xf32>
    %581 = math.tanh %580 : vector<2x128xf32>
    %cst_165 = arith.constant 5.000000e-01 : f32
    %582 = vector.broadcast %cst_165 : f32 to vector<2x128xf32>
    %583 = arith.mulf %582, %581 : vector<2x128xf32>
    %cst_166 = arith.constant 5.000000e-01 : f32
    %584 = vector.broadcast %cst_166 : f32 to vector<2x128xf32>
    %585 = arith.addf %583, %584 : vector<2x128xf32>
    %586 = math.tanh %578 : vector<2x128xf32>
    %587 = vector.extract_strided_slice %585 {offsets = [0, 0], sizes = [2, 32], strides = [1, 1]} : vector<2x128xf32> to vector<2x32xf32>
    %588 = vector.extract_strided_slice %585 {offsets = [0, 32], sizes = [2, 32], strides = [1, 1]} : vector<2x128xf32> to vector<2x32xf32>
    %589 = vector.extract_strided_slice %586 {offsets = [0, 64], sizes = [2, 32], strides = [1, 1]} : vector<2x128xf32> to vector<2x32xf32>
    %590 = vector.extract_strided_slice %585 {offsets = [0, 96], sizes = [2, 32], strides = [1, 1]} : vector<2x128xf32> to vector<2x32xf32>
    %591 = arith.mulf %588, %571 : vector<2x32xf32>
    %592 = arith.mulf %587, %589 : vector<2x32xf32>
    %593 = arith.addf %591, %592 : vector<2x32xf32>
    %594 = math.tanh %593 : vector<2x32xf32>
    %595 = arith.mulf %590, %594 : vector<2x32xf32>
    %cst_167 = arith.constant dense<0.000000e+00> : vector<2x128xf32>
    %596 = tpu.matmul %595, %345, %cst_167 {dimension_numbers = #tpu.dot_dimension_numbers<[1], [0], [0], [1], [0, 0, 1, 1], [], []>} : vector<2x32xf32>, vector<32x128xf32>, vector<2x128xf32> -> vector<2x128xf32>
    %597 = arith.addf %596, %348 : vector<2x128xf32>
    %c4 = arith.constant 4 : index
    %c0_168 = arith.constant 0 : index
    %598 = vector.load %arg16[%c4, %c0_168] : memref<16x128xf32, #tpu.memory_space<vmem>>, vector<2x128xf32>
    tpu.vector_store %arg16[%c4, %c0_168], %597 {strides = array<i32>} : memref<16x128xf32, #tpu.memory_space<vmem>>, vector<2x128xf32>,
    %cst_169 = arith.constant dense<0.000000e+00> : vector<2x128xf32>
    %599 = tpu.matmul %595, %530, %cst_169 {dimension_numbers = #tpu.dot_dimension_numbers<[1], [0], [0], [1], [0, 0, 1, 1], [], []>} : vector<2x32xf32>, vector<32x128xf32>, vector<2x128xf32> -> vector<2x128xf32>
    %600 = arith.addf %445, %599 : vector<2x128xf32>
    %cst_170 = arith.constant 5.000000e-01 : f32
    %601 = vector.broadcast %cst_170 : f32 to vector<2x128xf32>
    %602 = arith.mulf %601, %600 : vector<2x128xf32>
    %603 = math.tanh %602 : vector<2x128xf32>
    %cst_171 = arith.constant 5.000000e-01 : f32
    %604 = vector.broadcast %cst_171 : f32 to vector<2x128xf32>
    %605 = arith.mulf %604, %603 : vector<2x128xf32>
    %cst_172 = arith.constant 5.000000e-01 : f32
    %606 = vector.broadcast %cst_172 : f32 to vector<2x128xf32>
    %607 = arith.addf %605, %606 : vector<2x128xf32>
    %608 = math.tanh %600 : vector<2x128xf32>
    %609 = vector.extract_strided_slice %607 {offsets = [0, 0], sizes = [2, 32], strides = [1, 1]} : vector<2x128xf32> to vector<2x32xf32>
    %610 = vector.extract_strided_slice %607 {offsets = [0, 32], sizes = [2, 32], strides = [1, 1]} : vector<2x128xf32> to vector<2x32xf32>
    %611 = vector.extract_strided_slice %608 {offsets = [0, 64], sizes = [2, 32], strides = [1, 1]} : vector<2x128xf32> to vector<2x32xf32>
    %612 = vector.extract_strided_slice %607 {offsets = [0, 96], sizes = [2, 32], strides = [1, 1]} : vector<2x128xf32> to vector<2x32xf32>
    %613 = arith.mulf %610, %593 : vector<2x32xf32>
    %614 = arith.mulf %609, %611 : vector<2x32xf32>
    %615 = arith.addf %613, %614 : vector<2x32xf32>
    %616 = math.tanh %615 : vector<2x32xf32>
    %617 = arith.mulf %612, %616 : vector<2x32xf32>
    %cst_173 = arith.constant dense<0.000000e+00> : vector<2x128xf32>
    %618 = tpu.matmul %617, %345, %cst_173 {dimension_numbers = #tpu.dot_dimension_numbers<[1], [0], [0], [1], [0, 0, 1, 1], [], []>} : vector<2x32xf32>, vector<32x128xf32>, vector<2x128xf32> -> vector<2x128xf32>
    %619 = arith.addf %618, %348 : vector<2x128xf32>
    %c6 = arith.constant 6 : index
    %c0_174 = arith.constant 0 : index
    %620 = vector.load %arg16[%c6, %c0_174] : memref<16x128xf32, #tpu.memory_space<vmem>>, vector<2x128xf32>
    tpu.vector_store %arg16[%c6, %c0_174], %619 {strides = array<i32>} : memref<16x128xf32, #tpu.memory_space<vmem>>, vector<2x128xf32>,
    %cst_175 = arith.constant dense<0.000000e+00> : vector<2x128xf32>
    %621 = tpu.matmul %617, %530, %cst_175 {dimension_numbers = #tpu.dot_dimension_numbers<[1], [0], [0], [1], [0, 0, 1, 1], [], []>} : vector<2x32xf32>, vector<32x128xf32>, vector<2x128xf32> -> vector<2x128xf32>
    %622 = arith.addf %466, %621 : vector<2x128xf32>
    %cst_176 = arith.constant 5.000000e-01 : f32
    %623 = vector.broadcast %cst_176 : f32 to vector<2x128xf32>
    %624 = arith.mulf %623, %622 : vector<2x128xf32>
    %625 = math.tanh %624 : vector<2x128xf32>
    %cst_177 = arith.constant 5.000000e-01 : f32
    %626 = vector.broadcast %cst_177 : f32 to vector<2x128xf32>
    %627 = arith.mulf %626, %625 : vector<2x128xf32>
    %cst_178 = arith.constant 5.000000e-01 : f32
    %628 = vector.broadcast %cst_178 : f32 to vector<2x128xf32>
    %629 = arith.addf %627, %628 : vector<2x128xf32>
    %630 = math.tanh %622 : vector<2x128xf32>
    %631 = vector.extract_strided_slice %629 {offsets = [0, 0], sizes = [2, 32], strides = [1, 1]} : vector<2x128xf32> to vector<2x32xf32>
    %632 = vector.extract_strided_slice %629 {offsets = [0, 32], sizes = [2, 32], strides = [1, 1]} : vector<2x128xf32> to vector<2x32xf32>
    %633 = vector.extract_strided_slice %630 {offsets = [0, 64], sizes = [2, 32], strides = [1, 1]} : vector<2x128xf32> to vector<2x32xf32>
    %634 = vector.extract_strided_slice %629 {offsets = [0, 96], sizes = [2, 32], strides = [1, 1]} : vector<2x128xf32> to vector<2x32xf32>
    %635 = arith.mulf %632, %615 : vector<2x32xf32>
    %636 = arith.mulf %631, %633 : vector<2x32xf32>
    %637 = arith.addf %635, %636 : vector<2x32xf32>
    %638 = math.tanh %637 : vector<2x32xf32>
    %639 = arith.mulf %634, %638 : vector<2x32xf32>
    %cst_179 = arith.constant dense<0.000000e+00> : vector<2x128xf32>
    %640 = tpu.matmul %639, %345, %cst_179 {dimension_numbers = #tpu.dot_dimension_numbers<[1], [0], [0], [1], [0, 0, 1, 1], [], []>} : vector<2x32xf32>, vector<32x128xf32>, vector<2x128xf32> -> vector<2x128xf32>
    %641 = arith.addf %640, %348 : vector<2x128xf32>
    %c8 = arith.constant 8 : index
    %c0_180 = arith.constant 0 : index
    %642 = vector.load %arg16[%c8, %c0_180] : memref<16x128xf32, #tpu.memory_space<vmem>>, vector<2x128xf32>
    tpu.vector_store %arg16[%c8, %c0_180], %641 {strides = array<i32>} : memref<16x128xf32, #tpu.memory_space<vmem>>, vector<2x128xf32>,
    %cst_181 = arith.constant dense<0.000000e+00> : vector<2x128xf32>
    %643 = tpu.matmul %639, %530, %cst_181 {dimension_numbers = #tpu.dot_dimension_numbers<[1], [0], [0], [1], [0, 0, 1, 1], [], []>} : vector<2x32xf32>, vector<32x128xf32>, vector<2x128xf32> -> vector<2x128xf32>
    %644 = arith.addf %487, %643 : vector<2x128xf32>
    %cst_182 = arith.constant 5.000000e-01 : f32
    %645 = vector.broadcast %cst_182 : f32 to vector<2x128xf32>
    %646 = arith.mulf %645, %644 : vector<2x128xf32>
    %647 = math.tanh %646 : vector<2x128xf32>
    %cst_183 = arith.constant 5.000000e-01 : f32
    %648 = vector.broadcast %cst_183 : f32 to vector<2x128xf32>
    %649 = arith.mulf %648, %647 : vector<2x128xf32>
    %cst_184 = arith.constant 5.000000e-01 : f32
    %650 = vector.broadcast %cst_184 : f32 to vector<2x128xf32>
    %651 = arith.addf %649, %650 : vector<2x128xf32>
    %652 = math.tanh %644 : vector<2x128xf32>
    %653 = vector.extract_strided_slice %651 {offsets = [0, 0], sizes = [2, 32], strides = [1, 1]} : vector<2x128xf32> to vector<2x32xf32>
    %654 = vector.extract_strided_slice %651 {offsets = [0, 32], sizes = [2, 32], strides = [1, 1]} : vector<2x128xf32> to vector<2x32xf32>
    %655 = vector.extract_strided_slice %652 {offsets = [0, 64], sizes = [2, 32], strides = [1, 1]} : vector<2x128xf32> to vector<2x32xf32>
    %656 = vector.extract_strided_slice %651 {offsets = [0, 96], sizes = [2, 32], strides = [1, 1]} : vector<2x128xf32> to vector<2x32xf32>
    %657 = arith.mulf %654, %637 : vector<2x32xf32>
    %658 = arith.mulf %653, %655 : vector<2x32xf32>
    %659 = arith.addf %657, %658 : vector<2x32xf32>
    %660 = math.tanh %659 : vector<2x32xf32>
    %661 = arith.mulf %656, %660 : vector<2x32xf32>
    %cst_185 = arith.constant dense<0.000000e+00> : vector<2x128xf32>
    %662 = tpu.matmul %661, %345, %cst_185 {dimension_numbers = #tpu.dot_dimension_numbers<[1], [0], [0], [1], [0, 0, 1, 1], [], []>} : vector<2x32xf32>, vector<32x128xf32>, vector<2x128xf32> -> vector<2x128xf32>
    %663 = arith.addf %662, %348 : vector<2x128xf32>
    %c10 = arith.constant 10 : index
    %c0_186 = arith.constant 0 : index
    %664 = vector.load %arg16[%c10, %c0_186] : memref<16x128xf32, #tpu.memory_space<vmem>>, vector<2x128xf32>
    tpu.vector_store %arg16[%c10, %c0_186], %663 {strides = array<i32>} : memref<16x128xf32, #tpu.memory_space<vmem>>, vector<2x128xf32>,
    %cst_187 = arith.constant dense<0.000000e+00> : vector<2x128xf32>
    %665 = tpu.matmul %661, %530, %cst_187 {dimension_numbers = #tpu.dot_dimension_numbers<[1], [0], [0], [1], [0, 0, 1, 1], [], []>} : vector<2x32xf32>, vector<32x128xf32>, vector<2x128xf32> -> vector<2x128xf32>
    %666 = arith.addf %508, %665 : vector<2x128xf32>
    %cst_188 = arith.constant 5.000000e-01 : f32
    %667 = vector.broadcast %cst_188 : f32 to vector<2x128xf32>
    %668 = arith.mulf %667, %666 : vector<2x128xf32>
    %669 = math.tanh %668 : vector<2x128xf32>
    %cst_189 = arith.constant 5.000000e-01 : f32
    %670 = vector.broadcast %cst_189 : f32 to vector<2x128xf32>
    %671 = arith.mulf %670, %669 : vector<2x128xf32>
    %cst_190 = arith.constant 5.000000e-01 : f32
    %672 = vector.broadcast %cst_190 : f32 to vector<2x128xf32>
    %673 = arith.addf %671, %672 : vector<2x128xf32>
    %674 = math.tanh %666 : vector<2x128xf32>
    %675 = vector.extract_strided_slice %673 {offsets = [0, 0], sizes = [2, 32], strides = [1, 1]} : vector<2x128xf32> to vector<2x32xf32>
    %676 = vector.extract_strided_slice %673 {offsets = [0, 32], sizes = [2, 32], strides = [1, 1]} : vector<2x128xf32> to vector<2x32xf32>
    %677 = vector.extract_strided_slice %674 {offsets = [0, 64], sizes = [2, 32], strides = [1, 1]} : vector<2x128xf32> to vector<2x32xf32>
    %678 = vector.extract_strided_slice %673 {offsets = [0, 96], sizes = [2, 32], strides = [1, 1]} : vector<2x128xf32> to vector<2x32xf32>
    %679 = arith.mulf %676, %659 : vector<2x32xf32>
    %680 = arith.mulf %675, %677 : vector<2x32xf32>
    %681 = arith.addf %679, %680 : vector<2x32xf32>
    %682 = math.tanh %681 : vector<2x32xf32>
    %683 = arith.mulf %678, %682 : vector<2x32xf32>
    %cst_191 = arith.constant dense<0.000000e+00> : vector<2x128xf32>
    %684 = tpu.matmul %683, %345, %cst_191 {dimension_numbers = #tpu.dot_dimension_numbers<[1], [0], [0], [1], [0, 0, 1, 1], [], []>} : vector<2x32xf32>, vector<32x128xf32>, vector<2x128xf32> -> vector<2x128xf32>
    %685 = arith.addf %684, %348 : vector<2x128xf32>
    %c12 = arith.constant 12 : index
    %c0_192 = arith.constant 0 : index
    %686 = vector.load %arg16[%c12, %c0_192] : memref<16x128xf32, #tpu.memory_space<vmem>>, vector<2x128xf32>
    tpu.vector_store %arg16[%c12, %c0_192], %685 {strides = array<i32>} : memref<16x128xf32, #tpu.memory_space<vmem>>, vector<2x128xf32>,
    %cst_193 = arith.constant dense<0.000000e+00> : vector<2x128xf32>
    %687 = tpu.matmul %683, %530, %cst_193 {dimension_numbers = #tpu.dot_dimension_numbers<[1], [0], [0], [1], [0, 0, 1, 1], [], []>} : vector<2x32xf32>, vector<32x128xf32>, vector<2x128xf32> -> vector<2x128xf32>
    %688 = arith.addf %529, %687 : vector<2x128xf32>
    %cst_194 = arith.constant 5.000000e-01 : f32
    %689 = vector.broadcast %cst_194 : f32 to vector<2x128xf32>
    %690 = arith.mulf %689, %688 : vector<2x128xf32>
    %691 = math.tanh %690 : vector<2x128xf32>
    %cst_195 = arith.constant 5.000000e-01 : f32
    %692 = vector.broadcast %cst_195 : f32 to vector<2x128xf32>
    %693 = arith.mulf %692, %691 : vector<2x128xf32>
    %cst_196 = arith.constant 5.000000e-01 : f32
    %694 = vector.broadcast %cst_196 : f32 to vector<2x128xf32>
    %695 = arith.addf %693, %694 : vector<2x128xf32>
    %696 = math.tanh %688 : vector<2x128xf32>
    %697 = vector.extract_strided_slice %695 {offsets = [0, 0], sizes = [2, 32], strides = [1, 1]} : vector<2x128xf32> to vector<2x32xf32>
    %698 = vector.extract_strided_slice %695 {offsets = [0, 32], sizes = [2, 32], strides = [1, 1]} : vector<2x128xf32> to vector<2x32xf32>
    %699 = vector.extract_strided_slice %696 {offsets = [0, 64], sizes = [2, 32], strides = [1, 1]} : vector<2x128xf32> to vector<2x32xf32>
    %700 = vector.extract_strided_slice %695 {offsets = [0, 96], sizes = [2, 32], strides = [1, 1]} : vector<2x128xf32> to vector<2x32xf32>
    %701 = arith.mulf %698, %681 : vector<2x32xf32>
    %702 = arith.mulf %697, %699 : vector<2x32xf32>
    %703 = arith.addf %701, %702 : vector<2x32xf32>
    %704 = math.tanh %703 : vector<2x32xf32>
    %705 = arith.mulf %700, %704 : vector<2x32xf32>
    %cst_197 = arith.constant dense<0.000000e+00> : vector<2x128xf32>
    %706 = tpu.matmul %705, %345, %cst_197 {dimension_numbers = #tpu.dot_dimension_numbers<[1], [0], [0], [1], [0, 0, 1, 1], [], []>} : vector<2x32xf32>, vector<32x128xf32>, vector<2x128xf32> -> vector<2x128xf32>
    %707 = arith.addf %706, %348 : vector<2x128xf32>
    %c14 = arith.constant 14 : index
    %c0_198 = arith.constant 0 : index
    %708 = vector.load %arg16[%c14, %c0_198] : memref<16x128xf32, #tpu.memory_space<vmem>>, vector<2x128xf32>
    tpu.vector_store %arg16[%c14, %c0_198], %707 {strides = array<i32>} : memref<16x128xf32, #tpu.memory_space<vmem>>, vector<2x128xf32>,
    return
  }
  func.func @transform_0(%arg0: i32) -> (i32, i32) {
    %c0_i32 = arith.constant 0 : i32
    %c0_i32_0 = arith.constant 0 : i32
    %c0_i32_1 = arith.constant 0 : i32
    return %c0_i32, %c0_i32_0 : i32, i32
  }
  func.func @transform_1(%arg0: i32) -> (i32, i32) {
    %c0_i32 = arith.constant 0 : i32
    %c0_i32_0 = arith.constant 0 : i32
    %c0_i32_1 = arith.constant 0 : i32
    return %c0_i32, %c0_i32_0 : i32, i32
  }
  func.func @transform_2(%arg0: i32) -> (i32, i32) {
    %c0_i32 = arith.constant 0 : i32
    %c0_i32_0 = arith.constant 0 : i32
    %c0_i32_1 = arith.constant 0 : i32
    return %c0_i32, %c0_i32_0 : i32, i32
  }
  func.func @transform_3(%arg0: i32) -> (i32, i32) {
    %c0_i32 = arith.constant 0 : i32
    %c0_i32_0 = arith.constant 0 : i32
    %c0_i32_1 = arith.constant 0 : i32
    return %c0_i32, %c0_i32_0 : i32, i32
  }
  func.func @transform_4(%arg0: i32) -> (i32, i32) {
    %c0_i32 = arith.constant 0 : i32
    %c0_i32_0 = arith.constant 0 : i32
    %c0_i32_1 = arith.constant 0 : i32
    return %c0_i32, %c0_i32_0 : i32, i32
  }
  func.func @transform_5(%arg0: i32) -> (i32, i32) {
    %c0_i32 = arith.constant 0 : i32
    %c0_i32_0 = arith.constant 0 : i32
    %c0_i32_1 = arith.constant 0 : i32
    return %c0_i32, %c0_i32_0 : i32, i32
  }
  func.func @transform_6(%arg0: i32) -> (i32, i32) {
    %c0_i32 = arith.constant 0 : i32
    %c0_i32_0 = arith.constant 0 : i32
    %c0_i32_1 = arith.constant 0 : i32
    return %c0_i32, %c0_i32_0 : i32, i32
  }
  func.func @transform_7(%arg0: i32) -> (i32, i32) {
    %c0_i32 = arith.constant 0 : i32
    %c0_i32_0 = arith.constant 0 : i32
    %c0_i32_1 = arith.constant 0 : i32
    return %c0_i32, %c0_i32_0 : i32, i32
  }
  func.func @transform_8(%arg0: i32) -> (i32, i32) {
    %c0_i32 = arith.constant 0 : i32
    %c0_i32_0 = arith.constant 0 : i32
    %c0_i32_1 = arith.constant 0 : i32
    return %c0_i32, %c0_i32_0 : i32, i32
  }
  func.func @transform_9(%arg0: i32) -> (i32, i32) {
    %c0_i32 = arith.constant 0 : i32
    %c0_i32_0 = arith.constant 0 : i32
    %c0_i32_1 = arith.constant 0 : i32
    return %c0_i32, %c0_i32_0 : i32, i32
  }
  func.func @transform_10(%arg0: i32) -> (i32, i32) {
    %c0_i32 = arith.constant 0 : i32
    %c0_i32_0 = arith.constant 0 : i32
    %c0_i32_1 = arith.constant 0 : i32
    return %c0_i32, %c0_i32_0 : i32, i32
  }
  func.func @transform_11(%arg0: i32) -> (i32, i32) {
    %c0_i32 = arith.constant 0 : i32
    %c0_i32_0 = arith.constant 0 : i32
    %c0_i32_1 = arith.constant 0 : i32
    return %c0_i32, %c0_i32_0 : i32, i32
  }
  func.func @transform_12(%arg0: i32) -> (i32, i32) {
    %c0_i32 = arith.constant 0 : i32
    %c0_i32_0 = arith.constant 0 : i32
    %c0_i32_1 = arith.constant 0 : i32
    return %c0_i32, %c0_i32_0 : i32, i32
  }
  func.func @transform_13(%arg0: i32) -> (i32, i32) {
    %c0_i32 = arith.constant 0 : i32
    %c0_i32_0 = arith.constant 0 : i32
    %c0_i32_1 = arith.constant 0 : i32
    return %c0_i32, %c0_i32_0 : i32, i32
  }
  func.func @transform_14(%arg0: i32) -> (i32, i32) {
    %c0_i32 = arith.constant 0 : i32
    %c0_i32_0 = arith.constant 0 : i32
    %c0_i32_1 = arith.constant 0 : i32
    return %c0_i32, %c0_i32_0 : i32, i32
  }
  func.func @transform_15(%arg0: i32) -> (i32, i32) {
    %c0_i32 = arith.constant 0 : i32
    %c0_i32_0 = arith.constant 0 : i32
    %c0_i32_1 = arith.constant 0 : i32
    return %c0_i32, %c0_i32_0 : i32, i32
  }
}

</mosaic_0001>

<llo_original>
// kernel: tpu_custom_call.1
$region0: #{tpu_custom_call.1}
  #allocation0 [shape = 'u32[]', space=smem, size = 0x4, offset = 0x4, fixed_abs, tag = 'smem constant byte address 0x4 - core index']
  #allocation1 [shape = 'u32[144,128]{1,0:T(1,128)}', space=vmem, size = 0x12000, scoped, tag = 'internal scratch']
  %s0 = inlined_call_operand.vmem [shape: f32[16,4], index: 0, kind: input, shape index: {}]
  %s1 = inlined_call_operand.hbm [shape: f32[4,128], index: 1, kind: input, shape index: {}]
  %s2 = inlined_call_operand.hbm [shape: f32[32,128], index: 2, kind: input, shape index: {}]
  %s3 = inlined_call_operand.vmem [shape: f32[1,128], index: 3, kind: input, shape index: {}]
  %s4 = inlined_call_operand.vmem [shape: f32[32,128], index: 4, kind: input, shape index: {}]
  %s5 = inlined_call_operand.hbm [shape: f32[32,128], index: 5, kind: input, shape index: {}]
  %s6 = inlined_call_operand.hbm [shape: f32[1,128], index: 6, kind: input, shape index: {}]
  %s7 = inlined_call_operand.hbm [shape: f32[32,128], index: 7, kind: input, shape index: {}]
  %s8 = inlined_call_operand.hbm [shape: f32[32,128], index: 8, kind: input, shape index: {}]
  %s9 = inlined_call_operand.hbm [shape: f32[1,128], index: 9, kind: input, shape index: {}]
  %s10 = inlined_call_operand.hbm [shape: f32[32,128], index: 10, kind: input, shape index: {}]
  %s11 = inlined_call_operand.hbm [shape: f32[32,128], index: 11, kind: input, shape index: {}]
  %s12 = inlined_call_operand.hbm [shape: f32[1,128], index: 12, kind: input, shape index: {}]
  %s13 = inlined_call_operand.vmem [shape: f32[32,128], index: 13, kind: input, shape index: {}]
  %s14 = inlined_call_operand.vmem [shape: f32[1,128], index: 14, kind: input, shape index: {}]
  %s15 = inlined_call_operand.hbm [shape: f32[16,128], index: 15, kind: output, shape index: {}]
  %s16 = sld [smem:[#allocation0]]
  $region110: #{tpu_custom_call.1} parent=0
    _
  %s18 = ssub.s32 1, %s16
  %s19 = scalar_select 0, %s18, %s16
  $region1: #{tpu_custom_call.1} parent=0
    #allocation2 [shape = 'u8[2048]{0}', space=vmem, size = 0x800, scoped, tag = 'input window, operand 1, single buffered']
    #allocation3 [shape = 's32[1]{0}', space=sflag, size = 0x4, scoped, tag = 'scoped memory for tpu_custom_call.1']
    #allocation4 [shape = 's32[1]{0}', space=sflag, size = 0x4, scoped, tag = 'scoped memory for tpu_custom_call.1']
    #allocation5 [shape = 'u8[16384]{0}', space=vmem, size = 0x4000, scoped, tag = 'input window, operand 2, single buffered']
    #allocation6 [shape = 's32[1]{0}', space=sflag, size = 0x4, scoped, tag = 'scoped memory for tpu_custom_call.1']
    #allocation7 [shape = 'u8[16384]{0}', space=vmem, size = 0x4000, scoped, tag = 'input window, operand 5, single buffered']
    #allocation8 [shape = 'u8[512]{0}', space=vmem, size = 0x400, scoped, tag = 'input window, operand 6, single buffered']
    #allocation9 [shape = 's32[1]{0}', space=sflag, size = 0x4, scoped, tag = 'scoped memory for tpu_custom_call.1']
    #allocation10 [shape = 'u8[16384]{0}', space=vmem, size = 0x4000, scoped, tag = 'input window, operand 7, single buffered']
    #allocation11 [shape = 'u8[16384]{0}', space=vmem, size = 0x4000, scoped, tag = 'input window, operand 8, single buffered']
    #allocation12 [shape = 's32[1]{0}', space=sflag, size = 0x4, scoped, tag = 'scoped memory for tpu_custom_call.1']
    #allocation13 [shape = 'u8[512]{0}', space=vmem, size = 0x400, scoped, tag = 'input window, operand 9, single buffered']
    #allocation14 [shape = 'u8[16384]{0}', space=vmem, size = 0x4000, scoped, tag = 'input window, operand 10, single buffered']
    #allocation15 [shape = 's32[1]{0}', space=sflag, size = 0x4, scoped, tag = 'scoped memory for tpu_custom_call.1']
    #allocation16 [shape = 'u8[16384]{0}', space=vmem, size = 0x4000, scoped, tag = 'input window, operand 11, single buffered']
    #allocation17 [shape = 'u8[512]{0}', space=vmem, size = 0x400, scoped, tag = 'input window, operand 12, single buffered']
    #allocation18 [shape = 's32[1]{0}', space=sflag, size = 0x4, scoped, tag = 'scoped memory for tpu_custom_call.1']
    #allocation19 [shape = 'u8[8192]{0}', space=vmem, size = 0x2000, scoped, tag = 'output window, operand 0, single buffered']
    %20 = vsyncpa [#allocation3], 0
    %21 = vsyncpa [#allocation6], 0
    %22 = vsyncpa [#allocation9], 0
    %23 = vsyncpa [#allocation12], 0
    %24 = vsyncpa [#allocation15], 0
    %25 = vsyncpa [#allocation18], 0
    %26 = vsyncpa [#allocation4], 0
    // Predicated region
    $region2: #{tpu_custom_call.1} parent=1 // pred_check
      _
    $region3: #{tpu_custom_call.1} parent=1 // pred_check_branch
      %28 = sbr.rel (0) target = $region5
    $region4: #{tpu_custom_call.1} parent=1 // pred_region
      _
    $region5: #{tpu_custom_call.1} parent=1 // pred_fallthru
      _
    // Predicated region
    $region6: #{tpu_custom_call.1} parent=1 // pred_check
      _
    $region7: #{tpu_custom_call.1} parent=1 // pred_check_branch
      %30 = sbr.rel (0) target = $region9
    $region8: #{tpu_custom_call.1} parent=1 // pred_region
      %s32 = ssub.s32 64, 64
      %33 = vsyncadd [#allocation3], %s32
      %s35 = sshll.u32 [#allocation2], 4
      %s36 = int_to_ptr.vmem [resolvable:$true] %s35
      %38 = dma.hbm_to_vmem [thread:$0]  %s1, 64, %s36, [#allocation3]
    $region9: #{tpu_custom_call.1} parent=1 // pred_fallthru
      _
    // Predicated region
    $region10: #{tpu_custom_call.1} parent=1 // pred_check
      _
    $region11: #{tpu_custom_call.1} parent=1 // pred_check_branch
      %40 = sbr.rel (0) target = $region13
    $region12: #{tpu_custom_call.1} parent=1 // pred_region
      %s42 = ssub.s32 512, 512
      %43 = vsyncadd [#allocation6], %s42
      %s44 = sshll.u32 [#allocation5], 4
      %s45 = int_to_ptr.vmem [resolvable:$true] %s44
      %50 = dma.hbm_to_vmem [thread:$0]  %s2, 512, %s45, [#allocation6], 128, 128, 8
    $region13: #{tpu_custom_call.1} parent=1 // pred_fallthru
      _
    // Predicated region
    $region14: #{tpu_custom_call.1} parent=1 // pred_check
      _
    $region15: #{tpu_custom_call.1} parent=1 // pred_check_branch
      %52 = sbr.rel (0) target = $region17
    $region16: #{tpu_custom_call.1} parent=1 // pred_region
      _
    $region17: #{tpu_custom_call.1} parent=1 // pred_fallthru
      _
    // Predicated region
    $region18: #{tpu_custom_call.1} parent=1 // pred_check
      _
    $region19: #{tpu_custom_call.1} parent=1 // pred_check_branch
      %54 = sbr.rel (0) target = $region21
    $region20: #{tpu_custom_call.1} parent=1 // pred_region
      _
    $region21: #{tpu_custom_call.1} parent=1 // pred_fallthru
      _
    // Predicated region
    $region22: #{tpu_custom_call.1} parent=1 // pred_check
      _
    $region23: #{tpu_custom_call.1} parent=1 // pred_check_branch
      %56 = sbr.rel (0) target = $region25
    $region24: #{tpu_custom_call.1} parent=1 // pred_region
      %s58 = ssub.s32 512, 512
      %59 = vsyncadd [#allocation6], %s58
      %s60 = sshll.u32 [#allocation7], 4
      %s61 = int_to_ptr.vmem [resolvable:$true] %s60
      %66 = dma.hbm_to_vmem [thread:$0]  %s5, 512, %s61, [#allocation6], 128, 128, 8
    $region25: #{tpu_custom_call.1} parent=1 // pred_fallthru
      _
    // Predicated region
    $region26: #{tpu_custom_call.1} parent=1 // pred_check
      _
    $region27: #{tpu_custom_call.1} parent=1 // pred_check_branch
      %68 = sbr.rel (0) target = $region29
    $region28: #{tpu_custom_call.1} parent=1 // pred_region
      %s70 = ssub.s32 16, 16
      %71 = vsyncadd [#allocation9], %s70
      %s73 = sshll.u32 [#allocation8], 4
      %s74 = int_to_ptr.vmem [resolvable:$true] %s73
      %76 = dma.hbm_to_vmem [thread:$0]  %s6, 16, %s74, [#allocation9]
    $region29: #{tpu_custom_call.1} parent=1 // pred_fallthru
      _
    // Predicated region
    $region30: #{tpu_custom_call.1} parent=1 // pred_check
      _
    $region31: #{tpu_custom_call.1} parent=1 // pred_check_branch
      %78 = sbr.rel (0) target = $region33
    $region32: #{tpu_custom_call.1} parent=1 // pred_region
      %s80 = ssub.s32 512, 512
      %81 = vsyncadd [#allocation9], %s80
      %s82 = sshll.u32 [#allocation10], 4
      %s83 = int_to_ptr.vmem [resolvable:$true] %s82
      %88 = dma.hbm_to_vmem [thread:$0]  %s7, 512, %s83, [#allocation9], 128, 128, 8
    $region33: #{tpu_custom_call.1} parent=1 // pred_fallthru
      _
    // Predicated region
    $region34: #{tpu_custom_call.1} parent=1 // pred_check
      _
    $region35: #{tpu_custom_call.1} parent=1 // pred_check_branch
      %90 = sbr.rel (0) target = $region37
    $region36: #{tpu_custom_call.1} parent=1 // pred_region
      %s92 = ssub.s32 512, 512
      %93 = vsyncadd [#allocation12], %s92
      %s94 = sshll.u32 [#allocation11], 4
      %s95 = int_to_ptr.vmem [resolvable:$true] %s94
      %100 = dma.hbm_to_vmem [thread:$0]  %s8, 512, %s95, [#allocation12], 128, 128, 8
    $region37: #{tpu_custom_call.1} parent=1 // pred_fallthru
      _
    // Predicated region
    $region38: #{tpu_custom_call.1} parent=1 // pred_check
      _
    $region39: #{tpu_custom_call.1} parent=1 // pred_check_branch
      %102 = sbr.rel (0) target = $region41
    $region40: #{tpu_custom_call.1} parent=1 // pred_region
      %s104 = ssub.s32 16, 16
      %105 = vsyncadd [#allocation12], %s104
      %s107 = sshll.u32 [#allocation13], 4
      %s108 = int_to_ptr.vmem [resolvable:$true] %s107
      %110 = dma.hbm_to_vmem [thread:$0]  %s9, 16, %s108, [#allocation12]
    $region41: #{tpu_custom_call.1} parent=1 // pred_fallthru
      _
    // Predicated region
    $region42: #{tpu_custom_call.1} parent=1 // pred_check
      _
    $region43: #{tpu_custom_call.1} parent=1 // pred_check_branch
      %112 = sbr.rel (0) target = $region45
    $region44: #{tpu_custom_call.1} parent=1 // pred_region
      %s114 = ssub.s32 512, 512
      %115 = vsyncadd [#allocation15], %s114
      %s116 = sshll.u32 [#allocation14], 4
      %s117 = int_to_ptr.vmem [resolvable:$true] %s116
      %122 = dma.hbm_to_vmem [thread:$0]  %s10, 512, %s117, [#allocation15], 128, 128, 8
    $region45: #{tpu_custom_call.1} parent=1 // pred_fallthru
      _
    // Predicated region
    $region46: #{tpu_custom_call.1} parent=1 // pred_check
      _
    $region47: #{tpu_custom_call.1} parent=1 // pred_check_branch
      %124 = sbr.rel (0) target = $region49
    $region48: #{tpu_custom_call.1} parent=1 // pred_region
      %s126 = ssub.s32 512, 512
      %127 = vsyncadd [#allocation15], %s126
      %s128 = sshll.u32 [#allocation16], 4
      %s129 = int_to_ptr.vmem [resolvable:$true] %s128
      %134 = dma.hbm_to_vmem [thread:$0]  %s11, 512, %s129, [#allocation15], 128, 128, 8
    $region49: #{tpu_custom_call.1} parent=1 // pred_fallthru
      _
    // Predicated region
    $region50: #{tpu_custom_call.1} parent=1 // pred_check
      _
    $region51: #{tpu_custom_call.1} parent=1 // pred_check_branch
      %136 = sbr.rel (0) target = $region53
    $region52: #{tpu_custom_call.1} parent=1 // pred_region
      %s138 = ssub.s32 16, 16
      %139 = vsyncadd [#allocation18], %s138
      %s141 = sshll.u32 [#allocation17], 4
      %s142 = int_to_ptr.vmem [resolvable:$true] %s141
      %144 = dma.hbm_to_vmem [thread:$0]  %s12, 16, %s142, [#allocation18]
    $region53: #{tpu_custom_call.1} parent=1 // pred_fallthru
      _
    // Predicated region
    $region54: #{tpu_custom_call.1} parent=1 // pred_check
      _
    $region55: #{tpu_custom_call.1} parent=1 // pred_check_branch
      %146 = sbr.rel (0) target = $region57
    $region56: #{tpu_custom_call.1} parent=1 // pred_region
      _
    $region57: #{tpu_custom_call.1} parent=1 // pred_fallthru
      _
    // Predicated region
    $region58: #{tpu_custom_call.1} parent=1 // pred_check
      _
    $region59: #{tpu_custom_call.1} parent=1 // pred_check_branch
      %148 = sbr.rel (0) target = $region61
    $region60: #{tpu_custom_call.1} parent=1 // pred_region
      _
    $region61: #{tpu_custom_call.1} parent=1 // pred_fallthru
      _
    // Predicated region
    $region62: #{tpu_custom_call.1} parent=1 // pred_check
      _
    $region63: #{tpu_custom_call.1} parent=1 // pred_check_branch
      %150 = sbr.rel (0) target = $region65
    $region64: #{tpu_custom_call.1} parent=1 // pred_region
      %151 = dma.done [#allocation3], 64
    $region65: #{tpu_custom_call.1} parent=1 // pred_fallthru
      _
    // Predicated region
    $region66: #{tpu_custom_call.1} parent=1 // pred_check
      _
    $region67: #{tpu_custom_call.1} parent=1 // pred_check_branch
      %153 = sbr.rel (0) target = $region69
    $region68: #{tpu_custom_call.1} parent=1 // pred_region
      %154 = dma.done [#allocation6], 512
    $region69: #{tpu_custom_call.1} parent=1 // pred_fallthru
      _
    // Predicated region
    $region70: #{tpu_custom_call.1} parent=1 // pred_check
      _
    $region71: #{tpu_custom_call.1} parent=1 // pred_check_branch
      %156 = sbr.rel (0) target = $region73
    $region72: #{tpu_custom_call.1} parent=1 // pred_region
      %157 = dma.done [#allocation6], 512
    $region73: #{tpu_custom_call.1} parent=1 // pred_fallthru
      _
    // Predicated region
    $region74: #{tpu_custom_call.1} parent=1 // pred_check
      _
    $region75: #{tpu_custom_call.1} parent=1 // pred_check_branch
      %159 = sbr.rel (0) target = $region77
    $region76: #{tpu_custom_call.1} parent=1 // pred_region
      %160 = dma.done [#allocation9], 16
    $region77: #{tpu_custom_call.1} parent=1 // pred_fallthru
      _
    // Predicated region
    $region78: #{tpu_custom_call.1} parent=1 // pred_check
      _
    $region79: #{tpu_custom_call.1} parent=1 // pred_check_branch
      %162 = sbr.rel (0) target = $region81
    $region80: #{tpu_custom_call.1} parent=1 // pred_region
      %163 = dma.done [#allocation9], 512
    $region81: #{tpu_custom_call.1} parent=1 // pred_fallthru
      _
    // Predicated region
    $region82: #{tpu_custom_call.1} parent=1 // pred_check
      _
    $region83: #{tpu_custom_call.1} parent=1 // pred_check_branch
      %165 = sbr.rel (0) target = $region85
    $region84: #{tpu_custom_call.1} parent=1 // pred_region
      %166 = dma.done [#allocation12], 512
    $region85: #{tpu_custom_call.1} parent=1 // pred_fallthru
      _
    // Predicated region
    $region86: #{tpu_custom_call.1} parent=1 // pred_check
      _
    $region87: #{tpu_custom_call.1} parent=1 // pred_check_branch
      %168 = sbr.rel (0) target = $region89
    $region88: #{tpu_custom_call.1} parent=1 // pred_region
      %169 = dma.done [#allocation12], 16
    $region89: #{tpu_custom_call.1} parent=1 // pred_fallthru
      _
    // Predicated region
    $region90: #{tpu_custom_call.1} parent=1 // pred_check
      _
    $region91: #{tpu_custom_call.1} parent=1 // pred_check_branch
      %171 = sbr.rel (0) target = $region93
    $region92: #{tpu_custom_call.1} parent=1 // pred_region
      %172 = dma.done [#allocation15], 512
    $region93: #{tpu_custom_call.1} parent=1 // pred_fallthru
      _
    // Predicated region
    $region94: #{tpu_custom_call.1} parent=1 // pred_check
      _
    $region95: #{tpu_custom_call.1} parent=1 // pred_check_branch
      %174 = sbr.rel (0) target = $region97
    $region96: #{tpu_custom_call.1} parent=1 // pred_region
      %175 = dma.done [#allocation15], 512
    $region97: #{tpu_custom_call.1} parent=1 // pred_fallthru
      _
    // Predicated region
    $region98: #{tpu_custom_call.1} parent=1 // pred_check
      _
    $region99: #{tpu_custom_call.1} parent=1 // pred_check_branch
      %177 = sbr.rel (0) target = $region101
    $region100: #{tpu_custom_call.1} parent=1 // pred_region
      %178 = dma.done [#allocation18], 16
    $region101: #{tpu_custom_call.1} parent=1 // pred_fallthru
      _
    %v179 = vld [vmem:[%s0] sm:$0xff]
    %v180 = vld [vmem:[%s0 + $0x8] sm:$0xff]
    %v181 = vld [vmem:[#allocation2] sm:$0xf]
    %v182 = vld [vmem:[%s3] sm:$0x1]
    %v184 = vlaneseq
    %v185 = vshrl.u32 %v184, 7
    %v186 = vsub.s32 0, %v185
    %v187 = vrot.slane %v182, %v186
    %vm189 = vcmask 31744
    %v191 = vsel %vm189, %v179, 0
    %v194 = vsel %vm189, %v180, 0
    %vm196 = vcmask 1043456
    %v198 = vsel %vm196, %v181, 0
    %200 = vmatprep.subr.mxu0 0.0
    %201 = vmatpush1.msra.mxu0 %v198
    %202 = vmatprep.subr.mxu0 0.0
    %203 = vmatpush1.msra.mxu0 0.0
    %204 = vmatprep.subr.mxu0 0.0
    %205 = vmatpush1.msra.mxu0 0.0
    %206 = vmatprep.subr.mxu0 0.0
    %207 = vmatpush1.msra.mxu0 0.0
    %208 = vmatprep.subr.mxu0 0.0
    %209 = vmatpush1.msra.mxu0 0.0
    %210 = vmatprep.subr.mxu0 0.0
    %211 = vmatpush1.msra.mxu0 0.0
    %212 = vmatprep.subr.mxu0 0.0
    %213 = vmatpush1.msra.mxu0 0.0
    %214 = vmatprep.subr.mxu0 0.0
    %215 = vmatpush1.msra.mxu0 0.0
    %216 = vmatprep.subr.mxu0 0.0
    %217 = vmatpush1.msra.mxu0 0.0
    %218 = vmatprep.subr.mxu0 0.0
    %219 = vmatpush1.msra.mxu0 0.0
    %220 = vmatprep.subr.mxu0 0.0
    %221 = vmatpush1.msra.mxu0 0.0
    %222 = vmatprep.subr.mxu0 0.0
    %223 = vmatpush1.msra.mxu0 0.0
    %224 = vmatprep.subr.mxu0 0.0
    %225 = vmatpush1.msra.mxu0 0.0
    %226 = vmatprep.subr.mxu0 0.0
    %227 = vmatpush1.msra.mxu0 0.0
    %228 = vmatprep.subr.mxu0 0.0
    %229 = vmatpush1.msra.mxu0 0.0
    %230 = vmatprep.subr.mxu0 0.0
    %231 = vmatpush1.msra.mxu0 0.0
    %232 = vmatprep.subr.mxu0 0.0
    %233 = vmatpush1.msra.mxu0 0.0
    %234 = vmatprep.subr.mxu0 0.0
    %235 = vmatpush1.msra.mxu0 0.0
    %236 = vmatprep.subr.mxu0 0.0
    %237 = vmatpush1.msra.mxu0 0.0
    %238 = vmatprep.subr.mxu0 0.0
    %239 = vmatpush1.msra.mxu0 0.0
    %240 = vmatprep.subr.mxu0 0.0
    %241 = vmatpush1.msra.mxu0 0.0
    %242 = vmatprep.subr.mxu0 0.0
    %243 = vmatpush1.msra.mxu0 0.0
    %244 = vmatprep.subr.mxu0 0.0
    %245 = vmatpush1.msra.mxu0 0.0
    %246 = vmatprep.subr.mxu0 0.0
    %247 = vmatpush1.msra.mxu0 0.0
    %248 = vmatprep.subr.mxu0 0.0
    %249 = vmatpush1.msra.mxu0 0.0
    %250 = vmatprep.subr.mxu0 0.0
    %251 = vmatpush1.msra.mxu0 0.0
    %252 = vmatprep.subr.mxu0 0.0
    %253 = vmatpush1.msra.mxu0 0.0
    %254 = vmatprep.subr.mxu0 0.0
    %255 = vmatpush1.msra.mxu0 0.0
    %256 = vmatprep.subr.mxu0 0.0
    %257 = vmatpush1.msra.mxu0 0.0
    %258 = vmatprep.subr.mxu0 0.0
    %259 = vmatpush1.msra.mxu0 0.0
    %260 = vmatprep.subr.mxu0 0.0
    %261 = vmatpush1.msra.mxu0 0.0
    %262 = vmatprep.subr.mxu0 0.0
    %263 = vmatpush1.msra.mxu0 0.0
    %264 = vmatprep.mubr.f32.mxu0 0.0
    %265 = vmatmul.mubr.f32.gmra.mrb[0].mxu0 %v191
    %v266 = vpop.f32.mrb[0].mxu0
    %v267 = vadd.f32 %v187, %v266
    %v268 = vpop.f32.mrb[0].mxu0
    %269 = vmatprep.mubr.f32.mxu0 0.0
    %270 = vmatmul.mubr.f32.gmra.mrb[0].mxu0 %v194
    %v271 = vpop.f32.mrb[0].mxu0
    %v272 = vadd.f32 %v187, %v271
    %v273 = vpop.f32.mrb[0].mxu0
    %274 = vdwg.mxu0
    %v275 = vld [vmem:[#allocation5] sm:$0xff]
    %v276 = vld [vmem:[#allocation5 + $0x8] sm:$0xff]
    %v277 = vld [vmem:[#allocation5 + $0x10] sm:$0xff]
    %v278 = vld [vmem:[#allocation5 + $0x18] sm:$0xff]
    %v279 = vld [vmem:[%s4] sm:$0xff]
    %v280 = vld [vmem:[%s4 + $0x8] sm:$0xff]
    %v281 = vld [vmem:[%s4 + $0x10] sm:$0xff]
    %v282 = vld [vmem:[%s4 + $0x18] sm:$0xff]
    %v283 = vld [vmem:[#allocation8] sm:$0x1]
    %v285 = vlaneseq
    %v286 = vshrl.u32 %v285, 7
    %v287 = vsub.s32 0, %v286
    %v288 = vrot.slane %v283, %v287
    %vm290 = vcmask 261120
    %v292 = vsel %vm290, 0.0, 0
    %294 = vmatprep.subr.mxu0 0.0
    %295 = vmatpush1.msra.mxu0 %v275
    %296 = vmatprep.subr.mxu0 0.0
    %297 = vmatpush1.msra.mxu0 %v276
    %298 = vmatprep.subr.mxu0 0.0
    %299 = vmatpush1.msra.mxu0 %v277
    %300 = vmatprep.subr.mxu0 0.0
    %301 = vmatpush1.msra.mxu0 %v278
    %302 = vmatprep.subr.mxu0 0.0
    %303 = vmatpush1.msra.mxu0 0.0
    %304 = vmatprep.subr.mxu0 0.0
    %305 = vmatpush1.msra.mxu0 0.0
    %306 = vmatprep.subr.mxu0 0.0
    %307 = vmatpush1.msra.mxu0 0.0
    %308 = vmatprep.subr.mxu0 0.0
    %309 = vmatpush1.msra.mxu0 0.0
    %310 = vmatprep.subr.mxu0 0.0
    %311 = vmatpush1.msra.mxu0 0.0
    %312 = vmatprep.subr.mxu0 0.0
    %313 = vmatpush1.msra.mxu0 0.0
    %314 = vmatprep.subr.mxu0 0.0
    %315 = vmatpush1.msra.mxu0 0.0
    %316 = vmatprep.subr.mxu0 0.0
    %317 = vmatpush1.msra.mxu0 0.0
    %318 = vmatprep.subr.mxu0 0.0
    %319 = vmatpush1.msra.mxu0 0.0
    %320 = vmatprep.subr.mxu0 0.0
    %321 = vmatpush1.msra.mxu0 0.0
    %322 = vmatprep.subr.mxu0 0.0
    %323 = vmatpush1.msra.mxu0 0.0
    %324 = vmatprep.subr.mxu0 0.0
    %325 = vmatpush1.msra.mxu0 0.0
    %326 = vmatprep.subr.mxu0 0.0
    %327 = vmatpush1.msra.mxu0 0.0
    %328 = vmatprep.subr.mxu0 0.0
    %329 = vmatpush1.msra.mxu0 0.0
    %330 = vmatprep.subr.mxu0 0.0
    %331 = vmatpush1.msra.mxu0 0.0
    %332 = vmatprep.subr.mxu0 0.0
    %333 = vmatpush1.msra.mxu0 0.0
    %334 = vmatprep.subr.mxu0 0.0
    %335 = vmatpush1.msra.mxu0 0.0
    %336 = vmatprep.subr.mxu0 0.0
    %337 = vmatpush1.msra.mxu0 0.0
    %338 = vmatprep.subr.mxu0 0.0
    %339 = vmatpush1.msra.mxu0 0.0
    %340 = vmatprep.subr.mxu0 0.0
    %341 = vmatpush1.msra.mxu0 0.0
    %342 = vmatprep.subr.mxu0 0.0
    %343 = vmatpush1.msra.mxu0 0.0
    %344 = vmatprep.subr.mxu0 0.0
    %345 = vmatpush1.msra.mxu0 0.0
    %346 = vmatprep.subr.mxu0 0.0
    %347 = vmatpush1.msra.mxu0 0.0
    %348 = vmatprep.subr.mxu0 0.0
    %349 = vmatpush1.msra.mxu0 0.0
    %350 = vmatprep.subr.mxu0 0.0
    %351 = vmatpush1.msra.mxu0 0.0
    %352 = vmatprep.subr.mxu0 0.0
    %353 = vmatpush1.msra.mxu0 0.0
    %354 = vmatprep.subr.mxu0 0.0
    %355 = vmatpush1.msra.mxu0 0.0
    %356 = vmatprep.subr.mxu0 0.0
    %357 = vmatpush1.msra.mxu0 0.0
    %358 = vmatprep.mubr.f32.mxu0 0.0
    %359 = vmatmul.mubr.f32.gmra.mrb[0].mxu0 %v292
    %v360 = vpop.f32.mrb[0].mxu0
    %v361 = vadd.f32 0.0, %v360
    %v362 = vpop.f32.mrb[0].mxu0
    %363 = vdwg.mxu0
    %v364 = vadd.f32 %v267, %v361
    %v365 = vmul.f32 %v364, 0.5
    %v366 = vtanh.pop %v365
    %v367 = vmul.f32 %v366, 0.5
    %v368 = vadd.f32 %v367, 0.5
    %v369 = vtanh.pop %v364
    %v370 = vmul.f32 %v368, 0.0
    %372 = vrot.lane.b32.xlu0 %v369, 64
    %v373 = vpop.permute.xlu0 %372
    %v375 = vmul.f32 %v368, %v373
    %377 = vrot.lane.b32.xlu0 %v375, 32
    %v378 = vpop.permute.xlu0 %377
    %v380 = vadd.f32 %v370, %v378
    %v381 = vtanh.pop %v380
    %383 = vrot.lane.b32.xlu0 %v381, 64
    %v384 = vpop.permute.xlu0 %383
    %v386 = vmul.f32 %v368, %v384
    %388 = vrot.lane.b32.xlu0 %v386, 32
    %v389 = vpop.permute.xlu0 %388
    %v390 = vsel %vm290, %v389, 0
    %392 = vmatprep.subr.mxu0 0.0
    %393 = vmatpush1.msra.mxu0 %v279
    %394 = vmatprep.subr.mxu0 0.0
    %395 = vmatpush1.msra.mxu0 %v280
    %396 = vmatprep.subr.mxu0 0.0
    %397 = vmatpush1.msra.mxu0 %v281
    %398 = vmatprep.subr.mxu0 0.0
    %399 = vmatpush1.msra.mxu0 %v282
    %400 = vmatprep.subr.mxu0 0.0
    %401 = vmatpush1.msra.mxu0 0.0
    %402 = vmatprep.subr.mxu0 0.0
    %403 = vmatpush1.msra.mxu0 0.0
    %404 = vmatprep.subr.mxu0 0.0
    %405 = vmatpush1.msra.mxu0 0.0
    %406 = vmatprep.subr.mxu0 0.0
    %407 = vmatpush1.msra.mxu0 0.0
    %408 = vmatprep.subr.mxu0 0.0
    %409 = vmatpush1.msra.mxu0 0.0
    %410 = vmatprep.subr.mxu0 0.0
    %411 = vmatpush1.msra.mxu0 0.0
    %412 = vmatprep.subr.mxu0 0.0
    %413 = vmatpush1.msra.mxu0 0.0
    %414 = vmatprep.subr.mxu0 0.0
    %415 = vmatpush1.msra.mxu0 0.0
    %416 = vmatprep.subr.mxu0 0.0
    %417 = vmatpush1.msra.mxu0 0.0
    %418 = vmatprep.subr.mxu0 0.0
    %419 = vmatpush1.msra.mxu0 0.0
    %420 = vmatprep.subr.mxu0 0.0
    %421 = vmatpush1.msra.mxu0 0.0
    %422 = vmatprep.subr.mxu0 0.0
    %423 = vmatpush1.msra.mxu0 0.0
    %424 = vmatprep.subr.mxu0 0.0
    %425 = vmatpush1.msra.mxu0 0.0
    %426 = vmatprep.subr.mxu0 0.0
    %427 = vmatpush1.msra.mxu0 0.0
    %428 = vmatprep.subr.mxu0 0.0
    %429 = vmatpush1.msra.mxu0 0.0
    %430 = vmatprep.subr.mxu0 0.0
    %431 = vmatpush1.msra.mxu0 0.0
    %432 = vmatprep.subr.mxu0 0.0
    %433 = vmatpush1.msra.mxu0 0.0
    %434 = vmatprep.subr.mxu0 0.0
    %435 = vmatpush1.msra.mxu0 0.0
    %436 = vmatprep.subr.mxu0 0.0
    %437 = vmatpush1.msra.mxu0 0.0
    %438 = vmatprep.subr.mxu0 0.0
    %439 = vmatpush1.msra.mxu0 0.0
    %440 = vmatprep.subr.mxu0 0.0
    %441 = vmatpush1.msra.mxu0 0.0
    %442 = vmatprep.subr.mxu0 0.0
    %443 = vmatpush1.msra.mxu0 0.0
    %444 = vmatprep.subr.mxu0 0.0
    %445 = vmatpush1.msra.mxu0 0.0
    %446 = vmatprep.subr.mxu0 0.0
    %447 = vmatpush1.msra.mxu0 0.0
    %448 = vmatprep.subr.mxu0 0.0
    %449 = vmatpush1.msra.mxu0 0.0
    %450 = vmatprep.subr.mxu0 0.0
    %451 = vmatpush1.msra.mxu0 0.0
    %452 = vmatprep.subr.mxu0 0.0
    %453 = vmatpush1.msra.mxu0 0.0
    %454 = vmatprep.subr.mxu0 0.0
    %455 = vmatpush1.msra.mxu0 0.0
    %456 = vmatprep.mubr.f32.mxu0 0.0
    %457 = vmatmul.mubr.f32.gmra.mrb[0].mxu0 %v390
    %v458 = vpop.f32.mrb[0].mxu0
    %v459 = vadd.f32 %v288, %v458
    %v460 = vpop.f32.mrb[0].mxu0
    %461 = vdwg.mxu0
    %462 = vmatprep.subr.mxu0 0.0
    %463 = vmatpush1.msra.mxu0 %v275
    %464 = vmatprep.subr.mxu0 0.0
    %465 = vmatpush1.msra.mxu0 %v276
    %466 = vmatprep.subr.mxu0 0.0
    %467 = vmatpush1.msra.mxu0 %v277
    %468 = vmatprep.subr.mxu0 0.0
    %469 = vmatpush1.msra.mxu0 %v278
    %470 = vmatprep.subr.mxu0 0.0
    %471 = vmatpush1.msra.mxu0 0.0
    %472 = vmatprep.subr.mxu0 0.0
    %473 = vmatpush1.msra.mxu0 0.0
    %474 = vmatprep.subr.mxu0 0.0
    %475 = vmatpush1.msra.mxu0 0.0
    %476 = vmatprep.subr.mxu0 0.0
    %477 = vmatpush1.msra.mxu0 0.0
    %478 = vmatprep.subr.mxu0 0.0
    %479 = vmatpush1.msra.mxu0 0.0
    %480 = vmatprep.subr.mxu0 0.0
    %481 = vmatpush1.msra.mxu0 0.0
    %482 = vmatprep.subr.mxu0 0.0
    %483 = vmatpush1.msra.mxu0 0.0
    %484 = vmatprep.subr.mxu0 0.0
    %485 = vmatpush1.msra.mxu0 0.0
    %486 = vmatprep.subr.mxu0 0.0
    %487 = vmatpush1.msra.mxu0 0.0
    %488 = vmatprep.subr.mxu0 0.0
    %489 = vmatpush1.msra.mxu0 0.0
    %490 = vmatprep.subr.mxu0 0.0
    %491 = vmatpush1.msra.mxu0 0.0
    %492 = vmatprep.subr.mxu0 0.0
    %493 = vmatpush1.msra.mxu0 0.0
    %494 = vmatprep.subr.mxu0 0.0
    %495 = vmatpush1.msra.mxu0 0.0
    %496 = vmatprep.subr.mxu0 0.0
    %497 = vmatpush1.msra.mxu0 0.0
    %498 = vmatprep.subr.mxu0 0.0
    %499 = vmatpush1.msra.mxu0 0.0
    %500 = vmatprep.subr.mxu0 0.0
    %501 = vmatpush1.msra.mxu0 0.0
    %502 = vmatprep.subr.mxu0 0.0
    %503 = vmatpush1.msra.mxu0 0.0
    %504 = vmatprep.subr.mxu0 0.0
    %505 = vmatpush1.msra.mxu0 0.0
    %506 = vmatprep.subr.mxu0 0.0
    %507 = vmatpush1.msra.mxu0 0.0
    %508 = vmatprep.subr.mxu0 0.0
    %509 = vmatpush1.msra.mxu0 0.0
    %510 = vmatprep.subr.mxu0 0.0
    %511 = vmatpush1.msra.mxu0 0.0
    %512 = vmatprep.subr.mxu0 0.0
    %513 = vmatpush1.msra.mxu0 0.0
    %514 = vmatprep.subr.mxu0 0.0
    %515 = vmatpush1.msra.mxu0 0.0
    %516 = vmatprep.subr.mxu0 0.0
    %517 = vmatpush1.msra.mxu0 0.0
    %518 = vmatprep.subr.mxu0 0.0
    %519 = vmatpush1.msra.mxu0 0.0
    %520 = vmatprep.subr.mxu0 0.0
    %521 = vmatpush1.msra.mxu0 0.0
    %522 = vmatprep.subr.mxu0 0.0
    %523 = vmatpush1.msra.mxu0 0.0
    %524 = vmatprep.subr.mxu0 0.0
    %525 = vmatpush1.msra.mxu0 0.0
    %526 = vmatprep.mubr.f32.mxu0 0.0
    %527 = vmatmul.mubr.f32.gmra.mrb[0].mxu0 %v390
    %v528 = vpop.f32.mrb[0].mxu0
    %v529 = vadd.f32 0.0, %v528
    %v530 = vpop.f32.mrb[0].mxu0
    %531 = vdwg.mxu0
    %v533 = vrot.slane %v529, 6
    %v535 = vadd.f32 %v267, %v533
    %v536 = vmul.f32 %v535, 0.5
    %v537 = vtanh.pop %v536
    %v538 = vmul.f32 %v537, 0.5
    %v539 = vadd.f32 %v538, 0.5
    %v540 = vtanh.pop %v535
    %v542 = vrot.slane %v380, 6
    %v544 = vmul.f32 %v539, %v542
    %546 = vrot.lane.b32.xlu0 %v540, 64
    %v547 = vpop.permute.xlu0 %546
    %v549 = vmul.f32 %v539, %v547
    %551 = vrot.lane.b32.xlu0 %v549, 32
    %v552 = vpop.permute.xlu0 %551
    %v554 = vadd.f32 %v544, %v552
    %v555 = vtanh.pop %v554
    %557 = vrot.lane.b32.xlu0 %v555, 64
    %v558 = vpop.permute.xlu0 %557
    %v560 = vmul.f32 %v539, %v558
    %v562 = vrot.slane %v560, 2
    %563 = vrot.lane.b32.xlu0 %v562, 32
    %v564 = vpop.permute.xlu0 %563
    %v565 = vsel %vm290, %v564, 0
    %567 = vmatprep.subr.mxu0 0.0
    %568 = vmatpush1.msra.mxu0 %v279
    %569 = vmatprep.subr.mxu0 0.0
    %570 = vmatpush1.msra.mxu0 %v280
    %571 = vmatprep.subr.mxu0 0.0
    %572 = vmatpush1.msra.mxu0 %v281
    %573 = vmatprep.subr.mxu0 0.0
    %574 = vmatpush1.msra.mxu0 %v282
    %575 = vmatprep.subr.mxu0 0.0
    %576 = vmatpush1.msra.mxu0 0.0
    %577 = vmatprep.subr.mxu0 0.0
    %578 = vmatpush1.msra.mxu0 0.0
    %579 = vmatprep.subr.mxu0 0.0
    %580 = vmatpush1.msra.mxu0 0.0
    %581 = vmatprep.subr.mxu0 0.0
    %582 = vmatpush1.msra.mxu0 0.0
    %583 = vmatprep.subr.mxu0 0.0
    %584 = vmatpush1.msra.mxu0 0.0
    %585 = vmatprep.subr.mxu0 0.0
    %586 = vmatpush1.msra.mxu0 0.0
    %587 = vmatprep.subr.mxu0 0.0
    %588 = vmatpush1.msra.mxu0 0.0
    %589 = vmatprep.subr.mxu0 0.0
    %590 = vmatpush1.msra.mxu0 0.0
    %591 = vmatprep.subr.mxu0 0.0
    %592 = vmatpush1.msra.mxu0 0.0
    %593 = vmatprep.subr.mxu0 0.0
    %594 = vmatpush1.msra.mxu0 0.0
    %595 = vmatprep.subr.mxu0 0.0
    %596 = vmatpush1.msra.mxu0 0.0
    %597 = vmatprep.subr.mxu0 0.0
    %598 = vmatpush1.msra.mxu0 0.0
    %599 = vmatprep.subr.mxu0 0.0
    %600 = vmatpush1.msra.mxu0 0.0
    %601 = vmatprep.subr.mxu0 0.0
    %602 = vmatpush1.msra.mxu0 0.0
    %603 = vmatprep.subr.mxu0 0.0
    %604 = vmatpush1.msra.mxu0 0.0
    %605 = vmatprep.subr.mxu0 0.0
    %606 = vmatpush1.msra.mxu0 0.0
    %607 = vmatprep.subr.mxu0 0.0
    %608 = vmatpush1.msra.mxu0 0.0
    %609 = vmatprep.subr.mxu0 0.0
    %610 = vmatpush1.msra.mxu0 0.0
    %611 = vmatprep.subr.mxu0 0.0
    %612 = vmatpush1.msra.mxu0 0.0
    %613 = vmatprep.subr.mxu0 0.0
    %614 = vmatpush1.msra.mxu0 0.0
    %615 = vmatprep.subr.mxu0 0.0
    %616 = vmatpush1.msra.mxu0 0.0
    %617 = vmatprep.subr.mxu0 0.0
    %618 = vmatpush1.msra.mxu0 0.0
    %619 = vmatprep.subr.mxu0 0.0
    %620 = vmatpush1.msra.mxu0 0.0
    %621 = vmatprep.subr.mxu0 0.0
    %622 = vmatpush1.msra.mxu0 0.0
    %623 = vmatprep.subr.mxu0 0.0
    %624 = vmatpush1.msra.mxu0 0.0
    %625 = vmatprep.subr.mxu0 0.0
    %626 = vmatpush1.msra.mxu0 0.0
    %627 = vmatprep.subr.mxu0 0.0
    %628 = vmatpush1.msra.mxu0 0.0
    %629 = vmatprep.subr.mxu0 0.0
    %630 = vmatpush1.msra.mxu0 0.0
    %631 = vmatprep.mubr.f32.mxu0 0.0
    %632 = vmatmul.mubr.f32.gmra.mrb[0].mxu0 %v565
    %v633 = vpop.f32.mrb[0].mxu0
    %v634 = vadd.f32 %v288, %v633
    %v635 = vpop.f32.mrb[0].mxu0
    %636 = vdwg.mxu0
    %637 = vmatprep.subr.mxu0 0.0
    %638 = vmatpush1.msra.mxu0 %v275
    %639 = vmatprep.subr.mxu0 0.0
    %640 = vmatpush1.msra.mxu0 %v276
    %641 = vmatprep.subr.mxu0 0.0
    %642 = vmatpush1.msra.mxu0 %v277
    %643 = vmatprep.subr.mxu0 0.0
    %644 = vmatpush1.msra.mxu0 %v278
    %645 = vmatprep.subr.mxu0 0.0
    %646 = vmatpush1.msra.mxu0 0.0
    %647 = vmatprep.subr.mxu0 0.0
    %648 = vmatpush1.msra.mxu0 0.0
    %649 = vmatprep.subr.mxu0 0.0
    %650 = vmatpush1.msra.mxu0 0.0
    %651 = vmatprep.subr.mxu0 0.0
    %652 = vmatpush1.msra.mxu0 0.0
    %653 = vmatprep.subr.mxu0 0.0
    %654 = vmatpush1.msra.mxu0 0.0
    %655 = vmatprep.subr.mxu0 0.0
    %656 = vmatpush1.msra.mxu0 0.0
    %657 = vmatprep.subr.mxu0 0.0
    %658 = vmatpush1.msra.mxu0 0.0
    %659 = vmatprep.subr.mxu0 0.0
    %660 = vmatpush1.msra.mxu0 0.0
    %661 = vmatprep.subr.mxu0 0.0
    %662 = vmatpush1.msra.mxu0 0.0
    %663 = vmatprep.subr.mxu0 0.0
    %664 = vmatpush1.msra.mxu0 0.0
    %665 = vmatprep.subr.mxu0 0.0
    %666 = vmatpush1.msra.mxu0 0.0
    %667 = vmatprep.subr.mxu0 0.0
    %668 = vmatpush1.msra.mxu0 0.0
    %669 = vmatprep.subr.mxu0 0.0
    %670 = vmatpush1.msra.mxu0 0.0
    %671 = vmatprep.subr.mxu0 0.0
    %672 = vmatpush1.msra.mxu0 0.0
    %673 = vmatprep.subr.mxu0 0.0
    %674 = vmatpush1.msra.mxu0 0.0
    %675 = vmatprep.subr.mxu0 0.0
    %676 = vmatpush1.msra.mxu0 0.0
    %677 = vmatprep.subr.mxu0 0.0
    %678 = vmatpush1.msra.mxu0 0.0
    %679 = vmatprep.subr.mxu0 0.0
    %680 = vmatpush1.msra.mxu0 0.0
    %681 = vmatprep.subr.mxu0 0.0
    %682 = vmatpush1.msra.mxu0 0.0
    %683 = vmatprep.subr.mxu0 0.0
    %684 = vmatpush1.msra.mxu0 0.0
    %685 = vmatprep.subr.mxu0 0.0
    %686 = vmatpush1.msra.mxu0 0.0
    %687 = vmatprep.subr.mxu0 0.0
    %688 = vmatpush1.msra.mxu0 0.0
    %689 = vmatprep.subr.mxu0 0.0
    %690 = vmatpush1.msra.mxu0 0.0
    %691 = vmatprep.subr.mxu0 0.0
    %692 = vmatpush1.msra.mxu0 0.0
    %693 = vmatprep.subr.mxu0 0.0
    %694 = vmatpush1.msra.mxu0 0.0
    %695 = vmatprep.subr.mxu0 0.0
    %696 = vmatpush1.msra.mxu0 0.0
    %697 = vmatprep.subr.mxu0 0.0
    %698 = vmatpush1.msra.mxu0 0.0
    %699 = vmatprep.subr.mxu0 0.0
    %700 = vmatpush1.msra.mxu0 0.0
    %701 = vmatprep.mubr.f32.mxu0 0.0
    %702 = vmatmul.mubr.f32.gmra.mrb[0].mxu0 %v565
    %v703 = vpop.f32.mrb[0].mxu0
    %v704 = vadd.f32 0.0, %v703
    %v705 = vpop.f32.mrb[0].mxu0
    %706 = vdwg.mxu0
    %v708 = vrot.slane %v704, 4
    %v710 = vadd.f32 %v267, %v708
    %v711 = vmul.f32 %v710, 0.5
    %v712 = vtanh.pop %v711
    %v713 = vmul.f32 %v712, 0.5
    %v714 = vadd.f32 %v713, 0.5
    %v715 = vtanh.pop %v710
    %v717 = vrot.slane %v554, 6
    %v719 = vmul.f32 %v714, %v717
    %721 = vrot.lane.b32.xlu0 %v715, 64
    %v722 = vpop.permute.xlu0 %721
    %v724 = vmul.f32 %v714, %v722
    %726 = vrot.lane.b32.xlu0 %v724, 32
    %v727 = vpop.permute.xlu0 %726
    %v729 = vadd.f32 %v719, %v727
    %v730 = vtanh.pop %v729
    %732 = vrot.lane.b32.xlu0 %v730, 64
    %v733 = vpop.permute.xlu0 %732
    %v735 = vmul.f32 %v714, %v733
    %v737 = vrot.slane %v735, 4
    %738 = vrot.lane.b32.xlu0 %v737, 32
    %v739 = vpop.permute.xlu0 %738
    %v740 = vsel %vm290, %v739, 0
    %742 = vmatprep.subr.mxu0 0.0
    %743 = vmatpush1.msra.mxu0 %v279
    %744 = vmatprep.subr.mxu0 0.0
    %745 = vmatpush1.msra.mxu0 %v280
    %746 = vmatprep.subr.mxu0 0.0
    %747 = vmatpush1.msra.mxu0 %v281
    %748 = vmatprep.subr.mxu0 0.0
    %749 = vmatpush1.msra.mxu0 %v282
    %750 = vmatprep.subr.mxu0 0.0
    %751 = vmatpush1.msra.mxu0 0.0
    %752 = vmatprep.subr.mxu0 0.0
    %753 = vmatpush1.msra.mxu0 0.0
    %754 = vmatprep.subr.mxu0 0.0
    %755 = vmatpush1.msra.mxu0 0.0
    %756 = vmatprep.subr.mxu0 0.0
    %757 = vmatpush1.msra.mxu0 0.0
    %758 = vmatprep.subr.mxu0 0.0
    %759 = vmatpush1.msra.mxu0 0.0
    %760 = vmatprep.subr.mxu0 0.0
    %761 = vmatpush1.msra.mxu0 0.0
    %762 = vmatprep.subr.mxu0 0.0
    %763 = vmatpush1.msra.mxu0 0.0
    %764 = vmatprep.subr.mxu0 0.0
    %765 = vmatpush1.msra.mxu0 0.0
    %766 = vmatprep.subr.mxu0 0.0
    %767 = vmatpush1.msra.mxu0 0.0
    %768 = vmatprep.subr.mxu0 0.0
    %769 = vmatpush1.msra.mxu0 0.0
    %770 = vmatprep.subr.mxu0 0.0
    %771 = vmatpush1.msra.mxu0 0.0
    %772 = vmatprep.subr.mxu0 0.0
    %773 = vmatpush1.msra.mxu0 0.0
    %774 = vmatprep.subr.mxu0 0.0
    %775 = vmatpush1.msra.mxu0 0.0
    %776 = vmatprep.subr.mxu0 0.0
    %777 = vmatpush1.msra.mxu0 0.0
    %778 = vmatprep.subr.mxu0 0.0
    %779 = vmatpush1.msra.mxu0 0.0
    %780 = vmatprep.subr.mxu0 0.0
    %781 = vmatpush1.msra.mxu0 0.0
    %782 = vmatprep.subr.mxu0 0.0
    %783 = vmatpush1.msra.mxu0 0.0
    %784 = vmatprep.subr.mxu0 0.0
    %785 = vmatpush1.msra.mxu0 0.0
    %786 = vmatprep.subr.mxu0 0.0
    %787 = vmatpush1.msra.mxu0 0.0
    %788 = vmatprep.subr.mxu0 0.0
    %789 = vmatpush1.msra.mxu0 0.0
    %790 = vmatprep.subr.mxu0 0.0
    %791 = vmatpush1.msra.mxu0 0.0
    %792 = vmatprep.subr.mxu0 0.0
    %793 = vmatpush1.msra.mxu0 0.0
    %794 = vmatprep.subr.mxu0 0.0
    %795 = vmatpush1.msra.mxu0 0.0
    %796 = vmatprep.subr.mxu0 0.0
    %797 = vmatpush1.msra.mxu0 0.0
    %798 = vmatprep.subr.mxu0 0.0
    %799 = vmatpush1.msra.mxu0 0.0
    %800 = vmatprep.subr.mxu0 0.0
    %801 = vmatpush1.msra.mxu0 0.0
    %802 = vmatprep.subr.mxu0 0.0
    %803 = vmatpush1.msra.mxu0 0.0
    %804 = vmatprep.subr.mxu0 0.0
    %805 = vmatpush1.msra.mxu0 0.0
    %806 = vmatprep.mubr.f32.mxu0 0.0
    %807 = vmatmul.mubr.f32.gmra.mrb[0].mxu0 %v740
    %v808 = vpop.f32.mrb[0].mxu0
    %v809 = vadd.f32 %v288, %v808
    %v810 = vpop.f32.mrb[0].mxu0
    %811 = vdwg.mxu0
    %812 = vmatprep.subr.mxu0 0.0
    %813 = vmatpush1.msra.mxu0 %v275
    %814 = vmatprep.subr.mxu0 0.0
    %815 = vmatpush1.msra.mxu0 %v276
    %816 = vmatprep.subr.mxu0 0.0
    %817 = vmatpush1.msra.mxu0 %v277
    %818 = vmatprep.subr.mxu0 0.0
    %819 = vmatpush1.msra.mxu0 %v278
    %820 = vmatprep.subr.mxu0 0.0
    %821 = vmatpush1.msra.mxu0 0.0
    %822 = vmatprep.subr.mxu0 0.0
    %823 = vmatpush1.msra.mxu0 0.0
    %824 = vmatprep.subr.mxu0 0.0
    %825 = vmatpush1.msra.mxu0 0.0
    %826 = vmatprep.subr.mxu0 0.0
    %827 = vmatpush1.msra.mxu0 0.0
    %828 = vmatprep.subr.mxu0 0.0
    %829 = vmatpush1.msra.mxu0 0.0
    %830 = vmatprep.subr.mxu0 0.0
    %831 = vmatpush1.msra.mxu0 0.0
    %832 = vmatprep.subr.mxu0 0.0
    %833 = vmatpush1.msra.mxu0 0.0
    %834 = vmatprep.subr.mxu0 0.0
    %835 = vmatpush1.msra.mxu0 0.0
    %836 = vmatprep.subr.mxu0 0.0
    %837 = vmatpush1.msra.mxu0 0.0
    %838 = vmatprep.subr.mxu0 0.0
    %839 = vmatpush1.msra.mxu0 0.0
    %840 = vmatprep.subr.mxu0 0.0
    %841 = vmatpush1.msra.mxu0 0.0
    %842 = vmatprep.subr.mxu0 0.0
    %843 = vmatpush1.msra.mxu0 0.0
    %844 = vmatprep.subr.mxu0 0.0
    %845 = vmatpush1.msra.mxu0 0.0
    %846 = vmatprep.subr.mxu0 0.0
    %847 = vmatpush1.msra.mxu0 0.0
    %848 = vmatprep.subr.mxu0 0.0
    %849 = vmatpush1.msra.mxu0 0.0
    %850 = vmatprep.subr.mxu0 0.0
    %851 = vmatpush1.msra.mxu0 0.0
    %852 = vmatprep.subr.mxu0 0.0
    %853 = vmatpush1.msra.mxu0 0.0
    %854 = vmatprep.subr.mxu0 0.0
    %855 = vmatpush1.msra.mxu0 0.0
    %856 = vmatprep.subr.mxu0 0.0
    %857 = vmatpush1.msra.mxu0 0.0
    %858 = vmatprep.subr.mxu0 0.0
    %859 = vmatpush1.msra.mxu0 0.0
    %860 = vmatprep.subr.mxu0 0.0
    %861 = vmatpush1.msra.mxu0 0.0
    %862 = vmatprep.subr.mxu0 0.0
    %863 = vmatpush1.msra.mxu0 0.0
    %864 = vmatprep.subr.mxu0 0.0
    %865 = vmatpush1.msra.mxu0 0.0
    %866 = vmatprep.subr.mxu0 0.0
    %867 = vmatpush1.msra.mxu0 0.0
    %868 = vmatprep.subr.mxu0 0.0
    %869 = vmatpush1.msra.mxu0 0.0
    %870 = vmatprep.subr.mxu0 0.0
    %871 = vmatpush1.msra.mxu0 0.0
    %872 = vmatprep.subr.mxu0 0.0
    %873 = vmatpush1.msra.mxu0 0.0
    %874 = vmatprep.subr.mxu0 0.0
    %875 = vmatpush1.msra.mxu0 0.0
    %876 = vmatprep.mubr.f32.mxu0 0.0
    %877 = vmatmul.mubr.f32.gmra.mrb[0].mxu0 %v740
    %v878 = vpop.f32.mrb[0].mxu0
    %v879 = vadd.f32 0.0, %v878
    %v880 = vpop.f32.mrb[0].mxu0
    %881 = vdwg.mxu0
    %v883 = vrot.slane %v879, 2
    %v885 = vadd.f32 %v267, %v883
    %v886 = vmul.f32 %v885, 0.5
    %v887 = vtanh.pop %v886
    %v888 = vmul.f32 %v887, 0.5
    %v889 = vadd.f32 %v888, 0.5
    %v890 = vtanh.pop %v885
    %v892 = vrot.slane %v729, 6
    %v894 = vmul.f32 %v889, %v892
    %896 = vrot.lane.b32.xlu0 %v890, 64
    %v897 = vpop.permute.xlu0 %896
    %v899 = vmul.f32 %v889, %v897
    %901 = vrot.lane.b32.xlu0 %v899, 32
    %v902 = vpop.permute.xlu0 %901
    %v904 = vadd.f32 %v894, %v902
    %v905 = vtanh.pop %v904
    %907 = vrot.lane.b32.xlu0 %v905, 64
    %v908 = vpop.permute.xlu0 %907
    %v910 = vmul.f32 %v889, %v908
    %v912 = vrot.slane %v910, 6
    %913 = vrot.lane.b32.xlu0 %v912, 32
    %v914 = vpop.permute.xlu0 %913
    %v915 = vsel %vm290, %v914, 0
    %917 = vmatprep.subr.mxu0 0.0
    %918 = vmatpush1.msra.mxu0 %v279
    %919 = vmatprep.subr.mxu0 0.0
    %920 = vmatpush1.msra.mxu0 %v280
    %921 = vmatprep.subr.mxu0 0.0
    %922 = vmatpush1.msra.mxu0 %v281
    %923 = vmatprep.subr.mxu0 0.0
    %924 = vmatpush1.msra.mxu0 %v282
    %925 = vmatprep.subr.mxu0 0.0
    %926 = vmatpush1.msra.mxu0 0.0
    %927 = vmatprep.subr.mxu0 0.0
    %928 = vmatpush1.msra.mxu0 0.0
    %929 = vmatprep.subr.mxu0 0.0
    %930 = vmatpush1.msra.mxu0 0.0
    %931 = vmatprep.subr.mxu0 0.0
    %932 = vmatpush1.msra.mxu0 0.0
    %933 = vmatprep.subr.mxu0 0.0
    %934 = vmatpush1.msra.mxu0 0.0
    %935 = vmatprep.subr.mxu0 0.0
    %936 = vmatpush1.msra.mxu0 0.0
    %937 = vmatprep.subr.mxu0 0.0
    %938 = vmatpush1.msra.mxu0 0.0
    %939 = vmatprep.subr.mxu0 0.0
    %940 = vmatpush1.msra.mxu0 0.0
    %941 = vmatprep.subr.mxu0 0.0
    %942 = vmatpush1.msra.mxu0 0.0
    %943 = vmatprep.subr.mxu0 0.0
    %944 = vmatpush1.msra.mxu0 0.0
    %945 = vmatprep.subr.mxu0 0.0
    %946 = vmatpush1.msra.mxu0 0.0
    %947 = vmatprep.subr.mxu0 0.0
    %948 = vmatpush1.msra.mxu0 0.0
    %949 = vmatprep.subr.mxu0 0.0
    %950 = vmatpush1.msra.mxu0 0.0
    %951 = vmatprep.subr.mxu0 0.0
    %952 = vmatpush1.msra.mxu0 0.0
    %953 = vmatprep.subr.mxu0 0.0
    %954 = vmatpush1.msra.mxu0 0.0
    %955 = vmatprep.subr.mxu0 0.0
    %956 = vmatpush1.msra.mxu0 0.0
    %957 = vmatprep.subr.mxu0 0.0
    %958 = vmatpush1.msra.mxu0 0.0
    %959 = vmatprep.subr.mxu0 0.0
    %960 = vmatpush1.msra.mxu0 0.0
    %961 = vmatprep.subr.mxu0 0.0
    %962 = vmatpush1.msra.mxu0 0.0
    %963 = vmatprep.subr.mxu0 0.0
    %964 = vmatpush1.msra.mxu0 0.0
    %965 = vmatprep.subr.mxu0 0.0
    %966 = vmatpush1.msra.mxu0 0.0
    %967 = vmatprep.subr.mxu0 0.0
    %968 = vmatpush1.msra.mxu0 0.0
    %969 = vmatprep.subr.mxu0 0.0
    %970 = vmatpush1.msra.mxu0 0.0
    %971 = vmatprep.subr.mxu0 0.0
    %972 = vmatpush1.msra.mxu0 0.0
    %973 = vmatprep.subr.mxu0 0.0
    %974 = vmatpush1.msra.mxu0 0.0
    %975 = vmatprep.subr.mxu0 0.0
    %976 = vmatpush1.msra.mxu0 0.0
    %977 = vmatprep.subr.mxu0 0.0
    %978 = vmatpush1.msra.mxu0 0.0
    %979 = vmatprep.subr.mxu0 0.0
    %980 = vmatpush1.msra.mxu0 0.0
    %981 = vmatprep.mubr.f32.mxu0 0.0
    %982 = vmatmul.mubr.f32.gmra.mrb[0].mxu0 %v915
    %v983 = vpop.f32.mrb[0].mxu0
    %v984 = vadd.f32 %v288, %v983
    %v985 = vpop.f32.mrb[0].mxu0
    %986 = vdwg.mxu0
    %987 = vmatprep.subr.mxu0 0.0
    %988 = vmatpush1.msra.mxu0 %v275
    %989 = vmatprep.subr.mxu0 0.0
    %990 = vmatpush1.msra.mxu0 %v276
    %991 = vmatprep.subr.mxu0 0.0
    %992 = vmatpush1.msra.mxu0 %v277
    %993 = vmatprep.subr.mxu0 0.0
    %994 = vmatpush1.msra.mxu0 %v278
    %995 = vmatprep.subr.mxu0 0.0
    %996 = vmatpush1.msra.mxu0 0.0
    %997 = vmatprep.subr.mxu0 0.0
    %998 = vmatpush1.msra.mxu0 0.0
    %999 = vmatprep.subr.mxu0 0.0
    %1000 = vmatpush1.msra.mxu0 0.0
    %1001 = vmatprep.subr.mxu0 0.0
    %1002 = vmatpush1.msra.mxu0 0.0
    %1003 = vmatprep.subr.mxu0 0.0
    %1004 = vmatpush1.msra.mxu0 0.0
    %1005 = vmatprep.subr.mxu0 0.0
    %1006 = vmatpush1.msra.mxu0 0.0
    %1007 = vmatprep.subr.mxu0 0.0
    %1008 = vmatpush1.msra.mxu0 0.0
    %1009 = vmatprep.subr.mxu0 0.0
    %1010 = vmatpush1.msra.mxu0 0.0
    %1011 = vmatprep.subr.mxu0 0.0
    %1012 = vmatpush1.msra.mxu0 0.0
    %1013 = vmatprep.subr.mxu0 0.0
    %1014 = vmatpush1.msra.mxu0 0.0
    %1015 = vmatprep.subr.mxu0 0.0
    %1016 = vmatpush1.msra.mxu0 0.0
    %1017 = vmatprep.subr.mxu0 0.0
    %1018 = vmatpush1.msra.mxu0 0.0
    %1019 = vmatprep.subr.mxu0 0.0
    %1020 = vmatpush1.msra.mxu0 0.0
    %1021 = vmatprep.subr.mxu0 0.0
    %1022 = vmatpush1.msra.mxu0 0.0
    %1023 = vmatprep.subr.mxu0 0.0
    %1024 = vmatpush1.msra.mxu0 0.0
    %1025 = vmatprep.subr.mxu0 0.0
    %1026 = vmatpush1.msra.mxu0 0.0
    %1027 = vmatprep.subr.mxu0 0.0
    %1028 = vmatpush1.msra.mxu0 0.0
    %1029 = vmatprep.subr.mxu0 0.0
    %1030 = vmatpush1.msra.mxu0 0.0
    %1031 = vmatprep.subr.mxu0 0.0
    %1032 = vmatpush1.msra.mxu0 0.0
    %1033 = vmatprep.subr.mxu0 0.0
    %1034 = vmatpush1.msra.mxu0 0.0
    %1035 = vmatprep.subr.mxu0 0.0
    %1036 = vmatpush1.msra.mxu0 0.0
    %1037 = vmatprep.subr.mxu0 0.0
    %1038 = vmatpush1.msra.mxu0 0.0
    %1039 = vmatprep.subr.mxu0 0.0
    %1040 = vmatpush1.msra.mxu0 0.0
    %1041 = vmatprep.subr.mxu0 0.0
    %1042 = vmatpush1.msra.mxu0 0.0
    %1043 = vmatprep.subr.mxu0 0.0
    %1044 = vmatpush1.msra.mxu0 0.0
    %1045 = vmatprep.subr.mxu0 0.0
    %1046 = vmatpush1.msra.mxu0 0.0
    %1047 = vmatprep.subr.mxu0 0.0
    %1048 = vmatpush1.msra.mxu0 0.0
    %1049 = vmatprep.subr.mxu0 0.0
    %1050 = vmatpush1.msra.mxu0 0.0
    %1051 = vmatprep.mubr.f32.mxu0 0.0
    %1052 = vmatmul.mubr.f32.gmra.mrb[0].mxu0 %v915
    %v1053 = vpop.f32.mrb[0].mxu0
    %v1054 = vadd.f32 0.0, %v1053
    %v1055 = vpop.f32.mrb[0].mxu0
    %1056 = vdwg.mxu0
    %v1057 = vadd.f32 %v272, %v1054
    %v1058 = vmul.f32 %v1057, 0.5
    %v1059 = vtanh.pop %v1058
    %v1060 = vmul.f32 %v1059, 0.5
    %v1061 = vadd.f32 %v1060, 0.5
    %v1062 = vtanh.pop %v1057
    %v1064 = vrot.slane %v904, 6
    %v1066 = vmul.f32 %v1061, %v1064
    %1068 = vrot.lane.b32.xlu0 %v1062, 64
    %v1069 = vpop.permute.xlu0 %1068
    %v1071 = vmul.f32 %v1061, %v1069
    %1073 = vrot.lane.b32.xlu0 %v1071, 32
    %v1074 = vpop.permute.xlu0 %1073
    %v1076 = vadd.f32 %v1066, %v1074
    %v1077 = vtanh.pop %v1076
    %1079 = vrot.lane.b32.xlu0 %v1077, 64
    %v1080 = vpop.permute.xlu0 %1079
    %v1082 = vmul.f32 %v1061, %v1080
    %1084 = vrot.lane.b32.xlu0 %v1082, 32
    %v1085 = vpop.permute.xlu0 %1084
    %v1086 = vsel %vm290, %v1085, 0
    %1088 = vmatprep.subr.mxu0 0.0
    %1089 = vmatpush1.msra.mxu0 %v279
    %1090 = vmatprep.subr.mxu0 0.0
    %1091 = vmatpush1.msra.mxu0 %v280
    %1092 = vmatprep.subr.mxu0 0.0
    %1093 = vmatpush1.msra.mxu0 %v281
    %1094 = vmatprep.subr.mxu0 0.0
    %1095 = vmatpush1.msra.mxu0 %v282
    %1096 = vmatprep.subr.mxu0 0.0
    %1097 = vmatpush1.msra.mxu0 0.0
    %1098 = vmatprep.subr.mxu0 0.0
    %1099 = vmatpush1.msra.mxu0 0.0
    %1100 = vmatprep.subr.mxu0 0.0
    %1101 = vmatpush1.msra.mxu0 0.0
    %1102 = vmatprep.subr.mxu0 0.0
    %1103 = vmatpush1.msra.mxu0 0.0
    %1104 = vmatprep.subr.mxu0 0.0
    %1105 = vmatpush1.msra.mxu0 0.0
    %1106 = vmatprep.subr.mxu0 0.0
    %1107 = vmatpush1.msra.mxu0 0.0
    %1108 = vmatprep.subr.mxu0 0.0
    %1109 = vmatpush1.msra.mxu0 0.0
    %1110 = vmatprep.subr.mxu0 0.0
    %1111 = vmatpush1.msra.mxu0 0.0
    %1112 = vmatprep.subr.mxu0 0.0
    %1113 = vmatpush1.msra.mxu0 0.0
    %1114 = vmatprep.subr.mxu0 0.0
    %1115 = vmatpush1.msra.mxu0 0.0
    %1116 = vmatprep.subr.mxu0 0.0
    %1117 = vmatpush1.msra.mxu0 0.0
    %1118 = vmatprep.subr.mxu0 0.0
    %1119 = vmatpush1.msra.mxu0 0.0
    %1120 = vmatprep.subr.mxu0 0.0
    %1121 = vmatpush1.msra.mxu0 0.0
    %1122 = vmatprep.subr.mxu0 0.0
    %1123 = vmatpush1.msra.mxu0 0.0
    %1124 = vmatprep.subr.mxu0 0.0
    %1125 = vmatpush1.msra.mxu0 0.0
    %1126 = vmatprep.subr.mxu0 0.0
    %1127 = vmatpush1.msra.mxu0 0.0
    %1128 = vmatprep.subr.mxu0 0.0
    %1129 = vmatpush1.msra.mxu0 0.0
    %1130 = vmatprep.subr.mxu0 0.0
    %1131 = vmatpush1.msra.mxu0 0.0
    %1132 = vmatprep.subr.mxu0 0.0
    %1133 = vmatpush1.msra.mxu0 0.0
    %1134 = vmatprep.subr.mxu0 0.0
    %1135 = vmatpush1.msra.mxu0 0.0
    %1136 = vmatprep.subr.mxu0 0.0
    %1137 = vmatpush1.msra.mxu0 0.0
    %1138 = vmatprep.subr.mxu0 0.0
    %1139 = vmatpush1.msra.mxu0 0.0
    %1140 = vmatprep.subr.mxu0 0.0
    %1141 = vmatpush1.msra.mxu0 0.0
    %1142 = vmatprep.subr.mxu0 0.0
    %1143 = vmatpush1.msra.mxu0 0.0
    %1144 = vmatprep.subr.mxu0 0.0
    %1145 = vmatpush1.msra.mxu0 0.0
    %1146 = vmatprep.subr.mxu0 0.0
    %1147 = vmatpush1.msra.mxu0 0.0
    %1148 = vmatprep.subr.mxu0 0.0
    %1149 = vmatpush1.msra.mxu0 0.0
    %1150 = vmatprep.subr.mxu0 0.0
    %1151 = vmatpush1.msra.mxu0 0.0
    %1152 = vmatprep.mubr.f32.mxu0 0.0
    %1153 = vmatmul.mubr.f32.gmra.mrb[0].mxu0 %v1086
    %v1154 = vpop.f32.mrb[0].mxu0
    %v1155 = vadd.f32 %v288, %v1154
    %v1156 = vpop.f32.mrb[0].mxu0
    %1157 = vdwg.mxu0
    %1158 = vmatprep.subr.mxu0 0.0
    %1159 = vmatpush1.msra.mxu0 %v275
    %1160 = vmatprep.subr.mxu0 0.0
    %1161 = vmatpush1.msra.mxu0 %v276
    %1162 = vmatprep.subr.mxu0 0.0
    %1163 = vmatpush1.msra.mxu0 %v277
    %1164 = vmatprep.subr.mxu0 0.0
    %1165 = vmatpush1.msra.mxu0 %v278
    %1166 = vmatprep.subr.mxu0 0.0
    %1167 = vmatpush1.msra.mxu0 0.0
    %1168 = vmatprep.subr.mxu0 0.0
    %1169 = vmatpush1.msra.mxu0 0.0
    %1170 = vmatprep.subr.mxu0 0.0
    %1171 = vmatpush1.msra.mxu0 0.0
    %1172 = vmatprep.subr.mxu0 0.0
    %1173 = vmatpush1.msra.mxu0 0.0
    %1174 = vmatprep.subr.mxu0 0.0
    %1175 = vmatpush1.msra.mxu0 0.0
    %1176 = vmatprep.subr.mxu0 0.0
    %1177 = vmatpush1.msra.mxu0 0.0
    %1178 = vmatprep.subr.mxu0 0.0
    %1179 = vmatpush1.msra.mxu0 0.0
    %1180 = vmatprep.subr.mxu0 0.0
    %1181 = vmatpush1.msra.mxu0 0.0
    %1182 = vmatprep.subr.mxu0 0.0
    %1183 = vmatpush1.msra.mxu0 0.0
    %1184 = vmatprep.subr.mxu0 0.0
    %1185 = vmatpush1.msra.mxu0 0.0
    %1186 = vmatprep.subr.mxu0 0.0
    %1187 = vmatpush1.msra.mxu0 0.0
    %1188 = vmatprep.subr.mxu0 0.0
    %1189 = vmatpush1.msra.mxu0 0.0
    %1190 = vmatprep.subr.mxu0 0.0
    %1191 = vmatpush1.msra.mxu0 0.0
    %1192 = vmatprep.subr.mxu0 0.0
    %1193 = vmatpush1.msra.mxu0 0.0
    %1194 = vmatprep.subr.mxu0 0.0
    %1195 = vmatpush1.msra.mxu0 0.0
    %1196 = vmatprep.subr.mxu0 0.0
    %1197 = vmatpush1.msra.mxu0 0.0
    %1198 = vmatprep.subr.mxu0 0.0
    %1199 = vmatpush1.msra.mxu0 0.0
    %1200 = vmatprep.subr.mxu0 0.0
    %1201 = vmatpush1.msra.mxu0 0.0
    %1202 = vmatprep.subr.mxu0 0.0
    %1203 = vmatpush1.msra.mxu0 0.0
    %1204 = vmatprep.subr.mxu0 0.0
    %1205 = vmatpush1.msra.mxu0 0.0
    %1206 = vmatprep.subr.mxu0 0.0
    %1207 = vmatpush1.msra.mxu0 0.0
    %1208 = vmatprep.subr.mxu0 0.0
    %1209 = vmatpush1.msra.mxu0 0.0
    %1210 = vmatprep.subr.mxu0 0.0
    %1211 = vmatpush1.msra.mxu0 0.0
    %1212 = vmatprep.subr.mxu0 0.0
    %1213 = vmatpush1.msra.mxu0 0.0
    %1214 = vmatprep.subr.mxu0 0.0
    %1215 = vmatpush1.msra.mxu0 0.0
    %1216 = vmatprep.subr.mxu0 0.0
    %1217 = vmatpush1.msra.mxu0 0.0
    %1218 = vmatprep.subr.mxu0 0.0
    %1219 = vmatpush1.msra.mxu0 0.0
    %1220 = vmatprep.subr.mxu0 0.0
    %1221 = vmatpush1.msra.mxu0 0.0
    %1222 = vmatprep.mubr.f32.mxu0 0.0
    %1223 = vmatmul.mubr.f32.gmra.mrb[0].mxu0 %v1086
    %v1224 = vpop.f32.mrb[0].mxu0
    %v1225 = vadd.f32 0.0, %v1224
    %v1226 = vpop.f32.mrb[0].mxu0
    %1227 = vdwg.mxu0
    %v1229 = vrot.slane %v1225, 6
    %v1231 = vadd.f32 %v272, %v1229
    %v1232 = vmul.f32 %v1231, 0.5
    %v1233 = vtanh.pop %v1232
    %v1234 = vmul.f32 %v1233, 0.5
    %v1235 = vadd.f32 %v1234, 0.5
    %v1236 = vtanh.pop %v1231
    %v1238 = vrot.slane %v1076, 6
    %v1240 = vmul.f32 %v1235, %v1238
    %1242 = vrot.lane.b32.xlu0 %v1236, 64
    %v1243 = vpop.permute.xlu0 %1242
    %v1245 = vmul.f32 %v1235, %v1243
    %1247 = vrot.lane.b32.xlu0 %v1245, 32
    %v1248 = vpop.permute.xlu0 %1247
    %v1250 = vadd.f32 %v1240, %v1248
    %v1251 = vtanh.pop %v1250
    %1253 = vrot.lane.b32.xlu0 %v1251, 64
    %v1254 = vpop.permute.xlu0 %1253
    %v1256 = vmul.f32 %v1235, %v1254
    %v1258 = vrot.slane %v1256, 2
    %1259 = vrot.lane.b32.xlu0 %v1258, 32
    %v1260 = vpop.permute.xlu0 %1259
    %v1261 = vsel %vm290, %v1260, 0
    %1263 = vmatprep.subr.mxu0 0.0
    %1264 = vmatpush1.msra.mxu0 %v279
    %1265 = vmatprep.subr.mxu0 0.0
    %1266 = vmatpush1.msra.mxu0 %v280
    %1267 = vmatprep.subr.mxu0 0.0
    %1268 = vmatpush1.msra.mxu0 %v281
    %1269 = vmatprep.subr.mxu0 0.0
    %1270 = vmatpush1.msra.mxu0 %v282
    %1271 = vmatprep.subr.mxu0 0.0
    %1272 = vmatpush1.msra.mxu0 0.0
    %1273 = vmatprep.subr.mxu0 0.0
    %1274 = vmatpush1.msra.mxu0 0.0
    %1275 = vmatprep.subr.mxu0 0.0
    %1276 = vmatpush1.msra.mxu0 0.0
    %1277 = vmatprep.subr.mxu0 0.0
    %1278 = vmatpush1.msra.mxu0 0.0
    %1279 = vmatprep.subr.mxu0 0.0
    %1280 = vmatpush1.msra.mxu0 0.0
    %1281 = vmatprep.subr.mxu0 0.0
    %1282 = vmatpush1.msra.mxu0 0.0
    %1283 = vmatprep.subr.mxu0 0.0
    %1284 = vmatpush1.msra.mxu0 0.0
    %1285 = vmatprep.subr.mxu0 0.0
    %1286 = vmatpush1.msra.mxu0 0.0
    %1287 = vmatprep.subr.mxu0 0.0
    %1288 = vmatpush1.msra.mxu0 0.0
    %1289 = vmatprep.subr.mxu0 0.0
    %1290 = vmatpush1.msra.mxu0 0.0
    %1291 = vmatprep.subr.mxu0 0.0
    %1292 = vmatpush1.msra.mxu0 0.0
    %1293 = vmatprep.subr.mxu0 0.0
    %1294 = vmatpush1.msra.mxu0 0.0
    %1295 = vmatprep.subr.mxu0 0.0
    %1296 = vmatpush1.msra.mxu0 0.0
    %1297 = vmatprep.subr.mxu0 0.0
    %1298 = vmatpush1.msra.mxu0 0.0
    %1299 = vmatprep.subr.mxu0 0.0
    %1300 = vmatpush1.msra.mxu0 0.0
    %1301 = vmatprep.subr.mxu0 0.0
    %1302 = vmatpush1.msra.mxu0 0.0
    %1303 = vmatprep.subr.mxu0 0.0
    %1304 = vmatpush1.msra.mxu0 0.0
    %1305 = vmatprep.subr.mxu0 0.0
    %1306 = vmatpush1.msra.mxu0 0.0
    %1307 = vmatprep.subr.mxu0 0.0
    %1308 = vmatpush1.msra.mxu0 0.0
    %1309 = vmatprep.subr.mxu0 0.0
    %1310 = vmatpush1.msra.mxu0 0.0
    %1311 = vmatprep.subr.mxu0 0.0
    %1312 = vmatpush1.msra.mxu0 0.0
    %1313 = vmatprep.subr.mxu0 0.0
    %1314 = vmatpush1.msra.mxu0 0.0
    %1315 = vmatprep.subr.mxu0 0.0
    %1316 = vmatpush1.msra.mxu0 0.0
    %1317 = vmatprep.subr.mxu0 0.0
    %1318 = vmatpush1.msra.mxu0 0.0
    %1319 = vmatprep.subr.mxu0 0.0
    %1320 = vmatpush1.msra.mxu0 0.0
    %1321 = vmatprep.subr.mxu0 0.0
    %1322 = vmatpush1.msra.mxu0 0.0
    %1323 = vmatprep.subr.mxu0 0.0
    %1324 = vmatpush1.msra.mxu0 0.0
    %1325 = vmatprep.subr.mxu0 0.0
    %1326 = vmatpush1.msra.mxu0 0.0
    %1327 = vmatprep.mubr.f32.mxu0 0.0
    %1328 = vmatmul.mubr.f32.gmra.mrb[0].mxu0 %v1261
    %v1329 = vpop.f32.mrb[0].mxu0
    %v1330 = vadd.f32 %v288, %v1329
    %v1331 = vpop.f32.mrb[0].mxu0
    %1332 = vdwg.mxu0
    %1333 = vmatprep.subr.mxu0 0.0
    %1334 = vmatpush1.msra.mxu0 %v275
    %1335 = vmatprep.subr.mxu0 0.0
    %1336 = vmatpush1.msra.mxu0 %v276
    %1337 = vmatprep.subr.mxu0 0.0
    %1338 = vmatpush1.msra.mxu0 %v277
    %1339 = vmatprep.subr.mxu0 0.0
    %1340 = vmatpush1.msra.mxu0 %v278
    %1341 = vmatprep.subr.mxu0 0.0
    %1342 = vmatpush1.msra.mxu0 0.0
    %1343 = vmatprep.subr.mxu0 0.0
    %1344 = vmatpush1.msra.mxu0 0.0
    %1345 = vmatprep.subr.mxu0 0.0
    %1346 = vmatpush1.msra.mxu0 0.0
    %1347 = vmatprep.subr.mxu0 0.0
    %1348 = vmatpush1.msra.mxu0 0.0
    %1349 = vmatprep.subr.mxu0 0.0
    %1350 = vmatpush1.msra.mxu0 0.0
    %1351 = vmatprep.subr.mxu0 0.0
    %1352 = vmatpush1.msra.mxu0 0.0
    %1353 = vmatprep.subr.mxu0 0.0
    %1354 = vmatpush1.msra.mxu0 0.0
    %1355 = vmatprep.subr.mxu0 0.0
    %1356 = vmatpush1.msra.mxu0 0.0
    %1357 = vmatprep.subr.mxu0 0.0
    %1358 = vmatpush1.msra.mxu0 0.0
    %1359 = vmatprep.subr.mxu0 0.0
    %1360 = vmatpush1.msra.mxu0 0.0
    %1361 = vmatprep.subr.mxu0 0.0
    %1362 = vmatpush1.msra.mxu0 0.0
    %1363 = vmatprep.subr.mxu0 0.0
    %1364 = vmatpush1.msra.mxu0 0.0
    %1365 = vmatprep.subr.mxu0 0.0
    %1366 = vmatpush1.msra.mxu0 0.0
    %1367 = vmatprep.subr.mxu0 0.0
    %1368 = vmatpush1.msra.mxu0 0.0
    %1369 = vmatprep.subr.mxu0 0.0
    %1370 = vmatpush1.msra.mxu0 0.0
    %1371 = vmatprep.subr.mxu0 0.0
    %1372 = vmatpush1.msra.mxu0 0.0
    %1373 = vmatprep.subr.mxu0 0.0
    %1374 = vmatpush1.msra.mxu0 0.0
    %1375 = vmatprep.subr.mxu0 0.0
    %1376 = vmatpush1.msra.mxu0 0.0
    %1377 = vmatprep.subr.mxu0 0.0
    %1378 = vmatpush1.msra.mxu0 0.0
    %1379 = vmatprep.subr.mxu0 0.0
    %1380 = vmatpush1.msra.mxu0 0.0
    %1381 = vmatprep.subr.mxu0 0.0
    %1382 = vmatpush1.msra.mxu0 0.0
    %1383 = vmatprep.subr.mxu0 0.0
    %1384 = vmatpush1.msra.mxu0 0.0
    %1385 = vmatprep.subr.mxu0 0.0
    %1386 = vmatpush1.msra.mxu0 0.0
    %1387 = vmatprep.subr.mxu0 0.0
    %1388 = vmatpush1.msra.mxu0 0.0
    %1389 = vmatprep.subr.mxu0 0.0
    %1390 = vmatpush1.msra.mxu0 0.0
    %1391 = vmatprep.subr.mxu0 0.0
    %1392 = vmatpush1.msra.mxu0 0.0
    %1393 = vmatprep.subr.mxu0 0.0
    %1394 = vmatpush1.msra.mxu0 0.0
    %1395 = vmatprep.subr.mxu0 0.0
    %1396 = vmatpush1.msra.mxu0 0.0
    %1397 = vmatprep.mubr.f32.mxu0 0.0
    %1398 = vmatmul.mubr.f32.gmra.mrb[0].mxu0 %v1261
    %v1399 = vpop.f32.mrb[0].mxu0
    %v1400 = vadd.f32 0.0, %v1399
    %v1401 = vpop.f32.mrb[0].mxu0
    %1402 = vdwg.mxu0
    %v1404 = vrot.slane %v1400, 4
    %v1406 = vadd.f32 %v272, %v1404
    %v1407 = vmul.f32 %v1406, 0.5
    %v1408 = vtanh.pop %v1407
    %v1409 = vmul.f32 %v1408, 0.5
    %v1410 = vadd.f32 %v1409, 0.5
    %v1411 = vtanh.pop %v1406
    %v1413 = vrot.slane %v1250, 6
    %v1415 = vmul.f32 %v1410, %v1413
    %1417 = vrot.lane.b32.xlu0 %v1411, 64
    %v1418 = vpop.permute.xlu0 %1417
    %v1420 = vmul.f32 %v1410, %v1418
    %1422 = vrot.lane.b32.xlu0 %v1420, 32
    %v1423 = vpop.permute.xlu0 %1422
    %v1425 = vadd.f32 %v1415, %v1423
    %v1426 = vtanh.pop %v1425
    %1428 = vrot.lane.b32.xlu0 %v1426, 64
    %v1429 = vpop.permute.xlu0 %1428
    %v1431 = vmul.f32 %v1410, %v1429
    %v1433 = vrot.slane %v1431, 4
    %1434 = vrot.lane.b32.xlu0 %v1433, 32
    %v1435 = vpop.permute.xlu0 %1434
    %v1436 = vsel %vm290, %v1435, 0
    %1438 = vmatprep.subr.mxu0 0.0
    %1439 = vmatpush1.msra.mxu0 %v279
    %1440 = vmatprep.subr.mxu0 0.0
    %1441 = vmatpush1.msra.mxu0 %v280
    %1442 = vmatprep.subr.mxu0 0.0
    %1443 = vmatpush1.msra.mxu0 %v281
    %1444 = vmatprep.subr.mxu0 0.0
    %1445 = vmatpush1.msra.mxu0 %v282
    %1446 = vmatprep.subr.mxu0 0.0
    %1447 = vmatpush1.msra.mxu0 0.0
    %1448 = vmatprep.subr.mxu0 0.0
    %1449 = vmatpush1.msra.mxu0 0.0
    %1450 = vmatprep.subr.mxu0 0.0
    %1451 = vmatpush1.msra.mxu0 0.0
    %1452 = vmatprep.subr.mxu0 0.0
    %1453 = vmatpush1.msra.mxu0 0.0
    %1454 = vmatprep.subr.mxu0 0.0
    %1455 = vmatpush1.msra.mxu0 0.0
    %1456 = vmatprep.subr.mxu0 0.0
    %1457 = vmatpush1.msra.mxu0 0.0
    %1458 = vmatprep.subr.mxu0 0.0
    %1459 = vmatpush1.msra.mxu0 0.0
    %1460 = vmatprep.subr.mxu0 0.0
    %1461 = vmatpush1.msra.mxu0 0.0
    %1462 = vmatprep.subr.mxu0 0.0
    %1463 = vmatpush1.msra.mxu0 0.0
    %1464 = vmatprep.subr.mxu0 0.0
    %1465 = vmatpush1.msra.mxu0 0.0
    %1466 = vmatprep.subr.mxu0 0.0
    %1467 = vmatpush1.msra.mxu0 0.0
    %1468 = vmatprep.subr.mxu0 0.0
    %1469 = vmatpush1.msra.mxu0 0.0
    %1470 = vmatprep.subr.mxu0 0.0
    %1471 = vmatpush1.msra.mxu0 0.0
    %1472 = vmatprep.subr.mxu0 0.0
    %1473 = vmatpush1.msra.mxu0 0.0
    %1474 = vmatprep.subr.mxu0 0.0
    %1475 = vmatpush1.msra.mxu0 0.0
    %1476 = vmatprep.subr.mxu0 0.0
    %1477 = vmatpush1.msra.mxu0 0.0
    %1478 = vmatprep.subr.mxu0 0.0
    %1479 = vmatpush1.msra.mxu0 0.0
    %1480 = vmatprep.subr.mxu0 0.0
    %1481 = vmatpush1.msra.mxu0 0.0
    %1482 = vmatprep.subr.mxu0 0.0
    %1483 = vmatpush1.msra.mxu0 0.0
    %1484 = vmatprep.subr.mxu0 0.0
    %1485 = vmatpush1.msra.mxu0 0.0
    %1486 = vmatprep.subr.mxu0 0.0
    %1487 = vmatpush1.msra.mxu0 0.0
    %1488 = vmatprep.subr.mxu0 0.0
    %1489 = vmatpush1.msra.mxu0 0.0
    %1490 = vmatprep.subr.mxu0 0.0
    %1491 = vmatpush1.msra.mxu0 0.0
    %1492 = vmatprep.subr.mxu0 0.0
    %1493 = vmatpush1.msra.mxu0 0.0
    %1494 = vmatprep.subr.mxu0 0.0
    %1495 = vmatpush1.msra.mxu0 0.0
    %1496 = vmatprep.subr.mxu0 0.0
    %1497 = vmatpush1.msra.mxu0 0.0
    %1498 = vmatprep.subr.mxu0 0.0
    %1499 = vmatpush1.msra.mxu0 0.0
    %1500 = vmatprep.subr.mxu0 0.0
    %1501 = vmatpush1.msra.mxu0 0.0
    %1502 = vmatprep.mubr.f32.mxu0 0.0
    %1503 = vmatmul.mubr.f32.gmra.mrb[0].mxu0 %v1436
    %v1504 = vpop.f32.mrb[0].mxu0
    %v1505 = vadd.f32 %v288, %v1504
    %v1506 = vpop.f32.mrb[0].mxu0
    %1507 = vdwg.mxu0
    %1508 = vmatprep.subr.mxu0 0.0
    %1509 = vmatpush1.msra.mxu0 %v275
    %1510 = vmatprep.subr.mxu0 0.0
    %1511 = vmatpush1.msra.mxu0 %v276
    %1512 = vmatprep.subr.mxu0 0.0
    %1513 = vmatpush1.msra.mxu0 %v277
    %1514 = vmatprep.subr.mxu0 0.0
    %1515 = vmatpush1.msra.mxu0 %v278
    %1516 = vmatprep.subr.mxu0 0.0
    %1517 = vmatpush1.msra.mxu0 0.0
    %1518 = vmatprep.subr.mxu0 0.0
    %1519 = vmatpush1.msra.mxu0 0.0
    %1520 = vmatprep.subr.mxu0 0.0
    %1521 = vmatpush1.msra.mxu0 0.0
    %1522 = vmatprep.subr.mxu0 0.0
    %1523 = vmatpush1.msra.mxu0 0.0
    %1524 = vmatprep.subr.mxu0 0.0
    %1525 = vmatpush1.msra.mxu0 0.0
    %1526 = vmatprep.subr.mxu0 0.0
    %1527 = vmatpush1.msra.mxu0 0.0
    %1528 = vmatprep.subr.mxu0 0.0
    %1529 = vmatpush1.msra.mxu0 0.0
    %1530 = vmatprep.subr.mxu0 0.0
    %1531 = vmatpush1.msra.mxu0 0.0
    %1532 = vmatprep.subr.mxu0 0.0
    %1533 = vmatpush1.msra.mxu0 0.0
    %1534 = vmatprep.subr.mxu0 0.0
    %1535 = vmatpush1.msra.mxu0 0.0
    %1536 = vmatprep.subr.mxu0 0.0
    %1537 = vmatpush1.msra.mxu0 0.0
    %1538 = vmatprep.subr.mxu0 0.0
    %1539 = vmatpush1.msra.mxu0 0.0
    %1540 = vmatprep.subr.mxu0 0.0
    %1541 = vmatpush1.msra.mxu0 0.0
    %1542 = vmatprep.subr.mxu0 0.0
    %1543 = vmatpush1.msra.mxu0 0.0
    %1544 = vmatprep.subr.mxu0 0.0
    %1545 = vmatpush1.msra.mxu0 0.0
    %1546 = vmatprep.subr.mxu0 0.0
    %1547 = vmatpush1.msra.mxu0 0.0
    %1548 = vmatprep.subr.mxu0 0.0
    %1549 = vmatpush1.msra.mxu0 0.0
    %1550 = vmatprep.subr.mxu0 0.0
    %1551 = vmatpush1.msra.mxu0 0.0
    %1552 = vmatprep.subr.mxu0 0.0
    %1553 = vmatpush1.msra.mxu0 0.0
    %1554 = vmatprep.subr.mxu0 0.0
    %1555 = vmatpush1.msra.mxu0 0.0
    %1556 = vmatprep.subr.mxu0 0.0
    %1557 = vmatpush1.msra.mxu0 0.0
    %1558 = vmatprep.subr.mxu0 0.0
    %1559 = vmatpush1.msra.mxu0 0.0
    %1560 = vmatprep.subr.mxu0 0.0
    %1561 = vmatpush1.msra.mxu0 0.0
    %1562 = vmatprep.subr.mxu0 0.0
    %1563 = vmatpush1.msra.mxu0 0.0
    %1564 = vmatprep.subr.mxu0 0.0
    %1565 = vmatpush1.msra.mxu0 0.0
    %1566 = vmatprep.subr.mxu0 0.0
    %1567 = vmatpush1.msra.mxu0 0.0
    %1568 = vmatprep.subr.mxu0 0.0
    %1569 = vmatpush1.msra.mxu0 0.0
    %1570 = vmatprep.subr.mxu0 0.0
    %1571 = vmatpush1.msra.mxu0 0.0
    %1572 = vmatprep.mubr.f32.mxu0 0.0
    %1573 = vmatmul.mubr.f32.gmra.mrb[0].mxu0 %v1436
    %v1574 = vpop.f32.mrb[0].mxu0
    %v1575 = vadd.f32 0.0, %v1574
    %v1576 = vpop.f32.mrb[0].mxu0
    %1577 = vdwg.mxu0
    %v1579 = vrot.slane %v1575, 2
    %v1581 = vadd.f32 %v272, %v1579
    %v1582 = vmul.f32 %v1581, 0.5
    %v1583 = vtanh.pop %v1582
    %v1584 = vmul.f32 %v1583, 0.5
    %v1585 = vadd.f32 %v1584, 0.5
    %v1586 = vtanh.pop %v1581
    %v1588 = vrot.slane %v1425, 6
    %v1590 = vmul.f32 %v1585, %v1588
    %1592 = vrot.lane.b32.xlu0 %v1586, 64
    %v1593 = vpop.permute.xlu0 %1592
    %v1595 = vmul.f32 %v1585, %v1593
    %1597 = vrot.lane.b32.xlu0 %v1595, 32
    %v1598 = vpop.permute.xlu0 %1597
    %v1600 = vadd.f32 %v1590, %v1598
    %v1601 = vtanh.pop %v1600
    %1603 = vrot.lane.b32.xlu0 %v1601, 64
    %v1604 = vpop.permute.xlu0 %1603
    %v1606 = vmul.f32 %v1585, %v1604
    %v1608 = vrot.slane %v1606, 6
    %1609 = vrot.lane.b32.xlu0 %v1608, 32
    %v1610 = vpop.permute.xlu0 %1609
    %v1611 = vsel %vm290, %v1610, 0
    %1613 = vmatprep.subr.mxu0 0.0
    %1614 = vmatpush1.msra.mxu0 %v279
    %1615 = vmatprep.subr.mxu0 0.0
    %1616 = vmatpush1.msra.mxu0 %v280
    %1617 = vmatprep.subr.mxu0 0.0
    %1618 = vmatpush1.msra.mxu0 %v281
    %1619 = vmatprep.subr.mxu0 0.0
    %1620 = vmatpush1.msra.mxu0 %v282
    %1621 = vmatprep.subr.mxu0 0.0
    %1622 = vmatpush1.msra.mxu0 0.0
    %1623 = vmatprep.subr.mxu0 0.0
    %1624 = vmatpush1.msra.mxu0 0.0
    %1625 = vmatprep.subr.mxu0 0.0
    %1626 = vmatpush1.msra.mxu0 0.0
    %1627 = vmatprep.subr.mxu0 0.0
    %1628 = vmatpush1.msra.mxu0 0.0
    %1629 = vmatprep.subr.mxu0 0.0
    %1630 = vmatpush1.msra.mxu0 0.0
    %1631 = vmatprep.subr.mxu0 0.0
    %1632 = vmatpush1.msra.mxu0 0.0
    %1633 = vmatprep.subr.mxu0 0.0
    %1634 = vmatpush1.msra.mxu0 0.0
    %1635 = vmatprep.subr.mxu0 0.0
    %1636 = vmatpush1.msra.mxu0 0.0
    %1637 = vmatprep.subr.mxu0 0.0
    %1638 = vmatpush1.msra.mxu0 0.0
    %1639 = vmatprep.subr.mxu0 0.0
    %1640 = vmatpush1.msra.mxu0 0.0
    %1641 = vmatprep.subr.mxu0 0.0
    %1642 = vmatpush1.msra.mxu0 0.0
    %1643 = vmatprep.subr.mxu0 0.0
    %1644 = vmatpush1.msra.mxu0 0.0
    %1645 = vmatprep.subr.mxu0 0.0
    %1646 = vmatpush1.msra.mxu0 0.0
    %1647 = vmatprep.subr.mxu0 0.0
    %1648 = vmatpush1.msra.mxu0 0.0
    %1649 = vmatprep.subr.mxu0 0.0
    %1650 = vmatpush1.msra.mxu0 0.0
    %1651 = vmatprep.subr.mxu0 0.0
    %1652 = vmatpush1.msra.mxu0 0.0
    %1653 = vmatprep.subr.mxu0 0.0
    %1654 = vmatpush1.msra.mxu0 0.0
    %1655 = vmatprep.subr.mxu0 0.0
    %1656 = vmatpush1.msra.mxu0 0.0
    %1657 = vmatprep.subr.mxu0 0.0
    %1658 = vmatpush1.msra.mxu0 0.0
    %1659 = vmatprep.subr.mxu0 0.0
    %1660 = vmatpush1.msra.mxu0 0.0
    %1661 = vmatprep.subr.mxu0 0.0
    %1662 = vmatpush1.msra.mxu0 0.0
    %1663 = vmatprep.subr.mxu0 0.0
    %1664 = vmatpush1.msra.mxu0 0.0
    %1665 = vmatprep.subr.mxu0 0.0
    %1666 = vmatpush1.msra.mxu0 0.0
    %1667 = vmatprep.subr.mxu0 0.0
    %1668 = vmatpush1.msra.mxu0 0.0
    %1669 = vmatprep.subr.mxu0 0.0
    %1670 = vmatpush1.msra.mxu0 0.0
    %1671 = vmatprep.subr.mxu0 0.0
    %1672 = vmatpush1.msra.mxu0 0.0
    %1673 = vmatprep.subr.mxu0 0.0
    %1674 = vmatpush1.msra.mxu0 0.0
    %1675 = vmatprep.subr.mxu0 0.0
    %1676 = vmatpush1.msra.mxu0 0.0
    %1677 = vmatprep.mubr.f32.mxu0 0.0
    %1678 = vmatmul.mubr.f32.gmra.mrb[0].mxu0 %v1611
    %v1679 = vpop.f32.mrb[0].mxu0
    %v1680 = vadd.f32 %v288, %v1679
    %v1681 = vpop.f32.mrb[0].mxu0
    %1682 = vdwg.mxu0
    %v1683 = vld [vmem:[#allocation7] sm:$0xff]
    %v1684 = vld [vmem:[#allocation7 + $0x8] sm:$0xff]
    %v1685 = vld [vmem:[#allocation7 + $0x10] sm:$0xff]
    %v1686 = vld [vmem:[#allocation7 + $0x18] sm:$0xff]
    %1687 = vmatprep.subr.mxu0 0.0
    %1688 = vmatpush1.msra.mxu0 %v1683
    %1689 = vmatprep.subr.mxu0 0.0
    %1690 = vmatpush1.msra.mxu0 %v1684
    %1691 = vmatprep.subr.mxu0 0.0
    %1692 = vmatpush1.msra.mxu0 %v1685
    %1693 = vmatprep.subr.mxu0 0.0
    %1694 = vmatpush1.msra.mxu0 %v1686
    %1695 = vmatprep.subr.mxu0 0.0
    %1696 = vmatpush1.msra.mxu0 0.0
    %1697 = vmatprep.subr.mxu0 0.0
    %1698 = vmatpush1.msra.mxu0 0.0
    %1699 = vmatprep.subr.mxu0 0.0
    %1700 = vmatpush1.msra.mxu0 0.0
    %1701 = vmatprep.subr.mxu0 0.0
    %1702 = vmatpush1.msra.mxu0 0.0
    %1703 = vmatprep.subr.mxu0 0.0
    %1704 = vmatpush1.msra.mxu0 0.0
    %1705 = vmatprep.subr.mxu0 0.0
    %1706 = vmatpush1.msra.mxu0 0.0
    %1707 = vmatprep.subr.mxu0 0.0
    %1708 = vmatpush1.msra.mxu0 0.0
    %1709 = vmatprep.subr.mxu0 0.0
    %1710 = vmatpush1.msra.mxu0 0.0
    %1711 = vmatprep.subr.mxu0 0.0
    %1712 = vmatpush1.msra.mxu0 0.0
    %1713 = vmatprep.subr.mxu0 0.0
    %1714 = vmatpush1.msra.mxu0 0.0
    %1715 = vmatprep.subr.mxu0 0.0
    %1716 = vmatpush1.msra.mxu0 0.0
    %1717 = vmatprep.subr.mxu0 0.0
    %1718 = vmatpush1.msra.mxu0 0.0
    %1719 = vmatprep.subr.mxu0 0.0
    %1720 = vmatpush1.msra.mxu0 0.0
    %1721 = vmatprep.subr.mxu0 0.0
    %1722 = vmatpush1.msra.mxu0 0.0
    %1723 = vmatprep.subr.mxu0 0.0
    %1724 = vmatpush1.msra.mxu0 0.0
    %1725 = vmatprep.subr.mxu0 0.0
    %1726 = vmatpush1.msra.mxu0 0.0
    %1727 = vmatprep.subr.mxu0 0.0
    %1728 = vmatpush1.msra.mxu0 0.0
    %1729 = vmatprep.subr.mxu0 0.0
    %1730 = vmatpush1.msra.mxu0 0.0
    %1731 = vmatprep.subr.mxu0 0.0
    %1732 = vmatpush1.msra.mxu0 0.0
    %1733 = vmatprep.subr.mxu0 0.0
    %1734 = vmatpush1.msra.mxu0 0.0
    %1735 = vmatprep.subr.mxu0 0.0
    %1736 = vmatpush1.msra.mxu0 0.0
    %1737 = vmatprep.subr.mxu0 0.0
    %1738 = vmatpush1.msra.mxu0 0.0
    %1739 = vmatprep.subr.mxu0 0.0
    %1740 = vmatpush1.msra.mxu0 0.0
    %1741 = vmatprep.subr.mxu0 0.0
    %1742 = vmatpush1.msra.mxu0 0.0
    %1743 = vmatprep.subr.mxu0 0.0
    %1744 = vmatpush1.msra.mxu0 0.0
    %1745 = vmatprep.subr.mxu0 0.0
    %1746 = vmatpush1.msra.mxu0 0.0
    %1747 = vmatprep.subr.mxu0 0.0
    %1748 = vmatpush1.msra.mxu0 0.0
    %1749 = vmatprep.subr.mxu0 0.0
    %1750 = vmatpush1.msra.mxu0 0.0
    %1751 = vmatprep.mubr.f32.mxu0 0.0
    %1752 = vmatmul.mubr.f32.gmra.mrb[0].mxu0 %v292
    %v1753 = vpop.f32.mrb[0].mxu0
    %v1754 = vadd.f32 0.0, %v1753
    %v1755 = vpop.f32.mrb[0].mxu0
    %1756 = vdwg.mxu0
    %v1757 = vadd.f32 %v459, %v1754
    %v1758 = vmul.f32 %v1757, 0.5
    %v1759 = vtanh.pop %v1758
    %v1760 = vmul.f32 %v1759, 0.5
    %v1761 = vadd.f32 %v1760, 0.5
    %v1762 = vtanh.pop %v1757
    %v1763 = vmul.f32 %v1761, 0.0
    %1765 = vrot.lane.b32.xlu0 %v1762, 64
    %v1766 = vpop.permute.xlu0 %1765
    %v1768 = vmul.f32 %v1761, %v1766
    %1770 = vrot.lane.b32.xlu0 %v1768, 32
    %v1771 = vpop.permute.xlu0 %1770
    %v1773 = vadd.f32 %v1763, %v1771
    %v1774 = vtanh.pop %v1773
    %1776 = vrot.lane.b32.xlu0 %v1774, 64
    %v1777 = vpop.permute.xlu0 %1776
    %v1779 = vmul.f32 %v1761, %v1777
    %1781 = vrot.lane.b32.xlu0 %v1779, 32
    %v1782 = vpop.permute.xlu0 %1781
    %v1783 = vsel %vm290, %v1782, 0
    %1785 = vmatprep.subr.mxu0 0.0
    %1786 = vmatpush1.msra.mxu0 %v1683
    %1787 = vmatprep.subr.mxu0 0.0
    %1788 = vmatpush1.msra.mxu0 %v1684
    %1789 = vmatprep.subr.mxu0 0.0
    %1790 = vmatpush1.msra.mxu0 %v1685
    %1791 = vmatprep.subr.mxu0 0.0
    %1792 = vmatpush1.msra.mxu0 %v1686
    %1793 = vmatprep.subr.mxu0 0.0
    %1794 = vmatpush1.msra.mxu0 0.0
    %1795 = vmatprep.subr.mxu0 0.0
    %1796 = vmatpush1.msra.mxu0 0.0
    %1797 = vmatprep.subr.mxu0 0.0
    %1798 = vmatpush1.msra.mxu0 0.0
    %1799 = vmatprep.subr.mxu0 0.0
    %1800 = vmatpush1.msra.mxu0 0.0
    %1801 = vmatprep.subr.mxu0 0.0
    %1802 = vmatpush1.msra.mxu0 0.0
    %1803 = vmatprep.subr.mxu0 0.0
    %1804 = vmatpush1.msra.mxu0 0.0
    %1805 = vmatprep.subr.mxu0 0.0
    %1806 = vmatpush1.msra.mxu0 0.0
    %1807 = vmatprep.subr.mxu0 0.0
    %1808 = vmatpush1.msra.mxu0 0.0
    %1809 = vmatprep.subr.mxu0 0.0
    %1810 = vmatpush1.msra.mxu0 0.0
    %1811 = vmatprep.subr.mxu0 0.0
    %1812 = vmatpush1.msra.mxu0 0.0
    %1813 = vmatprep.subr.mxu0 0.0
    %1814 = vmatpush1.msra.mxu0 0.0
    %1815 = vmatprep.subr.mxu0 0.0
    %1816 = vmatpush1.msra.mxu0 0.0
    %1817 = vmatprep.subr.mxu0 0.0
    %1818 = vmatpush1.msra.mxu0 0.0
    %1819 = vmatprep.subr.mxu0 0.0
    %1820 = vmatpush1.msra.mxu0 0.0
    %1821 = vmatprep.subr.mxu0 0.0
    %1822 = vmatpush1.msra.mxu0 0.0
    %1823 = vmatprep.subr.mxu0 0.0
    %1824 = vmatpush1.msra.mxu0 0.0
    %1825 = vmatprep.subr.mxu0 0.0
    %1826 = vmatpush1.msra.mxu0 0.0
    %1827 = vmatprep.subr.mxu0 0.0
    %1828 = vmatpush1.msra.mxu0 0.0
    %1829 = vmatprep.subr.mxu0 0.0
    %1830 = vmatpush1.msra.mxu0 0.0
    %1831 = vmatprep.subr.mxu0 0.0
    %1832 = vmatpush1.msra.mxu0 0.0
    %1833 = vmatprep.subr.mxu0 0.0
    %1834 = vmatpush1.msra.mxu0 0.0
    %1835 = vmatprep.subr.mxu0 0.0
    %1836 = vmatpush1.msra.mxu0 0.0
    %1837 = vmatprep.subr.mxu0 0.0
    %1838 = vmatpush1.msra.mxu0 0.0
    %1839 = vmatprep.subr.mxu0 0.0
    %1840 = vmatpush1.msra.mxu0 0.0
    %1841 = vmatprep.subr.mxu0 0.0
    %1842 = vmatpush1.msra.mxu0 0.0
    %1843 = vmatprep.subr.mxu0 0.0
    %1844 = vmatpush1.msra.mxu0 0.0
    %1845 = vmatprep.subr.mxu0 0.0
    %1846 = vmatpush1.msra.mxu0 0.0
    %1847 = vmatprep.subr.mxu0 0.0
    %1848 = vmatpush1.msra.mxu0 0.0
    %1849 = vmatprep.mubr.f32.mxu0 0.0
    %1850 = vmatmul.mubr.f32.gmra.mrb[0].mxu0 %v1783
    %v1851 = vpop.f32.mrb[0].mxu0
    %v1852 = vadd.f32 0.0, %v1851
    %v1853 = vpop.f32.mrb[0].mxu0
    %1854 = vdwg.mxu0
    %v1855 = vadd.f32 %v634, %v1852
    %v1856 = vmul.f32 %v1855, 0.5
    %v1857 = vtanh.pop %v1856
    %v1858 = vmul.f32 %v1857, 0.5
    %v1859 = vadd.f32 %v1858, 0.5
    %v1860 = vtanh.pop %v1855
    %v1861 = vmul.f32 %v1859, %v1773
    %1863 = vrot.lane.b32.xlu0 %v1860, 64
    %v1864 = vpop.permute.xlu0 %1863
    %v1866 = vmul.f32 %v1859, %v1864
    %1868 = vrot.lane.b32.xlu0 %v1866, 32
    %v1869 = vpop.permute.xlu0 %1868
    %v1871 = vadd.f32 %v1861, %v1869
    %v1872 = vtanh.pop %v1871
    %1874 = vrot.lane.b32.xlu0 %v1872, 64
    %v1875 = vpop.permute.xlu0 %1874
    %v1877 = vmul.f32 %v1859, %v1875
    %1879 = vrot.lane.b32.xlu0 %v1877, 32
    %v1880 = vpop.permute.xlu0 %1879
    %v1881 = vsel %vm290, %v1880, 0
    %1883 = vmatprep.subr.mxu0 0.0
    %1884 = vmatpush1.msra.mxu0 %v1683
    %1885 = vmatprep.subr.mxu0 0.0
    %1886 = vmatpush1.msra.mxu0 %v1684
    %1887 = vmatprep.subr.mxu0 0.0
    %1888 = vmatpush1.msra.mxu0 %v1685
    %1889 = vmatprep.subr.mxu0 0.0
    %1890 = vmatpush1.msra.mxu0 %v1686
    %1891 = vmatprep.subr.mxu0 0.0
    %1892 = vmatpush1.msra.mxu0 0.0
    %1893 = vmatprep.subr.mxu0 0.0
    %1894 = vmatpush1.msra.mxu0 0.0
    %1895 = vmatprep.subr.mxu0 0.0
    %1896 = vmatpush1.msra.mxu0 0.0
    %1897 = vmatprep.subr.mxu0 0.0
    %1898 = vmatpush1.msra.mxu0 0.0
    %1899 = vmatprep.subr.mxu0 0.0
    %1900 = vmatpush1.msra.mxu0 0.0
    %1901 = vmatprep.subr.mxu0 0.0
    %1902 = vmatpush1.msra.mxu0 0.0
    %1903 = vmatprep.subr.mxu0 0.0
    %1904 = vmatpush1.msra.mxu0 0.0
    %1905 = vmatprep.subr.mxu0 0.0
    %1906 = vmatpush1.msra.mxu0 0.0
    %1907 = vmatprep.subr.mxu0 0.0
    %1908 = vmatpush1.msra.mxu0 0.0
    %1909 = vmatprep.subr.mxu0 0.0
    %1910 = vmatpush1.msra.mxu0 0.0
    %1911 = vmatprep.subr.mxu0 0.0
    %1912 = vmatpush1.msra.mxu0 0.0
    %1913 = vmatprep.subr.mxu0 0.0
    %1914 = vmatpush1.msra.mxu0 0.0
    %1915 = vmatprep.subr.mxu0 0.0
    %1916 = vmatpush1.msra.mxu0 0.0
    %1917 = vmatprep.subr.mxu0 0.0
    %1918 = vmatpush1.msra.mxu0 0.0
    %1919 = vmatprep.subr.mxu0 0.0
    %1920 = vmatpush1.msra.mxu0 0.0
    %1921 = vmatprep.subr.mxu0 0.0
    %1922 = vmatpush1.msra.mxu0 0.0
    %1923 = vmatprep.subr.mxu0 0.0
    %1924 = vmatpush1.msra.mxu0 0.0
    %1925 = vmatprep.subr.mxu0 0.0
    %1926 = vmatpush1.msra.mxu0 0.0
    %1927 = vmatprep.subr.mxu0 0.0
    %1928 = vmatpush1.msra.mxu0 0.0
    %1929 = vmatprep.subr.mxu0 0.0
    %1930 = vmatpush1.msra.mxu0 0.0
    %1931 = vmatprep.subr.mxu0 0.0
    %1932 = vmatpush1.msra.mxu0 0.0
    %1933 = vmatprep.subr.mxu0 0.0
    %1934 = vmatpush1.msra.mxu0 0.0
    %1935 = vmatprep.subr.mxu0 0.0
    %1936 = vmatpush1.msra.mxu0 0.0
    %1937 = vmatprep.subr.mxu0 0.0
    %1938 = vmatpush1.msra.mxu0 0.0
    %1939 = vmatprep.subr.mxu0 0.0
    %1940 = vmatpush1.msra.mxu0 0.0
    %1941 = vmatprep.subr.mxu0 0.0
    %1942 = vmatpush1.msra.mxu0 0.0
    %1943 = vmatprep.subr.mxu0 0.0
    %1944 = vmatpush1.msra.mxu0 0.0
    %1945 = vmatprep.subr.mxu0 0.0
    %1946 = vmatpush1.msra.mxu0 0.0
    %1947 = vmatprep.mubr.f32.mxu0 0.0
    %1948 = vmatmul.mubr.f32.gmra.mrb[0].mxu0 %v1881
    %v1949 = vpop.f32.mrb[0].mxu0
    %v1950 = vadd.f32 0.0, %v1949
    %v1951 = vpop.f32.mrb[0].mxu0
    %1952 = vdwg.mxu0
    %v1953 = vadd.f32 %v809, %v1950
    %v1954 = vmul.f32 %v1953, 0.5
    %v1955 = vtanh.pop %v1954
    %v1956 = vmul.f32 %v1955, 0.5
    %v1957 = vadd.f32 %v1956, 0.5
    %v1958 = vtanh.pop %v1953
    %v1959 = vmul.f32 %v1957, %v1871
    %1961 = vrot.lane.b32.xlu0 %v1958, 64
    %v1962 = vpop.permute.xlu0 %1961
    %v1964 = vmul.f32 %v1957, %v1962
    %1966 = vrot.lane.b32.xlu0 %v1964, 32
    %v1967 = vpop.permute.xlu0 %1966
    %v1969 = vadd.f32 %v1959, %v1967
    %v1970 = vtanh.pop %v1969
    %1972 = vrot.lane.b32.xlu0 %v1970, 64
    %v1973 = vpop.permute.xlu0 %1972
    %v1975 = vmul.f32 %v1957, %v1973
    %1977 = vrot.lane.b32.xlu0 %v1975, 32
    %v1978 = vpop.permute.xlu0 %1977
    %v1979 = vsel %vm290, %v1978, 0
    %1981 = vmatprep.subr.mxu0 0.0
    %1982 = vmatpush1.msra.mxu0 %v1683
    %1983 = vmatprep.subr.mxu0 0.0
    %1984 = vmatpush1.msra.mxu0 %v1684
    %1985 = vmatprep.subr.mxu0 0.0
    %1986 = vmatpush1.msra.mxu0 %v1685
    %1987 = vmatprep.subr.mxu0 0.0
    %1988 = vmatpush1.msra.mxu0 %v1686
    %1989 = vmatprep.subr.mxu0 0.0
    %1990 = vmatpush1.msra.mxu0 0.0
    %1991 = vmatprep.subr.mxu0 0.0
    %1992 = vmatpush1.msra.mxu0 0.0
    %1993 = vmatprep.subr.mxu0 0.0
    %1994 = vmatpush1.msra.mxu0 0.0
    %1995 = vmatprep.subr.mxu0 0.0
    %1996 = vmatpush1.msra.mxu0 0.0
    %1997 = vmatprep.subr.mxu0 0.0
    %1998 = vmatpush1.msra.mxu0 0.0
    %1999 = vmatprep.subr.mxu0 0.0
    %2000 = vmatpush1.msra.mxu0 0.0
    %2001 = vmatprep.subr.mxu0 0.0
    %2002 = vmatpush1.msra.mxu0 0.0
    %2003 = vmatprep.subr.mxu0 0.0
    %2004 = vmatpush1.msra.mxu0 0.0
    %2005 = vmatprep.subr.mxu0 0.0
    %2006 = vmatpush1.msra.mxu0 0.0
    %2007 = vmatprep.subr.mxu0 0.0
    %2008 = vmatpush1.msra.mxu0 0.0
    %2009 = vmatprep.subr.mxu0 0.0
    %2010 = vmatpush1.msra.mxu0 0.0
    %2011 = vmatprep.subr.mxu0 0.0
    %2012 = vmatpush1.msra.mxu0 0.0
    %2013 = vmatprep.subr.mxu0 0.0
    %2014 = vmatpush1.msra.mxu0 0.0
    %2015 = vmatprep.subr.mxu0 0.0
    %2016 = vmatpush1.msra.mxu0 0.0
    %2017 = vmatprep.subr.mxu0 0.0
    %2018 = vmatpush1.msra.mxu0 0.0
    %2019 = vmatprep.subr.mxu0 0.0
    %2020 = vmatpush1.msra.mxu0 0.0
    %2021 = vmatprep.subr.mxu0 0.0
    %2022 = vmatpush1.msra.mxu0 0.0
    %2023 = vmatprep.subr.mxu0 0.0
    %2024 = vmatpush1.msra.mxu0 0.0
    %2025 = vmatprep.subr.mxu0 0.0
    %2026 = vmatpush1.msra.mxu0 0.0
    %2027 = vmatprep.subr.mxu0 0.0
    %2028 = vmatpush1.msra.mxu0 0.0
    %2029 = vmatprep.subr.mxu0 0.0
    %2030 = vmatpush1.msra.mxu0 0.0
    %2031 = vmatprep.subr.mxu0 0.0
    %2032 = vmatpush1.msra.mxu0 0.0
    %2033 = vmatprep.subr.mxu0 0.0
    %2034 = vmatpush1.msra.mxu0 0.0
    %2035 = vmatprep.subr.mxu0 0.0
    %2036 = vmatpush1.msra.mxu0 0.0
    %2037 = vmatprep.subr.mxu0 0.0
    %2038 = vmatpush1.msra.mxu0 0.0
    %2039 = vmatprep.subr.mxu0 0.0
    %2040 = vmatpush1.msra.mxu0 0.0
    %2041 = vmatprep.subr.mxu0 0.0
    %2042 = vmatpush1.msra.mxu0 0.0
    %2043 = vmatprep.subr.mxu0 0.0
    %2044 = vmatpush1.msra.mxu0 0.0
    %2045 = vmatprep.mubr.f32.mxu0 0.0
    %2046 = vmatmul.mubr.f32.gmra.mrb[0].mxu0 %v1979
    %v2047 = vpop.f32.mrb[0].mxu0
    %v2048 = vadd.f32 0.0, %v2047
    %v2049 = vpop.f32.mrb[0].mxu0
    %2050 = vdwg.mxu0
    %v2051 = vadd.f32 %v984, %v2048
    %v2052 = vmul.f32 %v2051, 0.5
    %v2053 = vtanh.pop %v2052
    %v2054 = vmul.f32 %v2053, 0.5
    %v2055 = vadd.f32 %v2054, 0.5
    %v2056 = vtanh.pop %v2051
    %v2057 = vmul.f32 %v2055, %v1969
    %2059 = vrot.lane.b32.xlu0 %v2056, 64
    %v2060 = vpop.permute.xlu0 %2059
    %v2062 = vmul.f32 %v2055, %v2060
    %2064 = vrot.lane.b32.xlu0 %v2062, 32
    %v2065 = vpop.permute.xlu0 %2064
    %v2067 = vadd.f32 %v2057, %v2065
    %v2068 = vtanh.pop %v2067
    %2070 = vrot.lane.b32.xlu0 %v2068, 64
    %v2071 = vpop.permute.xlu0 %2070
    %v2073 = vmul.f32 %v2055, %v2071
    %2075 = vrot.lane.b32.xlu0 %v2073, 32
    %v2076 = vpop.permute.xlu0 %2075
    %v2077 = vsel %vm290, %v2076, 0
    %2079 = vmatprep.subr.mxu0 0.0
    %2080 = vmatpush1.msra.mxu0 %v1683
    %2081 = vmatprep.subr.mxu0 0.0
    %2082 = vmatpush1.msra.mxu0 %v1684
    %2083 = vmatprep.subr.mxu0 0.0
    %2084 = vmatpush1.msra.mxu0 %v1685
    %2085 = vmatprep.subr.mxu0 0.0
    %2086 = vmatpush1.msra.mxu0 %v1686
    %2087 = vmatprep.subr.mxu0 0.0
    %2088 = vmatpush1.msra.mxu0 0.0
    %2089 = vmatprep.subr.mxu0 0.0
    %2090 = vmatpush1.msra.mxu0 0.0
    %2091 = vmatprep.subr.mxu0 0.0
    %2092 = vmatpush1.msra.mxu0 0.0
    %2093 = vmatprep.subr.mxu0 0.0
    %2094 = vmatpush1.msra.mxu0 0.0
    %2095 = vmatprep.subr.mxu0 0.0
    %2096 = vmatpush1.msra.mxu0 0.0
    %2097 = vmatprep.subr.mxu0 0.0
    %2098 = vmatpush1.msra.mxu0 0.0
    %2099 = vmatprep.subr.mxu0 0.0
    %2100 = vmatpush1.msra.mxu0 0.0
    %2101 = vmatprep.subr.mxu0 0.0
    %2102 = vmatpush1.msra.mxu0 0.0
    %2103 = vmatprep.subr.mxu0 0.0
    %2104 = vmatpush1.msra.mxu0 0.0
    %2105 = vmatprep.subr.mxu0 0.0
    %2106 = vmatpush1.msra.mxu0 0.0
    %2107 = vmatprep.subr.mxu0 0.0
    %2108 = vmatpush1.msra.mxu0 0.0
    %2109 = vmatprep.subr.mxu0 0.0
    %2110 = vmatpush1.msra.mxu0 0.0
    %2111 = vmatprep.subr.mxu0 0.0
    %2112 = vmatpush1.msra.mxu0 0.0
    %2113 = vmatprep.subr.mxu0 0.0
    %2114 = vmatpush1.msra.mxu0 0.0
    %2115 = vmatprep.subr.mxu0 0.0
    %2116 = vmatpush1.msra.mxu0 0.0
    %2117 = vmatprep.subr.mxu0 0.0
    %2118 = vmatpush1.msra.mxu0 0.0
    %2119 = vmatprep.subr.mxu0 0.0
    %2120 = vmatpush1.msra.mxu0 0.0
    %2121 = vmatprep.subr.mxu0 0.0
    %2122 = vmatpush1.msra.mxu0 0.0
    %2123 = vmatprep.subr.mxu0 0.0
    %2124 = vmatpush1.msra.mxu0 0.0
    %2125 = vmatprep.subr.mxu0 0.0
    %2126 = vmatpush1.msra.mxu0 0.0
    %2127 = vmatprep.subr.mxu0 0.0
    %2128 = vmatpush1.msra.mxu0 0.0
    %2129 = vmatprep.subr.mxu0 0.0
    %2130 = vmatpush1.msra.mxu0 0.0
    %2131 = vmatprep.subr.mxu0 0.0
    %2132 = vmatpush1.msra.mxu0 0.0
    %2133 = vmatprep.subr.mxu0 0.0
    %2134 = vmatpush1.msra.mxu0 0.0
    %2135 = vmatprep.subr.mxu0 0.0
    %2136 = vmatpush1.msra.mxu0 0.0
    %2137 = vmatprep.subr.mxu0 0.0
    %2138 = vmatpush1.msra.mxu0 0.0
    %2139 = vmatprep.subr.mxu0 0.0
    %2140 = vmatpush1.msra.mxu0 0.0
    %2141 = vmatprep.subr.mxu0 0.0
    %2142 = vmatpush1.msra.mxu0 0.0
    %2143 = vmatprep.mubr.f32.mxu0 0.0
    %2144 = vmatmul.mubr.f32.gmra.mrb[0].mxu0 %v2077
    %v2145 = vpop.f32.mrb[0].mxu0
    %v2146 = vadd.f32 0.0, %v2145
    %v2147 = vpop.f32.mrb[0].mxu0
    %2148 = vdwg.mxu0
    %v2149 = vadd.f32 %v1155, %v2146
    %v2150 = vmul.f32 %v2149, 0.5
    %v2151 = vtanh.pop %v2150
    %v2152 = vmul.f32 %v2151, 0.5
    %v2153 = vadd.f32 %v2152, 0.5
    %v2154 = vtanh.pop %v2149
    %v2155 = vmul.f32 %v2153, %v2067
    %2157 = vrot.lane.b32.xlu0 %v2154, 64
    %v2158 = vpop.permute.xlu0 %2157
    %v2160 = vmul.f32 %v2153, %v2158
    %2162 = vrot.lane.b32.xlu0 %v2160, 32
    %v2163 = vpop.permute.xlu0 %2162
    %v2165 = vadd.f32 %v2155, %v2163
    %v2166 = vtanh.pop %v2165
    %2168 = vrot.lane.b32.xlu0 %v2166, 64
    %v2169 = vpop.permute.xlu0 %2168
    %v2171 = vmul.f32 %v2153, %v2169
    %2173 = vrot.lane.b32.xlu0 %v2171, 32
    %v2174 = vpop.permute.xlu0 %2173
    %v2175 = vsel %vm290, %v2174, 0
    %2177 = vmatprep.subr.mxu0 0.0
    %2178 = vmatpush1.msra.mxu0 %v1683
    %2179 = vmatprep.subr.mxu0 0.0
    %2180 = vmatpush1.msra.mxu0 %v1684
    %2181 = vmatprep.subr.mxu0 0.0
    %2182 = vmatpush1.msra.mxu0 %v1685
    %2183 = vmatprep.subr.mxu0 0.0
    %2184 = vmatpush1.msra.mxu0 %v1686
    %2185 = vmatprep.subr.mxu0 0.0
    %2186 = vmatpush1.msra.mxu0 0.0
    %2187 = vmatprep.subr.mxu0 0.0
    %2188 = vmatpush1.msra.mxu0 0.0
    %2189 = vmatprep.subr.mxu0 0.0
    %2190 = vmatpush1.msra.mxu0 0.0
    %2191 = vmatprep.subr.mxu0 0.0
    %2192 = vmatpush1.msra.mxu0 0.0
    %2193 = vmatprep.subr.mxu0 0.0
    %2194 = vmatpush1.msra.mxu0 0.0
    %2195 = vmatprep.subr.mxu0 0.0
    %2196 = vmatpush1.msra.mxu0 0.0
    %2197 = vmatprep.subr.mxu0 0.0
    %2198 = vmatpush1.msra.mxu0 0.0
    %2199 = vmatprep.subr.mxu0 0.0
    %2200 = vmatpush1.msra.mxu0 0.0
    %2201 = vmatprep.subr.mxu0 0.0
    %2202 = vmatpush1.msra.mxu0 0.0
    %2203 = vmatprep.subr.mxu0 0.0
    %2204 = vmatpush1.msra.mxu0 0.0
    %2205 = vmatprep.subr.mxu0 0.0
    %2206 = vmatpush1.msra.mxu0 0.0
    %2207 = vmatprep.subr.mxu0 0.0
    %2208 = vmatpush1.msra.mxu0 0.0
    %2209 = vmatprep.subr.mxu0 0.0
    %2210 = vmatpush1.msra.mxu0 0.0
    %2211 = vmatprep.subr.mxu0 0.0
    %2212 = vmatpush1.msra.mxu0 0.0
    %2213 = vmatprep.subr.mxu0 0.0
    %2214 = vmatpush1.msra.mxu0 0.0
    %2215 = vmatprep.subr.mxu0 0.0
    %2216 = vmatpush1.msra.mxu0 0.0
    %2217 = vmatprep.subr.mxu0 0.0
    %2218 = vmatpush1.msra.mxu0 0.0
    %2219 = vmatprep.subr.mxu0 0.0
    %2220 = vmatpush1.msra.mxu0 0.0
    %2221 = vmatprep.subr.mxu0 0.0
    %2222 = vmatpush1.msra.mxu0 0.0
    %2223 = vmatprep.subr.mxu0 0.0
    %2224 = vmatpush1.msra.mxu0 0.0
    %2225 = vmatprep.subr.mxu0 0.0
    %2226 = vmatpush1.msra.mxu0 0.0
    %2227 = vmatprep.subr.mxu0 0.0
    %2228 = vmatpush1.msra.mxu0 0.0
    %2229 = vmatprep.subr.mxu0 0.0
    %2230 = vmatpush1.msra.mxu0 0.0
    %2231 = vmatprep.subr.mxu0 0.0
    %2232 = vmatpush1.msra.mxu0 0.0
    %2233 = vmatprep.subr.mxu0 0.0
    %2234 = vmatpush1.msra.mxu0 0.0
    %2235 = vmatprep.subr.mxu0 0.0
    %2236 = vmatpush1.msra.mxu0 0.0
    %2237 = vmatprep.subr.mxu0 0.0
    %2238 = vmatpush1.msra.mxu0 0.0
    %2239 = vmatprep.subr.mxu0 0.0
    %2240 = vmatpush1.msra.mxu0 0.0
    %2241 = vmatprep.mubr.f32.mxu0 0.0
    %2242 = vmatmul.mubr.f32.gmra.mrb[0].mxu0 %v2175
    %v2243 = vpop.f32.mrb[0].mxu0
    %v2244 = vadd.f32 0.0, %v2243
    %v2245 = vpop.f32.mrb[0].mxu0
    %2246 = vdwg.mxu0
    %v2247 = vadd.f32 %v1330, %v2244
    %v2248 = vmul.f32 %v2247, 0.5
    %v2249 = vtanh.pop %v2248
    %v2250 = vmul.f32 %v2249, 0.5
    %v2251 = vadd.f32 %v2250, 0.5
    %v2252 = vtanh.pop %v2247
    %v2253 = vmul.f32 %v2251, %v2165
    %2255 = vrot.lane.b32.xlu0 %v2252, 64
    %v2256 = vpop.permute.xlu0 %2255
    %v2258 = vmul.f32 %v2251, %v2256
    %2260 = vrot.lane.b32.xlu0 %v2258, 32
    %v2261 = vpop.permute.xlu0 %2260
    %v2263 = vadd.f32 %v2253, %v2261
    %v2264 = vtanh.pop %v2263
    %2266 = vrot.lane.b32.xlu0 %v2264, 64
    %v2267 = vpop.permute.xlu0 %2266
    %v2269 = vmul.f32 %v2251, %v2267
    %2271 = vrot.lane.b32.xlu0 %v2269, 32
    %v2272 = vpop.permute.xlu0 %2271
    %v2273 = vsel %vm290, %v2272, 0
    %2275 = vmatprep.subr.mxu0 0.0
    %2276 = vmatpush1.msra.mxu0 %v1683
    %2277 = vmatprep.subr.mxu0 0.0
    %2278 = vmatpush1.msra.mxu0 %v1684
    %2279 = vmatprep.subr.mxu0 0.0
    %2280 = vmatpush1.msra.mxu0 %v1685
    %2281 = vmatprep.subr.mxu0 0.0
    %2282 = vmatpush1.msra.mxu0 %v1686
    %2283 = vmatprep.subr.mxu0 0.0
    %2284 = vmatpush1.msra.mxu0 0.0
    %2285 = vmatprep.subr.mxu0 0.0
    %2286 = vmatpush1.msra.mxu0 0.0
    %2287 = vmatprep.subr.mxu0 0.0
    %2288 = vmatpush1.msra.mxu0 0.0
    %2289 = vmatprep.subr.mxu0 0.0
    %2290 = vmatpush1.msra.mxu0 0.0
    %2291 = vmatprep.subr.mxu0 0.0
    %2292 = vmatpush1.msra.mxu0 0.0
    %2293 = vmatprep.subr.mxu0 0.0
    %2294 = vmatpush1.msra.mxu0 0.0
    %2295 = vmatprep.subr.mxu0 0.0
    %2296 = vmatpush1.msra.mxu0 0.0
    %2297 = vmatprep.subr.mxu0 0.0
    %2298 = vmatpush1.msra.mxu0 0.0
    %2299 = vmatprep.subr.mxu0 0.0
    %2300 = vmatpush1.msra.mxu0 0.0
    %2301 = vmatprep.subr.mxu0 0.0
    %2302 = vmatpush1.msra.mxu0 0.0
    %2303 = vmatprep.subr.mxu0 0.0
    %2304 = vmatpush1.msra.mxu0 0.0
    %2305 = vmatprep.subr.mxu0 0.0
    %2306 = vmatpush1.msra.mxu0 0.0
    %2307 = vmatprep.subr.mxu0 0.0
    %2308 = vmatpush1.msra.mxu0 0.0
    %2309 = vmatprep.subr.mxu0 0.0
    %2310 = vmatpush1.msra.mxu0 0.0
    %2311 = vmatprep.subr.mxu0 0.0
    %2312 = vmatpush1.msra.mxu0 0.0
    %2313 = vmatprep.subr.mxu0 0.0
    %2314 = vmatpush1.msra.mxu0 0.0
    %2315 = vmatprep.subr.mxu0 0.0
    %2316 = vmatpush1.msra.mxu0 0.0
    %2317 = vmatprep.subr.mxu0 0.0
    %2318 = vmatpush1.msra.mxu0 0.0
    %2319 = vmatprep.subr.mxu0 0.0
    %2320 = vmatpush1.msra.mxu0 0.0
    %2321 = vmatprep.subr.mxu0 0.0
    %2322 = vmatpush1.msra.mxu0 0.0
    %2323 = vmatprep.subr.mxu0 0.0
    %2324 = vmatpush1.msra.mxu0 0.0
    %2325 = vmatprep.subr.mxu0 0.0
    %2326 = vmatpush1.msra.mxu0 0.0
    %2327 = vmatprep.subr.mxu0 0.0
    %2328 = vmatpush1.msra.mxu0 0.0
    %2329 = vmatprep.subr.mxu0 0.0
    %2330 = vmatpush1.msra.mxu0 0.0
    %2331 = vmatprep.subr.mxu0 0.0
    %2332 = vmatpush1.msra.mxu0 0.0
    %2333 = vmatprep.subr.mxu0 0.0
    %2334 = vmatpush1.msra.mxu0 0.0
    %2335 = vmatprep.subr.mxu0 0.0
    %2336 = vmatpush1.msra.mxu0 0.0
    %2337 = vmatprep.subr.mxu0 0.0
    %2338 = vmatpush1.msra.mxu0 0.0
    %2339 = vmatprep.mubr.f32.mxu0 0.0
    %2340 = vmatmul.mubr.f32.gmra.mrb[0].mxu0 %v2273
    %v2341 = vpop.f32.mrb[0].mxu0
    %v2342 = vadd.f32 0.0, %v2341
    %v2343 = vpop.f32.mrb[0].mxu0
    %2344 = vdwg.mxu0
    %v2345 = vadd.f32 %v1505, %v2342
    %v2346 = vmul.f32 %v2345, 0.5
    %v2347 = vtanh.pop %v2346
    %v2348 = vmul.f32 %v2347, 0.5
    %v2349 = vadd.f32 %v2348, 0.5
    %v2350 = vtanh.pop %v2345
    %v2351 = vmul.f32 %v2349, %v2263
    %2353 = vrot.lane.b32.xlu0 %v2350, 64
    %v2354 = vpop.permute.xlu0 %2353
    %v2356 = vmul.f32 %v2349, %v2354
    %2358 = vrot.lane.b32.xlu0 %v2356, 32
    %v2359 = vpop.permute.xlu0 %2358
    %v2361 = vadd.f32 %v2351, %v2359
    %v2362 = vtanh.pop %v2361
    %2364 = vrot.lane.b32.xlu0 %v2362, 64
    %v2365 = vpop.permute.xlu0 %2364
    %v2367 = vmul.f32 %v2349, %v2365
    %2369 = vrot.lane.b32.xlu0 %v2367, 32
    %v2370 = vpop.permute.xlu0 %2369
    %v2371 = vsel %vm290, %v2370, 0
    %2373 = vmatprep.subr.mxu0 0.0
    %2374 = vmatpush1.msra.mxu0 %v1683
    %2375 = vmatprep.subr.mxu0 0.0
    %2376 = vmatpush1.msra.mxu0 %v1684
    %2377 = vmatprep.subr.mxu0 0.0
    %2378 = vmatpush1.msra.mxu0 %v1685
    %2379 = vmatprep.subr.mxu0 0.0
    %2380 = vmatpush1.msra.mxu0 %v1686
    %2381 = vmatprep.subr.mxu0 0.0
    %2382 = vmatpush1.msra.mxu0 0.0
    %2383 = vmatprep.subr.mxu0 0.0
    %2384 = vmatpush1.msra.mxu0 0.0
    %2385 = vmatprep.subr.mxu0 0.0
    %2386 = vmatpush1.msra.mxu0 0.0
    %2387 = vmatprep.subr.mxu0 0.0
    %2388 = vmatpush1.msra.mxu0 0.0
    %2389 = vmatprep.subr.mxu0 0.0
    %2390 = vmatpush1.msra.mxu0 0.0
    %2391 = vmatprep.subr.mxu0 0.0
    %2392 = vmatpush1.msra.mxu0 0.0
    %2393 = vmatprep.subr.mxu0 0.0
    %2394 = vmatpush1.msra.mxu0 0.0
    %2395 = vmatprep.subr.mxu0 0.0
    %2396 = vmatpush1.msra.mxu0 0.0
    %2397 = vmatprep.subr.mxu0 0.0
    %2398 = vmatpush1.msra.mxu0 0.0
    %2399 = vmatprep.subr.mxu0 0.0
    %2400 = vmatpush1.msra.mxu0 0.0
    %2401 = vmatprep.subr.mxu0 0.0
    %2402 = vmatpush1.msra.mxu0 0.0
    %2403 = vmatprep.subr.mxu0 0.0
    %2404 = vmatpush1.msra.mxu0 0.0
    %2405 = vmatprep.subr.mxu0 0.0
    %2406 = vmatpush1.msra.mxu0 0.0
    %2407 = vmatprep.subr.mxu0 0.0
    %2408 = vmatpush1.msra.mxu0 0.0
    %2409 = vmatprep.subr.mxu0 0.0
    %2410 = vmatpush1.msra.mxu0 0.0
    %2411 = vmatprep.subr.mxu0 0.0
    %2412 = vmatpush1.msra.mxu0 0.0
    %2413 = vmatprep.subr.mxu0 0.0
    %2414 = vmatpush1.msra.mxu0 0.0
    %2415 = vmatprep.subr.mxu0 0.0
    %2416 = vmatpush1.msra.mxu0 0.0
    %2417 = vmatprep.subr.mxu0 0.0
    %2418 = vmatpush1.msra.mxu0 0.0
    %2419 = vmatprep.subr.mxu0 0.0
    %2420 = vmatpush1.msra.mxu0 0.0
    %2421 = vmatprep.subr.mxu0 0.0
    %2422 = vmatpush1.msra.mxu0 0.0
    %2423 = vmatprep.subr.mxu0 0.0
    %2424 = vmatpush1.msra.mxu0 0.0
    %2425 = vmatprep.subr.mxu0 0.0
    %2426 = vmatpush1.msra.mxu0 0.0
    %2427 = vmatprep.subr.mxu0 0.0
    %2428 = vmatpush1.msra.mxu0 0.0
    %2429 = vmatprep.subr.mxu0 0.0
    %2430 = vmatpush1.msra.mxu0 0.0
    %2431 = vmatprep.subr.mxu0 0.0
    %2432 = vmatpush1.msra.mxu0 0.0
    %2433 = vmatprep.subr.mxu0 0.0
    %2434 = vmatpush1.msra.mxu0 0.0
    %2435 = vmatprep.subr.mxu0 0.0
    %2436 = vmatpush1.msra.mxu0 0.0
    %2437 = vmatprep.mubr.f32.mxu0 0.0
    %2438 = vmatmul.mubr.f32.gmra.mrb[0].mxu0 %v2371
    %v2439 = vpop.f32.mrb[0].mxu0
    %v2440 = vadd.f32 0.0, %v2439
    %v2441 = vpop.f32.mrb[0].mxu0
    %2442 = vdwg.mxu0
    %v2443 = vadd.f32 %v1680, %v2440
    %v2444 = vmul.f32 %v2443, 0.5
    %v2445 = vtanh.pop %v2444
    %v2446 = vmul.f32 %v2445, 0.5
    %v2447 = vadd.f32 %v2446, 0.5
    %v2448 = vtanh.pop %v2443
    %v2449 = vmul.f32 %v2447, %v2361
    %2451 = vrot.lane.b32.xlu0 %v2448, 64
    %v2452 = vpop.permute.xlu0 %2451
    %v2454 = vmul.f32 %v2447, %v2452
    %2456 = vrot.lane.b32.xlu0 %v2454, 32
    %v2457 = vpop.permute.xlu0 %2456
    %v2459 = vadd.f32 %v2449, %v2457
    %v2460 = vtanh.pop %v2459
    %2462 = vrot.lane.b32.xlu0 %v2460, 64
    %v2463 = vpop.permute.xlu0 %2462
    %v2465 = vmul.f32 %v2447, %v2463
    %v2466 = vld [vmem:[%s13] sm:$0xff]
    %v2467 = vld [vmem:[%s13 + $0x8] sm:$0xff]
    %v2468 = vld [vmem:[%s13 + $0x10] sm:$0xff]
    %v2469 = vld [vmem:[%s13 + $0x18] sm:$0xff]
    %v2470 = vld [vmem:[%s14] sm:$0x1]
    %v2472 = vlaneseq
    %v2473 = vshrl.u32 %v2472, 7
    %v2474 = vsub.s32 0, %v2473
    %v2475 = vrot.slane %v2470, %v2474
    %v2477 = vld [vmem:[#allocation11] sm:$0xff]
    %v2478 = vld [vmem:[#allocation11 + $0x8] sm:$0xff]
    %v2479 = vld [vmem:[#allocation11 + $0x10] sm:$0xff]
    %v2480 = vld [vmem:[#allocation11 + $0x18] sm:$0xff]
    %v2481 = vld [vmem:[#allocation10] sm:$0xff]
    %v2482 = vld [vmem:[#allocation10 + $0x8] sm:$0xff]
    %v2483 = vld [vmem:[#allocation10 + $0x10] sm:$0xff]
    %v2484 = vld [vmem:[#allocation10 + $0x18] sm:$0xff]
    %v2485 = vld [vmem:[#allocation13] sm:$0x1]
    %v2487 = vlaneseq
    %v2488 = vshrl.u32 %v2487, 7
    %v2489 = vsub.s32 0, %v2488
    %v2490 = vrot.slane %v2485, %v2489
    %2493 = vrot.lane.b32.xlu0 %v2465, 32
    %v2494 = vpop.permute.xlu0 %2493
    %v2495 = vsel %vm290, %v2494, 0
    %2497 = vmatprep.subr.mxu0 0.0
    %2498 = vmatpush1.msra.mxu0 %v2481
    %2499 = vmatprep.subr.mxu0 0.0
    %2500 = vmatpush1.msra.mxu0 %v2482
    %2501 = vmatprep.subr.mxu0 0.0
    %2502 = vmatpush1.msra.mxu0 %v2483
    %2503 = vmatprep.subr.mxu0 0.0
    %2504 = vmatpush1.msra.mxu0 %v2484
    %2505 = vmatprep.subr.mxu0 0.0
    %2506 = vmatpush1.msra.mxu0 0.0
    %2507 = vmatprep.subr.mxu0 0.0
    %2508 = vmatpush1.msra.mxu0 0.0
    %2509 = vmatprep.subr.mxu0 0.0
    %2510 = vmatpush1.msra.mxu0 0.0
    %2511 = vmatprep.subr.mxu0 0.0
    %2512 = vmatpush1.msra.mxu0 0.0
    %2513 = vmatprep.subr.mxu0 0.0
    %2514 = vmatpush1.msra.mxu0 0.0
    %2515 = vmatprep.subr.mxu0 0.0
    %2516 = vmatpush1.msra.mxu0 0.0
    %2517 = vmatprep.subr.mxu0 0.0
    %2518 = vmatpush1.msra.mxu0 0.0
    %2519 = vmatprep.subr.mxu0 0.0
    %2520 = vmatpush1.msra.mxu0 0.0
    %2521 = vmatprep.subr.mxu0 0.0
    %2522 = vmatpush1.msra.mxu0 0.0
    %2523 = vmatprep.subr.mxu0 0.0
    %2524 = vmatpush1.msra.mxu0 0.0
    %2525 = vmatprep.subr.mxu0 0.0
    %2526 = vmatpush1.msra.mxu0 0.0
    %2527 = vmatprep.subr.mxu0 0.0
    %2528 = vmatpush1.msra.mxu0 0.0
    %2529 = vmatprep.subr.mxu0 0.0
    %2530 = vmatpush1.msra.mxu0 0.0
    %2531 = vmatprep.subr.mxu0 0.0
    %2532 = vmatpush1.msra.mxu0 0.0
    %2533 = vmatprep.subr.mxu0 0.0
    %2534 = vmatpush1.msra.mxu0 0.0
    %2535 = vmatprep.subr.mxu0 0.0
    %2536 = vmatpush1.msra.mxu0 0.0
    %2537 = vmatprep.subr.mxu0 0.0
    %2538 = vmatpush1.msra.mxu0 0.0
    %2539 = vmatprep.subr.mxu0 0.0
    %2540 = vmatpush1.msra.mxu0 0.0
    %2541 = vmatprep.subr.mxu0 0.0
    %2542 = vmatpush1.msra.mxu0 0.0
    %2543 = vmatprep.subr.mxu0 0.0
    %2544 = vmatpush1.msra.mxu0 0.0
    %2545 = vmatprep.subr.mxu0 0.0
    %2546 = vmatpush1.msra.mxu0 0.0
    %2547 = vmatprep.subr.mxu0 0.0
    %2548 = vmatpush1.msra.mxu0 0.0
    %2549 = vmatprep.subr.mxu0 0.0
    %2550 = vmatpush1.msra.mxu0 0.0
    %2551 = vmatprep.subr.mxu0 0.0
    %2552 = vmatpush1.msra.mxu0 0.0
    %2553 = vmatprep.subr.mxu0 0.0
    %2554 = vmatpush1.msra.mxu0 0.0
    %2555 = vmatprep.subr.mxu0 0.0
    %2556 = vmatpush1.msra.mxu0 0.0
    %2557 = vmatprep.subr.mxu0 0.0
    %2558 = vmatpush1.msra.mxu0 0.0
    %2559 = vmatprep.subr.mxu0 0.0
    %2560 = vmatpush1.msra.mxu0 0.0
    %2561 = vmatprep.mubr.f32.mxu0 0.0
    %2562 = vmatmul.mubr.f32.gmra.mrb[0].mxu0 %v2495
    %v2563 = vpop.f32.mrb[0].mxu0
    %v2564 = vadd.f32 %v2490, %v2563
    %v2565 = vpop.f32.mrb[0].mxu0
    %2566 = vdwg.mxu0
    %v2567 = vld [vmem:[#allocation14] sm:$0xff]
    %v2568 = vld [vmem:[#allocation14 + $0x8] sm:$0xff]
    %v2569 = vld [vmem:[#allocation14 + $0x10] sm:$0xff]
    %v2570 = vld [vmem:[#allocation14 + $0x18] sm:$0xff]
    %v2571 = vld [vmem:[#allocation17] sm:$0x1]
    %v2573 = vlaneseq
    %v2574 = vshrl.u32 %v2573, 7
    %v2575 = vsub.s32 0, %v2574
    %v2576 = vrot.slane %v2571, %v2575
    %2578 = vmatprep.subr.mxu0 0.0
    %2579 = vmatpush1.msra.mxu0 %v2477
    %2580 = vmatprep.subr.mxu0 0.0
    %2581 = vmatpush1.msra.mxu0 %v2478
    %2582 = vmatprep.subr.mxu0 0.0
    %2583 = vmatpush1.msra.mxu0 %v2479
    %2584 = vmatprep.subr.mxu0 0.0
    %2585 = vmatpush1.msra.mxu0 %v2480
    %2586 = vmatprep.subr.mxu0 0.0
    %2587 = vmatpush1.msra.mxu0 0.0
    %2588 = vmatprep.subr.mxu0 0.0
    %2589 = vmatpush1.msra.mxu0 0.0
    %2590 = vmatprep.subr.mxu0 0.0
    %2591 = vmatpush1.msra.mxu0 0.0
    %2592 = vmatprep.subr.mxu0 0.0
    %2593 = vmatpush1.msra.mxu0 0.0
    %2594 = vmatprep.subr.mxu0 0.0
    %2595 = vmatpush1.msra.mxu0 0.0
    %2596 = vmatprep.subr.mxu0 0.0
    %2597 = vmatpush1.msra.mxu0 0.0
    %2598 = vmatprep.subr.mxu0 0.0
    %2599 = vmatpush1.msra.mxu0 0.0
    %2600 = vmatprep.subr.mxu0 0.0
    %2601 = vmatpush1.msra.mxu0 0.0
    %2602 = vmatprep.subr.mxu0 0.0
    %2603 = vmatpush1.msra.mxu0 0.0
    %2604 = vmatprep.subr.mxu0 0.0
    %2605 = vmatpush1.msra.mxu0 0.0
    %2606 = vmatprep.subr.mxu0 0.0
    %2607 = vmatpush1.msra.mxu0 0.0
    %2608 = vmatprep.subr.mxu0 0.0
    %2609 = vmatpush1.msra.mxu0 0.0
    %2610 = vmatprep.subr.mxu0 0.0
    %2611 = vmatpush1.msra.mxu0 0.0
    %2612 = vmatprep.subr.mxu0 0.0
    %2613 = vmatpush1.msra.mxu0 0.0
    %2614 = vmatprep.subr.mxu0 0.0
    %2615 = vmatpush1.msra.mxu0 0.0
    %2616 = vmatprep.subr.mxu0 0.0
    %2617 = vmatpush1.msra.mxu0 0.0
    %2618 = vmatprep.subr.mxu0 0.0
    %2619 = vmatpush1.msra.mxu0 0.0
    %2620 = vmatprep.subr.mxu0 0.0
    %2621 = vmatpush1.msra.mxu0 0.0
    %2622 = vmatprep.subr.mxu0 0.0
    %2623 = vmatpush1.msra.mxu0 0.0
    %2624 = vmatprep.subr.mxu0 0.0
    %2625 = vmatpush1.msra.mxu0 0.0
    %2626 = vmatprep.subr.mxu0 0.0
    %2627 = vmatpush1.msra.mxu0 0.0
    %2628 = vmatprep.subr.mxu0 0.0
    %2629 = vmatpush1.msra.mxu0 0.0
    %2630 = vmatprep.subr.mxu0 0.0
    %2631 = vmatpush1.msra.mxu0 0.0
    %2632 = vmatprep.subr.mxu0 0.0
    %2633 = vmatpush1.msra.mxu0 0.0
    %2634 = vmatprep.subr.mxu0 0.0
    %2635 = vmatpush1.msra.mxu0 0.0
    %2636 = vmatprep.subr.mxu0 0.0
    %2637 = vmatpush1.msra.mxu0 0.0
    %2638 = vmatprep.subr.mxu0 0.0
    %2639 = vmatpush1.msra.mxu0 0.0
    %2640 = vmatprep.subr.mxu0 0.0
    %2641 = vmatpush1.msra.mxu0 0.0
    %2642 = vmatprep.mubr.f32.mxu0 0.0
    %2643 = vmatmul.mubr.f32.gmra.mrb[0].mxu0 %v292
    %v2644 = vpop.f32.mrb[0].mxu0
    %v2645 = vadd.f32 0.0, %v2644
    %v2646 = vpop.f32.mrb[0].mxu0
    %2647 = vdwg.mxu0
    %v2648 = vadd.f32 %v2564, %v2645
    %v2649 = vmul.f32 %v2648, 0.5
    %v2650 = vtanh.pop %v2649
    %v2651 = vmul.f32 %v2650, 0.5
    %v2652 = vadd.f32 %v2651, 0.5
    %v2653 = vtanh.pop %v2648
    %v2654 = vmul.f32 %v2652, 0.0
    %2656 = vrot.lane.b32.xlu0 %v2653, 64
    %v2657 = vpop.permute.xlu0 %2656
    %v2659 = vmul.f32 %v2652, %v2657
    %2661 = vrot.lane.b32.xlu0 %v2659, 32
    %v2662 = vpop.permute.xlu0 %2661
    %v2664 = vadd.f32 %v2654, %v2662
    %v2665 = vtanh.pop %v2664
    %2667 = vrot.lane.b32.xlu0 %v2665, 64
    %v2668 = vpop.permute.xlu0 %2667
    %v2670 = vmul.f32 %v2652, %v2668
    %2672 = vrot.lane.b32.xlu0 %v2670, 32
    %v2673 = vpop.permute.xlu0 %2672
    %v2674 = vsel %vm290, %v2673, 0
    %2676 = vmatprep.subr.mxu0 0.0
    %2677 = vmatpush1.msra.mxu0 %v2567
    %2678 = vmatprep.subr.mxu0 0.0
    %2679 = vmatpush1.msra.mxu0 %v2568
    %2680 = vmatprep.subr.mxu0 0.0
    %2681 = vmatpush1.msra.mxu0 %v2569
    %2682 = vmatprep.subr.mxu0 0.0
    %2683 = vmatpush1.msra.mxu0 %v2570
    %2684 = vmatprep.subr.mxu0 0.0
    %2685 = vmatpush1.msra.mxu0 0.0
    %2686 = vmatprep.subr.mxu0 0.0
    %2687 = vmatpush1.msra.mxu0 0.0
    %2688 = vmatprep.subr.mxu0 0.0
    %2689 = vmatpush1.msra.mxu0 0.0
    %2690 = vmatprep.subr.mxu0 0.0
    %2691 = vmatpush1.msra.mxu0 0.0
    %2692 = vmatprep.subr.mxu0 0.0
    %2693 = vmatpush1.msra.mxu0 0.0
    %2694 = vmatprep.subr.mxu0 0.0
    %2695 = vmatpush1.msra.mxu0 0.0
    %2696 = vmatprep.subr.mxu0 0.0
    %2697 = vmatpush1.msra.mxu0 0.0
    %2698 = vmatprep.subr.mxu0 0.0
    %2699 = vmatpush1.msra.mxu0 0.0
    %2700 = vmatprep.subr.mxu0 0.0
    %2701 = vmatpush1.msra.mxu0 0.0
    %2702 = vmatprep.subr.mxu0 0.0
    %2703 = vmatpush1.msra.mxu0 0.0
    %2704 = vmatprep.subr.mxu0 0.0
    %2705 = vmatpush1.msra.mxu0 0.0
    %2706 = vmatprep.subr.mxu0 0.0
    %2707 = vmatpush1.msra.mxu0 0.0
    %2708 = vmatprep.subr.mxu0 0.0
    %2709 = vmatpush1.msra.mxu0 0.0
    %2710 = vmatprep.subr.mxu0 0.0
    %2711 = vmatpush1.msra.mxu0 0.0
    %2712 = vmatprep.subr.mxu0 0.0
    %2713 = vmatpush1.msra.mxu0 0.0
    %2714 = vmatprep.subr.mxu0 0.0
    %2715 = vmatpush1.msra.mxu0 0.0
    %2716 = vmatprep.subr.mxu0 0.0
    %2717 = vmatpush1.msra.mxu0 0.0
    %2718 = vmatprep.subr.mxu0 0.0
    %2719 = vmatpush1.msra.mxu0 0.0
    %2720 = vmatprep.subr.mxu0 0.0
    %2721 = vmatpush1.msra.mxu0 0.0
    %2722 = vmatprep.subr.mxu0 0.0
    %2723 = vmatpush1.msra.mxu0 0.0
    %2724 = vmatprep.subr.mxu0 0.0
    %2725 = vmatpush1.msra.mxu0 0.0
    %2726 = vmatprep.subr.mxu0 0.0
    %2727 = vmatpush1.msra.mxu0 0.0
    %2728 = vmatprep.subr.mxu0 0.0
    %2729 = vmatpush1.msra.mxu0 0.0
    %2730 = vmatprep.subr.mxu0 0.0
    %2731 = vmatpush1.msra.mxu0 0.0
    %2732 = vmatprep.subr.mxu0 0.0
    %2733 = vmatpush1.msra.mxu0 0.0
    %2734 = vmatprep.subr.mxu0 0.0
    %2735 = vmatpush1.msra.mxu0 0.0
    %2736 = vmatprep.subr.mxu0 0.0
    %2737 = vmatpush1.msra.mxu0 0.0
    %2738 = vmatprep.subr.mxu0 0.0
    %2739 = vmatpush1.msra.mxu0 0.0
    %2740 = vmatprep.mubr.f32.mxu0 0.0
    %2741 = vmatmul.mubr.f32.gmra.mrb[0].mxu0 %v2674
    %v2742 = vpop.f32.mrb[0].mxu0
    %v2743 = vadd.f32 %v2576, %v2742
    %v2744 = vpop.f32.mrb[0].mxu0
    %2745 = vdwg.mxu0
    %2746 = vmatprep.subr.mxu0 0.0
    %2747 = vmatpush1.msra.mxu0 %v2477
    %2748 = vmatprep.subr.mxu0 0.0
    %2749 = vmatpush1.msra.mxu0 %v2478
    %2750 = vmatprep.subr.mxu0 0.0
    %2751 = vmatpush1.msra.mxu0 %v2479
    %2752 = vmatprep.subr.mxu0 0.0
    %2753 = vmatpush1.msra.mxu0 %v2480
    %2754 = vmatprep.subr.mxu0 0.0
    %2755 = vmatpush1.msra.mxu0 0.0
    %2756 = vmatprep.subr.mxu0 0.0
    %2757 = vmatpush1.msra.mxu0 0.0
    %2758 = vmatprep.subr.mxu0 0.0
    %2759 = vmatpush1.msra.mxu0 0.0
    %2760 = vmatprep.subr.mxu0 0.0
    %2761 = vmatpush1.msra.mxu0 0.0
    %2762 = vmatprep.subr.mxu0 0.0
    %2763 = vmatpush1.msra.mxu0 0.0
    %2764 = vmatprep.subr.mxu0 0.0
    %2765 = vmatpush1.msra.mxu0 0.0
    %2766 = vmatprep.subr.mxu0 0.0
    %2767 = vmatpush1.msra.mxu0 0.0
    %2768 = vmatprep.subr.mxu0 0.0
    %2769 = vmatpush1.msra.mxu0 0.0
    %2770 = vmatprep.subr.mxu0 0.0
    %2771 = vmatpush1.msra.mxu0 0.0
    %2772 = vmatprep.subr.mxu0 0.0
    %2773 = vmatpush1.msra.mxu0 0.0
    %2774 = vmatprep.subr.mxu0 0.0
    %2775 = vmatpush1.msra.mxu0 0.0
    %2776 = vmatprep.subr.mxu0 0.0
    %2777 = vmatpush1.msra.mxu0 0.0
    %2778 = vmatprep.subr.mxu0 0.0
    %2779 = vmatpush1.msra.mxu0 0.0
    %2780 = vmatprep.subr.mxu0 0.0
    %2781 = vmatpush1.msra.mxu0 0.0
    %2782 = vmatprep.subr.mxu0 0.0
    %2783 = vmatpush1.msra.mxu0 0.0
    %2784 = vmatprep.subr.mxu0 0.0
    %2785 = vmatpush1.msra.mxu0 0.0
    %2786 = vmatprep.subr.mxu0 0.0
    %2787 = vmatpush1.msra.mxu0 0.0
    %2788 = vmatprep.subr.mxu0 0.0
    %2789 = vmatpush1.msra.mxu0 0.0
    %2790 = vmatprep.subr.mxu0 0.0
    %2791 = vmatpush1.msra.mxu0 0.0
    %2792 = vmatprep.subr.mxu0 0.0
    %2793 = vmatpush1.msra.mxu0 0.0
    %2794 = vmatprep.subr.mxu0 0.0
    %2795 = vmatpush1.msra.mxu0 0.0
    %2796 = vmatprep.subr.mxu0 0.0
    %2797 = vmatpush1.msra.mxu0 0.0
    %2798 = vmatprep.subr.mxu0 0.0
    %2799 = vmatpush1.msra.mxu0 0.0
    %2800 = vmatprep.subr.mxu0 0.0
    %2801 = vmatpush1.msra.mxu0 0.0
    %2802 = vmatprep.subr.mxu0 0.0
    %2803 = vmatpush1.msra.mxu0 0.0
    %2804 = vmatprep.subr.mxu0 0.0
    %2805 = vmatpush1.msra.mxu0 0.0
    %2806 = vmatprep.subr.mxu0 0.0
    %2807 = vmatpush1.msra.mxu0 0.0
    %2808 = vmatprep.subr.mxu0 0.0
    %2809 = vmatpush1.msra.mxu0 0.0
    %2810 = vmatprep.mubr.f32.mxu0 0.0
    %2811 = vmatmul.mubr.f32.gmra.mrb[0].mxu0 %v2674
    %v2812 = vpop.f32.mrb[0].mxu0
    %v2813 = vadd.f32 0.0, %v2812
    %v2814 = vpop.f32.mrb[0].mxu0
    %2815 = vdwg.mxu0
    %v2816 = vadd.f32 %v2564, %v2813
    %v2817 = vmul.f32 %v2816, 0.5
    %v2818 = vtanh.pop %v2817
    %v2819 = vmul.f32 %v2818, 0.5
    %v2820 = vadd.f32 %v2819, 0.5
    %v2821 = vtanh.pop %v2816
    %v2822 = vmul.f32 %v2820, %v2664
    %2824 = vrot.lane.b32.xlu0 %v2821, 64
    %v2825 = vpop.permute.xlu0 %2824
    %v2827 = vmul.f32 %v2820, %v2825
    %2829 = vrot.lane.b32.xlu0 %v2827, 32
    %v2830 = vpop.permute.xlu0 %2829
    %v2832 = vadd.f32 %v2822, %v2830
    %v2833 = vtanh.pop %v2832
    %2835 = vrot.lane.b32.xlu0 %v2833, 64
    %v2836 = vpop.permute.xlu0 %2835
    %v2838 = vmul.f32 %v2820, %v2836
    %2840 = vrot.lane.b32.xlu0 %v2838, 32
    %v2841 = vpop.permute.xlu0 %2840
    %v2842 = vsel %vm290, %v2841, 0
    %2844 = vmatprep.subr.mxu0 0.0
    %2845 = vmatpush1.msra.mxu0 %v2567
    %2846 = vmatprep.subr.mxu0 0.0
    %2847 = vmatpush1.msra.mxu0 %v2568
    %2848 = vmatprep.subr.mxu0 0.0
    %2849 = vmatpush1.msra.mxu0 %v2569
    %2850 = vmatprep.subr.mxu0 0.0
    %2851 = vmatpush1.msra.mxu0 %v2570
    %2852 = vmatprep.subr.mxu0 0.0
    %2853 = vmatpush1.msra.mxu0 0.0
    %2854 = vmatprep.subr.mxu0 0.0
    %2855 = vmatpush1.msra.mxu0 0.0
    %2856 = vmatprep.subr.mxu0 0.0
    %2857 = vmatpush1.msra.mxu0 0.0
    %2858 = vmatprep.subr.mxu0 0.0
    %2859 = vmatpush1.msra.mxu0 0.0
    %2860 = vmatprep.subr.mxu0 0.0
    %2861 = vmatpush1.msra.mxu0 0.0
    %2862 = vmatprep.subr.mxu0 0.0
    %2863 = vmatpush1.msra.mxu0 0.0
    %2864 = vmatprep.subr.mxu0 0.0
    %2865 = vmatpush1.msra.mxu0 0.0
    %2866 = vmatprep.subr.mxu0 0.0
    %2867 = vmatpush1.msra.mxu0 0.0
    %2868 = vmatprep.subr.mxu0 0.0
    %2869 = vmatpush1.msra.mxu0 0.0
    %2870 = vmatprep.subr.mxu0 0.0
    %2871 = vmatpush1.msra.mxu0 0.0
    %2872 = vmatprep.subr.mxu0 0.0
    %2873 = vmatpush1.msra.mxu0 0.0
    %2874 = vmatprep.subr.mxu0 0.0
    %2875 = vmatpush1.msra.mxu0 0.0
    %2876 = vmatprep.subr.mxu0 0.0
    %2877 = vmatpush1.msra.mxu0 0.0
    %2878 = vmatprep.subr.mxu0 0.0
    %2879 = vmatpush1.msra.mxu0 0.0
    %2880 = vmatprep.subr.mxu0 0.0
    %2881 = vmatpush1.msra.mxu0 0.0
    %2882 = vmatprep.subr.mxu0 0.0
    %2883 = vmatpush1.msra.mxu0 0.0
    %2884 = vmatprep.subr.mxu0 0.0
    %2885 = vmatpush1.msra.mxu0 0.0
    %2886 = vmatprep.subr.mxu0 0.0
    %2887 = vmatpush1.msra.mxu0 0.0
    %2888 = vmatprep.subr.mxu0 0.0
    %2889 = vmatpush1.msra.mxu0 0.0
    %2890 = vmatprep.subr.mxu0 0.0
    %2891 = vmatpush1.msra.mxu0 0.0
    %2892 = vmatprep.subr.mxu0 0.0
    %2893 = vmatpush1.msra.mxu0 0.0
    %2894 = vmatprep.subr.mxu0 0.0
    %2895 = vmatpush1.msra.mxu0 0.0
    %2896 = vmatprep.subr.mxu0 0.0
    %2897 = vmatpush1.msra.mxu0 0.0
    %2898 = vmatprep.subr.mxu0 0.0
    %2899 = vmatpush1.msra.mxu0 0.0
    %2900 = vmatprep.subr.mxu0 0.0
    %2901 = vmatpush1.msra.mxu0 0.0
    %2902 = vmatprep.subr.mxu0 0.0
    %2903 = vmatpush1.msra.mxu0 0.0
    %2904 = vmatprep.subr.mxu0 0.0
    %2905 = vmatpush1.msra.mxu0 0.0
    %2906 = vmatprep.subr.mxu0 0.0
    %2907 = vmatpush1.msra.mxu0 0.0
    %2908 = vmatprep.mubr.f32.mxu0 0.0
    %2909 = vmatmul.mubr.f32.gmra.mrb[0].mxu0 %v2842
    %v2910 = vpop.f32.mrb[0].mxu0
    %v2911 = vadd.f32 %v2576, %v2910
    %v2912 = vpop.f32.mrb[0].mxu0
    %2913 = vdwg.mxu0
    %2914 = vmatprep.subr.mxu0 0.0
    %2915 = vmatpush1.msra.mxu0 %v2477
    %2916 = vmatprep.subr.mxu0 0.0
    %2917 = vmatpush1.msra.mxu0 %v2478
    %2918 = vmatprep.subr.mxu0 0.0
    %2919 = vmatpush1.msra.mxu0 %v2479
    %2920 = vmatprep.subr.mxu0 0.0
    %2921 = vmatpush1.msra.mxu0 %v2480
    %2922 = vmatprep.subr.mxu0 0.0
    %2923 = vmatpush1.msra.mxu0 0.0
    %2924 = vmatprep.subr.mxu0 0.0
    %2925 = vmatpush1.msra.mxu0 0.0
    %2926 = vmatprep.subr.mxu0 0.0
    %2927 = vmatpush1.msra.mxu0 0.0
    %2928 = vmatprep.subr.mxu0 0.0
    %2929 = vmatpush1.msra.mxu0 0.0
    %2930 = vmatprep.subr.mxu0 0.0
    %2931 = vmatpush1.msra.mxu0 0.0
    %2932 = vmatprep.subr.mxu0 0.0
    %2933 = vmatpush1.msra.mxu0 0.0
    %2934 = vmatprep.subr.mxu0 0.0
    %2935 = vmatpush1.msra.mxu0 0.0
    %2936 = vmatprep.subr.mxu0 0.0
    %2937 = vmatpush1.msra.mxu0 0.0
    %2938 = vmatprep.subr.mxu0 0.0
    %2939 = vmatpush1.msra.mxu0 0.0
    %2940 = vmatprep.subr.mxu0 0.0
    %2941 = vmatpush1.msra.mxu0 0.0
    %2942 = vmatprep.subr.mxu0 0.0
    %2943 = vmatpush1.msra.mxu0 0.0
    %2944 = vmatprep.subr.mxu0 0.0
    %2945 = vmatpush1.msra.mxu0 0.0
    %2946 = vmatprep.subr.mxu0 0.0
    %2947 = vmatpush1.msra.mxu0 0.0
    %2948 = vmatprep.subr.mxu0 0.0
    %2949 = vmatpush1.msra.mxu0 0.0
    %2950 = vmatprep.subr.mxu0 0.0
    %2951 = vmatpush1.msra.mxu0 0.0
    %2952 = vmatprep.subr.mxu0 0.0
    %2953 = vmatpush1.msra.mxu0 0.0
    %2954 = vmatprep.subr.mxu0 0.0
    %2955 = vmatpush1.msra.mxu0 0.0
    %2956 = vmatprep.subr.mxu0 0.0
    %2957 = vmatpush1.msra.mxu0 0.0
    %2958 = vmatprep.subr.mxu0 0.0
    %2959 = vmatpush1.msra.mxu0 0.0
    %2960 = vmatprep.subr.mxu0 0.0
    %2961 = vmatpush1.msra.mxu0 0.0
    %2962 = vmatprep.subr.mxu0 0.0
    %2963 = vmatpush1.msra.mxu0 0.0
    %2964 = vmatprep.subr.mxu0 0.0
    %2965 = vmatpush1.msra.mxu0 0.0
    %2966 = vmatprep.subr.mxu0 0.0
    %2967 = vmatpush1.msra.mxu0 0.0
    %2968 = vmatprep.subr.mxu0 0.0
    %2969 = vmatpush1.msra.mxu0 0.0
    %2970 = vmatprep.subr.mxu0 0.0
    %2971 = vmatpush1.msra.mxu0 0.0
    %2972 = vmatprep.subr.mxu0 0.0
    %2973 = vmatpush1.msra.mxu0 0.0
    %2974 = vmatprep.subr.mxu0 0.0
    %2975 = vmatpush1.msra.mxu0 0.0
    %2976 = vmatprep.subr.mxu0 0.0
    %2977 = vmatpush1.msra.mxu0 0.0
    %2978 = vmatprep.mubr.f32.mxu0 0.0
    %2979 = vmatmul.mubr.f32.gmra.mrb[0].mxu0 %v2842
    %v2980 = vpop.f32.mrb[0].mxu0
    %v2981 = vadd.f32 0.0, %v2980
    %v2982 = vpop.f32.mrb[0].mxu0
    %2983 = vdwg.mxu0
    %v2984 = vadd.f32 %v2564, %v2981
    %v2985 = vmul.f32 %v2984, 0.5
    %v2986 = vtanh.pop %v2985
    %v2987 = vmul.f32 %v2986, 0.5
    %v2988 = vadd.f32 %v2987, 0.5
    %v2989 = vtanh.pop %v2984
    %v2990 = vmul.f32 %v2988, %v2832
    %2992 = vrot.lane.b32.xlu0 %v2989, 64
    %v2993 = vpop.permute.xlu0 %2992
    %v2995 = vmul.f32 %v2988, %v2993
    %2997 = vrot.lane.b32.xlu0 %v2995, 32
    %v2998 = vpop.permute.xlu0 %2997
    %v3000 = vadd.f32 %v2990, %v2998
    %v3001 = vtanh.pop %v3000
    %3003 = vrot.lane.b32.xlu0 %v3001, 64
    %v3004 = vpop.permute.xlu0 %3003
    %v3006 = vmul.f32 %v2988, %v3004
    %3008 = vrot.lane.b32.xlu0 %v3006, 32
    %v3009 = vpop.permute.xlu0 %3008
    %v3010 = vsel %vm290, %v3009, 0
    %3012 = vmatprep.subr.mxu0 0.0
    %3013 = vmatpush1.msra.mxu0 %v2567
    %3014 = vmatprep.subr.mxu0 0.0
    %3015 = vmatpush1.msra.mxu0 %v2568
    %3016 = vmatprep.subr.mxu0 0.0
    %3017 = vmatpush1.msra.mxu0 %v2569
    %3018 = vmatprep.subr.mxu0 0.0
    %3019 = vmatpush1.msra.mxu0 %v2570
    %3020 = vmatprep.subr.mxu0 0.0
    %3021 = vmatpush1.msra.mxu0 0.0
    %3022 = vmatprep.subr.mxu0 0.0
    %3023 = vmatpush1.msra.mxu0 0.0
    %3024 = vmatprep.subr.mxu0 0.0
    %3025 = vmatpush1.msra.mxu0 0.0
    %3026 = vmatprep.subr.mxu0 0.0
    %3027 = vmatpush1.msra.mxu0 0.0
    %3028 = vmatprep.subr.mxu0 0.0
    %3029 = vmatpush1.msra.mxu0 0.0
    %3030 = vmatprep.subr.mxu0 0.0
    %3031 = vmatpush1.msra.mxu0 0.0
    %3032 = vmatprep.subr.mxu0 0.0
    %3033 = vmatpush1.msra.mxu0 0.0
    %3034 = vmatprep.subr.mxu0 0.0
    %3035 = vmatpush1.msra.mxu0 0.0
    %3036 = vmatprep.subr.mxu0 0.0
    %3037 = vmatpush1.msra.mxu0 0.0
    %3038 = vmatprep.subr.mxu0 0.0
    %3039 = vmatpush1.msra.mxu0 0.0
    %3040 = vmatprep.subr.mxu0 0.0
    %3041 = vmatpush1.msra.mxu0 0.0
    %3042 = vmatprep.subr.mxu0 0.0
    %3043 = vmatpush1.msra.mxu0 0.0
    %3044 = vmatprep.subr.mxu0 0.0
    %3045 = vmatpush1.msra.mxu0 0.0
    %3046 = vmatprep.subr.mxu0 0.0
    %3047 = vmatpush1.msra.mxu0 0.0
    %3048 = vmatprep.subr.mxu0 0.0
    %3049 = vmatpush1.msra.mxu0 0.0
    %3050 = vmatprep.subr.mxu0 0.0
    %3051 = vmatpush1.msra.mxu0 0.0
    %3052 = vmatprep.subr.mxu0 0.0
    %3053 = vmatpush1.msra.mxu0 0.0
    %3054 = vmatprep.subr.mxu0 0.0
    %3055 = vmatpush1.msra.mxu0 0.0
    %3056 = vmatprep.subr.mxu0 0.0
    %3057 = vmatpush1.msra.mxu0 0.0
    %3058 = vmatprep.subr.mxu0 0.0
    %3059 = vmatpush1.msra.mxu0 0.0
    %3060 = vmatprep.subr.mxu0 0.0
    %3061 = vmatpush1.msra.mxu0 0.0
    %3062 = vmatprep.subr.mxu0 0.0
    %3063 = vmatpush1.msra.mxu0 0.0
    %3064 = vmatprep.subr.mxu0 0.0
    %3065 = vmatpush1.msra.mxu0 0.0
    %3066 = vmatprep.subr.mxu0 0.0
    %3067 = vmatpush1.msra.mxu0 0.0
    %3068 = vmatprep.subr.mxu0 0.0
    %3069 = vmatpush1.msra.mxu0 0.0
    %3070 = vmatprep.subr.mxu0 0.0
    %3071 = vmatpush1.msra.mxu0 0.0
    %3072 = vmatprep.subr.mxu0 0.0
    %3073 = vmatpush1.msra.mxu0 0.0
    %3074 = vmatprep.subr.mxu0 0.0
    %3075 = vmatpush1.msra.mxu0 0.0
    %3076 = vmatprep.mubr.f32.mxu0 0.0
    %3077 = vmatmul.mubr.f32.gmra.mrb[0].mxu0 %v3010
    %v3078 = vpop.f32.mrb[0].mxu0
    %v3079 = vadd.f32 %v2576, %v3078
    %v3080 = vpop.f32.mrb[0].mxu0
    %3081 = vdwg.mxu0
    %3082 = vmatprep.subr.mxu0 0.0
    %3083 = vmatpush1.msra.mxu0 %v2477
    %3084 = vmatprep.subr.mxu0 0.0
    %3085 = vmatpush1.msra.mxu0 %v2478
    %3086 = vmatprep.subr.mxu0 0.0
    %3087 = vmatpush1.msra.mxu0 %v2479
    %3088 = vmatprep.subr.mxu0 0.0
    %3089 = vmatpush1.msra.mxu0 %v2480
    %3090 = vmatprep.subr.mxu0 0.0
    %3091 = vmatpush1.msra.mxu0 0.0
    %3092 = vmatprep.subr.mxu0 0.0
    %3093 = vmatpush1.msra.mxu0 0.0
    %3094 = vmatprep.subr.mxu0 0.0
    %3095 = vmatpush1.msra.mxu0 0.0
    %3096 = vmatprep.subr.mxu0 0.0
    %3097 = vmatpush1.msra.mxu0 0.0
    %3098 = vmatprep.subr.mxu0 0.0
    %3099 = vmatpush1.msra.mxu0 0.0
    %3100 = vmatprep.subr.mxu0 0.0
    %3101 = vmatpush1.msra.mxu0 0.0
    %3102 = vmatprep.subr.mxu0 0.0
    %3103 = vmatpush1.msra.mxu0 0.0
    %3104 = vmatprep.subr.mxu0 0.0
    %3105 = vmatpush1.msra.mxu0 0.0
    %3106 = vmatprep.subr.mxu0 0.0
    %3107 = vmatpush1.msra.mxu0 0.0
    %3108 = vmatprep.subr.mxu0 0.0
    %3109 = vmatpush1.msra.mxu0 0.0
    %3110 = vmatprep.subr.mxu0 0.0
    %3111 = vmatpush1.msra.mxu0 0.0
    %3112 = vmatprep.subr.mxu0 0.0
    %3113 = vmatpush1.msra.mxu0 0.0
    %3114 = vmatprep.subr.mxu0 0.0
    %3115 = vmatpush1.msra.mxu0 0.0
    %3116 = vmatprep.subr.mxu0 0.0
    %3117 = vmatpush1.msra.mxu0 0.0
    %3118 = vmatprep.subr.mxu0 0.0
    %3119 = vmatpush1.msra.mxu0 0.0
    %3120 = vmatprep.subr.mxu0 0.0
    %3121 = vmatpush1.msra.mxu0 0.0
    %3122 = vmatprep.subr.mxu0 0.0
    %3123 = vmatpush1.msra.mxu0 0.0
    %3124 = vmatprep.subr.mxu0 0.0
    %3125 = vmatpush1.msra.mxu0 0.0
    %3126 = vmatprep.subr.mxu0 0.0
    %3127 = vmatpush1.msra.mxu0 0.0
    %3128 = vmatprep.subr.mxu0 0.0
    %3129 = vmatpush1.msra.mxu0 0.0
    %3130 = vmatprep.subr.mxu0 0.0
    %3131 = vmatpush1.msra.mxu0 0.0
    %3132 = vmatprep.subr.mxu0 0.0
    %3133 = vmatpush1.msra.mxu0 0.0
    %3134 = vmatprep.subr.mxu0 0.0
    %3135 = vmatpush1.msra.mxu0 0.0
    %3136 = vmatprep.subr.mxu0 0.0
    %3137 = vmatpush1.msra.mxu0 0.0
    %3138 = vmatprep.subr.mxu0 0.0
    %3139 = vmatpush1.msra.mxu0 0.0
    %3140 = vmatprep.subr.mxu0 0.0
    %3141 = vmatpush1.msra.mxu0 0.0
    %3142 = vmatprep.subr.mxu0 0.0
    %3143 = vmatpush1.msra.mxu0 0.0
    %3144 = vmatprep.subr.mxu0 0.0
    %3145 = vmatpush1.msra.mxu0 0.0
    %3146 = vmatprep.mubr.f32.mxu0 0.0
    %3147 = vmatmul.mubr.f32.gmra.mrb[0].mxu0 %v3010
    %v3148 = vpop.f32.mrb[0].mxu0
    %v3149 = vadd.f32 0.0, %v3148
    %v3150 = vpop.f32.mrb[0].mxu0
    %3151 = vdwg.mxu0
    %v3152 = vadd.f32 %v2564, %v3149
    %v3153 = vmul.f32 %v3152, 0.5
    %v3154 = vtanh.pop %v3153
    %v3155 = vmul.f32 %v3154, 0.5
    %v3156 = vadd.f32 %v3155, 0.5
    %v3157 = vtanh.pop %v3152
    %v3158 = vmul.f32 %v3156, %v3000
    %3160 = vrot.lane.b32.xlu0 %v3157, 64
    %v3161 = vpop.permute.xlu0 %3160
    %v3163 = vmul.f32 %v3156, %v3161
    %3165 = vrot.lane.b32.xlu0 %v3163, 32
    %v3166 = vpop.permute.xlu0 %3165
    %v3168 = vadd.f32 %v3158, %v3166
    %v3169 = vtanh.pop %v3168
    %3171 = vrot.lane.b32.xlu0 %v3169, 64
    %v3172 = vpop.permute.xlu0 %3171
    %v3174 = vmul.f32 %v3156, %v3172
    %3176 = vrot.lane.b32.xlu0 %v3174, 32
    %v3177 = vpop.permute.xlu0 %3176
    %v3178 = vsel %vm290, %v3177, 0
    %3180 = vmatprep.subr.mxu0 0.0
    %3181 = vmatpush1.msra.mxu0 %v2567
    %3182 = vmatprep.subr.mxu0 0.0
    %3183 = vmatpush1.msra.mxu0 %v2568
    %3184 = vmatprep.subr.mxu0 0.0
    %3185 = vmatpush1.msra.mxu0 %v2569
    %3186 = vmatprep.subr.mxu0 0.0
    %3187 = vmatpush1.msra.mxu0 %v2570
    %3188 = vmatprep.subr.mxu0 0.0
    %3189 = vmatpush1.msra.mxu0 0.0
    %3190 = vmatprep.subr.mxu0 0.0
    %3191 = vmatpush1.msra.mxu0 0.0
    %3192 = vmatprep.subr.mxu0 0.0
    %3193 = vmatpush1.msra.mxu0 0.0
    %3194 = vmatprep.subr.mxu0 0.0
    %3195 = vmatpush1.msra.mxu0 0.0
    %3196 = vmatprep.subr.mxu0 0.0
    %3197 = vmatpush1.msra.mxu0 0.0
    %3198 = vmatprep.subr.mxu0 0.0
    %3199 = vmatpush1.msra.mxu0 0.0
    %3200 = vmatprep.subr.mxu0 0.0
    %3201 = vmatpush1.msra.mxu0 0.0
    %3202 = vmatprep.subr.mxu0 0.0
    %3203 = vmatpush1.msra.mxu0 0.0
    %3204 = vmatprep.subr.mxu0 0.0
    %3205 = vmatpush1.msra.mxu0 0.0
    %3206 = vmatprep.subr.mxu0 0.0
    %3207 = vmatpush1.msra.mxu0 0.0
    %3208 = vmatprep.subr.mxu0 0.0
    %3209 = vmatpush1.msra.mxu0 0.0
    %3210 = vmatprep.subr.mxu0 0.0
    %3211 = vmatpush1.msra.mxu0 0.0
    %3212 = vmatprep.subr.mxu0 0.0
    %3213 = vmatpush1.msra.mxu0 0.0
    %3214 = vmatprep.subr.mxu0 0.0
    %3215 = vmatpush1.msra.mxu0 0.0
    %3216 = vmatprep.subr.mxu0 0.0
    %3217 = vmatpush1.msra.mxu0 0.0
    %3218 = vmatprep.subr.mxu0 0.0
    %3219 = vmatpush1.msra.mxu0 0.0
    %3220 = vmatprep.subr.mxu0 0.0
    %3221 = vmatpush1.msra.mxu0 0.0
    %3222 = vmatprep.subr.mxu0 0.0
    %3223 = vmatpush1.msra.mxu0 0.0
    %3224 = vmatprep.subr.mxu0 0.0
    %3225 = vmatpush1.msra.mxu0 0.0
    %3226 = vmatprep.subr.mxu0 0.0
    %3227 = vmatpush1.msra.mxu0 0.0
    %3228 = vmatprep.subr.mxu0 0.0
    %3229 = vmatpush1.msra.mxu0 0.0
    %3230 = vmatprep.subr.mxu0 0.0
    %3231 = vmatpush1.msra.mxu0 0.0
    %3232 = vmatprep.subr.mxu0 0.0
    %3233 = vmatpush1.msra.mxu0 0.0
    %3234 = vmatprep.subr.mxu0 0.0
    %3235 = vmatpush1.msra.mxu0 0.0
    %3236 = vmatprep.subr.mxu0 0.0
    %3237 = vmatpush1.msra.mxu0 0.0
    %3238 = vmatprep.subr.mxu0 0.0
    %3239 = vmatpush1.msra.mxu0 0.0
    %3240 = vmatprep.subr.mxu0 0.0
    %3241 = vmatpush1.msra.mxu0 0.0
    %3242 = vmatprep.subr.mxu0 0.0
    %3243 = vmatpush1.msra.mxu0 0.0
    %3244 = vmatprep.mubr.f32.mxu0 0.0
    %3245 = vmatmul.mubr.f32.gmra.mrb[0].mxu0 %v3178
    %v3246 = vpop.f32.mrb[0].mxu0
    %v3247 = vadd.f32 %v2576, %v3246
    %v3248 = vpop.f32.mrb[0].mxu0
    %3249 = vdwg.mxu0
    %3250 = vmatprep.subr.mxu0 0.0
    %3251 = vmatpush1.msra.mxu0 %v2477
    %3252 = vmatprep.subr.mxu0 0.0
    %3253 = vmatpush1.msra.mxu0 %v2478
    %3254 = vmatprep.subr.mxu0 0.0
    %3255 = vmatpush1.msra.mxu0 %v2479
    %3256 = vmatprep.subr.mxu0 0.0
    %3257 = vmatpush1.msra.mxu0 %v2480
    %3258 = vmatprep.subr.mxu0 0.0
    %3259 = vmatpush1.msra.mxu0 0.0
    %3260 = vmatprep.subr.mxu0 0.0
    %3261 = vmatpush1.msra.mxu0 0.0
    %3262 = vmatprep.subr.mxu0 0.0
    %3263 = vmatpush1.msra.mxu0 0.0
    %3264 = vmatprep.subr.mxu0 0.0
    %3265 = vmatpush1.msra.mxu0 0.0
    %3266 = vmatprep.subr.mxu0 0.0
    %3267 = vmatpush1.msra.mxu0 0.0
    %3268 = vmatprep.subr.mxu0 0.0
    %3269 = vmatpush1.msra.mxu0 0.0
    %3270 = vmatprep.subr.mxu0 0.0
    %3271 = vmatpush1.msra.mxu0 0.0
    %3272 = vmatprep.subr.mxu0 0.0
    %3273 = vmatpush1.msra.mxu0 0.0
    %3274 = vmatprep.subr.mxu0 0.0
    %3275 = vmatpush1.msra.mxu0 0.0
    %3276 = vmatprep.subr.mxu0 0.0
    %3277 = vmatpush1.msra.mxu0 0.0
    %3278 = vmatprep.subr.mxu0 0.0
    %3279 = vmatpush1.msra.mxu0 0.0
    %3280 = vmatprep.subr.mxu0 0.0
    %3281 = vmatpush1.msra.mxu0 0.0
    %3282 = vmatprep.subr.mxu0 0.0
    %3283 = vmatpush1.msra.mxu0 0.0
    %3284 = vmatprep.subr.mxu0 0.0
    %3285 = vmatpush1.msra.mxu0 0.0
    %3286 = vmatprep.subr.mxu0 0.0
    %3287 = vmatpush1.msra.mxu0 0.0
    %3288 = vmatprep.subr.mxu0 0.0
    %3289 = vmatpush1.msra.mxu0 0.0
    %3290 = vmatprep.subr.mxu0 0.0
    %3291 = vmatpush1.msra.mxu0 0.0
    %3292 = vmatprep.subr.mxu0 0.0
    %3293 = vmatpush1.msra.mxu0 0.0
    %3294 = vmatprep.subr.mxu0 0.0
    %3295 = vmatpush1.msra.mxu0 0.0
    %3296 = vmatprep.subr.mxu0 0.0
    %3297 = vmatpush1.msra.mxu0 0.0
    %3298 = vmatprep.subr.mxu0 0.0
    %3299 = vmatpush1.msra.mxu0 0.0
    %3300 = vmatprep.subr.mxu0 0.0
    %3301 = vmatpush1.msra.mxu0 0.0
    %3302 = vmatprep.subr.mxu0 0.0
    %3303 = vmatpush1.msra.mxu0 0.0
    %3304 = vmatprep.subr.mxu0 0.0
    %3305 = vmatpush1.msra.mxu0 0.0
    %3306 = vmatprep.subr.mxu0 0.0
    %3307 = vmatpush1.msra.mxu0 0.0
    %3308 = vmatprep.subr.mxu0 0.0
    %3309 = vmatpush1.msra.mxu0 0.0
    %3310 = vmatprep.subr.mxu0 0.0
    %3311 = vmatpush1.msra.mxu0 0.0
    %3312 = vmatprep.subr.mxu0 0.0
    %3313 = vmatpush1.msra.mxu0 0.0
    %3314 = vmatprep.mubr.f32.mxu0 0.0
    %3315 = vmatmul.mubr.f32.gmra.mrb[0].mxu0 %v3178
    %v3316 = vpop.f32.mrb[0].mxu0
    %v3317 = vadd.f32 0.0, %v3316
    %v3318 = vpop.f32.mrb[0].mxu0
    %3319 = vdwg.mxu0
    %v3320 = vadd.f32 %v2564, %v3317
    %v3321 = vmul.f32 %v3320, 0.5
    %v3322 = vtanh.pop %v3321
    %v3323 = vmul.f32 %v3322, 0.5
    %v3324 = vadd.f32 %v3323, 0.5
    %v3325 = vtanh.pop %v3320
    %v3326 = vmul.f32 %v3324, %v3168
    %3328 = vrot.lane.b32.xlu0 %v3325, 64
    %v3329 = vpop.permute.xlu0 %3328
    %v3331 = vmul.f32 %v3324, %v3329
    %3333 = vrot.lane.b32.xlu0 %v3331, 32
    %v3334 = vpop.permute.xlu0 %3333
    %v3336 = vadd.f32 %v3326, %v3334
    %v3337 = vtanh.pop %v3336
    %3339 = vrot.lane.b32.xlu0 %v3337, 64
    %v3340 = vpop.permute.xlu0 %3339
    %v3342 = vmul.f32 %v3324, %v3340
    %3344 = vrot.lane.b32.xlu0 %v3342, 32
    %v3345 = vpop.permute.xlu0 %3344
    %v3346 = vsel %vm290, %v3345, 0
    %3348 = vmatprep.subr.mxu0 0.0
    %3349 = vmatpush1.msra.mxu0 %v2567
    %3350 = vmatprep.subr.mxu0 0.0
    %3351 = vmatpush1.msra.mxu0 %v2568
    %3352 = vmatprep.subr.mxu0 0.0
    %3353 = vmatpush1.msra.mxu0 %v2569
    %3354 = vmatprep.subr.mxu0 0.0
    %3355 = vmatpush1.msra.mxu0 %v2570
    %3356 = vmatprep.subr.mxu0 0.0
    %3357 = vmatpush1.msra.mxu0 0.0
    %3358 = vmatprep.subr.mxu0 0.0
    %3359 = vmatpush1.msra.mxu0 0.0
    %3360 = vmatprep.subr.mxu0 0.0
    %3361 = vmatpush1.msra.mxu0 0.0
    %3362 = vmatprep.subr.mxu0 0.0
    %3363 = vmatpush1.msra.mxu0 0.0
    %3364 = vmatprep.subr.mxu0 0.0
    %3365 = vmatpush1.msra.mxu0 0.0
    %3366 = vmatprep.subr.mxu0 0.0
    %3367 = vmatpush1.msra.mxu0 0.0
    %3368 = vmatprep.subr.mxu0 0.0
    %3369 = vmatpush1.msra.mxu0 0.0
    %3370 = vmatprep.subr.mxu0 0.0
    %3371 = vmatpush1.msra.mxu0 0.0
    %3372 = vmatprep.subr.mxu0 0.0
    %3373 = vmatpush1.msra.mxu0 0.0
    %3374 = vmatprep.subr.mxu0 0.0
    %3375 = vmatpush1.msra.mxu0 0.0
    %3376 = vmatprep.subr.mxu0 0.0
    %3377 = vmatpush1.msra.mxu0 0.0
    %3378 = vmatprep.subr.mxu0 0.0
    %3379 = vmatpush1.msra.mxu0 0.0
    %3380 = vmatprep.subr.mxu0 0.0
    %3381 = vmatpush1.msra.mxu0 0.0
    %3382 = vmatprep.subr.mxu0 0.0
    %3383 = vmatpush1.msra.mxu0 0.0
    %3384 = vmatprep.subr.mxu0 0.0
    %3385 = vmatpush1.msra.mxu0 0.0
    %3386 = vmatprep.subr.mxu0 0.0
    %3387 = vmatpush1.msra.mxu0 0.0
    %3388 = vmatprep.subr.mxu0 0.0
    %3389 = vmatpush1.msra.mxu0 0.0
    %3390 = vmatprep.subr.mxu0 0.0
    %3391 = vmatpush1.msra.mxu0 0.0
    %3392 = vmatprep.subr.mxu0 0.0
    %3393 = vmatpush1.msra.mxu0 0.0
    %3394 = vmatprep.subr.mxu0 0.0
    %3395 = vmatpush1.msra.mxu0 0.0
    %3396 = vmatprep.subr.mxu0 0.0
    %3397 = vmatpush1.msra.mxu0 0.0
    %3398 = vmatprep.subr.mxu0 0.0
    %3399 = vmatpush1.msra.mxu0 0.0
    %3400 = vmatprep.subr.mxu0 0.0
    %3401 = vmatpush1.msra.mxu0 0.0
    %3402 = vmatprep.subr.mxu0 0.0
    %3403 = vmatpush1.msra.mxu0 0.0
    %3404 = vmatprep.subr.mxu0 0.0
    %3405 = vmatpush1.msra.mxu0 0.0
    %3406 = vmatprep.subr.mxu0 0.0
    %3407 = vmatpush1.msra.mxu0 0.0
    %3408 = vmatprep.subr.mxu0 0.0
    %3409 = vmatpush1.msra.mxu0 0.0
    %3410 = vmatprep.subr.mxu0 0.0
    %3411 = vmatpush1.msra.mxu0 0.0
    %3412 = vmatprep.mubr.f32.mxu0 0.0
    %3413 = vmatmul.mubr.f32.gmra.mrb[0].mxu0 %v3346
    %v3414 = vpop.f32.mrb[0].mxu0
    %v3415 = vadd.f32 %v2576, %v3414
    %v3416 = vpop.f32.mrb[0].mxu0
    %3417 = vdwg.mxu0
    %3418 = vmatprep.subr.mxu0 0.0
    %3419 = vmatpush1.msra.mxu0 %v2477
    %3420 = vmatprep.subr.mxu0 0.0
    %3421 = vmatpush1.msra.mxu0 %v2478
    %3422 = vmatprep.subr.mxu0 0.0
    %3423 = vmatpush1.msra.mxu0 %v2479
    %3424 = vmatprep.subr.mxu0 0.0
    %3425 = vmatpush1.msra.mxu0 %v2480
    %3426 = vmatprep.subr.mxu0 0.0
    %3427 = vmatpush1.msra.mxu0 0.0
    %3428 = vmatprep.subr.mxu0 0.0
    %3429 = vmatpush1.msra.mxu0 0.0
    %3430 = vmatprep.subr.mxu0 0.0
    %3431 = vmatpush1.msra.mxu0 0.0
    %3432 = vmatprep.subr.mxu0 0.0
    %3433 = vmatpush1.msra.mxu0 0.0
    %3434 = vmatprep.subr.mxu0 0.0
    %3435 = vmatpush1.msra.mxu0 0.0
    %3436 = vmatprep.subr.mxu0 0.0
    %3437 = vmatpush1.msra.mxu0 0.0
    %3438 = vmatprep.subr.mxu0 0.0
    %3439 = vmatpush1.msra.mxu0 0.0
    %3440 = vmatprep.subr.mxu0 0.0
    %3441 = vmatpush1.msra.mxu0 0.0
    %3442 = vmatprep.subr.mxu0 0.0
    %3443 = vmatpush1.msra.mxu0 0.0
    %3444 = vmatprep.subr.mxu0 0.0
    %3445 = vmatpush1.msra.mxu0 0.0
    %3446 = vmatprep.subr.mxu0 0.0
    %3447 = vmatpush1.msra.mxu0 0.0
    %3448 = vmatprep.subr.mxu0 0.0
    %3449 = vmatpush1.msra.mxu0 0.0
    %3450 = vmatprep.subr.mxu0 0.0
    %3451 = vmatpush1.msra.mxu0 0.0
    %3452 = vmatprep.subr.mxu0 0.0
    %3453 = vmatpush1.msra.mxu0 0.0
    %3454 = vmatprep.subr.mxu0 0.0
    %3455 = vmatpush1.msra.mxu0 0.0
    %3456 = vmatprep.subr.mxu0 0.0
    %3457 = vmatpush1.msra.mxu0 0.0
    %3458 = vmatprep.subr.mxu0 0.0
    %3459 = vmatpush1.msra.mxu0 0.0
    %3460 = vmatprep.subr.mxu0 0.0
    %3461 = vmatpush1.msra.mxu0 0.0
    %3462 = vmatprep.subr.mxu0 0.0
    %3463 = vmatpush1.msra.mxu0 0.0
    %3464 = vmatprep.subr.mxu0 0.0
    %3465 = vmatpush1.msra.mxu0 0.0
    %3466 = vmatprep.subr.mxu0 0.0
    %3467 = vmatpush1.msra.mxu0 0.0
    %3468 = vmatprep.subr.mxu0 0.0
    %3469 = vmatpush1.msra.mxu0 0.0
    %3470 = vmatprep.subr.mxu0 0.0
    %3471 = vmatpush1.msra.mxu0 0.0
    %3472 = vmatprep.subr.mxu0 0.0
    %3473 = vmatpush1.msra.mxu0 0.0
    %3474 = vmatprep.subr.mxu0 0.0
    %3475 = vmatpush1.msra.mxu0 0.0
    %3476 = vmatprep.subr.mxu0 0.0
    %3477 = vmatpush1.msra.mxu0 0.0
    %3478 = vmatprep.subr.mxu0 0.0
    %3479 = vmatpush1.msra.mxu0 0.0
    %3480 = vmatprep.subr.mxu0 0.0
    %3481 = vmatpush1.msra.mxu0 0.0
    %3482 = vmatprep.mubr.f32.mxu0 0.0
    %3483 = vmatmul.mubr.f32.gmra.mrb[0].mxu0 %v3346
    %v3484 = vpop.f32.mrb[0].mxu0
    %v3485 = vadd.f32 0.0, %v3484
    %v3486 = vpop.f32.mrb[0].mxu0
    %3487 = vdwg.mxu0
    %v3488 = vadd.f32 %v2564, %v3485
    %v3489 = vmul.f32 %v3488, 0.5
    %v3490 = vtanh.pop %v3489
    %v3491 = vmul.f32 %v3490, 0.5
    %v3492 = vadd.f32 %v3491, 0.5
    %v3493 = vtanh.pop %v3488
    %v3494 = vmul.f32 %v3492, %v3336
    %3496 = vrot.lane.b32.xlu0 %v3493, 64
    %v3497 = vpop.permute.xlu0 %3496
    %v3499 = vmul.f32 %v3492, %v3497
    %3501 = vrot.lane.b32.xlu0 %v3499, 32
    %v3502 = vpop.permute.xlu0 %3501
    %v3504 = vadd.f32 %v3494, %v3502
    %v3505 = vtanh.pop %v3504
    %3507 = vrot.lane.b32.xlu0 %v3505, 64
    %v3508 = vpop.permute.xlu0 %3507
    %v3510 = vmul.f32 %v3492, %v3508
    %3512 = vrot.lane.b32.xlu0 %v3510, 32
    %v3513 = vpop.permute.xlu0 %3512
    %v3514 = vsel %vm290, %v3513, 0
    %3516 = vmatprep.subr.mxu0 0.0
    %3517 = vmatpush1.msra.mxu0 %v2567
    %3518 = vmatprep.subr.mxu0 0.0
    %3519 = vmatpush1.msra.mxu0 %v2568
    %3520 = vmatprep.subr.mxu0 0.0
    %3521 = vmatpush1.msra.mxu0 %v2569
    %3522 = vmatprep.subr.mxu0 0.0
    %3523 = vmatpush1.msra.mxu0 %v2570
    %3524 = vmatprep.subr.mxu0 0.0
    %3525 = vmatpush1.msra.mxu0 0.0
    %3526 = vmatprep.subr.mxu0 0.0
    %3527 = vmatpush1.msra.mxu0 0.0
    %3528 = vmatprep.subr.mxu0 0.0
    %3529 = vmatpush1.msra.mxu0 0.0
    %3530 = vmatprep.subr.mxu0 0.0
    %3531 = vmatpush1.msra.mxu0 0.0
    %3532 = vmatprep.subr.mxu0 0.0
    %3533 = vmatpush1.msra.mxu0 0.0
    %3534 = vmatprep.subr.mxu0 0.0
    %3535 = vmatpush1.msra.mxu0 0.0
    %3536 = vmatprep.subr.mxu0 0.0
    %3537 = vmatpush1.msra.mxu0 0.0
    %3538 = vmatprep.subr.mxu0 0.0
    %3539 = vmatpush1.msra.mxu0 0.0
    %3540 = vmatprep.subr.mxu0 0.0
    %3541 = vmatpush1.msra.mxu0 0.0
    %3542 = vmatprep.subr.mxu0 0.0
    %3543 = vmatpush1.msra.mxu0 0.0
    %3544 = vmatprep.subr.mxu0 0.0
    %3545 = vmatpush1.msra.mxu0 0.0
    %3546 = vmatprep.subr.mxu0 0.0
    %3547 = vmatpush1.msra.mxu0 0.0
    %3548 = vmatprep.subr.mxu0 0.0
    %3549 = vmatpush1.msra.mxu0 0.0
    %3550 = vmatprep.subr.mxu0 0.0
    %3551 = vmatpush1.msra.mxu0 0.0
    %3552 = vmatprep.subr.mxu0 0.0
    %3553 = vmatpush1.msra.mxu0 0.0
    %3554 = vmatprep.subr.mxu0 0.0
    %3555 = vmatpush1.msra.mxu0 0.0
    %3556 = vmatprep.subr.mxu0 0.0
    %3557 = vmatpush1.msra.mxu0 0.0
    %3558 = vmatprep.subr.mxu0 0.0
    %3559 = vmatpush1.msra.mxu0 0.0
    %3560 = vmatprep.subr.mxu0 0.0
    %3561 = vmatpush1.msra.mxu0 0.0
    %3562 = vmatprep.subr.mxu0 0.0
    %3563 = vmatpush1.msra.mxu0 0.0
    %3564 = vmatprep.subr.mxu0 0.0
    %3565 = vmatpush1.msra.mxu0 0.0
    %3566 = vmatprep.subr.mxu0 0.0
    %3567 = vmatpush1.msra.mxu0 0.0
    %3568 = vmatprep.subr.mxu0 0.0
    %3569 = vmatpush1.msra.mxu0 0.0
    %3570 = vmatprep.subr.mxu0 0.0
    %3571 = vmatpush1.msra.mxu0 0.0
    %3572 = vmatprep.subr.mxu0 0.0
    %3573 = vmatpush1.msra.mxu0 0.0
    %3574 = vmatprep.subr.mxu0 0.0
    %3575 = vmatpush1.msra.mxu0 0.0
    %3576 = vmatprep.subr.mxu0 0.0
    %3577 = vmatpush1.msra.mxu0 0.0
    %3578 = vmatprep.subr.mxu0 0.0
    %3579 = vmatpush1.msra.mxu0 0.0
    %3580 = vmatprep.mubr.f32.mxu0 0.0
    %3581 = vmatmul.mubr.f32.gmra.mrb[0].mxu0 %v3514
    %v3582 = vpop.f32.mrb[0].mxu0
    %v3583 = vadd.f32 %v2576, %v3582
    %v3584 = vpop.f32.mrb[0].mxu0
    %3585 = vdwg.mxu0
    %3586 = vmatprep.subr.mxu0 0.0
    %3587 = vmatpush1.msra.mxu0 %v2477
    %3588 = vmatprep.subr.mxu0 0.0
    %3589 = vmatpush1.msra.mxu0 %v2478
    %3590 = vmatprep.subr.mxu0 0.0
    %3591 = vmatpush1.msra.mxu0 %v2479
    %3592 = vmatprep.subr.mxu0 0.0
    %3593 = vmatpush1.msra.mxu0 %v2480
    %3594 = vmatprep.subr.mxu0 0.0
    %3595 = vmatpush1.msra.mxu0 0.0
    %3596 = vmatprep.subr.mxu0 0.0
    %3597 = vmatpush1.msra.mxu0 0.0
    %3598 = vmatprep.subr.mxu0 0.0
    %3599 = vmatpush1.msra.mxu0 0.0
    %3600 = vmatprep.subr.mxu0 0.0
    %3601 = vmatpush1.msra.mxu0 0.0
    %3602 = vmatprep.subr.mxu0 0.0
    %3603 = vmatpush1.msra.mxu0 0.0
    %3604 = vmatprep.subr.mxu0 0.0
    %3605 = vmatpush1.msra.mxu0 0.0
    %3606 = vmatprep.subr.mxu0 0.0
    %3607 = vmatpush1.msra.mxu0 0.0
    %3608 = vmatprep.subr.mxu0 0.0
    %3609 = vmatpush1.msra.mxu0 0.0
    %3610 = vmatprep.subr.mxu0 0.0
    %3611 = vmatpush1.msra.mxu0 0.0
    %3612 = vmatprep.subr.mxu0 0.0
    %3613 = vmatpush1.msra.mxu0 0.0
    %3614 = vmatprep.subr.mxu0 0.0
    %3615 = vmatpush1.msra.mxu0 0.0
    %3616 = vmatprep.subr.mxu0 0.0
    %3617 = vmatpush1.msra.mxu0 0.0
    %3618 = vmatprep.subr.mxu0 0.0
    %3619 = vmatpush1.msra.mxu0 0.0
    %3620 = vmatprep.subr.mxu0 0.0
    %3621 = vmatpush1.msra.mxu0 0.0
    %3622 = vmatprep.subr.mxu0 0.0
    %3623 = vmatpush1.msra.mxu0 0.0
    %3624 = vmatprep.subr.mxu0 0.0
    %3625 = vmatpush1.msra.mxu0 0.0
    %3626 = vmatprep.subr.mxu0 0.0
    %3627 = vmatpush1.msra.mxu0 0.0
    %3628 = vmatprep.subr.mxu0 0.0
    %3629 = vmatpush1.msra.mxu0 0.0
    %3630 = vmatprep.subr.mxu0 0.0
    %3631 = vmatpush1.msra.mxu0 0.0
    %3632 = vmatprep.subr.mxu0 0.0
    %3633 = vmatpush1.msra.mxu0 0.0
    %3634 = vmatprep.subr.mxu0 0.0
    %3635 = vmatpush1.msra.mxu0 0.0
    %3636 = vmatprep.subr.mxu0 0.0
    %3637 = vmatpush1.msra.mxu0 0.0
    %3638 = vmatprep.subr.mxu0 0.0
    %3639 = vmatpush1.msra.mxu0 0.0
    %3640 = vmatprep.subr.mxu0 0.0
    %3641 = vmatpush1.msra.mxu0 0.0
    %3642 = vmatprep.subr.mxu0 0.0
    %3643 = vmatpush1.msra.mxu0 0.0
    %3644 = vmatprep.subr.mxu0 0.0
    %3645 = vmatpush1.msra.mxu0 0.0
    %3646 = vmatprep.subr.mxu0 0.0
    %3647 = vmatpush1.msra.mxu0 0.0
    %3648 = vmatprep.subr.mxu0 0.0
    %3649 = vmatpush1.msra.mxu0 0.0
    %3650 = vmatprep.mubr.f32.mxu0 0.0
    %3651 = vmatmul.mubr.f32.gmra.mrb[0].mxu0 %v3514
    %v3652 = vpop.f32.mrb[0].mxu0
    %v3653 = vadd.f32 0.0, %v3652
    %v3654 = vpop.f32.mrb[0].mxu0
    %3655 = vdwg.mxu0
    %v3656 = vadd.f32 %v2564, %v3653
    %v3657 = vmul.f32 %v3656, 0.5
    %v3658 = vtanh.pop %v3657
    %v3659 = vmul.f32 %v3658, 0.5
    %v3660 = vadd.f32 %v3659, 0.5
    %v3661 = vtanh.pop %v3656
    %v3662 = vmul.f32 %v3660, %v3504
    %3664 = vrot.lane.b32.xlu0 %v3661, 64
    %v3665 = vpop.permute.xlu0 %3664
    %v3667 = vmul.f32 %v3660, %v3665
    %3669 = vrot.lane.b32.xlu0 %v3667, 32
    %v3670 = vpop.permute.xlu0 %3669
    %v3672 = vadd.f32 %v3662, %v3670
    %v3673 = vtanh.pop %v3672
    %3675 = vrot.lane.b32.xlu0 %v3673, 64
    %v3676 = vpop.permute.xlu0 %3675
    %v3678 = vmul.f32 %v3660, %v3676
    %3680 = vrot.lane.b32.xlu0 %v3678, 32
    %v3681 = vpop.permute.xlu0 %3680
    %v3682 = vsel %vm290, %v3681, 0
    %3684 = vmatprep.subr.mxu0 0.0
    %3685 = vmatpush1.msra.mxu0 %v2567
    %3686 = vmatprep.subr.mxu0 0.0
    %3687 = vmatpush1.msra.mxu0 %v2568
    %3688 = vmatprep.subr.mxu0 0.0
    %3689 = vmatpush1.msra.mxu0 %v2569
    %3690 = vmatprep.subr.mxu0 0.0
    %3691 = vmatpush1.msra.mxu0 %v2570
    %3692 = vmatprep.subr.mxu0 0.0
    %3693 = vmatpush1.msra.mxu0 0.0
    %3694 = vmatprep.subr.mxu0 0.0
    %3695 = vmatpush1.msra.mxu0 0.0
    %3696 = vmatprep.subr.mxu0 0.0
    %3697 = vmatpush1.msra.mxu0 0.0
    %3698 = vmatprep.subr.mxu0 0.0
    %3699 = vmatpush1.msra.mxu0 0.0
    %3700 = vmatprep.subr.mxu0 0.0
    %3701 = vmatpush1.msra.mxu0 0.0
    %3702 = vmatprep.subr.mxu0 0.0
    %3703 = vmatpush1.msra.mxu0 0.0
    %3704 = vmatprep.subr.mxu0 0.0
    %3705 = vmatpush1.msra.mxu0 0.0
    %3706 = vmatprep.subr.mxu0 0.0
    %3707 = vmatpush1.msra.mxu0 0.0
    %3708 = vmatprep.subr.mxu0 0.0
    %3709 = vmatpush1.msra.mxu0 0.0
    %3710 = vmatprep.subr.mxu0 0.0
    %3711 = vmatpush1.msra.mxu0 0.0
    %3712 = vmatprep.subr.mxu0 0.0
    %3713 = vmatpush1.msra.mxu0 0.0
    %3714 = vmatprep.subr.mxu0 0.0
    %3715 = vmatpush1.msra.mxu0 0.0
    %3716 = vmatprep.subr.mxu0 0.0
    %3717 = vmatpush1.msra.mxu0 0.0
    %3718 = vmatprep.subr.mxu0 0.0
    %3719 = vmatpush1.msra.mxu0 0.0
    %3720 = vmatprep.subr.mxu0 0.0
    %3721 = vmatpush1.msra.mxu0 0.0
    %3722 = vmatprep.subr.mxu0 0.0
    %3723 = vmatpush1.msra.mxu0 0.0
    %3724 = vmatprep.subr.mxu0 0.0
    %3725 = vmatpush1.msra.mxu0 0.0
    %3726 = vmatprep.subr.mxu0 0.0
    %3727 = vmatpush1.msra.mxu0 0.0
    %3728 = vmatprep.subr.mxu0 0.0
    %3729 = vmatpush1.msra.mxu0 0.0
    %3730 = vmatprep.subr.mxu0 0.0
    %3731 = vmatpush1.msra.mxu0 0.0
    %3732 = vmatprep.subr.mxu0 0.0
    %3733 = vmatpush1.msra.mxu0 0.0
    %3734 = vmatprep.subr.mxu0 0.0
    %3735 = vmatpush1.msra.mxu0 0.0
    %3736 = vmatprep.subr.mxu0 0.0
    %3737 = vmatpush1.msra.mxu0 0.0
    %3738 = vmatprep.subr.mxu0 0.0
    %3739 = vmatpush1.msra.mxu0 0.0
    %3740 = vmatprep.subr.mxu0 0.0
    %3741 = vmatpush1.msra.mxu0 0.0
    %3742 = vmatprep.subr.mxu0 0.0
    %3743 = vmatpush1.msra.mxu0 0.0
    %3744 = vmatprep.subr.mxu0 0.0
    %3745 = vmatpush1.msra.mxu0 0.0
    %3746 = vmatprep.subr.mxu0 0.0
    %3747 = vmatpush1.msra.mxu0 0.0
    %3748 = vmatprep.mubr.f32.mxu0 0.0
    %3749 = vmatmul.mubr.f32.gmra.mrb[0].mxu0 %v3682
    %v3750 = vpop.f32.mrb[0].mxu0
    %v3751 = vadd.f32 %v2576, %v3750
    %v3752 = vpop.f32.mrb[0].mxu0
    %3753 = vdwg.mxu0
    %3754 = vmatprep.subr.mxu0 0.0
    %3755 = vmatpush1.msra.mxu0 %v2477
    %3756 = vmatprep.subr.mxu0 0.0
    %3757 = vmatpush1.msra.mxu0 %v2478
    %3758 = vmatprep.subr.mxu0 0.0
    %3759 = vmatpush1.msra.mxu0 %v2479
    %3760 = vmatprep.subr.mxu0 0.0
    %3761 = vmatpush1.msra.mxu0 %v2480
    %3762 = vmatprep.subr.mxu0 0.0
    %3763 = vmatpush1.msra.mxu0 0.0
    %3764 = vmatprep.subr.mxu0 0.0
    %3765 = vmatpush1.msra.mxu0 0.0
    %3766 = vmatprep.subr.mxu0 0.0
    %3767 = vmatpush1.msra.mxu0 0.0
    %3768 = vmatprep.subr.mxu0 0.0
    %3769 = vmatpush1.msra.mxu0 0.0
    %3770 = vmatprep.subr.mxu0 0.0
    %3771 = vmatpush1.msra.mxu0 0.0
    %3772 = vmatprep.subr.mxu0 0.0
    %3773 = vmatpush1.msra.mxu0 0.0
    %3774 = vmatprep.subr.mxu0 0.0
    %3775 = vmatpush1.msra.mxu0 0.0
    %3776 = vmatprep.subr.mxu0 0.0
    %3777 = vmatpush1.msra.mxu0 0.0
    %3778 = vmatprep.subr.mxu0 0.0
    %3779 = vmatpush1.msra.mxu0 0.0
    %3780 = vmatprep.subr.mxu0 0.0
    %3781 = vmatpush1.msra.mxu0 0.0
    %3782 = vmatprep.subr.mxu0 0.0
    %3783 = vmatpush1.msra.mxu0 0.0
    %3784 = vmatprep.subr.mxu0 0.0
    %3785 = vmatpush1.msra.mxu0 0.0
    %3786 = vmatprep.subr.mxu0 0.0
    %3787 = vmatpush1.msra.mxu0 0.0
    %3788 = vmatprep.subr.mxu0 0.0
    %3789 = vmatpush1.msra.mxu0 0.0
    %3790 = vmatprep.subr.mxu0 0.0
    %3791 = vmatpush1.msra.mxu0 0.0
    %3792 = vmatprep.subr.mxu0 0.0
    %3793 = vmatpush1.msra.mxu0 0.0
    %3794 = vmatprep.subr.mxu0 0.0
    %3795 = vmatpush1.msra.mxu0 0.0
    %3796 = vmatprep.subr.mxu0 0.0
    %3797 = vmatpush1.msra.mxu0 0.0
    %3798 = vmatprep.subr.mxu0 0.0
    %3799 = vmatpush1.msra.mxu0 0.0
    %3800 = vmatprep.subr.mxu0 0.0
    %3801 = vmatpush1.msra.mxu0 0.0
    %3802 = vmatprep.subr.mxu0 0.0
    %3803 = vmatpush1.msra.mxu0 0.0
    %3804 = vmatprep.subr.mxu0 0.0
    %3805 = vmatpush1.msra.mxu0 0.0
    %3806 = vmatprep.subr.mxu0 0.0
    %3807 = vmatpush1.msra.mxu0 0.0
    %3808 = vmatprep.subr.mxu0 0.0
    %3809 = vmatpush1.msra.mxu0 0.0
    %3810 = vmatprep.subr.mxu0 0.0
    %3811 = vmatpush1.msra.mxu0 0.0
    %3812 = vmatprep.subr.mxu0 0.0
    %3813 = vmatpush1.msra.mxu0 0.0
    %3814 = vmatprep.subr.mxu0 0.0
    %3815 = vmatpush1.msra.mxu0 0.0
    %3816 = vmatprep.subr.mxu0 0.0
    %3817 = vmatpush1.msra.mxu0 0.0
    %3818 = vmatprep.mubr.f32.mxu0 0.0
    %3819 = vmatmul.mubr.f32.gmra.mrb[0].mxu0 %v3682
    %v3820 = vpop.f32.mrb[0].mxu0
    %v3821 = vadd.f32 0.0, %v3820
    %v3822 = vpop.f32.mrb[0].mxu0
    %3823 = vdwg.mxu0
    %v3824 = vadd.f32 %v2564, %v3821
    %v3825 = vmul.f32 %v3824, 0.5
    %v3826 = vtanh.pop %v3825
    %v3827 = vmul.f32 %v3826, 0.5
    %v3828 = vadd.f32 %v3827, 0.5
    %v3829 = vtanh.pop %v3824
    %v3830 = vmul.f32 %v3828, %v3672
    %3832 = vrot.lane.b32.xlu0 %v3829, 64
    %v3833 = vpop.permute.xlu0 %3832
    %v3835 = vmul.f32 %v3828, %v3833
    %3837 = vrot.lane.b32.xlu0 %v3835, 32
    %v3838 = vpop.permute.xlu0 %3837
    %v3840 = vadd.f32 %v3830, %v3838
    %v3841 = vtanh.pop %v3840
    %3843 = vrot.lane.b32.xlu0 %v3841, 64
    %v3844 = vpop.permute.xlu0 %3843
    %v3846 = vmul.f32 %v3828, %v3844
    %3848 = vrot.lane.b32.xlu0 %v3846, 32
    %v3849 = vpop.permute.xlu0 %3848
    %v3850 = vsel %vm290, %v3849, 0
    %3852 = vmatprep.subr.mxu0 0.0
    %3853 = vmatpush1.msra.mxu0 %v2567
    %3854 = vmatprep.subr.mxu0 0.0
    %3855 = vmatpush1.msra.mxu0 %v2568
    %3856 = vmatprep.subr.mxu0 0.0
    %3857 = vmatpush1.msra.mxu0 %v2569
    %3858 = vmatprep.subr.mxu0 0.0
    %3859 = vmatpush1.msra.mxu0 %v2570
    %3860 = vmatprep.subr.mxu0 0.0
    %3861 = vmatpush1.msra.mxu0 0.0
    %3862 = vmatprep.subr.mxu0 0.0
    %3863 = vmatpush1.msra.mxu0 0.0
    %3864 = vmatprep.subr.mxu0 0.0
    %3865 = vmatpush1.msra.mxu0 0.0
    %3866 = vmatprep.subr.mxu0 0.0
    %3867 = vmatpush1.msra.mxu0 0.0
    %3868 = vmatprep.subr.mxu0 0.0
    %3869 = vmatpush1.msra.mxu0 0.0
    %3870 = vmatprep.subr.mxu0 0.0
    %3871 = vmatpush1.msra.mxu0 0.0
    %3872 = vmatprep.subr.mxu0 0.0
    %3873 = vmatpush1.msra.mxu0 0.0
    %3874 = vmatprep.subr.mxu0 0.0
    %3875 = vmatpush1.msra.mxu0 0.0
    %3876 = vmatprep.subr.mxu0 0.0
    %3877 = vmatpush1.msra.mxu0 0.0
    %3878 = vmatprep.subr.mxu0 0.0
    %3879 = vmatpush1.msra.mxu0 0.0
    %3880 = vmatprep.subr.mxu0 0.0
    %3881 = vmatpush1.msra.mxu0 0.0
    %3882 = vmatprep.subr.mxu0 0.0
    %3883 = vmatpush1.msra.mxu0 0.0
    %3884 = vmatprep.subr.mxu0 0.0
    %3885 = vmatpush1.msra.mxu0 0.0
    %3886 = vmatprep.subr.mxu0 0.0
    %3887 = vmatpush1.msra.mxu0 0.0
    %3888 = vmatprep.subr.mxu0 0.0
    %3889 = vmatpush1.msra.mxu0 0.0
    %3890 = vmatprep.subr.mxu0 0.0
    %3891 = vmatpush1.msra.mxu0 0.0
    %3892 = vmatprep.subr.mxu0 0.0
    %3893 = vmatpush1.msra.mxu0 0.0
    %3894 = vmatprep.subr.mxu0 0.0
    %3895 = vmatpush1.msra.mxu0 0.0
    %3896 = vmatprep.subr.mxu0 0.0
    %3897 = vmatpush1.msra.mxu0 0.0
    %3898 = vmatprep.subr.mxu0 0.0
    %3899 = vmatpush1.msra.mxu0 0.0
    %3900 = vmatprep.subr.mxu0 0.0
    %3901 = vmatpush1.msra.mxu0 0.0
    %3902 = vmatprep.subr.mxu0 0.0
    %3903 = vmatpush1.msra.mxu0 0.0
    %3904 = vmatprep.subr.mxu0 0.0
    %3905 = vmatpush1.msra.mxu0 0.0
    %3906 = vmatprep.subr.mxu0 0.0
    %3907 = vmatpush1.msra.mxu0 0.0
    %3908 = vmatprep.subr.mxu0 0.0
    %3909 = vmatpush1.msra.mxu0 0.0
    %3910 = vmatprep.subr.mxu0 0.0
    %3911 = vmatpush1.msra.mxu0 0.0
    %3912 = vmatprep.subr.mxu0 0.0
    %3913 = vmatpush1.msra.mxu0 0.0
    %3914 = vmatprep.subr.mxu0 0.0
    %3915 = vmatpush1.msra.mxu0 0.0
    %3916 = vmatprep.mubr.f32.mxu0 0.0
    %3917 = vmatmul.mubr.f32.gmra.mrb[0].mxu0 %v3850
    %v3918 = vpop.f32.mrb[0].mxu0
    %v3919 = vadd.f32 %v2576, %v3918
    %v3920 = vpop.f32.mrb[0].mxu0
    %3921 = vdwg.mxu0
    %v3922 = vld [vmem:[#allocation16] sm:$0xff]
    %v3923 = vld [vmem:[#allocation16 + $0x8] sm:$0xff]
    %v3924 = vld [vmem:[#allocation16 + $0x10] sm:$0xff]
    %v3925 = vld [vmem:[#allocation16 + $0x18] sm:$0xff]
    %3926 = vmatprep.subr.mxu0 0.0
    %3927 = vmatpush1.msra.mxu0 %v3922
    %3928 = vmatprep.subr.mxu0 0.0
    %3929 = vmatpush1.msra.mxu0 %v3923
    %3930 = vmatprep.subr.mxu0 0.0
    %3931 = vmatpush1.msra.mxu0 %v3924
    %3932 = vmatprep.subr.mxu0 0.0
    %3933 = vmatpush1.msra.mxu0 %v3925
    %3934 = vmatprep.subr.mxu0 0.0
    %3935 = vmatpush1.msra.mxu0 0.0
    %3936 = vmatprep.subr.mxu0 0.0
    %3937 = vmatpush1.msra.mxu0 0.0
    %3938 = vmatprep.subr.mxu0 0.0
    %3939 = vmatpush1.msra.mxu0 0.0
    %3940 = vmatprep.subr.mxu0 0.0
    %3941 = vmatpush1.msra.mxu0 0.0
    %3942 = vmatprep.subr.mxu0 0.0
    %3943 = vmatpush1.msra.mxu0 0.0
    %3944 = vmatprep.subr.mxu0 0.0
    %3945 = vmatpush1.msra.mxu0 0.0
    %3946 = vmatprep.subr.mxu0 0.0
    %3947 = vmatpush1.msra.mxu0 0.0
    %3948 = vmatprep.subr.mxu0 0.0
    %3949 = vmatpush1.msra.mxu0 0.0
    %3950 = vmatprep.subr.mxu0 0.0
    %3951 = vmatpush1.msra.mxu0 0.0
    %3952 = vmatprep.subr.mxu0 0.0
    %3953 = vmatpush1.msra.mxu0 0.0
    %3954 = vmatprep.subr.mxu0 0.0
    %3955 = vmatpush1.msra.mxu0 0.0
    %3956 = vmatprep.subr.mxu0 0.0
    %3957 = vmatpush1.msra.mxu0 0.0
    %3958 = vmatprep.subr.mxu0 0.0
    %3959 = vmatpush1.msra.mxu0 0.0
    %3960 = vmatprep.subr.mxu0 0.0
    %3961 = vmatpush1.msra.mxu0 0.0
    %3962 = vmatprep.subr.mxu0 0.0
    %3963 = vmatpush1.msra.mxu0 0.0
    %3964 = vmatprep.subr.mxu0 0.0
    %3965 = vmatpush1.msra.mxu0 0.0
    %3966 = vmatprep.subr.mxu0 0.0
    %3967 = vmatpush1.msra.mxu0 0.0
    %3968 = vmatprep.subr.mxu0 0.0
    %3969 = vmatpush1.msra.mxu0 0.0
    %3970 = vmatprep.subr.mxu0 0.0
    %3971 = vmatpush1.msra.mxu0 0.0
    %3972 = vmatprep.subr.mxu0 0.0
    %3973 = vmatpush1.msra.mxu0 0.0
    %3974 = vmatprep.subr.mxu0 0.0
    %3975 = vmatpush1.msra.mxu0 0.0
    %3976 = vmatprep.subr.mxu0 0.0
    %3977 = vmatpush1.msra.mxu0 0.0
    %3978 = vmatprep.subr.mxu0 0.0
    %3979 = vmatpush1.msra.mxu0 0.0
    %3980 = vmatprep.subr.mxu0 0.0
    %3981 = vmatpush1.msra.mxu0 0.0
    %3982 = vmatprep.subr.mxu0 0.0
    %3983 = vmatpush1.msra.mxu0 0.0
    %3984 = vmatprep.subr.mxu0 0.0
    %3985 = vmatpush1.msra.mxu0 0.0
    %3986 = vmatprep.subr.mxu0 0.0
    %3987 = vmatpush1.msra.mxu0 0.0
    %3988 = vmatprep.subr.mxu0 0.0
    %3989 = vmatpush1.msra.mxu0 0.0
    %3990 = vmatprep.mubr.f32.mxu0 0.0
    %3991 = vmatmul.mubr.f32.gmra.mrb[0].mxu0 %v292
    %v3992 = vpop.f32.mrb[0].mxu0
    %v3993 = vadd.f32 0.0, %v3992
    %v3994 = vpop.f32.mrb[0].mxu0
    %3995 = vdwg.mxu0
    %v3996 = vadd.f32 %v2743, %v3993
    %v3997 = vmul.f32 %v3996, 0.5
    %v3998 = vtanh.pop %v3997
    %v3999 = vmul.f32 %v3998, 0.5
    %v4000 = vadd.f32 %v3999, 0.5
    %v4001 = vtanh.pop %v3996
    %v4002 = vmul.f32 %v4000, 0.0
    %4004 = vrot.lane.b32.xlu0 %v4001, 64
    %v4005 = vpop.permute.xlu0 %4004
    %v4007 = vmul.f32 %v4000, %v4005
    %4009 = vrot.lane.b32.xlu0 %v4007, 32
    %v4010 = vpop.permute.xlu0 %4009
    %v4012 = vadd.f32 %v4002, %v4010
    %v4013 = vtanh.pop %v4012
    %4015 = vrot.lane.b32.xlu0 %v4013, 64
    %v4016 = vpop.permute.xlu0 %4015
    %v4018 = vmul.f32 %v4000, %v4016
    %4020 = vrot.lane.b32.xlu0 %v4018, 32
    %v4021 = vpop.permute.xlu0 %4020
    %v4022 = vsel %vm290, %v4021, 0
    %4024 = vmatprep.subr.mxu0 0.0
    %4025 = vmatpush1.msra.mxu0 %v2466
    %4026 = vmatprep.subr.mxu0 0.0
    %4027 = vmatpush1.msra.mxu0 %v2467
    %4028 = vmatprep.subr.mxu0 0.0
    %4029 = vmatpush1.msra.mxu0 %v2468
    %4030 = vmatprep.subr.mxu0 0.0
    %4031 = vmatpush1.msra.mxu0 %v2469
    %4032 = vmatprep.subr.mxu0 0.0
    %4033 = vmatpush1.msra.mxu0 0.0
    %4034 = vmatprep.subr.mxu0 0.0
    %4035 = vmatpush1.msra.mxu0 0.0
    %4036 = vmatprep.subr.mxu0 0.0
    %4037 = vmatpush1.msra.mxu0 0.0
    %4038 = vmatprep.subr.mxu0 0.0
    %4039 = vmatpush1.msra.mxu0 0.0
    %4040 = vmatprep.subr.mxu0 0.0
    %4041 = vmatpush1.msra.mxu0 0.0
    %4042 = vmatprep.subr.mxu0 0.0
    %4043 = vmatpush1.msra.mxu0 0.0
    %4044 = vmatprep.subr.mxu0 0.0
    %4045 = vmatpush1.msra.mxu0 0.0
    %4046 = vmatprep.subr.mxu0 0.0
    %4047 = vmatpush1.msra.mxu0 0.0
    %4048 = vmatprep.subr.mxu0 0.0
    %4049 = vmatpush1.msra.mxu0 0.0
    %4050 = vmatprep.subr.mxu0 0.0
    %4051 = vmatpush1.msra.mxu0 0.0
    %4052 = vmatprep.subr.mxu0 0.0
    %4053 = vmatpush1.msra.mxu0 0.0
    %4054 = vmatprep.subr.mxu0 0.0
    %4055 = vmatpush1.msra.mxu0 0.0
    %4056 = vmatprep.subr.mxu0 0.0
    %4057 = vmatpush1.msra.mxu0 0.0
    %4058 = vmatprep.subr.mxu0 0.0
    %4059 = vmatpush1.msra.mxu0 0.0
    %4060 = vmatprep.subr.mxu0 0.0
    %4061 = vmatpush1.msra.mxu0 0.0
    %4062 = vmatprep.subr.mxu0 0.0
    %4063 = vmatpush1.msra.mxu0 0.0
    %4064 = vmatprep.subr.mxu0 0.0
    %4065 = vmatpush1.msra.mxu0 0.0
    %4066 = vmatprep.subr.mxu0 0.0
    %4067 = vmatpush1.msra.mxu0 0.0
    %4068 = vmatprep.subr.mxu0 0.0
    %4069 = vmatpush1.msra.mxu0 0.0
    %4070 = vmatprep.subr.mxu0 0.0
    %4071 = vmatpush1.msra.mxu0 0.0
    %4072 = vmatprep.subr.mxu0 0.0
    %4073 = vmatpush1.msra.mxu0 0.0
    %4074 = vmatprep.subr.mxu0 0.0
    %4075 = vmatpush1.msra.mxu0 0.0
    %4076 = vmatprep.subr.mxu0 0.0
    %4077 = vmatpush1.msra.mxu0 0.0
    %4078 = vmatprep.subr.mxu0 0.0
    %4079 = vmatpush1.msra.mxu0 0.0
    %4080 = vmatprep.subr.mxu0 0.0
    %4081 = vmatpush1.msra.mxu0 0.0
    %4082 = vmatprep.subr.mxu0 0.0
    %4083 = vmatpush1.msra.mxu0 0.0
    %4084 = vmatprep.subr.mxu0 0.0
    %4085 = vmatpush1.msra.mxu0 0.0
    %4086 = vmatprep.subr.mxu0 0.0
    %4087 = vmatpush1.msra.mxu0 0.0
    %4088 = vmatprep.mubr.f32.mxu0 0.0
    %4089 = vmatmul.mubr.f32.gmra.mrb[0].mxu0 %v4022
    %v4090 = vpop.f32.mrb[0].mxu0
    %v4091 = vadd.f32 %v2475, %v4090
    %v4092 = vpop.f32.mrb[0].mxu0
    %4093 = vdwg.mxu0
    %4094 = vst [vmem:[#allocation19] sm:$0x3] %v4091
    %4095 = vmatprep.subr.mxu0 0.0
    %4096 = vmatpush1.msra.mxu0 %v3922
    %4097 = vmatprep.subr.mxu0 0.0
    %4098 = vmatpush1.msra.mxu0 %v3923
    %4099 = vmatprep.subr.mxu0 0.0
    %4100 = vmatpush1.msra.mxu0 %v3924
    %4101 = vmatprep.subr.mxu0 0.0
    %4102 = vmatpush1.msra.mxu0 %v3925
    %4103 = vmatprep.subr.mxu0 0.0
    %4104 = vmatpush1.msra.mxu0 0.0
    %4105 = vmatprep.subr.mxu0 0.0
    %4106 = vmatpush1.msra.mxu0 0.0
    %4107 = vmatprep.subr.mxu0 0.0
    %4108 = vmatpush1.msra.mxu0 0.0
    %4109 = vmatprep.subr.mxu0 0.0
    %4110 = vmatpush1.msra.mxu0 0.0
    %4111 = vmatprep.subr.mxu0 0.0
    %4112 = vmatpush1.msra.mxu0 0.0
    %4113 = vmatprep.subr.mxu0 0.0
    %4114 = vmatpush1.msra.mxu0 0.0
    %4115 = vmatprep.subr.mxu0 0.0
    %4116 = vmatpush1.msra.mxu0 0.0
    %4117 = vmatprep.subr.mxu0 0.0
    %4118 = vmatpush1.msra.mxu0 0.0
    %4119 = vmatprep.subr.mxu0 0.0
    %4120 = vmatpush1.msra.mxu0 0.0
    %4121 = vmatprep.subr.mxu0 0.0
    %4122 = vmatpush1.msra.mxu0 0.0
    %4123 = vmatprep.subr.mxu0 0.0
    %4124 = vmatpush1.msra.mxu0 0.0
    %4125 = vmatprep.subr.mxu0 0.0
    %4126 = vmatpush1.msra.mxu0 0.0
    %4127 = vmatprep.subr.mxu0 0.0
    %4128 = vmatpush1.msra.mxu0 0.0
    %4129 = vmatprep.subr.mxu0 0.0
    %4130 = vmatpush1.msra.mxu0 0.0
    %4131 = vmatprep.subr.mxu0 0.0
    %4132 = vmatpush1.msra.mxu0 0.0
    %4133 = vmatprep.subr.mxu0 0.0
    %4134 = vmatpush1.msra.mxu0 0.0
    %4135 = vmatprep.subr.mxu0 0.0
    %4136 = vmatpush1.msra.mxu0 0.0
    %4137 = vmatprep.subr.mxu0 0.0
    %4138 = vmatpush1.msra.mxu0 0.0
    %4139 = vmatprep.subr.mxu0 0.0
    %4140 = vmatpush1.msra.mxu0 0.0
    %4141 = vmatprep.subr.mxu0 0.0
    %4142 = vmatpush1.msra.mxu0 0.0
    %4143 = vmatprep.subr.mxu0 0.0
    %4144 = vmatpush1.msra.mxu0 0.0
    %4145 = vmatprep.subr.mxu0 0.0
    %4146 = vmatpush1.msra.mxu0 0.0
    %4147 = vmatprep.subr.mxu0 0.0
    %4148 = vmatpush1.msra.mxu0 0.0
    %4149 = vmatprep.subr.mxu0 0.0
    %4150 = vmatpush1.msra.mxu0 0.0
    %4151 = vmatprep.subr.mxu0 0.0
    %4152 = vmatpush1.msra.mxu0 0.0
    %4153 = vmatprep.subr.mxu0 0.0
    %4154 = vmatpush1.msra.mxu0 0.0
    %4155 = vmatprep.subr.mxu0 0.0
    %4156 = vmatpush1.msra.mxu0 0.0
    %4157 = vmatprep.subr.mxu0 0.0
    %4158 = vmatpush1.msra.mxu0 0.0
    %4159 = vmatprep.mubr.f32.mxu0 0.0
    %4160 = vmatmul.mubr.f32.gmra.mrb[0].mxu0 %v4022
    %v4161 = vpop.f32.mrb[0].mxu0
    %v4162 = vadd.f32 0.0, %v4161
    %v4163 = vpop.f32.mrb[0].mxu0
    %4164 = vdwg.mxu0
    %v4165 = vadd.f32 %v2911, %v4162
    %v4166 = vmul.f32 %v4165, 0.5
    %v4167 = vtanh.pop %v4166
    %v4168 = vmul.f32 %v4167, 0.5
    %v4169 = vadd.f32 %v4168, 0.5
    %v4170 = vtanh.pop %v4165
    %v4171 = vmul.f32 %v4169, %v4012
    %4173 = vrot.lane.b32.xlu0 %v4170, 64
    %v4174 = vpop.permute.xlu0 %4173
    %v4176 = vmul.f32 %v4169, %v4174
    %4178 = vrot.lane.b32.xlu0 %v4176, 32
    %v4179 = vpop.permute.xlu0 %4178
    %v4181 = vadd.f32 %v4171, %v4179
    %v4182 = vtanh.pop %v4181
    %4184 = vrot.lane.b32.xlu0 %v4182, 64
    %v4185 = vpop.permute.xlu0 %4184
    %v4187 = vmul.f32 %v4169, %v4185
    %4189 = vrot.lane.b32.xlu0 %v4187, 32
    %v4190 = vpop.permute.xlu0 %4189
    %v4191 = vsel %vm290, %v4190, 0
    %4193 = vmatprep.subr.mxu0 0.0
    %4194 = vmatpush1.msra.mxu0 %v2466
    %4195 = vmatprep.subr.mxu0 0.0
    %4196 = vmatpush1.msra.mxu0 %v2467
    %4197 = vmatprep.subr.mxu0 0.0
    %4198 = vmatpush1.msra.mxu0 %v2468
    %4199 = vmatprep.subr.mxu0 0.0
    %4200 = vmatpush1.msra.mxu0 %v2469
    %4201 = vmatprep.subr.mxu0 0.0
    %4202 = vmatpush1.msra.mxu0 0.0
    %4203 = vmatprep.subr.mxu0 0.0
    %4204 = vmatpush1.msra.mxu0 0.0
    %4205 = vmatprep.subr.mxu0 0.0
    %4206 = vmatpush1.msra.mxu0 0.0
    %4207 = vmatprep.subr.mxu0 0.0
    %4208 = vmatpush1.msra.mxu0 0.0
    %4209 = vmatprep.subr.mxu0 0.0
    %4210 = vmatpush1.msra.mxu0 0.0
    %4211 = vmatprep.subr.mxu0 0.0
    %4212 = vmatpush1.msra.mxu0 0.0
    %4213 = vmatprep.subr.mxu0 0.0
    %4214 = vmatpush1.msra.mxu0 0.0
    %4215 = vmatprep.subr.mxu0 0.0
    %4216 = vmatpush1.msra.mxu0 0.0
    %4217 = vmatprep.subr.mxu0 0.0
    %4218 = vmatpush1.msra.mxu0 0.0
    %4219 = vmatprep.subr.mxu0 0.0
    %4220 = vmatpush1.msra.mxu0 0.0
    %4221 = vmatprep.subr.mxu0 0.0
    %4222 = vmatpush1.msra.mxu0 0.0
    %4223 = vmatprep.subr.mxu0 0.0
    %4224 = vmatpush1.msra.mxu0 0.0
    %4225 = vmatprep.subr.mxu0 0.0
    %4226 = vmatpush1.msra.mxu0 0.0
    %4227 = vmatprep.subr.mxu0 0.0
    %4228 = vmatpush1.msra.mxu0 0.0
    %4229 = vmatprep.subr.mxu0 0.0
    %4230 = vmatpush1.msra.mxu0 0.0
    %4231 = vmatprep.subr.mxu0 0.0
    %4232 = vmatpush1.msra.mxu0 0.0
    %4233 = vmatprep.subr.mxu0 0.0
    %4234 = vmatpush1.msra.mxu0 0.0
    %4235 = vmatprep.subr.mxu0 0.0
    %4236 = vmatpush1.msra.mxu0 0.0
    %4237 = vmatprep.subr.mxu0 0.0
    %4238 = vmatpush1.msra.mxu0 0.0
    %4239 = vmatprep.subr.mxu0 0.0
    %4240 = vmatpush1.msra.mxu0 0.0
    %4241 = vmatprep.subr.mxu0 0.0
    %4242 = vmatpush1.msra.mxu0 0.0
    %4243 = vmatprep.subr.mxu0 0.0
    %4244 = vmatpush1.msra.mxu0 0.0
    %4245 = vmatprep.subr.mxu0 0.0
    %4246 = vmatpush1.msra.mxu0 0.0
    %4247 = vmatprep.subr.mxu0 0.0
    %4248 = vmatpush1.msra.mxu0 0.0
    %4249 = vmatprep.subr.mxu0 0.0
    %4250 = vmatpush1.msra.mxu0 0.0
    %4251 = vmatprep.subr.mxu0 0.0
    %4252 = vmatpush1.msra.mxu0 0.0
    %4253 = vmatprep.subr.mxu0 0.0
    %4254 = vmatpush1.msra.mxu0 0.0
    %4255 = vmatprep.subr.mxu0 0.0
    %4256 = vmatpush1.msra.mxu0 0.0
    %4257 = vmatprep.mubr.f32.mxu0 0.0
    %4258 = vmatmul.mubr.f32.gmra.mrb[0].mxu0 %v4191
    %v4259 = vpop.f32.mrb[0].mxu0
    %v4260 = vadd.f32 %v2475, %v4259
    %v4261 = vpop.f32.mrb[0].mxu0
    %4262 = vdwg.mxu0
    %4263 = vst [vmem:[#allocation19 + $0x2] sm:$0x3] %v4260
    %4264 = vmatprep.subr.mxu0 0.0
    %4265 = vmatpush1.msra.mxu0 %v3922
    %4266 = vmatprep.subr.mxu0 0.0
    %4267 = vmatpush1.msra.mxu0 %v3923
    %4268 = vmatprep.subr.mxu0 0.0
    %4269 = vmatpush1.msra.mxu0 %v3924
    %4270 = vmatprep.subr.mxu0 0.0
    %4271 = vmatpush1.msra.mxu0 %v3925
    %4272 = vmatprep.subr.mxu0 0.0
    %4273 = vmatpush1.msra.mxu0 0.0
    %4274 = vmatprep.subr.mxu0 0.0
    %4275 = vmatpush1.msra.mxu0 0.0
    %4276 = vmatprep.subr.mxu0 0.0
    %4277 = vmatpush1.msra.mxu0 0.0
    %4278 = vmatprep.subr.mxu0 0.0
    %4279 = vmatpush1.msra.mxu0 0.0
    %4280 = vmatprep.subr.mxu0 0.0
    %4281 = vmatpush1.msra.mxu0 0.0
    %4282 = vmatprep.subr.mxu0 0.0
    %4283 = vmatpush1.msra.mxu0 0.0
    %4284 = vmatprep.subr.mxu0 0.0
    %4285 = vmatpush1.msra.mxu0 0.0
    %4286 = vmatprep.subr.mxu0 0.0
    %4287 = vmatpush1.msra.mxu0 0.0
    %4288 = vmatprep.subr.mxu0 0.0
    %4289 = vmatpush1.msra.mxu0 0.0
    %4290 = vmatprep.subr.mxu0 0.0
    %4291 = vmatpush1.msra.mxu0 0.0
    %4292 = vmatprep.subr.mxu0 0.0
    %4293 = vmatpush1.msra.mxu0 0.0
    %4294 = vmatprep.subr.mxu0 0.0
    %4295 = vmatpush1.msra.mxu0 0.0
    %4296 = vmatprep.subr.mxu0 0.0
    %4297 = vmatpush1.msra.mxu0 0.0
    %4298 = vmatprep.subr.mxu0 0.0
    %4299 = vmatpush1.msra.mxu0 0.0
    %4300 = vmatprep.subr.mxu0 0.0
    %4301 = vmatpush1.msra.mxu0 0.0
    %4302 = vmatprep.subr.mxu0 0.0
    %4303 = vmatpush1.msra.mxu0 0.0
    %4304 = vmatprep.subr.mxu0 0.0
    %4305 = vmatpush1.msra.mxu0 0.0
    %4306 = vmatprep.subr.mxu0 0.0
    %4307 = vmatpush1.msra.mxu0 0.0
    %4308 = vmatprep.subr.mxu0 0.0
    %4309 = vmatpush1.msra.mxu0 0.0
    %4310 = vmatprep.subr.mxu0 0.0
    %4311 = vmatpush1.msra.mxu0 0.0
    %4312 = vmatprep.subr.mxu0 0.0
    %4313 = vmatpush1.msra.mxu0 0.0
    %4314 = vmatprep.subr.mxu0 0.0
    %4315 = vmatpush1.msra.mxu0 0.0
    %4316 = vmatprep.subr.mxu0 0.0
    %4317 = vmatpush1.msra.mxu0 0.0
    %4318 = vmatprep.subr.mxu0 0.0
    %4319 = vmatpush1.msra.mxu0 0.0
    %4320 = vmatprep.subr.mxu0 0.0
    %4321 = vmatpush1.msra.mxu0 0.0
    %4322 = vmatprep.subr.mxu0 0.0
    %4323 = vmatpush1.msra.mxu0 0.0
    %4324 = vmatprep.subr.mxu0 0.0
    %4325 = vmatpush1.msra.mxu0 0.0
    %4326 = vmatprep.subr.mxu0 0.0
    %4327 = vmatpush1.msra.mxu0 0.0
    %4328 = vmatprep.mubr.f32.mxu0 0.0
    %4329 = vmatmul.mubr.f32.gmra.mrb[0].mxu0 %v4191
    %v4330 = vpop.f32.mrb[0].mxu0
    %v4331 = vadd.f32 0.0, %v4330
    %v4332 = vpop.f32.mrb[0].mxu0
    %4333 = vdwg.mxu0
    %v4334 = vadd.f32 %v3079, %v4331
    %v4335 = vmul.f32 %v4334, 0.5
    %v4336 = vtanh.pop %v4335
    %v4337 = vmul.f32 %v4336, 0.5
    %v4338 = vadd.f32 %v4337, 0.5
    %v4339 = vtanh.pop %v4334
    %v4340 = vmul.f32 %v4338, %v4181
    %4342 = vrot.lane.b32.xlu0 %v4339, 64
    %v4343 = vpop.permute.xlu0 %4342
    %v4345 = vmul.f32 %v4338, %v4343
    %4347 = vrot.lane.b32.xlu0 %v4345, 32
    %v4348 = vpop.permute.xlu0 %4347
    %v4350 = vadd.f32 %v4340, %v4348
    %v4351 = vtanh.pop %v4350
    %4353 = vrot.lane.b32.xlu0 %v4351, 64
    %v4354 = vpop.permute.xlu0 %4353
    %v4356 = vmul.f32 %v4338, %v4354
    %4358 = vrot.lane.b32.xlu0 %v4356, 32
    %v4359 = vpop.permute.xlu0 %4358
    %v4360 = vsel %vm290, %v4359, 0
    %4362 = vmatprep.subr.mxu0 0.0
    %4363 = vmatpush1.msra.mxu0 %v2466
    %4364 = vmatprep.subr.mxu0 0.0
    %4365 = vmatpush1.msra.mxu0 %v2467
    %4366 = vmatprep.subr.mxu0 0.0
    %4367 = vmatpush1.msra.mxu0 %v2468
    %4368 = vmatprep.subr.mxu0 0.0
    %4369 = vmatpush1.msra.mxu0 %v2469
    %4370 = vmatprep.subr.mxu0 0.0
    %4371 = vmatpush1.msra.mxu0 0.0
    %4372 = vmatprep.subr.mxu0 0.0
    %4373 = vmatpush1.msra.mxu0 0.0
    %4374 = vmatprep.subr.mxu0 0.0
    %4375 = vmatpush1.msra.mxu0 0.0
    %4376 = vmatprep.subr.mxu0 0.0
    %4377 = vmatpush1.msra.mxu0 0.0
    %4378 = vmatprep.subr.mxu0 0.0
    %4379 = vmatpush1.msra.mxu0 0.0
    %4380 = vmatprep.subr.mxu0 0.0
    %4381 = vmatpush1.msra.mxu0 0.0
    %4382 = vmatprep.subr.mxu0 0.0
    %4383 = vmatpush1.msra.mxu0 0.0
    %4384 = vmatprep.subr.mxu0 0.0
    %4385 = vmatpush1.msra.mxu0 0.0
    %4386 = vmatprep.subr.mxu0 0.0
    %4387 = vmatpush1.msra.mxu0 0.0
    %4388 = vmatprep.subr.mxu0 0.0
    %4389 = vmatpush1.msra.mxu0 0.0
    %4390 = vmatprep.subr.mxu0 0.0
    %4391 = vmatpush1.msra.mxu0 0.0
    %4392 = vmatprep.subr.mxu0 0.0
    %4393 = vmatpush1.msra.mxu0 0.0
    %4394 = vmatprep.subr.mxu0 0.0
    %4395 = vmatpush1.msra.mxu0 0.0
    %4396 = vmatprep.subr.mxu0 0.0
    %4397 = vmatpush1.msra.mxu0 0.0
    %4398 = vmatprep.subr.mxu0 0.0
    %4399 = vmatpush1.msra.mxu0 0.0
    %4400 = vmatprep.subr.mxu0 0.0
    %4401 = vmatpush1.msra.mxu0 0.0
    %4402 = vmatprep.subr.mxu0 0.0
    %4403 = vmatpush1.msra.mxu0 0.0
    %4404 = vmatprep.subr.mxu0 0.0
    %4405 = vmatpush1.msra.mxu0 0.0
    %4406 = vmatprep.subr.mxu0 0.0
    %4407 = vmatpush1.msra.mxu0 0.0
    %4408 = vmatprep.subr.mxu0 0.0
    %4409 = vmatpush1.msra.mxu0 0.0
    %4410 = vmatprep.subr.mxu0 0.0
    %4411 = vmatpush1.msra.mxu0 0.0
    %4412 = vmatprep.subr.mxu0 0.0
    %4413 = vmatpush1.msra.mxu0 0.0
    %4414 = vmatprep.subr.mxu0 0.0
    %4415 = vmatpush1.msra.mxu0 0.0
    %4416 = vmatprep.subr.mxu0 0.0
    %4417 = vmatpush1.msra.mxu0 0.0
    %4418 = vmatprep.subr.mxu0 0.0
    %4419 = vmatpush1.msra.mxu0 0.0
    %4420 = vmatprep.subr.mxu0 0.0
    %4421 = vmatpush1.msra.mxu0 0.0
    %4422 = vmatprep.subr.mxu0 0.0
    %4423 = vmatpush1.msra.mxu0 0.0
    %4424 = vmatprep.subr.mxu0 0.0
    %4425 = vmatpush1.msra.mxu0 0.0
    %4426 = vmatprep.mubr.f32.mxu0 0.0
    %4427 = vmatmul.mubr.f32.gmra.mrb[0].mxu0 %v4360
    %v4428 = vpop.f32.mrb[0].mxu0
    %v4429 = vadd.f32 %v2475, %v4428
    %v4430 = vpop.f32.mrb[0].mxu0
    %4431 = vdwg.mxu0
    %4432 = vst [vmem:[#allocation19 + $0x4] sm:$0x3] %v4429
    %4433 = vmatprep.subr.mxu0 0.0
    %4434 = vmatpush1.msra.mxu0 %v3922
    %4435 = vmatprep.subr.mxu0 0.0
    %4436 = vmatpush1.msra.mxu0 %v3923
    %4437 = vmatprep.subr.mxu0 0.0
    %4438 = vmatpush1.msra.mxu0 %v3924
    %4439 = vmatprep.subr.mxu0 0.0
    %4440 = vmatpush1.msra.mxu0 %v3925
    %4441 = vmatprep.subr.mxu0 0.0
    %4442 = vmatpush1.msra.mxu0 0.0
    %4443 = vmatprep.subr.mxu0 0.0
    %4444 = vmatpush1.msra.mxu0 0.0
    %4445 = vmatprep.subr.mxu0 0.0
    %4446 = vmatpush1.msra.mxu0 0.0
    %4447 = vmatprep.subr.mxu0 0.0
    %4448 = vmatpush1.msra.mxu0 0.0
    %4449 = vmatprep.subr.mxu0 0.0
    %4450 = vmatpush1.msra.mxu0 0.0
    %4451 = vmatprep.subr.mxu0 0.0
    %4452 = vmatpush1.msra.mxu0 0.0
    %4453 = vmatprep.subr.mxu0 0.0
    %4454 = vmatpush1.msra.mxu0 0.0
    %4455 = vmatprep.subr.mxu0 0.0
    %4456 = vmatpush1.msra.mxu0 0.0
    %4457 = vmatprep.subr.mxu0 0.0
    %4458 = vmatpush1.msra.mxu0 0.0
    %4459 = vmatprep.subr.mxu0 0.0
    %4460 = vmatpush1.msra.mxu0 0.0
    %4461 = vmatprep.subr.mxu0 0.0
    %4462 = vmatpush1.msra.mxu0 0.0
    %4463 = vmatprep.subr.mxu0 0.0
    %4464 = vmatpush1.msra.mxu0 0.0
    %4465 = vmatprep.subr.mxu0 0.0
    %4466 = vmatpush1.msra.mxu0 0.0
    %4467 = vmatprep.subr.mxu0 0.0
    %4468 = vmatpush1.msra.mxu0 0.0
    %4469 = vmatprep.subr.mxu0 0.0
    %4470 = vmatpush1.msra.mxu0 0.0
    %4471 = vmatprep.subr.mxu0 0.0
    %4472 = vmatpush1.msra.mxu0 0.0
    %4473 = vmatprep.subr.mxu0 0.0
    %4474 = vmatpush1.msra.mxu0 0.0
    %4475 = vmatprep.subr.mxu0 0.0
    %4476 = vmatpush1.msra.mxu0 0.0
    %4477 = vmatprep.subr.mxu0 0.0
    %4478 = vmatpush1.msra.mxu0 0.0
    %4479 = vmatprep.subr.mxu0 0.0
    %4480 = vmatpush1.msra.mxu0 0.0
    %4481 = vmatprep.subr.mxu0 0.0
    %4482 = vmatpush1.msra.mxu0 0.0
    %4483 = vmatprep.subr.mxu0 0.0
    %4484 = vmatpush1.msra.mxu0 0.0
    %4485 = vmatprep.subr.mxu0 0.0
    %4486 = vmatpush1.msra.mxu0 0.0
    %4487 = vmatprep.subr.mxu0 0.0
    %4488 = vmatpush1.msra.mxu0 0.0
    %4489 = vmatprep.subr.mxu0 0.0
    %4490 = vmatpush1.msra.mxu0 0.0
    %4491 = vmatprep.subr.mxu0 0.0
    %4492 = vmatpush1.msra.mxu0 0.0
    %4493 = vmatprep.subr.mxu0 0.0
    %4494 = vmatpush1.msra.mxu0 0.0
    %4495 = vmatprep.subr.mxu0 0.0
    %4496 = vmatpush1.msra.mxu0 0.0
    %4497 = vmatprep.mubr.f32.mxu0 0.0
    %4498 = vmatmul.mubr.f32.gmra.mrb[0].mxu0 %v4360
    %v4499 = vpop.f32.mrb[0].mxu0
    %v4500 = vadd.f32 0.0, %v4499
    %v4501 = vpop.f32.mrb[0].mxu0
    %4502 = vdwg.mxu0
    %v4503 = vadd.f32 %v3247, %v4500
    %v4504 = vmul.f32 %v4503, 0.5
    %v4505 = vtanh.pop %v4504
    %v4506 = vmul.f32 %v4505, 0.5
    %v4507 = vadd.f32 %v4506, 0.5
    %v4508 = vtanh.pop %v4503
    %v4509 = vmul.f32 %v4507, %v4350
    %4511 = vrot.lane.b32.xlu0 %v4508, 64
    %v4512 = vpop.permute.xlu0 %4511
    %v4514 = vmul.f32 %v4507, %v4512
    %4516 = vrot.lane.b32.xlu0 %v4514, 32
    %v4517 = vpop.permute.xlu0 %4516
    %v4519 = vadd.f32 %v4509, %v4517
    %v4520 = vtanh.pop %v4519
    %4522 = vrot.lane.b32.xlu0 %v4520, 64
    %v4523 = vpop.permute.xlu0 %4522
    %v4525 = vmul.f32 %v4507, %v4523
    %4527 = vrot.lane.b32.xlu0 %v4525, 32
    %v4528 = vpop.permute.xlu0 %4527
    %v4529 = vsel %vm290, %v4528, 0
    %4531 = vmatprep.subr.mxu0 0.0
    %4532 = vmatpush1.msra.mxu0 %v2466
    %4533 = vmatprep.subr.mxu0 0.0
    %4534 = vmatpush1.msra.mxu0 %v2467
    %4535 = vmatprep.subr.mxu0 0.0
    %4536 = vmatpush1.msra.mxu0 %v2468
    %4537 = vmatprep.subr.mxu0 0.0
    %4538 = vmatpush1.msra.mxu0 %v2469
    %4539 = vmatprep.subr.mxu0 0.0
    %4540 = vmatpush1.msra.mxu0 0.0
    %4541 = vmatprep.subr.mxu0 0.0
    %4542 = vmatpush1.msra.mxu0 0.0
    %4543 = vmatprep.subr.mxu0 0.0
    %4544 = vmatpush1.msra.mxu0 0.0
    %4545 = vmatprep.subr.mxu0 0.0
    %4546 = vmatpush1.msra.mxu0 0.0
    %4547 = vmatprep.subr.mxu0 0.0
    %4548 = vmatpush1.msra.mxu0 0.0
    %4549 = vmatprep.subr.mxu0 0.0
    %4550 = vmatpush1.msra.mxu0 0.0
    %4551 = vmatprep.subr.mxu0 0.0
    %4552 = vmatpush1.msra.mxu0 0.0
    %4553 = vmatprep.subr.mxu0 0.0
    %4554 = vmatpush1.msra.mxu0 0.0
    %4555 = vmatprep.subr.mxu0 0.0
    %4556 = vmatpush1.msra.mxu0 0.0
    %4557 = vmatprep.subr.mxu0 0.0
    %4558 = vmatpush1.msra.mxu0 0.0
    %4559 = vmatprep.subr.mxu0 0.0
    %4560 = vmatpush1.msra.mxu0 0.0
    %4561 = vmatprep.subr.mxu0 0.0
    %4562 = vmatpush1.msra.mxu0 0.0
    %4563 = vmatprep.subr.mxu0 0.0
    %4564 = vmatpush1.msra.mxu0 0.0
    %4565 = vmatprep.subr.mxu0 0.0
    %4566 = vmatpush1.msra.mxu0 0.0
    %4567 = vmatprep.subr.mxu0 0.0
    %4568 = vmatpush1.msra.mxu0 0.0
    %4569 = vmatprep.subr.mxu0 0.0
    %4570 = vmatpush1.msra.mxu0 0.0
    %4571 = vmatprep.subr.mxu0 0.0
    %4572 = vmatpush1.msra.mxu0 0.0
    %4573 = vmatprep.subr.mxu0 0.0
    %4574 = vmatpush1.msra.mxu0 0.0
    %4575 = vmatprep.subr.mxu0 0.0
    %4576 = vmatpush1.msra.mxu0 0.0
    %4577 = vmatprep.subr.mxu0 0.0
    %4578 = vmatpush1.msra.mxu0 0.0
    %4579 = vmatprep.subr.mxu0 0.0
    %4580 = vmatpush1.msra.mxu0 0.0
    %4581 = vmatprep.subr.mxu0 0.0
    %4582 = vmatpush1.msra.mxu0 0.0
    %4583 = vmatprep.subr.mxu0 0.0
    %4584 = vmatpush1.msra.mxu0 0.0
    %4585 = vmatprep.subr.mxu0 0.0
    %4586 = vmatpush1.msra.mxu0 0.0
    %4587 = vmatprep.subr.mxu0 0.0
    %4588 = vmatpush1.msra.mxu0 0.0
    %4589 = vmatprep.subr.mxu0 0.0
    %4590 = vmatpush1.msra.mxu0 0.0
    %4591 = vmatprep.subr.mxu0 0.0
    %4592 = vmatpush1.msra.mxu0 0.0
    %4593 = vmatprep.subr.mxu0 0.0
    %4594 = vmatpush1.msra.mxu0 0.0
    %4595 = vmatprep.mubr.f32.mxu0 0.0
    %4596 = vmatmul.mubr.f32.gmra.mrb[0].mxu0 %v4529
    %v4597 = vpop.f32.mrb[0].mxu0
    %v4598 = vadd.f32 %v2475, %v4597
    %v4599 = vpop.f32.mrb[0].mxu0
    %4600 = vdwg.mxu0
    %4601 = vst [vmem:[#allocation19 + $0x6] sm:$0x3] %v4598
    %4602 = vmatprep.subr.mxu0 0.0
    %4603 = vmatpush1.msra.mxu0 %v3922
    %4604 = vmatprep.subr.mxu0 0.0
    %4605 = vmatpush1.msra.mxu0 %v3923
    %4606 = vmatprep.subr.mxu0 0.0
    %4607 = vmatpush1.msra.mxu0 %v3924
    %4608 = vmatprep.subr.mxu0 0.0
    %4609 = vmatpush1.msra.mxu0 %v3925
    %4610 = vmatprep.subr.mxu0 0.0
    %4611 = vmatpush1.msra.mxu0 0.0
    %4612 = vmatprep.subr.mxu0 0.0
    %4613 = vmatpush1.msra.mxu0 0.0
    %4614 = vmatprep.subr.mxu0 0.0
    %4615 = vmatpush1.msra.mxu0 0.0
    %4616 = vmatprep.subr.mxu0 0.0
    %4617 = vmatpush1.msra.mxu0 0.0
    %4618 = vmatprep.subr.mxu0 0.0
    %4619 = vmatpush1.msra.mxu0 0.0
    %4620 = vmatprep.subr.mxu0 0.0
    %4621 = vmatpush1.msra.mxu0 0.0
    %4622 = vmatprep.subr.mxu0 0.0
    %4623 = vmatpush1.msra.mxu0 0.0
    %4624 = vmatprep.subr.mxu0 0.0
    %4625 = vmatpush1.msra.mxu0 0.0
    %4626 = vmatprep.subr.mxu0 0.0
    %4627 = vmatpush1.msra.mxu0 0.0
    %4628 = vmatprep.subr.mxu0 0.0
    %4629 = vmatpush1.msra.mxu0 0.0
    %4630 = vmatprep.subr.mxu0 0.0
    %4631 = vmatpush1.msra.mxu0 0.0
    %4632 = vmatprep.subr.mxu0 0.0
    %4633 = vmatpush1.msra.mxu0 0.0
    %4634 = vmatprep.subr.mxu0 0.0
    %4635 = vmatpush1.msra.mxu0 0.0
    %4636 = vmatprep.subr.mxu0 0.0
    %4637 = vmatpush1.msra.mxu0 0.0
    %4638 = vmatprep.subr.mxu0 0.0
    %4639 = vmatpush1.msra.mxu0 0.0
    %4640 = vmatprep.subr.mxu0 0.0
    %4641 = vmatpush1.msra.mxu0 0.0
    %4642 = vmatprep.subr.mxu0 0.0
    %4643 = vmatpush1.msra.mxu0 0.0
    %4644 = vmatprep.subr.mxu0 0.0
    %4645 = vmatpush1.msra.mxu0 0.0
    %4646 = vmatprep.subr.mxu0 0.0
    %4647 = vmatpush1.msra.mxu0 0.0
    %4648 = vmatprep.subr.mxu0 0.0
    %4649 = vmatpush1.msra.mxu0 0.0
    %4650 = vmatprep.subr.mxu0 0.0
    %4651 = vmatpush1.msra.mxu0 0.0
    %4652 = vmatprep.subr.mxu0 0.0
    %4653 = vmatpush1.msra.mxu0 0.0
    %4654 = vmatprep.subr.mxu0 0.0
    %4655 = vmatpush1.msra.mxu0 0.0
    %4656 = vmatprep.subr.mxu0 0.0
    %4657 = vmatpush1.msra.mxu0 0.0
    %4658 = vmatprep.subr.mxu0 0.0
    %4659 = vmatpush1.msra.mxu0 0.0
    %4660 = vmatprep.subr.mxu0 0.0
    %4661 = vmatpush1.msra.mxu0 0.0
    %4662 = vmatprep.subr.mxu0 0.0
    %4663 = vmatpush1.msra.mxu0 0.0
    %4664 = vmatprep.subr.mxu0 0.0
    %4665 = vmatpush1.msra.mxu0 0.0
    %4666 = vmatprep.mubr.f32.mxu0 0.0
    %4667 = vmatmul.mubr.f32.gmra.mrb[0].mxu0 %v4529
    %v4668 = vpop.f32.mrb[0].mxu0
    %v4669 = vadd.f32 0.0, %v4668
    %v4670 = vpop.f32.mrb[0].mxu0
    %4671 = vdwg.mxu0
    %v4672 = vadd.f32 %v3415, %v4669
    %v4673 = vmul.f32 %v4672, 0.5
    %v4674 = vtanh.pop %v4673
    %v4675 = vmul.f32 %v4674, 0.5
    %v4676 = vadd.f32 %v4675, 0.5
    %v4677 = vtanh.pop %v4672
    %v4678 = vmul.f32 %v4676, %v4519
    %4680 = vrot.lane.b32.xlu0 %v4677, 64
    %v4681 = vpop.permute.xlu0 %4680
    %v4683 = vmul.f32 %v4676, %v4681
    %4685 = vrot.lane.b32.xlu0 %v4683, 32
    %v4686 = vpop.permute.xlu0 %4685
    %v4688 = vadd.f32 %v4678, %v4686
    %v4689 = vtanh.pop %v4688
    %4691 = vrot.lane.b32.xlu0 %v4689, 64
    %v4692 = vpop.permute.xlu0 %4691
    %v4694 = vmul.f32 %v4676, %v4692
    %4696 = vrot.lane.b32.xlu0 %v4694, 32
    %v4697 = vpop.permute.xlu0 %4696
    %v4698 = vsel %vm290, %v4697, 0
    %4700 = vmatprep.subr.mxu0 0.0
    %4701 = vmatpush1.msra.mxu0 %v2466
    %4702 = vmatprep.subr.mxu0 0.0
    %4703 = vmatpush1.msra.mxu0 %v2467
    %4704 = vmatprep.subr.mxu0 0.0
    %4705 = vmatpush1.msra.mxu0 %v2468
    %4706 = vmatprep.subr.mxu0 0.0
    %4707 = vmatpush1.msra.mxu0 %v2469
    %4708 = vmatprep.subr.mxu0 0.0
    %4709 = vmatpush1.msra.mxu0 0.0
    %4710 = vmatprep.subr.mxu0 0.0
    %4711 = vmatpush1.msra.mxu0 0.0
    %4712 = vmatprep.subr.mxu0 0.0
    %4713 = vmatpush1.msra.mxu0 0.0
    %4714 = vmatprep.subr.mxu0 0.0
    %4715 = vmatpush1.msra.mxu0 0.0
    %4716 = vmatprep.subr.mxu0 0.0
    %4717 = vmatpush1.msra.mxu0 0.0
    %4718 = vmatprep.subr.mxu0 0.0
    %4719 = vmatpush1.msra.mxu0 0.0
    %4720 = vmatprep.subr.mxu0 0.0
    %4721 = vmatpush1.msra.mxu0 0.0
    %4722 = vmatprep.subr.mxu0 0.0
    %4723 = vmatpush1.msra.mxu0 0.0
    %4724 = vmatprep.subr.mxu0 0.0
    %4725 = vmatpush1.msra.mxu0 0.0
    %4726 = vmatprep.subr.mxu0 0.0
    %4727 = vmatpush1.msra.mxu0 0.0
    %4728 = vmatprep.subr.mxu0 0.0
    %4729 = vmatpush1.msra.mxu0 0.0
    %4730 = vmatprep.subr.mxu0 0.0
    %4731 = vmatpush1.msra.mxu0 0.0
    %4732 = vmatprep.subr.mxu0 0.0
    %4733 = vmatpush1.msra.mxu0 0.0
    %4734 = vmatprep.subr.mxu0 0.0
    %4735 = vmatpush1.msra.mxu0 0.0
    %4736 = vmatprep.subr.mxu0 0.0
    %4737 = vmatpush1.msra.mxu0 0.0
    %4738 = vmatprep.subr.mxu0 0.0
    %4739 = vmatpush1.msra.mxu0 0.0
    %4740 = vmatprep.subr.mxu0 0.0
    %4741 = vmatpush1.msra.mxu0 0.0
    %4742 = vmatprep.subr.mxu0 0.0
    %4743 = vmatpush1.msra.mxu0 0.0
    %4744 = vmatprep.subr.mxu0 0.0
    %4745 = vmatpush1.msra.mxu0 0.0
    %4746 = vmatprep.subr.mxu0 0.0
    %4747 = vmatpush1.msra.mxu0 0.0
    %4748 = vmatprep.subr.mxu0 0.0
    %4749 = vmatpush1.msra.mxu0 0.0
    %4750 = vmatprep.subr.mxu0 0.0
    %4751 = vmatpush1.msra.mxu0 0.0
    %4752 = vmatprep.subr.mxu0 0.0
    %4753 = vmatpush1.msra.mxu0 0.0
    %4754 = vmatprep.subr.mxu0 0.0
    %4755 = vmatpush1.msra.mxu0 0.0
    %4756 = vmatprep.subr.mxu0 0.0
    %4757 = vmatpush1.msra.mxu0 0.0
    %4758 = vmatprep.subr.mxu0 0.0
    %4759 = vmatpush1.msra.mxu0 0.0
    %4760 = vmatprep.subr.mxu0 0.0
    %4761 = vmatpush1.msra.mxu0 0.0
    %4762 = vmatprep.subr.mxu0 0.0
    %4763 = vmatpush1.msra.mxu0 0.0
    %4764 = vmatprep.mubr.f32.mxu0 0.0
    %4765 = vmatmul.mubr.f32.gmra.mrb[0].mxu0 %v4698
    %v4766 = vpop.f32.mrb[0].mxu0
    %v4767 = vadd.f32 %v2475, %v4766
    %v4768 = vpop.f32.mrb[0].mxu0
    %4769 = vdwg.mxu0
    %4770 = vst [vmem:[#allocation19 + $0x8] sm:$0x3] %v4767
    %4771 = vmatprep.subr.mxu0 0.0
    %4772 = vmatpush1.msra.mxu0 %v3922
    %4773 = vmatprep.subr.mxu0 0.0
    %4774 = vmatpush1.msra.mxu0 %v3923
    %4775 = vmatprep.subr.mxu0 0.0
    %4776 = vmatpush1.msra.mxu0 %v3924
    %4777 = vmatprep.subr.mxu0 0.0
    %4778 = vmatpush1.msra.mxu0 %v3925
    %4779 = vmatprep.subr.mxu0 0.0
    %4780 = vmatpush1.msra.mxu0 0.0
    %4781 = vmatprep.subr.mxu0 0.0
    %4782 = vmatpush1.msra.mxu0 0.0
    %4783 = vmatprep.subr.mxu0 0.0
    %4784 = vmatpush1.msra.mxu0 0.0
    %4785 = vmatprep.subr.mxu0 0.0
    %4786 = vmatpush1.msra.mxu0 0.0
    %4787 = vmatprep.subr.mxu0 0.0
    %4788 = vmatpush1.msra.mxu0 0.0
    %4789 = vmatprep.subr.mxu0 0.0
    %4790 = vmatpush1.msra.mxu0 0.0
    %4791 = vmatprep.subr.mxu0 0.0
    %4792 = vmatpush1.msra.mxu0 0.0
    %4793 = vmatprep.subr.mxu0 0.0
    %4794 = vmatpush1.msra.mxu0 0.0
    %4795 = vmatprep.subr.mxu0 0.0
    %4796 = vmatpush1.msra.mxu0 0.0
    %4797 = vmatprep.subr.mxu0 0.0
    %4798 = vmatpush1.msra.mxu0 0.0
    %4799 = vmatprep.subr.mxu0 0.0
    %4800 = vmatpush1.msra.mxu0 0.0
    %4801 = vmatprep.subr.mxu0 0.0
    %4802 = vmatpush1.msra.mxu0 0.0
    %4803 = vmatprep.subr.mxu0 0.0
    %4804 = vmatpush1.msra.mxu0 0.0
    %4805 = vmatprep.subr.mxu0 0.0
    %4806 = vmatpush1.msra.mxu0 0.0
    %4807 = vmatprep.subr.mxu0 0.0
    %4808 = vmatpush1.msra.mxu0 0.0
    %4809 = vmatprep.subr.mxu0 0.0
    %4810 = vmatpush1.msra.mxu0 0.0
    %4811 = vmatprep.subr.mxu0 0.0
    %4812 = vmatpush1.msra.mxu0 0.0
    %4813 = vmatprep.subr.mxu0 0.0
    %4814 = vmatpush1.msra.mxu0 0.0
    %4815 = vmatprep.subr.mxu0 0.0
    %4816 = vmatpush1.msra.mxu0 0.0
    %4817 = vmatprep.subr.mxu0 0.0
    %4818 = vmatpush1.msra.mxu0 0.0
    %4819 = vmatprep.subr.mxu0 0.0
    %4820 = vmatpush1.msra.mxu0 0.0
    %4821 = vmatprep.subr.mxu0 0.0
    %4822 = vmatpush1.msra.mxu0 0.0
    %4823 = vmatprep.subr.mxu0 0.0
    %4824 = vmatpush1.msra.mxu0 0.0
    %4825 = vmatprep.subr.mxu0 0.0
    %4826 = vmatpush1.msra.mxu0 0.0
    %4827 = vmatprep.subr.mxu0 0.0
    %4828 = vmatpush1.msra.mxu0 0.0
    %4829 = vmatprep.subr.mxu0 0.0
    %4830 = vmatpush1.msra.mxu0 0.0
    %4831 = vmatprep.subr.mxu0 0.0
    %4832 = vmatpush1.msra.mxu0 0.0
    %4833 = vmatprep.subr.mxu0 0.0
    %4834 = vmatpush1.msra.mxu0 0.0
    %4835 = vmatprep.mubr.f32.mxu0 0.0
    %4836 = vmatmul.mubr.f32.gmra.mrb[0].mxu0 %v4698
    %v4837 = vpop.f32.mrb[0].mxu0
    %v4838 = vadd.f32 0.0, %v4837
    %v4839 = vpop.f32.mrb[0].mxu0
    %4840 = vdwg.mxu0
    %v4841 = vadd.f32 %v3583, %v4838
    %v4842 = vmul.f32 %v4841, 0.5
    %v4843 = vtanh.pop %v4842
    %v4844 = vmul.f32 %v4843, 0.5
    %v4845 = vadd.f32 %v4844, 0.5
    %v4846 = vtanh.pop %v4841
    %v4847 = vmul.f32 %v4845, %v4688
    %4849 = vrot.lane.b32.xlu0 %v4846, 64
    %v4850 = vpop.permute.xlu0 %4849
    %v4852 = vmul.f32 %v4845, %v4850
    %4854 = vrot.lane.b32.xlu0 %v4852, 32
    %v4855 = vpop.permute.xlu0 %4854
    %v4857 = vadd.f32 %v4847, %v4855
    %v4858 = vtanh.pop %v4857
    %4860 = vrot.lane.b32.xlu0 %v4858, 64
    %v4861 = vpop.permute.xlu0 %4860
    %v4863 = vmul.f32 %v4845, %v4861
    %4865 = vrot.lane.b32.xlu0 %v4863, 32
    %v4866 = vpop.permute.xlu0 %4865
    %v4867 = vsel %vm290, %v4866, 0
    %4869 = vmatprep.subr.mxu0 0.0
    %4870 = vmatpush1.msra.mxu0 %v2466
    %4871 = vmatprep.subr.mxu0 0.0
    %4872 = vmatpush1.msra.mxu0 %v2467
    %4873 = vmatprep.subr.mxu0 0.0
    %4874 = vmatpush1.msra.mxu0 %v2468
    %4875 = vmatprep.subr.mxu0 0.0
    %4876 = vmatpush1.msra.mxu0 %v2469
    %4877 = vmatprep.subr.mxu0 0.0
    %4878 = vmatpush1.msra.mxu0 0.0
    %4879 = vmatprep.subr.mxu0 0.0
    %4880 = vmatpush1.msra.mxu0 0.0
    %4881 = vmatprep.subr.mxu0 0.0
    %4882 = vmatpush1.msra.mxu0 0.0
    %4883 = vmatprep.subr.mxu0 0.0
    %4884 = vmatpush1.msra.mxu0 0.0
    %4885 = vmatprep.subr.mxu0 0.0
    %4886 = vmatpush1.msra.mxu0 0.0
    %4887 = vmatprep.subr.mxu0 0.0
    %4888 = vmatpush1.msra.mxu0 0.0
    %4889 = vmatprep.subr.mxu0 0.0
    %4890 = vmatpush1.msra.mxu0 0.0
    %4891 = vmatprep.subr.mxu0 0.0
    %4892 = vmatpush1.msra.mxu0 0.0
    %4893 = vmatprep.subr.mxu0 0.0
    %4894 = vmatpush1.msra.mxu0 0.0
    %4895 = vmatprep.subr.mxu0 0.0
    %4896 = vmatpush1.msra.mxu0 0.0
    %4897 = vmatprep.subr.mxu0 0.0
    %4898 = vmatpush1.msra.mxu0 0.0
    %4899 = vmatprep.subr.mxu0 0.0
    %4900 = vmatpush1.msra.mxu0 0.0
    %4901 = vmatprep.subr.mxu0 0.0
    %4902 = vmatpush1.msra.mxu0 0.0
    %4903 = vmatprep.subr.mxu0 0.0
    %4904 = vmatpush1.msra.mxu0 0.0
    %4905 = vmatprep.subr.mxu0 0.0
    %4906 = vmatpush1.msra.mxu0 0.0
    %4907 = vmatprep.subr.mxu0 0.0
    %4908 = vmatpush1.msra.mxu0 0.0
    %4909 = vmatprep.subr.mxu0 0.0
    %4910 = vmatpush1.msra.mxu0 0.0
    %4911 = vmatprep.subr.mxu0 0.0
    %4912 = vmatpush1.msra.mxu0 0.0
    %4913 = vmatprep.subr.mxu0 0.0
    %4914 = vmatpush1.msra.mxu0 0.0
    %4915 = vmatprep.subr.mxu0 0.0
    %4916 = vmatpush1.msra.mxu0 0.0
    %4917 = vmatprep.subr.mxu0 0.0
    %4918 = vmatpush1.msra.mxu0 0.0
    %4919 = vmatprep.subr.mxu0 0.0
    %4920 = vmatpush1.msra.mxu0 0.0
    %4921 = vmatprep.subr.mxu0 0.0
    %4922 = vmatpush1.msra.mxu0 0.0
    %4923 = vmatprep.subr.mxu0 0.0
    %4924 = vmatpush1.msra.mxu0 0.0
    %4925 = vmatprep.subr.mxu0 0.0
    %4926 = vmatpush1.msra.mxu0 0.0
    %4927 = vmatprep.subr.mxu0 0.0
    %4928 = vmatpush1.msra.mxu0 0.0
    %4929 = vmatprep.subr.mxu0 0.0
    %4930 = vmatpush1.msra.mxu0 0.0
    %4931 = vmatprep.subr.mxu0 0.0
    %4932 = vmatpush1.msra.mxu0 0.0
    %4933 = vmatprep.mubr.f32.mxu0 0.0
    %4934 = vmatmul.mubr.f32.gmra.mrb[0].mxu0 %v4867
    %v4935 = vpop.f32.mrb[0].mxu0
    %v4936 = vadd.f32 %v2475, %v4935
    %v4937 = vpop.f32.mrb[0].mxu0
    %4938 = vdwg.mxu0
    %4939 = vst [vmem:[#allocation19 + $0xa] sm:$0x3] %v4936
    %4940 = vmatprep.subr.mxu0 0.0
    %4941 = vmatpush1.msra.mxu0 %v3922
    %4942 = vmatprep.subr.mxu0 0.0
    %4943 = vmatpush1.msra.mxu0 %v3923
    %4944 = vmatprep.subr.mxu0 0.0
    %4945 = vmatpush1.msra.mxu0 %v3924
    %4946 = vmatprep.subr.mxu0 0.0
    %4947 = vmatpush1.msra.mxu0 %v3925
    %4948 = vmatprep.subr.mxu0 0.0
    %4949 = vmatpush1.msra.mxu0 0.0
    %4950 = vmatprep.subr.mxu0 0.0
    %4951 = vmatpush1.msra.mxu0 0.0
    %4952 = vmatprep.subr.mxu0 0.0
    %4953 = vmatpush1.msra.mxu0 0.0
    %4954 = vmatprep.subr.mxu0 0.0
    %4955 = vmatpush1.msra.mxu0 0.0
    %4956 = vmatprep.subr.mxu0 0.0
    %4957 = vmatpush1.msra.mxu0 0.0
    %4958 = vmatprep.subr.mxu0 0.0
    %4959 = vmatpush1.msra.mxu0 0.0
    %4960 = vmatprep.subr.mxu0 0.0
    %4961 = vmatpush1.msra.mxu0 0.0
    %4962 = vmatprep.subr.mxu0 0.0
    %4963 = vmatpush1.msra.mxu0 0.0
    %4964 = vmatprep.subr.mxu0 0.0
    %4965 = vmatpush1.msra.mxu0 0.0
    %4966 = vmatprep.subr.mxu0 0.0
    %4967 = vmatpush1.msra.mxu0 0.0
    %4968 = vmatprep.subr.mxu0 0.0
    %4969 = vmatpush1.msra.mxu0 0.0
    %4970 = vmatprep.subr.mxu0 0.0
    %4971 = vmatpush1.msra.mxu0 0.0
    %4972 = vmatprep.subr.mxu0 0.0
    %4973 = vmatpush1.msra.mxu0 0.0
    %4974 = vmatprep.subr.mxu0 0.0
    %4975 = vmatpush1.msra.mxu0 0.0
    %4976 = vmatprep.subr.mxu0 0.0
    %4977 = vmatpush1.msra.mxu0 0.0
    %4978 = vmatprep.subr.mxu0 0.0
    %4979 = vmatpush1.msra.mxu0 0.0
    %4980 = vmatprep.subr.mxu0 0.0
    %4981 = vmatpush1.msra.mxu0 0.0
    %4982 = vmatprep.subr.mxu0 0.0
    %4983 = vmatpush1.msra.mxu0 0.0
    %4984 = vmatprep.subr.mxu0 0.0
    %4985 = vmatpush1.msra.mxu0 0.0
    %4986 = vmatprep.subr.mxu0 0.0
    %4987 = vmatpush1.msra.mxu0 0.0
    %4988 = vmatprep.subr.mxu0 0.0
    %4989 = vmatpush1.msra.mxu0 0.0
    %4990 = vmatprep.subr.mxu0 0.0
    %4991 = vmatpush1.msra.mxu0 0.0
    %4992 = vmatprep.subr.mxu0 0.0
    %4993 = vmatpush1.msra.mxu0 0.0
    %4994 = vmatprep.subr.mxu0 0.0
    %4995 = vmatpush1.msra.mxu0 0.0
    %4996 = vmatprep.subr.mxu0 0.0
    %4997 = vmatpush1.msra.mxu0 0.0
    %4998 = vmatprep.subr.mxu0 0.0
    %4999 = vmatpush1.msra.mxu0 0.0
    %5000 = vmatprep.subr.mxu0 0.0
    %5001 = vmatpush1.msra.mxu0 0.0
    %5002 = vmatprep.subr.mxu0 0.0
    %5003 = vmatpush1.msra.mxu0 0.0
    %5004 = vmatprep.mubr.f32.mxu0 0.0
    %5005 = vmatmul.mubr.f32.gmra.mrb[0].mxu0 %v4867
    %v5006 = vpop.f32.mrb[0].mxu0
    %v5007 = vadd.f32 0.0, %v5006
    %v5008 = vpop.f32.mrb[0].mxu0
    %5009 = vdwg.mxu0
    %v5010 = vadd.f32 %v3751, %v5007
    %v5011 = vmul.f32 %v5010, 0.5
    %v5012 = vtanh.pop %v5011
    %v5013 = vmul.f32 %v5012, 0.5
    %v5014 = vadd.f32 %v5013, 0.5
    %v5015 = vtanh.pop %v5010
    %v5016 = vmul.f32 %v5014, %v4857
    %5018 = vrot.lane.b32.xlu0 %v5015, 64
    %v5019 = vpop.permute.xlu0 %5018
    %v5021 = vmul.f32 %v5014, %v5019
    %5023 = vrot.lane.b32.xlu0 %v5021, 32
    %v5024 = vpop.permute.xlu0 %5023
    %v5026 = vadd.f32 %v5016, %v5024
    %v5027 = vtanh.pop %v5026
    %5029 = vrot.lane.b32.xlu0 %v5027, 64
    %v5030 = vpop.permute.xlu0 %5029
    %v5032 = vmul.f32 %v5014, %v5030
    %5034 = vrot.lane.b32.xlu0 %v5032, 32
    %v5035 = vpop.permute.xlu0 %5034
    %v5036 = vsel %vm290, %v5035, 0
    %5038 = vmatprep.subr.mxu0 0.0
    %5039 = vmatpush1.msra.mxu0 %v2466
    %5040 = vmatprep.subr.mxu0 0.0
    %5041 = vmatpush1.msra.mxu0 %v2467
    %5042 = vmatprep.subr.mxu0 0.0
    %5043 = vmatpush1.msra.mxu0 %v2468
    %5044 = vmatprep.subr.mxu0 0.0
    %5045 = vmatpush1.msra.mxu0 %v2469
    %5046 = vmatprep.subr.mxu0 0.0
    %5047 = vmatpush1.msra.mxu0 0.0
    %5048 = vmatprep.subr.mxu0 0.0
    %5049 = vmatpush1.msra.mxu0 0.0
    %5050 = vmatprep.subr.mxu0 0.0
    %5051 = vmatpush1.msra.mxu0 0.0
    %5052 = vmatprep.subr.mxu0 0.0
    %5053 = vmatpush1.msra.mxu0 0.0
    %5054 = vmatprep.subr.mxu0 0.0
    %5055 = vmatpush1.msra.mxu0 0.0
    %5056 = vmatprep.subr.mxu0 0.0
    %5057 = vmatpush1.msra.mxu0 0.0
    %5058 = vmatprep.subr.mxu0 0.0
    %5059 = vmatpush1.msra.mxu0 0.0
    %5060 = vmatprep.subr.mxu0 0.0
    %5061 = vmatpush1.msra.mxu0 0.0
    %5062 = vmatprep.subr.mxu0 0.0
    %5063 = vmatpush1.msra.mxu0 0.0
    %5064 = vmatprep.subr.mxu0 0.0
    %5065 = vmatpush1.msra.mxu0 0.0
    %5066 = vmatprep.subr.mxu0 0.0
    %5067 = vmatpush1.msra.mxu0 0.0
    %5068 = vmatprep.subr.mxu0 0.0
    %5069 = vmatpush1.msra.mxu0 0.0
    %5070 = vmatprep.subr.mxu0 0.0
    %5071 = vmatpush1.msra.mxu0 0.0
    %5072 = vmatprep.subr.mxu0 0.0
    %5073 = vmatpush1.msra.mxu0 0.0
    %5074 = vmatprep.subr.mxu0 0.0
    %5075 = vmatpush1.msra.mxu0 0.0
    %5076 = vmatprep.subr.mxu0 0.0
    %5077 = vmatpush1.msra.mxu0 0.0
    %5078 = vmatprep.subr.mxu0 0.0
    %5079 = vmatpush1.msra.mxu0 0.0
    %5080 = vmatprep.subr.mxu0 0.0
    %5081 = vmatpush1.msra.mxu0 0.0
    %5082 = vmatprep.subr.mxu0 0.0
    %5083 = vmatpush1.msra.mxu0 0.0
    %5084 = vmatprep.subr.mxu0 0.0
    %5085 = vmatpush1.msra.mxu0 0.0
    %5086 = vmatprep.subr.mxu0 0.0
    %5087 = vmatpush1.msra.mxu0 0.0
    %5088 = vmatprep.subr.mxu0 0.0
    %5089 = vmatpush1.msra.mxu0 0.0
    %5090 = vmatprep.subr.mxu0 0.0
    %5091 = vmatpush1.msra.mxu0 0.0
    %5092 = vmatprep.subr.mxu0 0.0
    %5093 = vmatpush1.msra.mxu0 0.0
    %5094 = vmatprep.subr.mxu0 0.0
    %5095 = vmatpush1.msra.mxu0 0.0
    %5096 = vmatprep.subr.mxu0 0.0
    %5097 = vmatpush1.msra.mxu0 0.0
    %5098 = vmatprep.subr.mxu0 0.0
    %5099 = vmatpush1.msra.mxu0 0.0
    %5100 = vmatprep.subr.mxu0 0.0
    %5101 = vmatpush1.msra.mxu0 0.0
    %5102 = vmatprep.mubr.f32.mxu0 0.0
    %5103 = vmatmul.mubr.f32.gmra.mrb[0].mxu0 %v5036
    %v5104 = vpop.f32.mrb[0].mxu0
    %v5105 = vadd.f32 %v2475, %v5104
    %v5106 = vpop.f32.mrb[0].mxu0
    %5107 = vdwg.mxu0
    %5108 = vst [vmem:[#allocation19 + $0xc] sm:$0x3] %v5105
    %5109 = vmatprep.subr.mxu0 0.0
    %5110 = vmatpush1.msra.mxu0 %v3922
    %5111 = vmatprep.subr.mxu0 0.0
    %5112 = vmatpush1.msra.mxu0 %v3923
    %5113 = vmatprep.subr.mxu0 0.0
    %5114 = vmatpush1.msra.mxu0 %v3924
    %5115 = vmatprep.subr.mxu0 0.0
    %5116 = vmatpush1.msra.mxu0 %v3925
    %5117 = vmatprep.subr.mxu0 0.0
    %5118 = vmatpush1.msra.mxu0 0.0
    %5119 = vmatprep.subr.mxu0 0.0
    %5120 = vmatpush1.msra.mxu0 0.0
    %5121 = vmatprep.subr.mxu0 0.0
    %5122 = vmatpush1.msra.mxu0 0.0
    %5123 = vmatprep.subr.mxu0 0.0
    %5124 = vmatpush1.msra.mxu0 0.0
    %5125 = vmatprep.subr.mxu0 0.0
    %5126 = vmatpush1.msra.mxu0 0.0
    %5127 = vmatprep.subr.mxu0 0.0
    %5128 = vmatpush1.msra.mxu0 0.0
    %5129 = vmatprep.subr.mxu0 0.0
    %5130 = vmatpush1.msra.mxu0 0.0
    %5131 = vmatprep.subr.mxu0 0.0
    %5132 = vmatpush1.msra.mxu0 0.0
    %5133 = vmatprep.subr.mxu0 0.0
    %5134 = vmatpush1.msra.mxu0 0.0
    %5135 = vmatprep.subr.mxu0 0.0
    %5136 = vmatpush1.msra.mxu0 0.0
    %5137 = vmatprep.subr.mxu0 0.0
    %5138 = vmatpush1.msra.mxu0 0.0
    %5139 = vmatprep.subr.mxu0 0.0
    %5140 = vmatpush1.msra.mxu0 0.0
    %5141 = vmatprep.subr.mxu0 0.0
    %5142 = vmatpush1.msra.mxu0 0.0
    %5143 = vmatprep.subr.mxu0 0.0
    %5144 = vmatpush1.msra.mxu0 0.0
    %5145 = vmatprep.subr.mxu0 0.0
    %5146 = vmatpush1.msra.mxu0 0.0
    %5147 = vmatprep.subr.mxu0 0.0
    %5148 = vmatpush1.msra.mxu0 0.0
    %5149 = vmatprep.subr.mxu0 0.0
    %5150 = vmatpush1.msra.mxu0 0.0
    %5151 = vmatprep.subr.mxu0 0.0
    %5152 = vmatpush1.msra.mxu0 0.0
    %5153 = vmatprep.subr.mxu0 0.0
    %5154 = vmatpush1.msra.mxu0 0.0
    %5155 = vmatprep.subr.mxu0 0.0
    %5156 = vmatpush1.msra.mxu0 0.0
    %5157 = vmatprep.subr.mxu0 0.0
    %5158 = vmatpush1.msra.mxu0 0.0
    %5159 = vmatprep.subr.mxu0 0.0
    %5160 = vmatpush1.msra.mxu0 0.0
    %5161 = vmatprep.subr.mxu0 0.0
    %5162 = vmatpush1.msra.mxu0 0.0
    %5163 = vmatprep.subr.mxu0 0.0
    %5164 = vmatpush1.msra.mxu0 0.0
    %5165 = vmatprep.subr.mxu0 0.0
    %5166 = vmatpush1.msra.mxu0 0.0
    %5167 = vmatprep.subr.mxu0 0.0
    %5168 = vmatpush1.msra.mxu0 0.0
    %5169 = vmatprep.subr.mxu0 0.0
    %5170 = vmatpush1.msra.mxu0 0.0
    %5171 = vmatprep.subr.mxu0 0.0
    %5172 = vmatpush1.msra.mxu0 0.0
    %5173 = vmatprep.mubr.f32.mxu0 0.0
    %5174 = vmatmul.mubr.f32.gmra.mrb[0].mxu0 %v5036
    %v5175 = vpop.f32.mrb[0].mxu0
    %v5176 = vadd.f32 0.0, %v5175
    %v5177 = vpop.f32.mrb[0].mxu0
    %5178 = vdwg.mxu0
    %v5179 = vadd.f32 %v3919, %v5176
    %v5180 = vmul.f32 %v5179, 0.5
    %v5181 = vtanh.pop %v5180
    %v5182 = vmul.f32 %v5181, 0.5
    %v5183 = vadd.f32 %v5182, 0.5
    %v5184 = vtanh.pop %v5179
    %v5185 = vmul.f32 %v5183, %v5026
    %5187 = vrot.lane.b32.xlu0 %v5184, 64
    %v5188 = vpop.permute.xlu0 %5187
    %v5190 = vmul.f32 %v5183, %v5188
    %5192 = vrot.lane.b32.xlu0 %v5190, 32
    %v5193 = vpop.permute.xlu0 %5192
    %v5195 = vadd.f32 %v5185, %v5193
    %v5196 = vtanh.pop %v5195
    %5198 = vrot.lane.b32.xlu0 %v5196, 64
    %v5199 = vpop.permute.xlu0 %5198
    %v5201 = vmul.f32 %v5183, %v5199
    %5203 = vrot.lane.b32.xlu0 %v5201, 32
    %v5204 = vpop.permute.xlu0 %5203
    %v5205 = vsel %vm290, %v5204, 0
    %5207 = vmatprep.subr.mxu0 0.0
    %5208 = vmatpush1.msra.mxu0 %v2466
    %5209 = vmatprep.subr.mxu0 0.0
    %5210 = vmatpush1.msra.mxu0 %v2467
    %5211 = vmatprep.subr.mxu0 0.0
    %5212 = vmatpush1.msra.mxu0 %v2468
    %5213 = vmatprep.subr.mxu0 0.0
    %5214 = vmatpush1.msra.mxu0 %v2469
    %5215 = vmatprep.subr.mxu0 0.0
    %5216 = vmatpush1.msra.mxu0 0.0
    %5217 = vmatprep.subr.mxu0 0.0
    %5218 = vmatpush1.msra.mxu0 0.0
    %5219 = vmatprep.subr.mxu0 0.0
    %5220 = vmatpush1.msra.mxu0 0.0
    %5221 = vmatprep.subr.mxu0 0.0
    %5222 = vmatpush1.msra.mxu0 0.0
    %5223 = vmatprep.subr.mxu0 0.0
    %5224 = vmatpush1.msra.mxu0 0.0
    %5225 = vmatprep.subr.mxu0 0.0
    %5226 = vmatpush1.msra.mxu0 0.0
    %5227 = vmatprep.subr.mxu0 0.0
    %5228 = vmatpush1.msra.mxu0 0.0
    %5229 = vmatprep.subr.mxu0 0.0
    %5230 = vmatpush1.msra.mxu0 0.0
    %5231 = vmatprep.subr.mxu0 0.0
    %5232 = vmatpush1.msra.mxu0 0.0
    %5233 = vmatprep.subr.mxu0 0.0
    %5234 = vmatpush1.msra.mxu0 0.0
    %5235 = vmatprep.subr.mxu0 0.0
    %5236 = vmatpush1.msra.mxu0 0.0
    %5237 = vmatprep.subr.mxu0 0.0
    %5238 = vmatpush1.msra.mxu0 0.0
    %5239 = vmatprep.subr.mxu0 0.0
    %5240 = vmatpush1.msra.mxu0 0.0
    %5241 = vmatprep.subr.mxu0 0.0
    %5242 = vmatpush1.msra.mxu0 0.0
    %5243 = vmatprep.subr.mxu0 0.0
    %5244 = vmatpush1.msra.mxu0 0.0
    %5245 = vmatprep.subr.mxu0 0.0
    %5246 = vmatpush1.msra.mxu0 0.0
    %5247 = vmatprep.subr.mxu0 0.0
    %5248 = vmatpush1.msra.mxu0 0.0
    %5249 = vmatprep.subr.mxu0 0.0
    %5250 = vmatpush1.msra.mxu0 0.0
    %5251 = vmatprep.subr.mxu0 0.0
    %5252 = vmatpush1.msra.mxu0 0.0
    %5253 = vmatprep.subr.mxu0 0.0
    %5254 = vmatpush1.msra.mxu0 0.0
    %5255 = vmatprep.subr.mxu0 0.0
    %5256 = vmatpush1.msra.mxu0 0.0
    %5257 = vmatprep.subr.mxu0 0.0
    %5258 = vmatpush1.msra.mxu0 0.0
    %5259 = vmatprep.subr.mxu0 0.0
    %5260 = vmatpush1.msra.mxu0 0.0
    %5261 = vmatprep.subr.mxu0 0.0
    %5262 = vmatpush1.msra.mxu0 0.0
    %5263 = vmatprep.subr.mxu0 0.0
    %5264 = vmatpush1.msra.mxu0 0.0
    %5265 = vmatprep.subr.mxu0 0.0
    %5266 = vmatpush1.msra.mxu0 0.0
    %5267 = vmatprep.subr.mxu0 0.0
    %5268 = vmatpush1.msra.mxu0 0.0
    %5269 = vmatprep.subr.mxu0 0.0
    %5270 = vmatpush1.msra.mxu0 0.0
    %5271 = vmatprep.mubr.f32.mxu0 0.0
    %5272 = vmatmul.mubr.f32.gmra.mrb[0].mxu0 %v5205
    %v5273 = vpop.f32.mrb[0].mxu0
    %v5274 = vadd.f32 %v2475, %v5273
    %v5275 = vpop.f32.mrb[0].mxu0
    %5276 = vdwg.mxu0
    %5277 = vst [vmem:[#allocation19 + $0xe] sm:$0x3] %v5274
    // Predicated region
    $region102: #{tpu_custom_call.1} parent=1 // pred_check
      _
    $region103: #{tpu_custom_call.1} parent=1 // pred_check_branch
      %5279 = sbr.rel (0) target = $region105
    $region104: #{tpu_custom_call.1} parent=1 // pred_region
      %s5281 = ssub.s32 256, 256
      %5282 = vsyncadd [#allocation4], %s5281
      %s5283 = sshll.u32 [#allocation19], 4
      %s5284 = int_to_ptr.vmem [resolvable:$true] %s5283
      %5289 = dma.vmem_to_hbm [thread:$0]  %s5284, 256, %s15, [#allocation4], 128, 128, 8
    $region105: #{tpu_custom_call.1} parent=1 // pred_fallthru
      _
    // Predicated region
    $region106: #{tpu_custom_call.1} parent=1 // pred_check
      _
    $region107: #{tpu_custom_call.1} parent=1 // pred_check_branch
      %5291 = sbr.rel (0) target = $region109
    $region108: #{tpu_custom_call.1} parent=1 // pred_region
      %5292 = dma.done [#allocation4], 256
    $region109: #{tpu_custom_call.1} parent=1 // pred_fallthru
      _
    %5293 = vsyncpa [#allocation3], 1
    %5294 = vsyncpa [#allocation6], 1
    %5295 = vsyncpa [#allocation9], 1
    %5296 = vsyncpa [#allocation12], 1
    %5297 = vsyncpa [#allocation15], 1
    %5298 = vsyncpa [#allocation18], 1
    %5299 = vsyncpa [#allocation4], 1

</llo_original>
